<compile_context>
chip_gen: v7x
topology: tpu7x:2x2x1
jax: 0.10.0
libtpu: 0.0.40
codegen_flags: <defaults>
</compile_context>

<pallas_src>
import functools
import math

import jax
import jax.numpy as jnp
from jax.experimental import pallas as pl
from jax.experimental.pallas import tpu as pltpu

_MAB_KEYS = ("wq", "bq", "wk", "bk", "wv", "bv", "wo", "bo", "g0", "b0", "g1", "b1")


# ------------------------------- kernel body -------------------------------- #

def _layernorm(x, g, b, eps=1e-5):
    mu = jnp.mean(x, axis=-1, keepdims=True)
    var = jnp.mean((x - mu) ** 2, axis=-1, keepdims=True)
    return (x - mu) * jax.lax.rsqrt(var + eps) * g + b


def _mab(q_in, k_in, p, num_heads, mask, cd):
    """Set-Transformer MAB on one batch block.

    q_in: [Sq, Dq] (shared queries: object queries / inducing points) or [Bb, Sq, Dq]
    k_in: [Bb, Sk, Dk];  mask: None or [Bb, 1, Sk] (1.0 == padded key)
    Returns [Bb, Sq, Dv] in float32.
    """
    wq, bq, wk, bk, wv, bv, wo, bo, g0, b0, g1, b1 = p
    Bb, Sk, Dk = k_in.shape
    Dv = wq.shape[-1]
    ds = Dv // num_heads
    scale = 1.0 / math.sqrt(Dv)

    if q_in.ndim == 2:
        # Shared queries: project once, broadcast over the batch block.
        Sq = q_in.shape[0]
        q = jnp.dot(q_in.astype(cd), wq, preferred_element_type=jnp.float32) + bq
        q = jnp.broadcast_to(q[None], (Bb, Sq, Dv))
    else:
        Sq = q_in.shape[1]
        q = (jnp.dot(q_in.reshape(Bb * Sq, -1).astype(cd), wq,
                     preferred_element_type=jnp.float32) + bq).reshape(Bb, Sq, Dv)

    k_flat = k_in.reshape(Bb * Sk, Dk).astype(cd)
    k = (jnp.dot(k_flat, wk, preferred_element_type=jnp.float32) + bk).reshape(Bb, Sk, Dv)
    v = (jnp.dot(k_flat, wv, preferred_element_type=jnp.float32) + bv).reshape(Bb, Sk, Dv)

    neg = None if mask is None else mask * 1e9      # hoisted out of the head loop

    head_outs = []
    for h in range(num_heads):                      # static unroll over heads
        sl = slice(h * ds, (h + 1) * ds)
        qh, kh, vh = q[..., sl], k[..., sl], v[..., sl]
        logits = jnp.einsum('bqd,bkd->bqk', qh.astype(cd), kh.astype(cd),
                            preferred_element_type=jnp.float32) * scale
        if neg is not None:
            logits = logits - neg                   # f32 logits, f32 mask
        logits = logits - jnp.max(logits, axis=-1, keepdims=True)
        pr = jnp.exp(logits)
        pr = pr * pl.reciprocal(jnp.sum(pr, axis=-1, keepdims=True), approx=True)
        att = jnp.einsum('bqk,bkd->bqd', pr.astype(cd), vh.astype(cd),
                         preferred_element_type=jnp.float32)
        head_outs.append(qh + att)                  # residual in f32

    o = jnp.concatenate(head_outs, axis=-1)         # [Bb, Sq, Dv]
    o = _layernorm(o, g0, b0)
    h2 = jnp.dot(o.reshape(Bb * Sq, Dv).astype(cd), wo,
                 preferred_element_type=jnp.float32) + bo
    o = o + jax.nn.relu(h2).reshape(Bb, Sq, Dv)
    o = _layernorm(o, g1, b1)
    return o


def decoder_kernel(*refs, n_isab, num_heads, num_heads_cross, has_mask, cd):
    """Fused decoder: cross-attn MAB -> n_isab ISABs -> Linear, one batch block."""
    out_ref = refs[-1]
    it = iter(refs[:-1])

    oq = next(it)[0]                                   # [Sq, D]   shared object queries
    mem = next(it)[...]                                # [Bb, Sm, D]
    mask = next(it)[...] if has_mask else None         # [Bb, 1, Sm]

    def take_mab():
        return tuple(next(it)[...] for _ in range(len(_MAB_KEYS)))

    mab0 = take_mab()
    isab_params = []
    for _ in range(n_isab):
        ind = next(it)[0]                              # [num_inds, D] shared inducing pts
        isab_params.append((ind, take_mab(), take_mab()))
    lin_w = next(it)[...]
    lin_b = next(it)[...]

    # Cross-attention MAB (queries attend over memory, key-padding masked).
    x = _mab(oq, mem, mab0, num_heads_cross, mask, cd)         # [Bb, Sq, D]

    # ISAB blocks: H = MAB(I, X); X = MAB(X, H)   (no mask inside)
    for (ind, mab_i, mab_o) in isab_params:
        hmid = _mab(ind, x, mab_i, num_heads, None, cd)        # [Bb, num_inds, D]
        x = _mab(x, hmid, mab_o, num_heads, None, cd)          # [Bb, Sq, D]

    Bb, Sq, D = x.shape
    y = jnp.dot(x.reshape(Bb * Sq, D).astype(cd), lin_w,
                preferred_element_type=jnp.float32) + lin_b
    out_ref[...] = y.reshape(Bb, Sq, -1).astype(out_ref.dtype)


# ------------------------------ Python wrapper ------------------------------ #

def isab_decoder_forward(object_queries, memory, padding_mask, params,
                         num_heads=4, num_heads_cross_attention=4,
                         block_b=1, compute_dtype=jnp.bfloat16):
    """object_queries: [1, Sq, D], memory: [B, Sm, D], padding_mask: [B, Sm] or None."""
    B, Sm, D = memory.shape
    _, Sq, _ = object_queries.shape
    Dout = params["lin_w"].shape[1]
    n_isab = len(params["isabs"])
    has_mask = padding_mask is not None
    assert B % block_b == 0, "block_b must divide the batch size"

    cast_w = lambda w: w.astype(compute_dtype)          # bf16 weights -> half DMA + native MXU

    def mab_arrays(p):
        return [cast_w(p[k]) if k in ("wq", "wk", "wv", "wo") else p[k]
                for k in _MAB_KEYS]

    inputs = [object_queries, memory]
    in_specs = [
        pl.BlockSpec((1, Sq, D), lambda b: (0, 0, 0)),          # shared: never B-tiled
        pl.BlockSpec((block_b, Sm, D), lambda b: (b, 0, 0)),
    ]
    if has_mask:
        inputs.append(padding_mask.astype(jnp.float32).reshape(B, 1, Sm))
        in_specs.append(pl.BlockSpec((block_b, 1, Sm), lambda b: (b, 0, 0)))

    def const_spec(a):
        nd = a.ndim
        return pl.BlockSpec(a.shape, lambda b: (0,) * nd)       # VMEM-resident weights

    weights = list(mab_arrays(params["mab0"]))
    for isab_p in params["isabs"]:
        weights.append(isab_p["I"])
        weights += mab_arrays(isab_p["mab0"])
        weights += mab_arrays(isab_p["mab1"])
    weights += [cast_w(params["lin_w"]), params["lin_b"]]

    inputs += weights
    in_specs += [const_spec(a) for a in weights]

    kernel = functools.partial(
        decoder_kernel, n_isab=n_isab, num_heads=num_heads,
        num_heads_cross=num_heads_cross_attention, has_mask=has_mask,
        cd=compute_dtype)

    return pl.pallas_call(
        kernel,
        out_shape=jax.ShapeDtypeStruct((B, Sq, Dout), jnp.float32),
        grid=(B // block_b,),
        in_specs=in_specs,
        out_specs=pl.BlockSpec((block_b, Sq, Dout), lambda b: (b, 0, 0)),
        compiler_params=pltpu.CompilerParams(dimension_semantics=("parallel",)),
    )(*inputs)


# ----------------------------- Parameter init ------------------------------- #

def init_mab_params(key, dq, dk, dv):
    ks = jax.random.split(key, 4)
    s = 0.1
    return {
        "wq": jax.random.normal(ks[0], (dq, dv), jnp.float32) * s,
        "bq": jnp.zeros((1, dv), jnp.float32),
        "wk": jax.random.normal(ks[1], (dk, dv), jnp.float32) * s,
        "bk": jnp.zeros((1, dv), jnp.float32),
        "wv": jax.random.normal(ks[2], (dk, dv), jnp.float32) * s,
        "bv": jnp.zeros((1, dv), jnp.float32),
        "wo": jax.random.normal(ks[3], (dv, dv), jnp.float32) * s,
        "bo": jnp.zeros((1, dv), jnp.float32),
        "g0": jnp.ones((1, dv), jnp.float32), "b0": jnp.zeros((1, dv), jnp.float32),
        "g1": jnp.ones((1, dv), jnp.float32), "b1": jnp.zeros((1, dv), jnp.float32),
    }


def init_isab_decoder_params(key, dim_latent, dim_output, n_hidden_layers,
                             num_inds_points):
    keys = jax.random.split(key, 2 + 3 * n_hidden_layers)
    params = {"mab0": init_mab_params(keys[0], dim_latent, dim_latent, dim_latent)}
    isabs = []
    kidx = 1
    for _ in range(n_hidden_layers):   # (n_hidden_layers - 1) hidden ISABs + final ISAB
        ind = jax.random.normal(keys[kidx], (1, num_inds_points, dim_latent),
                                jnp.float32) * 0.1
        mab_i = init_mab_params(keys[kidx + 1], dim_latent, dim_latent, dim_latent)
        mab_o = init_mab_params(keys[kidx + 2], dim_latent, dim_latent, dim_latent)
        isabs.append({"I": ind, "mab0": mab_i, "mab1": mab_o})
        kidx += 3
    params["isabs"] = isabs
    params["lin_w"] = jax.random.normal(keys[kidx], (dim_latent, dim_output),
                                        jnp.float32) * 0.1
    params["lin_b"] = jnp.zeros((1, dim_output), jnp.float32)
    return params


# --------------------------------- Main ------------------------------------- #

if __name__ == "__main__":
    # Small config: dim_latent=32, dim_output=16, n_hidden_layers=2, 4 heads,
    # 16 inducing points, batch=2, 8 object queries, memory length 16.
    dim_latent, dim_output = 32, 16
    n_hidden_layers, num_heads, num_heads_cross, num_inds = 2, 4, 4, 16
    B, n_queries, S_mem = 2, 8, 16

    root = jax.random.PRNGKey(0)
    k_params, k_q, k_m = jax.random.split(root, 3)

    params = init_isab_decoder_params(k_params, dim_latent, dim_output,
                                      n_hidden_layers, num_inds)

    object_queries = jax.random.normal(k_q, (1, n_queries, dim_latent), jnp.float32)
    memory = jax.random.normal(k_m, (B, S_mem, dim_latent), jnp.float32)
    # Padding mask: 1.0 == padded key position (last 4 positions of batch 1 padded).
    padding_mask = jnp.zeros((B, S_mem), jnp.float32).at[1, -4:].set(1.0)

    out = isab_decoder_forward(object_queries, memory, padding_mask, params,
                               num_heads=num_heads,
                               num_heads_cross_attention=num_heads_cross,
                               block_b=1, compute_dtype=jnp.bfloat16)
    out = jax.block_until_ready(out)
    assert out.shape == (B, n_queries, dim_output)
    print("KERNEL_OK")
</pallas_src>

<mosaic_0001>
module attributes {stable_mosaic.version = 11 : i64} {
  func.func @decoder_kernel(%arg0: i32, %arg1: memref<1x8x32xf32, #tpu.memory_space<vmem>>, %arg2: memref<1x16x32xf32, #tpu.memory_space<vmem>>, %arg3: memref<1x1x16xf32, #tpu.memory_space<vmem>>, %arg4: memref<32x32xbf16, #tpu.memory_space<vmem>>, %arg5: memref<1x32xf32, #tpu.memory_space<vmem>>, %arg6: memref<32x32xbf16, #tpu.memory_space<vmem>>, %arg7: memref<1x32xf32, #tpu.memory_space<vmem>>, %arg8: memref<32x32xbf16, #tpu.memory_space<vmem>>, %arg9: memref<1x32xf32, #tpu.memory_space<vmem>>, %arg10: memref<32x32xbf16, #tpu.memory_space<vmem>>, %arg11: memref<1x32xf32, #tpu.memory_space<vmem>>, %arg12: memref<1x32xf32, #tpu.memory_space<vmem>>, %arg13: memref<1x32xf32, #tpu.memory_space<vmem>>, %arg14: memref<1x32xf32, #tpu.memory_space<vmem>>, %arg15: memref<1x32xf32, #tpu.memory_space<vmem>>, %arg16: memref<1x16x32xf32, #tpu.memory_space<vmem>>, %arg17: memref<32x32xbf16, #tpu.memory_space<vmem>>, %arg18: memref<1x32xf32, #tpu.memory_space<vmem>>, %arg19: memref<32x32xbf16, #tpu.memory_space<vmem>>, %arg20: memref<1x32xf32, #tpu.memory_space<vmem>>, %arg21: memref<32x32xbf16, #tpu.memory_space<vmem>>, %arg22: memref<1x32xf32, #tpu.memory_space<vmem>>, %arg23: memref<32x32xbf16, #tpu.memory_space<vmem>>, %arg24: memref<1x32xf32, #tpu.memory_space<vmem>>, %arg25: memref<1x32xf32, #tpu.memory_space<vmem>>, %arg26: memref<1x32xf32, #tpu.memory_space<vmem>>, %arg27: memref<1x32xf32, #tpu.memory_space<vmem>>, %arg28: memref<1x32xf32, #tpu.memory_space<vmem>>, %arg29: memref<32x32xbf16, #tpu.memory_space<vmem>>, %arg30: memref<1x32xf32, #tpu.memory_space<vmem>>, %arg31: memref<32x32xbf16, #tpu.memory_space<vmem>>, %arg32: memref<1x32xf32, #tpu.memory_space<vmem>>, %arg33: memref<32x32xbf16, #tpu.memory_space<vmem>>, %arg34: memref<1x32xf32, #tpu.memory_space<vmem>>, %arg35: memref<32x32xbf16, #tpu.memory_space<vmem>>, %arg36: memref<1x32xf32, #tpu.memory_space<vmem>>, %arg37: memref<1x32xf32, #tpu.memory_space<vmem>>, %arg38: memref<1x32xf32, #tpu.memory_space<vmem>>, %arg39: memref<1x32xf32, #tpu.memory_space<vmem>>, %arg40: memref<1x32xf32, #tpu.memory_space<vmem>>, %arg41: memref<1x16x32xf32, #tpu.memory_space<vmem>>, %arg42: memref<32x32xbf16, #tpu.memory_space<vmem>>, %arg43: memref<1x32xf32, #tpu.memory_space<vmem>>, %arg44: memref<32x32xbf16, #tpu.memory_space<vmem>>, %arg45: memref<1x32xf32, #tpu.memory_space<vmem>>, %arg46: memref<32x32xbf16, #tpu.memory_space<vmem>>, %arg47: memref<1x32xf32, #tpu.memory_space<vmem>>, %arg48: memref<32x32xbf16, #tpu.memory_space<vmem>>, %arg49: memref<1x32xf32, #tpu.memory_space<vmem>>, %arg50: memref<1x32xf32, #tpu.memory_space<vmem>>, %arg51: memref<1x32xf32, #tpu.memory_space<vmem>>, %arg52: memref<1x32xf32, #tpu.memory_space<vmem>>, %arg53: memref<1x32xf32, #tpu.memory_space<vmem>>, %arg54: memref<32x32xbf16, #tpu.memory_space<vmem>>, %arg55: memref<1x32xf32, #tpu.memory_space<vmem>>, %arg56: memref<32x32xbf16, #tpu.memory_space<vmem>>, %arg57: memref<1x32xf32, #tpu.memory_space<vmem>>, %arg58: memref<32x32xbf16, #tpu.memory_space<vmem>>, %arg59: memref<1x32xf32, #tpu.memory_space<vmem>>, %arg60: memref<32x32xbf16, #tpu.memory_space<vmem>>, %arg61: memref<1x32xf32, #tpu.memory_space<vmem>>, %arg62: memref<1x32xf32, #tpu.memory_space<vmem>>, %arg63: memref<1x32xf32, #tpu.memory_space<vmem>>, %arg64: memref<1x32xf32, #tpu.memory_space<vmem>>, %arg65: memref<1x32xf32, #tpu.memory_space<vmem>>, %arg66: memref<32x16xbf16, #tpu.memory_space<vmem>>, %arg67: memref<1x16xf32, #tpu.memory_space<vmem>>, %arg68: memref<1x8x16xf32, #tpu.memory_space<vmem>>) attributes {dimension_semantics = [#tpu.dimension_semantics<parallel>], iteration_bounds = array<i64: 2>, scalar_prefetch = 0 : i64, scratch_operands = 0 : i64, tpu.core_type = #tpu.core_type<tc>, window_params = [{pipeline_mode = #tpu.pipeline_mode<synchronous>, transform_indices = @transform_0, window_bounds = array<i64: 1, 8, 32>}, {transform_indices = @transform_1, window_bounds = array<i64: 1, 16, 32>}, {transform_indices = @transform_2, window_bounds = array<i64: 1, 1, 16>}, {pipeline_mode = #tpu.pipeline_mode<synchronous>, transform_indices = @transform_3, window_bounds = array<i64: 32, 32>}, {pipeline_mode = #tpu.pipeline_mode<synchronous>, transform_indices = @transform_4, window_bounds = array<i64: 1, 32>}, {pipeline_mode = #tpu.pipeline_mode<synchronous>, transform_indices = @transform_5, window_bounds = array<i64: 32, 32>}, {pipeline_mode = #tpu.pipeline_mode<synchronous>, transform_indices = @transform_6, window_bounds = array<i64: 1, 32>}, {pipeline_mode = #tpu.pipeline_mode<synchronous>, transform_indices = @transform_7, window_bounds = array<i64: 32, 32>}, {pipeline_mode = #tpu.pipeline_mode<synchronous>, transform_indices = @transform_8, window_bounds = array<i64: 1, 32>}, {pipeline_mode = #tpu.pipeline_mode<synchronous>, transform_indices = @transform_9, window_bounds = array<i64: 32, 32>}, {pipeline_mode = #tpu.pipeline_mode<synchronous>, transform_indices = @transform_10, window_bounds = array<i64: 1, 32>}, {pipeline_mode = #tpu.pipeline_mode<synchronous>, transform_indices = @transform_11, window_bounds = array<i64: 1, 32>}, {pipeline_mode = #tpu.pipeline_mode<synchronous>, transform_indices = @transform_12, window_bounds = array<i64: 1, 32>}, {pipeline_mode = #tpu.pipeline_mode<synchronous>, transform_indices = @transform_13, window_bounds = array<i64: 1, 32>}, {pipeline_mode = #tpu.pipeline_mode<synchronous>, transform_indices = @transform_14, window_bounds = array<i64: 1, 32>}, {pipeline_mode = #tpu.pipeline_mode<synchronous>, transform_indices = @transform_15, window_bounds = array<i64: 1, 16, 32>}, {pipeline_mode = #tpu.pipeline_mode<synchronous>, transform_indices = @transform_16, window_bounds = array<i64: 32, 32>}, {pipeline_mode = #tpu.pipeline_mode<synchronous>, transform_indices = @transform_17, window_bounds = array<i64: 1, 32>}, {pipeline_mode = #tpu.pipeline_mode<synchronous>, transform_indices = @transform_18, window_bounds = array<i64: 32, 32>}, {pipeline_mode = #tpu.pipeline_mode<synchronous>, transform_indices = @transform_19, window_bounds = array<i64: 1, 32>}, {pipeline_mode = #tpu.pipeline_mode<synchronous>, transform_indices = @transform_20, window_bounds = array<i64: 32, 32>}, {pipeline_mode = #tpu.pipeline_mode<synchronous>, transform_indices = @transform_21, window_bounds = array<i64: 1, 32>}, {pipeline_mode = #tpu.pipeline_mode<synchronous>, transform_indices = @transform_22, window_bounds = array<i64: 32, 32>}, {pipeline_mode = #tpu.pipeline_mode<synchronous>, transform_indices = @transform_23, window_bounds = array<i64: 1, 32>}, {pipeline_mode = #tpu.pipeline_mode<synchronous>, transform_indices = @transform_24, window_bounds = array<i64: 1, 32>}, {pipeline_mode = #tpu.pipeline_mode<synchronous>, transform_indices = @transform_25, window_bounds = array<i64: 1, 32>}, {pipeline_mode = #tpu.pipeline_mode<synchronous>, transform_indices = @transform_26, window_bounds = array<i64: 1, 32>}, {pipeline_mode = #tpu.pipeline_mode<synchronous>, transform_indices = @transform_27, window_bounds = array<i64: 1, 32>}, {pipeline_mode = #tpu.pipeline_mode<synchronous>, transform_indices = @transform_28, window_bounds = array<i64: 32, 32>}, {pipeline_mode = #tpu.pipeline_mode<synchronous>, transform_indices = @transform_29, window_bounds = array<i64: 1, 32>}, {pipeline_mode = #tpu.pipeline_mode<synchronous>, transform_indices = @transform_30, window_bounds = array<i64: 32, 32>}, {pipeline_mode = #tpu.pipeline_mode<synchronous>, transform_indices = @transform_31, window_bounds = array<i64: 1, 32>}, {pipeline_mode = #tpu.pipeline_mode<synchronous>, transform_indices = @transform_32, window_bounds = array<i64: 32, 32>}, {pipeline_mode = #tpu.pipeline_mode<synchronous>, transform_indices = @transform_33, window_bounds = array<i64: 1, 32>}, {pipeline_mode = #tpu.pipeline_mode<synchronous>, transform_indices = @transform_34, window_bounds = array<i64: 32, 32>}, {pipeline_mode = #tpu.pipeline_mode<synchronous>, transform_indices = @transform_35, window_bounds = array<i64: 1, 32>}, {pipeline_mode = #tpu.pipeline_mode<synchronous>, transform_indices = @transform_36, window_bounds = array<i64: 1, 32>}, {pipeline_mode = #tpu.pipeline_mode<synchronous>, transform_indices = @transform_37, window_bounds = array<i64: 1, 32>}, {pipeline_mode = #tpu.pipeline_mode<synchronous>, transform_indices = @transform_38, window_bounds = array<i64: 1, 32>}, {pipeline_mode = #tpu.pipeline_mode<synchronous>, transform_indices = @transform_39, window_bounds = array<i64: 1, 32>}, {pipeline_mode = #tpu.pipeline_mode<synchronous>, transform_indices = @transform_40, window_bounds = array<i64: 1, 16, 32>}, {pipeline_mode = #tpu.pipeline_mode<synchronous>, transform_indices = @transform_41, window_bounds = array<i64: 32, 32>}, {pipeline_mode = #tpu.pipeline_mode<synchronous>, transform_indices = @transform_42, window_bounds = array<i64: 1, 32>}, {pipeline_mode = #tpu.pipeline_mode<synchronous>, transform_indices = @transform_43, window_bounds = array<i64: 32, 32>}, {pipeline_mode = #tpu.pipeline_mode<synchronous>, transform_indices = @transform_44, window_bounds = array<i64: 1, 32>}, {pipeline_mode = #tpu.pipeline_mode<synchronous>, transform_indices = @transform_45, window_bounds = array<i64: 32, 32>}, {pipeline_mode = #tpu.pipeline_mode<synchronous>, transform_indices = @transform_46, window_bounds = array<i64: 1, 32>}, {pipeline_mode = #tpu.pipeline_mode<synchronous>, transform_indices = @transform_47, window_bounds = array<i64: 32, 32>}, {pipeline_mode = #tpu.pipeline_mode<synchronous>, transform_indices = @transform_48, window_bounds = array<i64: 1, 32>}, {pipeline_mode = #tpu.pipeline_mode<synchronous>, transform_indices = @transform_49, window_bounds = array<i64: 1, 32>}, {pipeline_mode = #tpu.pipeline_mode<synchronous>, transform_indices = @transform_50, window_bounds = array<i64: 1, 32>}, {pipeline_mode = #tpu.pipeline_mode<synchronous>, transform_indices = @transform_51, window_bounds = array<i64: 1, 32>}, {pipeline_mode = #tpu.pipeline_mode<synchronous>, transform_indices = @transform_52, window_bounds = array<i64: 1, 32>}, {pipeline_mode = #tpu.pipeline_mode<synchronous>, transform_indices = @transform_53, window_bounds = array<i64: 32, 32>}, {pipeline_mode = #tpu.pipeline_mode<synchronous>, transform_indices = @transform_54, window_bounds = array<i64: 1, 32>}, {pipeline_mode = #tpu.pipeline_mode<synchronous>, transform_indices = @transform_55, window_bounds = array<i64: 32, 32>}, {pipeline_mode = #tpu.pipeline_mode<synchronous>, transform_indices = @transform_56, window_bounds = array<i64: 1, 32>}, {pipeline_mode = #tpu.pipeline_mode<synchronous>, transform_indices = @transform_57, window_bounds = array<i64: 32, 32>}, {pipeline_mode = #tpu.pipeline_mode<synchronous>, transform_indices = @transform_58, window_bounds = array<i64: 1, 32>}, {pipeline_mode = #tpu.pipeline_mode<synchronous>, transform_indices = @transform_59, window_bounds = array<i64: 32, 32>}, {pipeline_mode = #tpu.pipeline_mode<synchronous>, transform_indices = @transform_60, window_bounds = array<i64: 1, 32>}, {pipeline_mode = #tpu.pipeline_mode<synchronous>, transform_indices = @transform_61, window_bounds = array<i64: 1, 32>}, {pipeline_mode = #tpu.pipeline_mode<synchronous>, transform_indices = @transform_62, window_bounds = array<i64: 1, 32>}, {pipeline_mode = #tpu.pipeline_mode<synchronous>, transform_indices = @transform_63, window_bounds = array<i64: 1, 32>}, {pipeline_mode = #tpu.pipeline_mode<synchronous>, transform_indices = @transform_64, window_bounds = array<i64: 1, 32>}, {pipeline_mode = #tpu.pipeline_mode<synchronous>, transform_indices = @transform_65, window_bounds = array<i64: 32, 16>}, {pipeline_mode = #tpu.pipeline_mode<synchronous>, transform_indices = @transform_66, window_bounds = array<i64: 1, 16>}, {transform_indices = @transform_67, window_bounds = array<i64: 1, 8, 16>}]} {
    %c0 = arith.constant 0 : index
    %c0_0 = arith.constant 0 : index
    %c0_1 = arith.constant 0 : index
    %0 = vector.load %arg1[%c0, %c0_0, %c0_1] : memref<1x8x32xf32, #tpu.memory_space<vmem>>, vector<1x8x32xf32>
    %1 = vector.shape_cast %0 : vector<1x8x32xf32> to vector<8x32xf32>
    %c0_2 = arith.constant 0 : index
    %c0_3 = arith.constant 0 : index
    %c0_4 = arith.constant 0 : index
    %2 = vector.load %arg2[%c0_2, %c0_3, %c0_4] : memref<1x16x32xf32, #tpu.memory_space<vmem>>, vector<1x16x32xf32>
    %c0_5 = arith.constant 0 : index
    %c0_6 = arith.constant 0 : index
    %c0_7 = arith.constant 0 : index
    %3 = vector.load %arg3[%c0_5, %c0_6, %c0_7] : memref<1x1x16xf32, #tpu.memory_space<vmem>>, vector<1x1x16xf32>
    %c0_8 = arith.constant 0 : index
    %c0_9 = arith.constant 0 : index
    %4 = vector.load %arg4[%c0_8, %c0_9] : memref<32x32xbf16, #tpu.memory_space<vmem>>, vector<32x32xbf16>
    %c0_10 = arith.constant 0 : index
    %c0_11 = arith.constant 0 : index
    %5 = vector.load %arg5[%c0_10, %c0_11] : memref<1x32xf32, #tpu.memory_space<vmem>>, vector<1x32xf32>
    %c0_12 = arith.constant 0 : index
    %c0_13 = arith.constant 0 : index
    %6 = vector.load %arg6[%c0_12, %c0_13] : memref<32x32xbf16, #tpu.memory_space<vmem>>, vector<32x32xbf16>
    %c0_14 = arith.constant 0 : index
    %c0_15 = arith.constant 0 : index
    %7 = vector.load %arg7[%c0_14, %c0_15] : memref<1x32xf32, #tpu.memory_space<vmem>>, vector<1x32xf32>
    %c0_16 = arith.constant 0 : index
    %c0_17 = arith.constant 0 : index
    %8 = vector.load %arg8[%c0_16, %c0_17] : memref<32x32xbf16, #tpu.memory_space<vmem>>, vector<32x32xbf16>
    %c0_18 = arith.constant 0 : index
    %c0_19 = arith.constant 0 : index
    %9 = vector.load %arg9[%c0_18, %c0_19] : memref<1x32xf32, #tpu.memory_space<vmem>>, vector<1x32xf32>
    %c0_20 = arith.constant 0 : index
    %c0_21 = arith.constant 0 : index
    %10 = vector.load %arg10[%c0_20, %c0_21] : memref<32x32xbf16, #tpu.memory_space<vmem>>, vector<32x32xbf16>
    %c0_22 = arith.constant 0 : index
    %c0_23 = arith.constant 0 : index
    %11 = vector.load %arg11[%c0_22, %c0_23] : memref<1x32xf32, #tpu.memory_space<vmem>>, vector<1x32xf32>
    %c0_24 = arith.constant 0 : index
    %c0_25 = arith.constant 0 : index
    %12 = vector.load %arg12[%c0_24, %c0_25] : memref<1x32xf32, #tpu.memory_space<vmem>>, vector<1x32xf32>
    %c0_26 = arith.constant 0 : index
    %c0_27 = arith.constant 0 : index
    %13 = vector.load %arg13[%c0_26, %c0_27] : memref<1x32xf32, #tpu.memory_space<vmem>>, vector<1x32xf32>
    %c0_28 = arith.constant 0 : index
    %c0_29 = arith.constant 0 : index
    %14 = vector.load %arg14[%c0_28, %c0_29] : memref<1x32xf32, #tpu.memory_space<vmem>>, vector<1x32xf32>
    %c0_30 = arith.constant 0 : index
    %c0_31 = arith.constant 0 : index
    %15 = vector.load %arg15[%c0_30, %c0_31] : memref<1x32xf32, #tpu.memory_space<vmem>>, vector<1x32xf32>
    %c0_32 = arith.constant 0 : index
    %c0_33 = arith.constant 0 : index
    %c0_34 = arith.constant 0 : index
    %16 = vector.load %arg16[%c0_32, %c0_33, %c0_34] : memref<1x16x32xf32, #tpu.memory_space<vmem>>, vector<1x16x32xf32>
    %17 = vector.shape_cast %16 : vector<1x16x32xf32> to vector<16x32xf32>
    %c0_35 = arith.constant 0 : index
    %c0_36 = arith.constant 0 : index
    %18 = vector.load %arg17[%c0_35, %c0_36] : memref<32x32xbf16, #tpu.memory_space<vmem>>, vector<32x32xbf16>
    %c0_37 = arith.constant 0 : index
    %c0_38 = arith.constant 0 : index
    %19 = vector.load %arg18[%c0_37, %c0_38] : memref<1x32xf32, #tpu.memory_space<vmem>>, vector<1x32xf32>
    %c0_39 = arith.constant 0 : index
    %c0_40 = arith.constant 0 : index
    %20 = vector.load %arg19[%c0_39, %c0_40] : memref<32x32xbf16, #tpu.memory_space<vmem>>, vector<32x32xbf16>
    %c0_41 = arith.constant 0 : index
    %c0_42 = arith.constant 0 : index
    %21 = vector.load %arg20[%c0_41, %c0_42] : memref<1x32xf32, #tpu.memory_space<vmem>>, vector<1x32xf32>
    %c0_43 = arith.constant 0 : index
    %c0_44 = arith.constant 0 : index
    %22 = vector.load %arg21[%c0_43, %c0_44] : memref<32x32xbf16, #tpu.memory_space<vmem>>, vector<32x32xbf16>
    %c0_45 = arith.constant 0 : index
    %c0_46 = arith.constant 0 : index
    %23 = vector.load %arg22[%c0_45, %c0_46] : memref<1x32xf32, #tpu.memory_space<vmem>>, vector<1x32xf32>
    %c0_47 = arith.constant 0 : index
    %c0_48 = arith.constant 0 : index
    %24 = vector.load %arg23[%c0_47, %c0_48] : memref<32x32xbf16, #tpu.memory_space<vmem>>, vector<32x32xbf16>
    %c0_49 = arith.constant 0 : index
    %c0_50 = arith.constant 0 : index
    %25 = vector.load %arg24[%c0_49, %c0_50] : memref<1x32xf32, #tpu.memory_space<vmem>>, vector<1x32xf32>
    %c0_51 = arith.constant 0 : index
    %c0_52 = arith.constant 0 : index
    %26 = vector.load %arg25[%c0_51, %c0_52] : memref<1x32xf32, #tpu.memory_space<vmem>>, vector<1x32xf32>
    %c0_53 = arith.constant 0 : index
    %c0_54 = arith.constant 0 : index
    %27 = vector.load %arg26[%c0_53, %c0_54] : memref<1x32xf32, #tpu.memory_space<vmem>>, vector<1x32xf32>
    %c0_55 = arith.constant 0 : index
    %c0_56 = arith.constant 0 : index
    %28 = vector.load %arg27[%c0_55, %c0_56] : memref<1x32xf32, #tpu.memory_space<vmem>>, vector<1x32xf32>
    %c0_57 = arith.constant 0 : index
    %c0_58 = arith.constant 0 : index
    %29 = vector.load %arg28[%c0_57, %c0_58] : memref<1x32xf32, #tpu.memory_space<vmem>>, vector<1x32xf32>
    %c0_59 = arith.constant 0 : index
    %c0_60 = arith.constant 0 : index
    %30 = vector.load %arg29[%c0_59, %c0_60] : memref<32x32xbf16, #tpu.memory_space<vmem>>, vector<32x32xbf16>
    %c0_61 = arith.constant 0 : index
    %c0_62 = arith.constant 0 : index
    %31 = vector.load %arg30[%c0_61, %c0_62] : memref<1x32xf32, #tpu.memory_space<vmem>>, vector<1x32xf32>
    %c0_63 = arith.constant 0 : index
    %c0_64 = arith.constant 0 : index
    %32 = vector.load %arg31[%c0_63, %c0_64] : memref<32x32xbf16, #tpu.memory_space<vmem>>, vector<32x32xbf16>
    %c0_65 = arith.constant 0 : index
    %c0_66 = arith.constant 0 : index
    %33 = vector.load %arg32[%c0_65, %c0_66] : memref<1x32xf32, #tpu.memory_space<vmem>>, vector<1x32xf32>
    %c0_67 = arith.constant 0 : index
    %c0_68 = arith.constant 0 : index
    %34 = vector.load %arg33[%c0_67, %c0_68] : memref<32x32xbf16, #tpu.memory_space<vmem>>, vector<32x32xbf16>
    %c0_69 = arith.constant 0 : index
    %c0_70 = arith.constant 0 : index
    %35 = vector.load %arg34[%c0_69, %c0_70] : memref<1x32xf32, #tpu.memory_space<vmem>>, vector<1x32xf32>
    %c0_71 = arith.constant 0 : index
    %c0_72 = arith.constant 0 : index
    %36 = vector.load %arg35[%c0_71, %c0_72] : memref<32x32xbf16, #tpu.memory_space<vmem>>, vector<32x32xbf16>
    %c0_73 = arith.constant 0 : index
    %c0_74 = arith.constant 0 : index
    %37 = vector.load %arg36[%c0_73, %c0_74] : memref<1x32xf32, #tpu.memory_space<vmem>>, vector<1x32xf32>
    %c0_75 = arith.constant 0 : index
    %c0_76 = arith.constant 0 : index
    %38 = vector.load %arg37[%c0_75, %c0_76] : memref<1x32xf32, #tpu.memory_space<vmem>>, vector<1x32xf32>
    %c0_77 = arith.constant 0 : index
    %c0_78 = arith.constant 0 : index
    %39 = vector.load %arg38[%c0_77, %c0_78] : memref<1x32xf32, #tpu.memory_space<vmem>>, vector<1x32xf32>
    %c0_79 = arith.constant 0 : index
    %c0_80 = arith.constant 0 : index
    %40 = vector.load %arg39[%c0_79, %c0_80] : memref<1x32xf32, #tpu.memory_space<vmem>>, vector<1x32xf32>
    %c0_81 = arith.constant 0 : index
    %c0_82 = arith.constant 0 : index
    %41 = vector.load %arg40[%c0_81, %c0_82] : memref<1x32xf32, #tpu.memory_space<vmem>>, vector<1x32xf32>
    %c0_83 = arith.constant 0 : index
    %c0_84 = arith.constant 0 : index
    %c0_85 = arith.constant 0 : index
    %42 = vector.load %arg41[%c0_83, %c0_84, %c0_85] : memref<1x16x32xf32, #tpu.memory_space<vmem>>, vector<1x16x32xf32>
    %43 = vector.shape_cast %42 : vector<1x16x32xf32> to vector<16x32xf32>
    %c0_86 = arith.constant 0 : index
    %c0_87 = arith.constant 0 : index
    %44 = vector.load %arg42[%c0_86, %c0_87] : memref<32x32xbf16, #tpu.memory_space<vmem>>, vector<32x32xbf16>
    %c0_88 = arith.constant 0 : index
    %c0_89 = arith.constant 0 : index
    %45 = vector.load %arg43[%c0_88, %c0_89] : memref<1x32xf32, #tpu.memory_space<vmem>>, vector<1x32xf32>
    %c0_90 = arith.constant 0 : index
    %c0_91 = arith.constant 0 : index
    %46 = vector.load %arg44[%c0_90, %c0_91] : memref<32x32xbf16, #tpu.memory_space<vmem>>, vector<32x32xbf16>
    %c0_92 = arith.constant 0 : index
    %c0_93 = arith.constant 0 : index
    %47 = vector.load %arg45[%c0_92, %c0_93] : memref<1x32xf32, #tpu.memory_space<vmem>>, vector<1x32xf32>
    %c0_94 = arith.constant 0 : index
    %c0_95 = arith.constant 0 : index
    %48 = vector.load %arg46[%c0_94, %c0_95] : memref<32x32xbf16, #tpu.memory_space<vmem>>, vector<32x32xbf16>
    %c0_96 = arith.constant 0 : index
    %c0_97 = arith.constant 0 : index
    %49 = vector.load %arg47[%c0_96, %c0_97] : memref<1x32xf32, #tpu.memory_space<vmem>>, vector<1x32xf32>
    %c0_98 = arith.constant 0 : index
    %c0_99 = arith.constant 0 : index
    %50 = vector.load %arg48[%c0_98, %c0_99] : memref<32x32xbf16, #tpu.memory_space<vmem>>, vector<32x32xbf16>
    %c0_100 = arith.constant 0 : index
    %c0_101 = arith.constant 0 : index
    %51 = vector.load %arg49[%c0_100, %c0_101] : memref<1x32xf32, #tpu.memory_space<vmem>>, vector<1x32xf32>
    %c0_102 = arith.constant 0 : index
    %c0_103 = arith.constant 0 : index
    %52 = vector.load %arg50[%c0_102, %c0_103] : memref<1x32xf32, #tpu.memory_space<vmem>>, vector<1x32xf32>
    %c0_104 = arith.constant 0 : index
    %c0_105 = arith.constant 0 : index
    %53 = vector.load %arg51[%c0_104, %c0_105] : memref<1x32xf32, #tpu.memory_space<vmem>>, vector<1x32xf32>
    %c0_106 = arith.constant 0 : index
    %c0_107 = arith.constant 0 : index
    %54 = vector.load %arg52[%c0_106, %c0_107] : memref<1x32xf32, #tpu.memory_space<vmem>>, vector<1x32xf32>
    %c0_108 = arith.constant 0 : index
    %c0_109 = arith.constant 0 : index
    %55 = vector.load %arg53[%c0_108, %c0_109] : memref<1x32xf32, #tpu.memory_space<vmem>>, vector<1x32xf32>
    %c0_110 = arith.constant 0 : index
    %c0_111 = arith.constant 0 : index
    %56 = vector.load %arg54[%c0_110, %c0_111] : memref<32x32xbf16, #tpu.memory_space<vmem>>, vector<32x32xbf16>
    %c0_112 = arith.constant 0 : index
    %c0_113 = arith.constant 0 : index
    %57 = vector.load %arg55[%c0_112, %c0_113] : memref<1x32xf32, #tpu.memory_space<vmem>>, vector<1x32xf32>
    %c0_114 = arith.constant 0 : index
    %c0_115 = arith.constant 0 : index
    %58 = vector.load %arg56[%c0_114, %c0_115] : memref<32x32xbf16, #tpu.memory_space<vmem>>, vector<32x32xbf16>
    %c0_116 = arith.constant 0 : index
    %c0_117 = arith.constant 0 : index
    %59 = vector.load %arg57[%c0_116, %c0_117] : memref<1x32xf32, #tpu.memory_space<vmem>>, vector<1x32xf32>
    %c0_118 = arith.constant 0 : index
    %c0_119 = arith.constant 0 : index
    %60 = vector.load %arg58[%c0_118, %c0_119] : memref<32x32xbf16, #tpu.memory_space<vmem>>, vector<32x32xbf16>
    %c0_120 = arith.constant 0 : index
    %c0_121 = arith.constant 0 : index
    %61 = vector.load %arg59[%c0_120, %c0_121] : memref<1x32xf32, #tpu.memory_space<vmem>>, vector<1x32xf32>
    %c0_122 = arith.constant 0 : index
    %c0_123 = arith.constant 0 : index
    %62 = vector.load %arg60[%c0_122, %c0_123] : memref<32x32xbf16, #tpu.memory_space<vmem>>, vector<32x32xbf16>
    %c0_124 = arith.constant 0 : index
    %c0_125 = arith.constant 0 : index
    %63 = vector.load %arg61[%c0_124, %c0_125] : memref<1x32xf32, #tpu.memory_space<vmem>>, vector<1x32xf32>
    %c0_126 = arith.constant 0 : index
    %c0_127 = arith.constant 0 : index
    %64 = vector.load %arg62[%c0_126, %c0_127] : memref<1x32xf32, #tpu.memory_space<vmem>>, vector<1x32xf32>
    %c0_128 = arith.constant 0 : index
    %c0_129 = arith.constant 0 : index
    %65 = vector.load %arg63[%c0_128, %c0_129] : memref<1x32xf32, #tpu.memory_space<vmem>>, vector<1x32xf32>
    %c0_130 = arith.constant 0 : index
    %c0_131 = arith.constant 0 : index
    %66 = vector.load %arg64[%c0_130, %c0_131] : memref<1x32xf32, #tpu.memory_space<vmem>>, vector<1x32xf32>
    %c0_132 = arith.constant 0 : index
    %c0_133 = arith.constant 0 : index
    %67 = vector.load %arg65[%c0_132, %c0_133] : memref<1x32xf32, #tpu.memory_space<vmem>>, vector<1x32xf32>
    %c0_134 = arith.constant 0 : index
    %c0_135 = arith.constant 0 : index
    %68 = vector.load %arg66[%c0_134, %c0_135] : memref<32x16xbf16, #tpu.memory_space<vmem>>, vector<32x16xbf16>
    %c0_136 = arith.constant 0 : index
    %c0_137 = arith.constant 0 : index
    %69 = vector.load %arg67[%c0_136, %c0_137] : memref<1x16xf32, #tpu.memory_space<vmem>>, vector<1x16xf32>
    %70 = arith.truncf %1 : vector<8x32xf32> to vector<8x32xbf16>
    %cst = arith.constant dense<0.000000e+00> : vector<8x32xf32>
    %71 = tpu.matmul %70, %4, %cst {dimension_numbers = #tpu.dot_dimension_numbers<[1], [0], [0], [1], [0, 0, 1, 1], [], []>} : vector<8x32xbf16>, vector<32x32xbf16>, vector<8x32xf32> -> vector<8x32xf32>
    %72 = vector.broadcast %5 : vector<1x32xf32> to vector<8x32xf32>
    %73 = arith.addf %71, %72 : vector<8x32xf32>
    %74 = vector.shape_cast %73 : vector<8x32xf32> to vector<1x8x32xf32>
    %75 = vector.shape_cast %2 : vector<1x16x32xf32> to vector<16x32xf32>
    %76 = arith.truncf %75 : vector<16x32xf32> to vector<16x32xbf16>
    %cst_138 = arith.constant dense<0.000000e+00> : vector<16x32xf32>
    %77 = tpu.matmul %76, %6, %cst_138 {dimension_numbers = #tpu.dot_dimension_numbers<[1], [0], [0], [1], [0, 0, 1, 1], [], []>} : vector<16x32xbf16>, vector<32x32xbf16>, vector<16x32xf32> -> vector<16x32xf32>
    %78 = vector.broadcast %7 : vector<1x32xf32> to vector<16x32xf32>
    %79 = arith.addf %77, %78 : vector<16x32xf32>
    %80 = vector.shape_cast %79 : vector<16x32xf32> to vector<1x16x32xf32>
    %cst_139 = arith.constant dense<0.000000e+00> : vector<16x32xf32>
    %81 = tpu.matmul %76, %8, %cst_139 {dimension_numbers = #tpu.dot_dimension_numbers<[1], [0], [0], [1], [0, 0, 1, 1], [], []>} : vector<16x32xbf16>, vector<32x32xbf16>, vector<16x32xf32> -> vector<16x32xf32>
    %82 = vector.broadcast %9 : vector<1x32xf32> to vector<16x32xf32>
    %83 = arith.addf %81, %82 : vector<16x32xf32>
    %84 = vector.shape_cast %83 : vector<16x32xf32> to vector<1x16x32xf32>
    %cst_140 = arith.constant 1.000000e+09 : f32
    %85 = vector.broadcast %cst_140 : f32 to vector<1x1x16xf32>
    %86 = arith.mulf %3, %85 : vector<1x1x16xf32>
    %87 = vector.extract_strided_slice %74 {offsets = [0, 0, 0], sizes = [1, 8, 8], strides = [1, 1, 1]} : vector<1x8x32xf32> to vector<1x8x8xf32>
    %88 = vector.extract_strided_slice %80 {offsets = [0, 0, 0], sizes = [1, 16, 8], strides = [1, 1, 1]} : vector<1x16x32xf32> to vector<1x16x8xf32>
    %89 = vector.extract_strided_slice %84 {offsets = [0, 0, 0], sizes = [1, 16, 8], strides = [1, 1, 1]} : vector<1x16x32xf32> to vector<1x16x8xf32>
    %90 = arith.truncf %87 : vector<1x8x8xf32> to vector<1x8x8xbf16>
    %91 = arith.truncf %88 : vector<1x16x8xf32> to vector<1x16x8xbf16>
    "tpu.trace_start"() <{level = 10 : i32, message = "bqd,bkd->bqk"}> : () -> ()
    %cst_141 = arith.constant dense<0.000000e+00> : vector<1x8x16xf32>
    %92 = tpu.matmul %90, %91, %cst_141 {dimension_numbers = #tpu.dot_dimension_numbers<[2], [2], [1], [1], [0, 0, 0, 1, 1, 1], [0], [0]>} : vector<1x8x8xbf16>, vector<1x16x8xbf16>, vector<1x8x16xf32> -> vector<1x8x16xf32>
    "tpu.trace_stop"() : () -> ()
    %cst_142 = arith.constant 0.176776692 : f32
    %93 = vector.broadcast %cst_142 : f32 to vector<1x8x16xf32>
    %94 = arith.mulf %92, %93 : vector<1x8x16xf32>
    %95 = vector.broadcast %86 : vector<1x1x16xf32> to vector<1x8x16xf32>
    %96 = arith.subf %94, %95 : vector<1x8x16xf32>
    %cst_143 = arith.constant dense<0xFF800000> : vector<1x8xf32>
    %97 = vector.multi_reduction <maximumf>, %96, %cst_143 [2] : vector<1x8x16xf32> to vector<1x8xf32>
    %98 = vector.shape_cast %97 : vector<1x8xf32> to vector<1x8x1xf32>
    %99 = vector.broadcast %98 : vector<1x8x1xf32> to vector<1x8x16xf32>
    %100 = arith.subf %96, %99 : vector<1x8x16xf32>
    %101 = math.exp %100 : vector<1x8x16xf32>
    %cst_144 = arith.constant dense<0.000000e+00> : vector<1x8xf32>
    %102 = vector.multi_reduction <add>, %101, %cst_144 [2] : vector<1x8x16xf32> to vector<1x8xf32>
    %103 = vector.shape_cast %102 : vector<1x8xf32> to vector<1x8x1xf32>
    %104 = tpu.reciprocal %103 {approx = true} : vector<1x8x1xf32> -> vector<1x8x1xf32>
    %105 = vector.broadcast %104 : vector<1x8x1xf32> to vector<1x8x16xf32>
    %106 = arith.mulf %101, %105 : vector<1x8x16xf32>
    %107 = arith.truncf %106 : vector<1x8x16xf32> to vector<1x8x16xbf16>
    %108 = arith.truncf %89 : vector<1x16x8xf32> to vector<1x16x8xbf16>
    "tpu.trace_start"() <{level = 10 : i32, message = "bqk,bkd->bqd"}> : () -> ()
    %cst_145 = arith.constant dense<0.000000e+00> : vector<1x8x8xf32>
    %109 = tpu.matmul %107, %108, %cst_145 {dimension_numbers = #tpu.dot_dimension_numbers<[2], [1], [1], [2], [0, 0, 0, 1, 1, 2], [0], [0]>} : vector<1x8x16xbf16>, vector<1x16x8xbf16>, vector<1x8x8xf32> -> vector<1x8x8xf32>
    "tpu.trace_stop"() : () -> ()
    %110 = arith.addf %87, %109 : vector<1x8x8xf32>
    %111 = vector.extract_strided_slice %74 {offsets = [0, 0, 8], sizes = [1, 8, 8], strides = [1, 1, 1]} : vector<1x8x32xf32> to vector<1x8x8xf32>
    %112 = vector.extract_strided_slice %80 {offsets = [0, 0, 8], sizes = [1, 16, 8], strides = [1, 1, 1]} : vector<1x16x32xf32> to vector<1x16x8xf32>
    %113 = vector.extract_strided_slice %84 {offsets = [0, 0, 8], sizes = [1, 16, 8], strides = [1, 1, 1]} : vector<1x16x32xf32> to vector<1x16x8xf32>
    %114 = arith.truncf %111 : vector<1x8x8xf32> to vector<1x8x8xbf16>
    %115 = arith.truncf %112 : vector<1x16x8xf32> to vector<1x16x8xbf16>
    "tpu.trace_start"() <{level = 10 : i32, message = "bqd,bkd->bqk"}> : () -> ()
    %cst_146 = arith.constant dense<0.000000e+00> : vector<1x8x16xf32>
    %116 = tpu.matmul %114, %115, %cst_146 {dimension_numbers = #tpu.dot_dimension_numbers<[2], [2], [1], [1], [0, 0, 0, 1, 1, 1], [0], [0]>} : vector<1x8x8xbf16>, vector<1x16x8xbf16>, vector<1x8x16xf32> -> vector<1x8x16xf32>
    "tpu.trace_stop"() : () -> ()
    %cst_147 = arith.constant 0.176776692 : f32
    %117 = vector.broadcast %cst_147 : f32 to vector<1x8x16xf32>
    %118 = arith.mulf %116, %117 : vector<1x8x16xf32>
    %119 = vector.broadcast %86 : vector<1x1x16xf32> to vector<1x8x16xf32>
    %120 = arith.subf %118, %119 : vector<1x8x16xf32>
    %cst_148 = arith.constant dense<0xFF800000> : vector<1x8xf32>
    %121 = vector.multi_reduction <maximumf>, %120, %cst_148 [2] : vector<1x8x16xf32> to vector<1x8xf32>
    %122 = vector.shape_cast %121 : vector<1x8xf32> to vector<1x8x1xf32>
    %123 = vector.broadcast %122 : vector<1x8x1xf32> to vector<1x8x16xf32>
    %124 = arith.subf %120, %123 : vector<1x8x16xf32>
    %125 = math.exp %124 : vector<1x8x16xf32>
    %cst_149 = arith.constant dense<0.000000e+00> : vector<1x8xf32>
    %126 = vector.multi_reduction <add>, %125, %cst_149 [2] : vector<1x8x16xf32> to vector<1x8xf32>
    %127 = vector.shape_cast %126 : vector<1x8xf32> to vector<1x8x1xf32>
    %128 = tpu.reciprocal %127 {approx = true} : vector<1x8x1xf32> -> vector<1x8x1xf32>
    %129 = vector.broadcast %128 : vector<1x8x1xf32> to vector<1x8x16xf32>
    %130 = arith.mulf %125, %129 : vector<1x8x16xf32>
    %131 = arith.truncf %130 : vector<1x8x16xf32> to vector<1x8x16xbf16>
    %132 = arith.truncf %113 : vector<1x16x8xf32> to vector<1x16x8xbf16>
    "tpu.trace_start"() <{level = 10 : i32, message = "bqk,bkd->bqd"}> : () -> ()
    %cst_150 = arith.constant dense<0.000000e+00> : vector<1x8x8xf32>
    %133 = tpu.matmul %131, %132, %cst_150 {dimension_numbers = #tpu.dot_dimension_numbers<[2], [1], [1], [2], [0, 0, 0, 1, 1, 2], [0], [0]>} : vector<1x8x16xbf16>, vector<1x16x8xbf16>, vector<1x8x8xf32> -> vector<1x8x8xf32>
    "tpu.trace_stop"() : () -> ()
    %134 = arith.addf %111, %133 : vector<1x8x8xf32>
    %135 = vector.extract_strided_slice %74 {offsets = [0, 0, 16], sizes = [1, 8, 8], strides = [1, 1, 1]} : vector<1x8x32xf32> to vector<1x8x8xf32>
    %136 = vector.extract_strided_slice %80 {offsets = [0, 0, 16], sizes = [1, 16, 8], strides = [1, 1, 1]} : vector<1x16x32xf32> to vector<1x16x8xf32>
    %137 = vector.extract_strided_slice %84 {offsets = [0, 0, 16], sizes = [1, 16, 8], strides = [1, 1, 1]} : vector<1x16x32xf32> to vector<1x16x8xf32>
    %138 = arith.truncf %135 : vector<1x8x8xf32> to vector<1x8x8xbf16>
    %139 = arith.truncf %136 : vector<1x16x8xf32> to vector<1x16x8xbf16>
    "tpu.trace_start"() <{level = 10 : i32, message = "bqd,bkd->bqk"}> : () -> ()
    %cst_151 = arith.constant dense<0.000000e+00> : vector<1x8x16xf32>
    %140 = tpu.matmul %138, %139, %cst_151 {dimension_numbers = #tpu.dot_dimension_numbers<[2], [2], [1], [1], [0, 0, 0, 1, 1, 1], [0], [0]>} : vector<1x8x8xbf16>, vector<1x16x8xbf16>, vector<1x8x16xf32> -> vector<1x8x16xf32>
    "tpu.trace_stop"() : () -> ()
    %cst_152 = arith.constant 0.176776692 : f32
    %141 = vector.broadcast %cst_152 : f32 to vector<1x8x16xf32>
    %142 = arith.mulf %140, %141 : vector<1x8x16xf32>
    %143 = vector.broadcast %86 : vector<1x1x16xf32> to vector<1x8x16xf32>
    %144 = arith.subf %142, %143 : vector<1x8x16xf32>
    %cst_153 = arith.constant dense<0xFF800000> : vector<1x8xf32>
    %145 = vector.multi_reduction <maximumf>, %144, %cst_153 [2] : vector<1x8x16xf32> to vector<1x8xf32>
    %146 = vector.shape_cast %145 : vector<1x8xf32> to vector<1x8x1xf32>
    %147 = vector.broadcast %146 : vector<1x8x1xf32> to vector<1x8x16xf32>
    %148 = arith.subf %144, %147 : vector<1x8x16xf32>
    %149 = math.exp %148 : vector<1x8x16xf32>
    %cst_154 = arith.constant dense<0.000000e+00> : vector<1x8xf32>
    %150 = vector.multi_reduction <add>, %149, %cst_154 [2] : vector<1x8x16xf32> to vector<1x8xf32>
    %151 = vector.shape_cast %150 : vector<1x8xf32> to vector<1x8x1xf32>
    %152 = tpu.reciprocal %151 {approx = true} : vector<1x8x1xf32> -> vector<1x8x1xf32>
    %153 = vector.broadcast %152 : vector<1x8x1xf32> to vector<1x8x16xf32>
    %154 = arith.mulf %149, %153 : vector<1x8x16xf32>
    %155 = arith.truncf %154 : vector<1x8x16xf32> to vector<1x8x16xbf16>
    %156 = arith.truncf %137 : vector<1x16x8xf32> to vector<1x16x8xbf16>
    "tpu.trace_start"() <{level = 10 : i32, message = "bqk,bkd->bqd"}> : () -> ()
    %cst_155 = arith.constant dense<0.000000e+00> : vector<1x8x8xf32>
    %157 = tpu.matmul %155, %156, %cst_155 {dimension_numbers = #tpu.dot_dimension_numbers<[2], [1], [1], [2], [0, 0, 0, 1, 1, 2], [0], [0]>} : vector<1x8x16xbf16>, vector<1x16x8xbf16>, vector<1x8x8xf32> -> vector<1x8x8xf32>
    "tpu.trace_stop"() : () -> ()
    %158 = arith.addf %135, %157 : vector<1x8x8xf32>
    %159 = vector.extract_strided_slice %74 {offsets = [0, 0, 24], sizes = [1, 8, 8], strides = [1, 1, 1]} : vector<1x8x32xf32> to vector<1x8x8xf32>
    %160 = vector.extract_strided_slice %80 {offsets = [0, 0, 24], sizes = [1, 16, 8], strides = [1, 1, 1]} : vector<1x16x32xf32> to vector<1x16x8xf32>
    %161 = vector.extract_strided_slice %84 {offsets = [0, 0, 24], sizes = [1, 16, 8], strides = [1, 1, 1]} : vector<1x16x32xf32> to vector<1x16x8xf32>
    %162 = arith.truncf %159 : vector<1x8x8xf32> to vector<1x8x8xbf16>
    %163 = arith.truncf %160 : vector<1x16x8xf32> to vector<1x16x8xbf16>
    "tpu.trace_start"() <{level = 10 : i32, message = "bqd,bkd->bqk"}> : () -> ()
    %cst_156 = arith.constant dense<0.000000e+00> : vector<1x8x16xf32>
    %164 = tpu.matmul %162, %163, %cst_156 {dimension_numbers = #tpu.dot_dimension_numbers<[2], [2], [1], [1], [0, 0, 0, 1, 1, 1], [0], [0]>} : vector<1x8x8xbf16>, vector<1x16x8xbf16>, vector<1x8x16xf32> -> vector<1x8x16xf32>
    "tpu.trace_stop"() : () -> ()
    %cst_157 = arith.constant 0.176776692 : f32
    %165 = vector.broadcast %cst_157 : f32 to vector<1x8x16xf32>
    %166 = arith.mulf %164, %165 : vector<1x8x16xf32>
    %167 = vector.broadcast %86 : vector<1x1x16xf32> to vector<1x8x16xf32>
    %168 = arith.subf %166, %167 : vector<1x8x16xf32>
    %cst_158 = arith.constant dense<0xFF800000> : vector<1x8xf32>
    %169 = vector.multi_reduction <maximumf>, %168, %cst_158 [2] : vector<1x8x16xf32> to vector<1x8xf32>
    %170 = vector.shape_cast %169 : vector<1x8xf32> to vector<1x8x1xf32>
    %171 = vector.broadcast %170 : vector<1x8x1xf32> to vector<1x8x16xf32>
    %172 = arith.subf %168, %171 : vector<1x8x16xf32>
    %173 = math.exp %172 : vector<1x8x16xf32>
    %cst_159 = arith.constant dense<0.000000e+00> : vector<1x8xf32>
    %174 = vector.multi_reduction <add>, %173, %cst_159 [2] : vector<1x8x16xf32> to vector<1x8xf32>
    %175 = vector.shape_cast %174 : vector<1x8xf32> to vector<1x8x1xf32>
    %176 = tpu.reciprocal %175 {approx = true} : vector<1x8x1xf32> -> vector<1x8x1xf32>
    %177 = vector.broadcast %176 : vector<1x8x1xf32> to vector<1x8x16xf32>
    %178 = arith.mulf %173, %177 : vector<1x8x16xf32>
    %179 = arith.truncf %178 : vector<1x8x16xf32> to vector<1x8x16xbf16>
    %180 = arith.truncf %161 : vector<1x16x8xf32> to vector<1x16x8xbf16>
    "tpu.trace_start"() <{level = 10 : i32, message = "bqk,bkd->bqd"}> : () -> ()
    %cst_160 = arith.constant dense<0.000000e+00> : vector<1x8x8xf32>
    %181 = tpu.matmul %179, %180, %cst_160 {dimension_numbers = #tpu.dot_dimension_numbers<[2], [1], [1], [2], [0, 0, 0, 1, 1, 2], [0], [0]>} : vector<1x8x16xbf16>, vector<1x16x8xbf16>, vector<1x8x8xf32> -> vector<1x8x8xf32>
    "tpu.trace_stop"() : () -> ()
    %182 = arith.addf %159, %181 : vector<1x8x8xf32>
    %183 = tpu.concatenate %110, %134, %158, %182 in 2 : vector<1x8x8xf32>, vector<1x8x8xf32>, vector<1x8x8xf32>, vector<1x8x8xf32> -> vector<1x8x32xf32>
    %cst_161 = arith.constant dense<0.000000e+00> : vector<1x8xf32>
    %184 = vector.multi_reduction <add>, %183, %cst_161 [2] : vector<1x8x32xf32> to vector<1x8xf32>
    %185 = vector.shape_cast %184 : vector<1x8xf32> to vector<1x8x1xf32>
    %cst_162 = arith.constant 3.200000e+01 : f32
    %186 = vector.broadcast %cst_162 : f32 to vector<1x8x1xf32>
    %187 = arith.divf %185, %186 : vector<1x8x1xf32>
    %188 = vector.broadcast %187 : vector<1x8x1xf32> to vector<1x8x32xf32>
    %189 = arith.subf %183, %188 : vector<1x8x32xf32>
    %190 = arith.mulf %189, %189 : vector<1x8x32xf32>
    %cst_163 = arith.constant dense<0.000000e+00> : vector<1x8xf32>
    %191 = vector.multi_reduction <add>, %190, %cst_163 [2] : vector<1x8x32xf32> to vector<1x8xf32>
    %192 = vector.shape_cast %191 : vector<1x8xf32> to vector<1x8x1xf32>
    %cst_164 = arith.constant 3.200000e+01 : f32
    %193 = vector.broadcast %cst_164 : f32 to vector<1x8x1xf32>
    %194 = arith.divf %192, %193 : vector<1x8x1xf32>
    %195 = vector.broadcast %187 : vector<1x8x1xf32> to vector<1x8x32xf32>
    %196 = arith.subf %183, %195 : vector<1x8x32xf32>
    %cst_165 = arith.constant 9.99999974E-6 : f32
    %197 = vector.broadcast %cst_165 : f32 to vector<1x8x1xf32>
    %198 = arith.addf %194, %197 : vector<1x8x1xf32>
    %199 = math.rsqrt %198 : vector<1x8x1xf32>
    %200 = vector.broadcast %199 : vector<1x8x1xf32> to vector<1x8x32xf32>
    %201 = arith.mulf %196, %200 : vector<1x8x32xf32>
    %202 = vector.shape_cast %12 : vector<1x32xf32> to vector<1x1x32xf32>
    %203 = vector.broadcast %202 : vector<1x1x32xf32> to vector<1x8x32xf32>
    %204 = arith.mulf %201, %203 : vector<1x8x32xf32>
    %205 = vector.shape_cast %13 : vector<1x32xf32> to vector<1x1x32xf32>
    %206 = vector.broadcast %205 : vector<1x1x32xf32> to vector<1x8x32xf32>
    %207 = arith.addf %204, %206 : vector<1x8x32xf32>
    %208 = vector.shape_cast %207 : vector<1x8x32xf32> to vector<8x32xf32>
    %209 = arith.truncf %208 : vector<8x32xf32> to vector<8x32xbf16>
    %cst_166 = arith.constant dense<0.000000e+00> : vector<8x32xf32>
    %210 = tpu.matmul %209, %10, %cst_166 {dimension_numbers = #tpu.dot_dimension_numbers<[1], [0], [0], [1], [0, 0, 1, 1], [], []>} : vector<8x32xbf16>, vector<32x32xbf16>, vector<8x32xf32> -> vector<8x32xf32>
    %211 = vector.broadcast %11 : vector<1x32xf32> to vector<8x32xf32>
    %212 = arith.addf %210, %211 : vector<8x32xf32>
    %cst_167 = arith.constant 0.000000e+00 : f32
    %213 = vector.broadcast %cst_167 : f32 to vector<8x32xf32>
    %214 = arith.maximumf %212, %213 : vector<8x32xf32>
    %215 = vector.shape_cast %214 : vector<8x32xf32> to vector<1x8x32xf32>
    %216 = arith.addf %207, %215 : vector<1x8x32xf32>
    %cst_168 = arith.constant dense<0.000000e+00> : vector<1x8xf32>
    %217 = vector.multi_reduction <add>, %216, %cst_168 [2] : vector<1x8x32xf32> to vector<1x8xf32>
    %218 = vector.shape_cast %217 : vector<1x8xf32> to vector<1x8x1xf32>
    %cst_169 = arith.constant 3.200000e+01 : f32
    %219 = vector.broadcast %cst_169 : f32 to vector<1x8x1xf32>
    %220 = arith.divf %218, %219 : vector<1x8x1xf32>
    %221 = vector.broadcast %220 : vector<1x8x1xf32> to vector<1x8x32xf32>
    %222 = arith.subf %216, %221 : vector<1x8x32xf32>
    %223 = arith.mulf %222, %222 : vector<1x8x32xf32>
    %cst_170 = arith.constant dense<0.000000e+00> : vector<1x8xf32>
    %224 = vector.multi_reduction <add>, %223, %cst_170 [2] : vector<1x8x32xf32> to vector<1x8xf32>
    %225 = vector.shape_cast %224 : vector<1x8xf32> to vector<1x8x1xf32>
    %cst_171 = arith.constant 3.200000e+01 : f32
    %226 = vector.broadcast %cst_171 : f32 to vector<1x8x1xf32>
    %227 = arith.divf %225, %226 : vector<1x8x1xf32>
    %228 = vector.broadcast %220 : vector<1x8x1xf32> to vector<1x8x32xf32>
    %229 = arith.subf %216, %228 : vector<1x8x32xf32>
    %cst_172 = arith.constant 9.99999974E-6 : f32
    %230 = vector.broadcast %cst_172 : f32 to vector<1x8x1xf32>
    %231 = arith.addf %227, %230 : vector<1x8x1xf32>
    %232 = math.rsqrt %231 : vector<1x8x1xf32>
    %233 = vector.broadcast %232 : vector<1x8x1xf32> to vector<1x8x32xf32>
    %234 = arith.mulf %229, %233 : vector<1x8x32xf32>
    %235 = vector.shape_cast %14 : vector<1x32xf32> to vector<1x1x32xf32>
    %236 = vector.broadcast %235 : vector<1x1x32xf32> to vector<1x8x32xf32>
    %237 = arith.mulf %234, %236 : vector<1x8x32xf32>
    %238 = vector.shape_cast %15 : vector<1x32xf32> to vector<1x1x32xf32>
    %239 = vector.broadcast %238 : vector<1x1x32xf32> to vector<1x8x32xf32>
    %240 = arith.addf %237, %239 : vector<1x8x32xf32>
    %241 = arith.truncf %17 : vector<16x32xf32> to vector<16x32xbf16>
    %cst_173 = arith.constant dense<0.000000e+00> : vector<16x32xf32>
    %242 = tpu.matmul %241, %18, %cst_173 {dimension_numbers = #tpu.dot_dimension_numbers<[1], [0], [0], [1], [0, 0, 1, 1], [], []>} : vector<16x32xbf16>, vector<32x32xbf16>, vector<16x32xf32> -> vector<16x32xf32>
    %243 = vector.broadcast %19 : vector<1x32xf32> to vector<16x32xf32>
    %244 = arith.addf %242, %243 : vector<16x32xf32>
    %245 = vector.shape_cast %244 : vector<16x32xf32> to vector<1x16x32xf32>
    %246 = vector.shape_cast %240 : vector<1x8x32xf32> to vector<8x32xf32>
    %247 = arith.truncf %246 : vector<8x32xf32> to vector<8x32xbf16>
    %cst_174 = arith.constant dense<0.000000e+00> : vector<8x32xf32>
    %248 = tpu.matmul %247, %20, %cst_174 {dimension_numbers = #tpu.dot_dimension_numbers<[1], [0], [0], [1], [0, 0, 1, 1], [], []>} : vector<8x32xbf16>, vector<32x32xbf16>, vector<8x32xf32> -> vector<8x32xf32>
    %249 = vector.broadcast %21 : vector<1x32xf32> to vector<8x32xf32>
    %250 = arith.addf %248, %249 : vector<8x32xf32>
    %251 = vector.shape_cast %250 : vector<8x32xf32> to vector<1x8x32xf32>
    %cst_175 = arith.constant dense<0.000000e+00> : vector<8x32xf32>
    %252 = tpu.matmul %247, %22, %cst_175 {dimension_numbers = #tpu.dot_dimension_numbers<[1], [0], [0], [1], [0, 0, 1, 1], [], []>} : vector<8x32xbf16>, vector<32x32xbf16>, vector<8x32xf32> -> vector<8x32xf32>
    %253 = vector.broadcast %23 : vector<1x32xf32> to vector<8x32xf32>
    %254 = arith.addf %252, %253 : vector<8x32xf32>
    %255 = vector.shape_cast %254 : vector<8x32xf32> to vector<1x8x32xf32>
    %256 = vector.extract_strided_slice %245 {offsets = [0, 0, 0], sizes = [1, 16, 8], strides = [1, 1, 1]} : vector<1x16x32xf32> to vector<1x16x8xf32>
    %257 = vector.extract_strided_slice %251 {offsets = [0, 0, 0], sizes = [1, 8, 8], strides = [1, 1, 1]} : vector<1x8x32xf32> to vector<1x8x8xf32>
    %258 = vector.extract_strided_slice %255 {offsets = [0, 0, 0], sizes = [1, 8, 8], strides = [1, 1, 1]} : vector<1x8x32xf32> to vector<1x8x8xf32>
    %259 = arith.truncf %256 : vector<1x16x8xf32> to vector<1x16x8xbf16>
    %260 = arith.truncf %257 : vector<1x8x8xf32> to vector<1x8x8xbf16>
    "tpu.trace_start"() <{level = 10 : i32, message = "bqd,bkd->bqk"}> : () -> ()
    %cst_176 = arith.constant dense<0.000000e+00> : vector<1x16x8xf32>
    %261 = tpu.matmul %259, %260, %cst_176 {dimension_numbers = #tpu.dot_dimension_numbers<[2], [2], [1], [1], [0, 0, 0, 1, 1, 1], [0], [0]>} : vector<1x16x8xbf16>, vector<1x8x8xbf16>, vector<1x16x8xf32> -> vector<1x16x8xf32>
    "tpu.trace_stop"() : () -> ()
    %cst_177 = arith.constant 0.176776692 : f32
    %262 = vector.broadcast %cst_177 : f32 to vector<1x16x8xf32>
    %263 = arith.mulf %261, %262 : vector<1x16x8xf32>
    %cst_178 = arith.constant dense<0xFF800000> : vector<1x16xf32>
    %264 = vector.multi_reduction <maximumf>, %263, %cst_178 [2] : vector<1x16x8xf32> to vector<1x16xf32>
    %265 = vector.shape_cast %264 : vector<1x16xf32> to vector<1x16x1xf32>
    %266 = vector.broadcast %265 : vector<1x16x1xf32> to vector<1x16x8xf32>
    %267 = arith.subf %263, %266 : vector<1x16x8xf32>
    %268 = math.exp %267 : vector<1x16x8xf32>
    %cst_179 = arith.constant dense<0.000000e+00> : vector<1x16xf32>
    %269 = vector.multi_reduction <add>, %268, %cst_179 [2] : vector<1x16x8xf32> to vector<1x16xf32>
    %270 = vector.shape_cast %269 : vector<1x16xf32> to vector<1x16x1xf32>
    %271 = tpu.reciprocal %270 {approx = true} : vector<1x16x1xf32> -> vector<1x16x1xf32>
    %272 = vector.broadcast %271 : vector<1x16x1xf32> to vector<1x16x8xf32>
    %273 = arith.mulf %268, %272 : vector<1x16x8xf32>
    %274 = arith.truncf %273 : vector<1x16x8xf32> to vector<1x16x8xbf16>
    %275 = arith.truncf %258 : vector<1x8x8xf32> to vector<1x8x8xbf16>
    "tpu.trace_start"() <{level = 10 : i32, message = "bqk,bkd->bqd"}> : () -> ()
    %cst_180 = arith.constant dense<0.000000e+00> : vector<1x16x8xf32>
    %276 = tpu.matmul %274, %275, %cst_180 {dimension_numbers = #tpu.dot_dimension_numbers<[2], [1], [1], [2], [0, 0, 0, 1, 1, 2], [0], [0]>} : vector<1x16x8xbf16>, vector<1x8x8xbf16>, vector<1x16x8xf32> -> vector<1x16x8xf32>
    "tpu.trace_stop"() : () -> ()
    %277 = arith.addf %256, %276 : vector<1x16x8xf32>
    %278 = vector.extract_strided_slice %245 {offsets = [0, 0, 8], sizes = [1, 16, 8], strides = [1, 1, 1]} : vector<1x16x32xf32> to vector<1x16x8xf32>
    %279 = vector.extract_strided_slice %251 {offsets = [0, 0, 8], sizes = [1, 8, 8], strides = [1, 1, 1]} : vector<1x8x32xf32> to vector<1x8x8xf32>
    %280 = vector.extract_strided_slice %255 {offsets = [0, 0, 8], sizes = [1, 8, 8], strides = [1, 1, 1]} : vector<1x8x32xf32> to vector<1x8x8xf32>
    %281 = arith.truncf %278 : vector<1x16x8xf32> to vector<1x16x8xbf16>
    %282 = arith.truncf %279 : vector<1x8x8xf32> to vector<1x8x8xbf16>
    "tpu.trace_start"() <{level = 10 : i32, message = "bqd,bkd->bqk"}> : () -> ()
    %cst_181 = arith.constant dense<0.000000e+00> : vector<1x16x8xf32>
    %283 = tpu.matmul %281, %282, %cst_181 {dimension_numbers = #tpu.dot_dimension_numbers<[2], [2], [1], [1], [0, 0, 0, 1, 1, 1], [0], [0]>} : vector<1x16x8xbf16>, vector<1x8x8xbf16>, vector<1x16x8xf32> -> vector<1x16x8xf32>
    "tpu.trace_stop"() : () -> ()
    %cst_182 = arith.constant 0.176776692 : f32
    %284 = vector.broadcast %cst_182 : f32 to vector<1x16x8xf32>
    %285 = arith.mulf %283, %284 : vector<1x16x8xf32>
    %cst_183 = arith.constant dense<0xFF800000> : vector<1x16xf32>
    %286 = vector.multi_reduction <maximumf>, %285, %cst_183 [2] : vector<1x16x8xf32> to vector<1x16xf32>
    %287 = vector.shape_cast %286 : vector<1x16xf32> to vector<1x16x1xf32>
    %288 = vector.broadcast %287 : vector<1x16x1xf32> to vector<1x16x8xf32>
    %289 = arith.subf %285, %288 : vector<1x16x8xf32>
    %290 = math.exp %289 : vector<1x16x8xf32>
    %cst_184 = arith.constant dense<0.000000e+00> : vector<1x16xf32>
    %291 = vector.multi_reduction <add>, %290, %cst_184 [2] : vector<1x16x8xf32> to vector<1x16xf32>
    %292 = vector.shape_cast %291 : vector<1x16xf32> to vector<1x16x1xf32>
    %293 = tpu.reciprocal %292 {approx = true} : vector<1x16x1xf32> -> vector<1x16x1xf32>
    %294 = vector.broadcast %293 : vector<1x16x1xf32> to vector<1x16x8xf32>
    %295 = arith.mulf %290, %294 : vector<1x16x8xf32>
    %296 = arith.truncf %295 : vector<1x16x8xf32> to vector<1x16x8xbf16>
    %297 = arith.truncf %280 : vector<1x8x8xf32> to vector<1x8x8xbf16>
    "tpu.trace_start"() <{level = 10 : i32, message = "bqk,bkd->bqd"}> : () -> ()
    %cst_185 = arith.constant dense<0.000000e+00> : vector<1x16x8xf32>
    %298 = tpu.matmul %296, %297, %cst_185 {dimension_numbers = #tpu.dot_dimension_numbers<[2], [1], [1], [2], [0, 0, 0, 1, 1, 2], [0], [0]>} : vector<1x16x8xbf16>, vector<1x8x8xbf16>, vector<1x16x8xf32> -> vector<1x16x8xf32>
    "tpu.trace_stop"() : () -> ()
    %299 = arith.addf %278, %298 : vector<1x16x8xf32>
    %300 = vector.extract_strided_slice %245 {offsets = [0, 0, 16], sizes = [1, 16, 8], strides = [1, 1, 1]} : vector<1x16x32xf32> to vector<1x16x8xf32>
    %301 = vector.extract_strided_slice %251 {offsets = [0, 0, 16], sizes = [1, 8, 8], strides = [1, 1, 1]} : vector<1x8x32xf32> to vector<1x8x8xf32>
    %302 = vector.extract_strided_slice %255 {offsets = [0, 0, 16], sizes = [1, 8, 8], strides = [1, 1, 1]} : vector<1x8x32xf32> to vector<1x8x8xf32>
    %303 = arith.truncf %300 : vector<1x16x8xf32> to vector<1x16x8xbf16>
    %304 = arith.truncf %301 : vector<1x8x8xf32> to vector<1x8x8xbf16>
    "tpu.trace_start"() <{level = 10 : i32, message = "bqd,bkd->bqk"}> : () -> ()
    %cst_186 = arith.constant dense<0.000000e+00> : vector<1x16x8xf32>
    %305 = tpu.matmul %303, %304, %cst_186 {dimension_numbers = #tpu.dot_dimension_numbers<[2], [2], [1], [1], [0, 0, 0, 1, 1, 1], [0], [0]>} : vector<1x16x8xbf16>, vector<1x8x8xbf16>, vector<1x16x8xf32> -> vector<1x16x8xf32>
    "tpu.trace_stop"() : () -> ()
    %cst_187 = arith.constant 0.176776692 : f32
    %306 = vector.broadcast %cst_187 : f32 to vector<1x16x8xf32>
    %307 = arith.mulf %305, %306 : vector<1x16x8xf32>
    %cst_188 = arith.constant dense<0xFF800000> : vector<1x16xf32>
    %308 = vector.multi_reduction <maximumf>, %307, %cst_188 [2] : vector<1x16x8xf32> to vector<1x16xf32>
    %309 = vector.shape_cast %308 : vector<1x16xf32> to vector<1x16x1xf32>
    %310 = vector.broadcast %309 : vector<1x16x1xf32> to vector<1x16x8xf32>
    %311 = arith.subf %307, %310 : vector<1x16x8xf32>
    %312 = math.exp %311 : vector<1x16x8xf32>
    %cst_189 = arith.constant dense<0.000000e+00> : vector<1x16xf32>
    %313 = vector.multi_reduction <add>, %312, %cst_189 [2] : vector<1x16x8xf32> to vector<1x16xf32>
    %314 = vector.shape_cast %313 : vector<1x16xf32> to vector<1x16x1xf32>
    %315 = tpu.reciprocal %314 {approx = true} : vector<1x16x1xf32> -> vector<1x16x1xf32>
    %316 = vector.broadcast %315 : vector<1x16x1xf32> to vector<1x16x8xf32>
    %317 = arith.mulf %312, %316 : vector<1x16x8xf32>
    %318 = arith.truncf %317 : vector<1x16x8xf32> to vector<1x16x8xbf16>
    %319 = arith.truncf %302 : vector<1x8x8xf32> to vector<1x8x8xbf16>
    "tpu.trace_start"() <{level = 10 : i32, message = "bqk,bkd->bqd"}> : () -> ()
    %cst_190 = arith.constant dense<0.000000e+00> : vector<1x16x8xf32>
    %320 = tpu.matmul %318, %319, %cst_190 {dimension_numbers = #tpu.dot_dimension_numbers<[2], [1], [1], [2], [0, 0, 0, 1, 1, 2], [0], [0]>} : vector<1x16x8xbf16>, vector<1x8x8xbf16>, vector<1x16x8xf32> -> vector<1x16x8xf32>
    "tpu.trace_stop"() : () -> ()
    %321 = arith.addf %300, %320 : vector<1x16x8xf32>
    %322 = vector.extract_strided_slice %245 {offsets = [0, 0, 24], sizes = [1, 16, 8], strides = [1, 1, 1]} : vector<1x16x32xf32> to vector<1x16x8xf32>
    %323 = vector.extract_strided_slice %251 {offsets = [0, 0, 24], sizes = [1, 8, 8], strides = [1, 1, 1]} : vector<1x8x32xf32> to vector<1x8x8xf32>
    %324 = vector.extract_strided_slice %255 {offsets = [0, 0, 24], sizes = [1, 8, 8], strides = [1, 1, 1]} : vector<1x8x32xf32> to vector<1x8x8xf32>
    %325 = arith.truncf %322 : vector<1x16x8xf32> to vector<1x16x8xbf16>
    %326 = arith.truncf %323 : vector<1x8x8xf32> to vector<1x8x8xbf16>
    "tpu.trace_start"() <{level = 10 : i32, message = "bqd,bkd->bqk"}> : () -> ()
    %cst_191 = arith.constant dense<0.000000e+00> : vector<1x16x8xf32>
    %327 = tpu.matmul %325, %326, %cst_191 {dimension_numbers = #tpu.dot_dimension_numbers<[2], [2], [1], [1], [0, 0, 0, 1, 1, 1], [0], [0]>} : vector<1x16x8xbf16>, vector<1x8x8xbf16>, vector<1x16x8xf32> -> vector<1x16x8xf32>
    "tpu.trace_stop"() : () -> ()
    %cst_192 = arith.constant 0.176776692 : f32
    %328 = vector.broadcast %cst_192 : f32 to vector<1x16x8xf32>
    %329 = arith.mulf %327, %328 : vector<1x16x8xf32>
    %cst_193 = arith.constant dense<0xFF800000> : vector<1x16xf32>
    %330 = vector.multi_reduction <maximumf>, %329, %cst_193 [2] : vector<1x16x8xf32> to vector<1x16xf32>
    %331 = vector.shape_cast %330 : vector<1x16xf32> to vector<1x16x1xf32>
    %332 = vector.broadcast %331 : vector<1x16x1xf32> to vector<1x16x8xf32>
    %333 = arith.subf %329, %332 : vector<1x16x8xf32>
    %334 = math.exp %333 : vector<1x16x8xf32>
    %cst_194 = arith.constant dense<0.000000e+00> : vector<1x16xf32>
    %335 = vector.multi_reduction <add>, %334, %cst_194 [2] : vector<1x16x8xf32> to vector<1x16xf32>
    %336 = vector.shape_cast %335 : vector<1x16xf32> to vector<1x16x1xf32>
    %337 = tpu.reciprocal %336 {approx = true} : vector<1x16x1xf32> -> vector<1x16x1xf32>
    %338 = vector.broadcast %337 : vector<1x16x1xf32> to vector<1x16x8xf32>
    %339 = arith.mulf %334, %338 : vector<1x16x8xf32>
    %340 = arith.truncf %339 : vector<1x16x8xf32> to vector<1x16x8xbf16>
    %341 = arith.truncf %324 : vector<1x8x8xf32> to vector<1x8x8xbf16>
    "tpu.trace_start"() <{level = 10 : i32, message = "bqk,bkd->bqd"}> : () -> ()
    %cst_195 = arith.constant dense<0.000000e+00> : vector<1x16x8xf32>
    %342 = tpu.matmul %340, %341, %cst_195 {dimension_numbers = #tpu.dot_dimension_numbers<[2], [1], [1], [2], [0, 0, 0, 1, 1, 2], [0], [0]>} : vector<1x16x8xbf16>, vector<1x8x8xbf16>, vector<1x16x8xf32> -> vector<1x16x8xf32>
    "tpu.trace_stop"() : () -> ()
    %343 = arith.addf %322, %342 : vector<1x16x8xf32>
    %344 = tpu.concatenate %277, %299, %321, %343 in 2 : vector<1x16x8xf32>, vector<1x16x8xf32>, vector<1x16x8xf32>, vector<1x16x8xf32> -> vector<1x16x32xf32>
    %cst_196 = arith.constant dense<0.000000e+00> : vector<1x16xf32>
    %345 = vector.multi_reduction <add>, %344, %cst_196 [2] : vector<1x16x32xf32> to vector<1x16xf32>
    %346 = vector.shape_cast %345 : vector<1x16xf32> to vector<1x16x1xf32>
    %cst_197 = arith.constant 3.200000e+01 : f32
    %347 = vector.broadcast %cst_197 : f32 to vector<1x16x1xf32>
    %348 = arith.divf %346, %347 : vector<1x16x1xf32>
    %349 = vector.broadcast %348 : vector<1x16x1xf32> to vector<1x16x32xf32>
    %350 = arith.subf %344, %349 : vector<1x16x32xf32>
    %351 = arith.mulf %350, %350 : vector<1x16x32xf32>
    %cst_198 = arith.constant dense<0.000000e+00> : vector<1x16xf32>
    %352 = vector.multi_reduction <add>, %351, %cst_198 [2] : vector<1x16x32xf32> to vector<1x16xf32>
    %353 = vector.shape_cast %352 : vector<1x16xf32> to vector<1x16x1xf32>
    %cst_199 = arith.constant 3.200000e+01 : f32
    %354 = vector.broadcast %cst_199 : f32 to vector<1x16x1xf32>
    %355 = arith.divf %353, %354 : vector<1x16x1xf32>
    %356 = vector.broadcast %348 : vector<1x16x1xf32> to vector<1x16x32xf32>
    %357 = arith.subf %344, %356 : vector<1x16x32xf32>
    %cst_200 = arith.constant 9.99999974E-6 : f32
    %358 = vector.broadcast %cst_200 : f32 to vector<1x16x1xf32>
    %359 = arith.addf %355, %358 : vector<1x16x1xf32>
    %360 = math.rsqrt %359 : vector<1x16x1xf32>
    %361 = vector.broadcast %360 : vector<1x16x1xf32> to vector<1x16x32xf32>
    %362 = arith.mulf %357, %361 : vector<1x16x32xf32>
    %363 = vector.shape_cast %26 : vector<1x32xf32> to vector<1x1x32xf32>
    %364 = vector.broadcast %363 : vector<1x1x32xf32> to vector<1x16x32xf32>
    %365 = arith.mulf %362, %364 : vector<1x16x32xf32>
    %366 = vector.shape_cast %27 : vector<1x32xf32> to vector<1x1x32xf32>
    %367 = vector.broadcast %366 : vector<1x1x32xf32> to vector<1x16x32xf32>
    %368 = arith.addf %365, %367 : vector<1x16x32xf32>
    %369 = vector.shape_cast %368 : vector<1x16x32xf32> to vector<16x32xf32>
    %370 = arith.truncf %369 : vector<16x32xf32> to vector<16x32xbf16>
    %cst_201 = arith.constant dense<0.000000e+00> : vector<16x32xf32>
    %371 = tpu.matmul %370, %24, %cst_201 {dimension_numbers = #tpu.dot_dimension_numbers<[1], [0], [0], [1], [0, 0, 1, 1], [], []>} : vector<16x32xbf16>, vector<32x32xbf16>, vector<16x32xf32> -> vector<16x32xf32>
    %372 = vector.broadcast %25 : vector<1x32xf32> to vector<16x32xf32>
    %373 = arith.addf %371, %372 : vector<16x32xf32>
    %cst_202 = arith.constant 0.000000e+00 : f32
    %374 = vector.broadcast %cst_202 : f32 to vector<16x32xf32>
    %375 = arith.maximumf %373, %374 : vector<16x32xf32>
    %376 = vector.shape_cast %375 : vector<16x32xf32> to vector<1x16x32xf32>
    %377 = arith.addf %368, %376 : vector<1x16x32xf32>
    %cst_203 = arith.constant dense<0.000000e+00> : vector<1x16xf32>
    %378 = vector.multi_reduction <add>, %377, %cst_203 [2] : vector<1x16x32xf32> to vector<1x16xf32>
    %379 = vector.shape_cast %378 : vector<1x16xf32> to vector<1x16x1xf32>
    %cst_204 = arith.constant 3.200000e+01 : f32
    %380 = vector.broadcast %cst_204 : f32 to vector<1x16x1xf32>
    %381 = arith.divf %379, %380 : vector<1x16x1xf32>
    %382 = vector.broadcast %381 : vector<1x16x1xf32> to vector<1x16x32xf32>
    %383 = arith.subf %377, %382 : vector<1x16x32xf32>
    %384 = arith.mulf %383, %383 : vector<1x16x32xf32>
    %cst_205 = arith.constant dense<0.000000e+00> : vector<1x16xf32>
    %385 = vector.multi_reduction <add>, %384, %cst_205 [2] : vector<1x16x32xf32> to vector<1x16xf32>
    %386 = vector.shape_cast %385 : vector<1x16xf32> to vector<1x16x1xf32>
    %cst_206 = arith.constant 3.200000e+01 : f32
    %387 = vector.broadcast %cst_206 : f32 to vector<1x16x1xf32>
    %388 = arith.divf %386, %387 : vector<1x16x1xf32>
    %389 = vector.broadcast %381 : vector<1x16x1xf32> to vector<1x16x32xf32>
    %390 = arith.subf %377, %389 : vector<1x16x32xf32>
    %cst_207 = arith.constant 9.99999974E-6 : f32
    %391 = vector.broadcast %cst_207 : f32 to vector<1x16x1xf32>
    %392 = arith.addf %388, %391 : vector<1x16x1xf32>
    %393 = math.rsqrt %392 : vector<1x16x1xf32>
    %394 = vector.broadcast %393 : vector<1x16x1xf32> to vector<1x16x32xf32>
    %395 = arith.mulf %390, %394 : vector<1x16x32xf32>
    %396 = vector.shape_cast %28 : vector<1x32xf32> to vector<1x1x32xf32>
    %397 = vector.broadcast %396 : vector<1x1x32xf32> to vector<1x16x32xf32>
    %398 = arith.mulf %395, %397 : vector<1x16x32xf32>
    %399 = vector.shape_cast %29 : vector<1x32xf32> to vector<1x1x32xf32>
    %400 = vector.broadcast %399 : vector<1x1x32xf32> to vector<1x16x32xf32>
    %401 = arith.addf %398, %400 : vector<1x16x32xf32>
    %402 = vector.shape_cast %240 : vector<1x8x32xf32> to vector<8x32xf32>
    %403 = arith.truncf %402 : vector<8x32xf32> to vector<8x32xbf16>
    %cst_208 = arith.constant dense<0.000000e+00> : vector<8x32xf32>
    %404 = tpu.matmul %403, %30, %cst_208 {dimension_numbers = #tpu.dot_dimension_numbers<[1], [0], [0], [1], [0, 0, 1, 1], [], []>} : vector<8x32xbf16>, vector<32x32xbf16>, vector<8x32xf32> -> vector<8x32xf32>
    %405 = vector.broadcast %31 : vector<1x32xf32> to vector<8x32xf32>
    %406 = arith.addf %404, %405 : vector<8x32xf32>
    %407 = vector.shape_cast %406 : vector<8x32xf32> to vector<1x8x32xf32>
    %408 = vector.shape_cast %401 : vector<1x16x32xf32> to vector<16x32xf32>
    %409 = arith.truncf %408 : vector<16x32xf32> to vector<16x32xbf16>
    %cst_209 = arith.constant dense<0.000000e+00> : vector<16x32xf32>
    %410 = tpu.matmul %409, %32, %cst_209 {dimension_numbers = #tpu.dot_dimension_numbers<[1], [0], [0], [1], [0, 0, 1, 1], [], []>} : vector<16x32xbf16>, vector<32x32xbf16>, vector<16x32xf32> -> vector<16x32xf32>
    %411 = vector.broadcast %33 : vector<1x32xf32> to vector<16x32xf32>
    %412 = arith.addf %410, %411 : vector<16x32xf32>
    %413 = vector.shape_cast %412 : vector<16x32xf32> to vector<1x16x32xf32>
    %cst_210 = arith.constant dense<0.000000e+00> : vector<16x32xf32>
    %414 = tpu.matmul %409, %34, %cst_210 {dimension_numbers = #tpu.dot_dimension_numbers<[1], [0], [0], [1], [0, 0, 1, 1], [], []>} : vector<16x32xbf16>, vector<32x32xbf16>, vector<16x32xf32> -> vector<16x32xf32>
    %415 = vector.broadcast %35 : vector<1x32xf32> to vector<16x32xf32>
    %416 = arith.addf %414, %415 : vector<16x32xf32>
    %417 = vector.shape_cast %416 : vector<16x32xf32> to vector<1x16x32xf32>
    %418 = vector.extract_strided_slice %407 {offsets = [0, 0, 0], sizes = [1, 8, 8], strides = [1, 1, 1]} : vector<1x8x32xf32> to vector<1x8x8xf32>
    %419 = vector.extract_strided_slice %413 {offsets = [0, 0, 0], sizes = [1, 16, 8], strides = [1, 1, 1]} : vector<1x16x32xf32> to vector<1x16x8xf32>
    %420 = vector.extract_strided_slice %417 {offsets = [0, 0, 0], sizes = [1, 16, 8], strides = [1, 1, 1]} : vector<1x16x32xf32> to vector<1x16x8xf32>
    %421 = arith.truncf %418 : vector<1x8x8xf32> to vector<1x8x8xbf16>
    %422 = arith.truncf %419 : vector<1x16x8xf32> to vector<1x16x8xbf16>
    "tpu.trace_start"() <{level = 10 : i32, message = "bqd,bkd->bqk"}> : () -> ()
    %cst_211 = arith.constant dense<0.000000e+00> : vector<1x8x16xf32>
    %423 = tpu.matmul %421, %422, %cst_211 {dimension_numbers = #tpu.dot_dimension_numbers<[2], [2], [1], [1], [0, 0, 0, 1, 1, 1], [0], [0]>} : vector<1x8x8xbf16>, vector<1x16x8xbf16>, vector<1x8x16xf32> -> vector<1x8x16xf32>
    "tpu.trace_stop"() : () -> ()
    %cst_212 = arith.constant 0.176776692 : f32
    %424 = vector.broadcast %cst_212 : f32 to vector<1x8x16xf32>
    %425 = arith.mulf %423, %424 : vector<1x8x16xf32>
    %cst_213 = arith.constant dense<0xFF800000> : vector<1x8xf32>
    %426 = vector.multi_reduction <maximumf>, %425, %cst_213 [2] : vector<1x8x16xf32> to vector<1x8xf32>
    %427 = vector.shape_cast %426 : vector<1x8xf32> to vector<1x8x1xf32>
    %428 = vector.broadcast %427 : vector<1x8x1xf32> to vector<1x8x16xf32>
    %429 = arith.subf %425, %428 : vector<1x8x16xf32>
    %430 = math.exp %429 : vector<1x8x16xf32>
    %cst_214 = arith.constant dense<0.000000e+00> : vector<1x8xf32>
    %431 = vector.multi_reduction <add>, %430, %cst_214 [2] : vector<1x8x16xf32> to vector<1x8xf32>
    %432 = vector.shape_cast %431 : vector<1x8xf32> to vector<1x8x1xf32>
    %433 = tpu.reciprocal %432 {approx = true} : vector<1x8x1xf32> -> vector<1x8x1xf32>
    %434 = vector.broadcast %433 : vector<1x8x1xf32> to vector<1x8x16xf32>
    %435 = arith.mulf %430, %434 : vector<1x8x16xf32>
    %436 = arith.truncf %435 : vector<1x8x16xf32> to vector<1x8x16xbf16>
    %437 = arith.truncf %420 : vector<1x16x8xf32> to vector<1x16x8xbf16>
    "tpu.trace_start"() <{level = 10 : i32, message = "bqk,bkd->bqd"}> : () -> ()
    %cst_215 = arith.constant dense<0.000000e+00> : vector<1x8x8xf32>
    %438 = tpu.matmul %436, %437, %cst_215 {dimension_numbers = #tpu.dot_dimension_numbers<[2], [1], [1], [2], [0, 0, 0, 1, 1, 2], [0], [0]>} : vector<1x8x16xbf16>, vector<1x16x8xbf16>, vector<1x8x8xf32> -> vector<1x8x8xf32>
    "tpu.trace_stop"() : () -> ()
    %439 = arith.addf %418, %438 : vector<1x8x8xf32>
    %440 = vector.extract_strided_slice %407 {offsets = [0, 0, 8], sizes = [1, 8, 8], strides = [1, 1, 1]} : vector<1x8x32xf32> to vector<1x8x8xf32>
    %441 = vector.extract_strided_slice %413 {offsets = [0, 0, 8], sizes = [1, 16, 8], strides = [1, 1, 1]} : vector<1x16x32xf32> to vector<1x16x8xf32>
    %442 = vector.extract_strided_slice %417 {offsets = [0, 0, 8], sizes = [1, 16, 8], strides = [1, 1, 1]} : vector<1x16x32xf32> to vector<1x16x8xf32>
    %443 = arith.truncf %440 : vector<1x8x8xf32> to vector<1x8x8xbf16>
    %444 = arith.truncf %441 : vector<1x16x8xf32> to vector<1x16x8xbf16>
    "tpu.trace_start"() <{level = 10 : i32, message = "bqd,bkd->bqk"}> : () -> ()
    %cst_216 = arith.constant dense<0.000000e+00> : vector<1x8x16xf32>
    %445 = tpu.matmul %443, %444, %cst_216 {dimension_numbers = #tpu.dot_dimension_numbers<[2], [2], [1], [1], [0, 0, 0, 1, 1, 1], [0], [0]>} : vector<1x8x8xbf16>, vector<1x16x8xbf16>, vector<1x8x16xf32> -> vector<1x8x16xf32>
    "tpu.trace_stop"() : () -> ()
    %cst_217 = arith.constant 0.176776692 : f32
    %446 = vector.broadcast %cst_217 : f32 to vector<1x8x16xf32>
    %447 = arith.mulf %445, %446 : vector<1x8x16xf32>
    %cst_218 = arith.constant dense<0xFF800000> : vector<1x8xf32>
    %448 = vector.multi_reduction <maximumf>, %447, %cst_218 [2] : vector<1x8x16xf32> to vector<1x8xf32>
    %449 = vector.shape_cast %448 : vector<1x8xf32> to vector<1x8x1xf32>
    %450 = vector.broadcast %449 : vector<1x8x1xf32> to vector<1x8x16xf32>
    %451 = arith.subf %447, %450 : vector<1x8x16xf32>
    %452 = math.exp %451 : vector<1x8x16xf32>
    %cst_219 = arith.constant dense<0.000000e+00> : vector<1x8xf32>
    %453 = vector.multi_reduction <add>, %452, %cst_219 [2] : vector<1x8x16xf32> to vector<1x8xf32>
    %454 = vector.shape_cast %453 : vector<1x8xf32> to vector<1x8x1xf32>
    %455 = tpu.reciprocal %454 {approx = true} : vector<1x8x1xf32> -> vector<1x8x1xf32>
    %456 = vector.broadcast %455 : vector<1x8x1xf32> to vector<1x8x16xf32>
    %457 = arith.mulf %452, %456 : vector<1x8x16xf32>
    %458 = arith.truncf %457 : vector<1x8x16xf32> to vector<1x8x16xbf16>
    %459 = arith.truncf %442 : vector<1x16x8xf32> to vector<1x16x8xbf16>
    "tpu.trace_start"() <{level = 10 : i32, message = "bqk,bkd->bqd"}> : () -> ()
    %cst_220 = arith.constant dense<0.000000e+00> : vector<1x8x8xf32>
    %460 = tpu.matmul %458, %459, %cst_220 {dimension_numbers = #tpu.dot_dimension_numbers<[2], [1], [1], [2], [0, 0, 0, 1, 1, 2], [0], [0]>} : vector<1x8x16xbf16>, vector<1x16x8xbf16>, vector<1x8x8xf32> -> vector<1x8x8xf32>
    "tpu.trace_stop"() : () -> ()
    %461 = arith.addf %440, %460 : vector<1x8x8xf32>
    %462 = vector.extract_strided_slice %407 {offsets = [0, 0, 16], sizes = [1, 8, 8], strides = [1, 1, 1]} : vector<1x8x32xf32> to vector<1x8x8xf32>
    %463 = vector.extract_strided_slice %413 {offsets = [0, 0, 16], sizes = [1, 16, 8], strides = [1, 1, 1]} : vector<1x16x32xf32> to vector<1x16x8xf32>
    %464 = vector.extract_strided_slice %417 {offsets = [0, 0, 16], sizes = [1, 16, 8], strides = [1, 1, 1]} : vector<1x16x32xf32> to vector<1x16x8xf32>
    %465 = arith.truncf %462 : vector<1x8x8xf32> to vector<1x8x8xbf16>
    %466 = arith.truncf %463 : vector<1x16x8xf32> to vector<1x16x8xbf16>
    "tpu.trace_start"() <{level = 10 : i32, message = "bqd,bkd->bqk"}> : () -> ()
    %cst_221 = arith.constant dense<0.000000e+00> : vector<1x8x16xf32>
    %467 = tpu.matmul %465, %466, %cst_221 {dimension_numbers = #tpu.dot_dimension_numbers<[2], [2], [1], [1], [0, 0, 0, 1, 1, 1], [0], [0]>} : vector<1x8x8xbf16>, vector<1x16x8xbf16>, vector<1x8x16xf32> -> vector<1x8x16xf32>
    "tpu.trace_stop"() : () -> ()
    %cst_222 = arith.constant 0.176776692 : f32
    %468 = vector.broadcast %cst_222 : f32 to vector<1x8x16xf32>
    %469 = arith.mulf %467, %468 : vector<1x8x16xf32>
    %cst_223 = arith.constant dense<0xFF800000> : vector<1x8xf32>
    %470 = vector.multi_reduction <maximumf>, %469, %cst_223 [2] : vector<1x8x16xf32> to vector<1x8xf32>
    %471 = vector.shape_cast %470 : vector<1x8xf32> to vector<1x8x1xf32>
    %472 = vector.broadcast %471 : vector<1x8x1xf32> to vector<1x8x16xf32>
    %473 = arith.subf %469, %472 : vector<1x8x16xf32>
    %474 = math.exp %473 : vector<1x8x16xf32>
    %cst_224 = arith.constant dense<0.000000e+00> : vector<1x8xf32>
    %475 = vector.multi_reduction <add>, %474, %cst_224 [2] : vector<1x8x16xf32> to vector<1x8xf32>
    %476 = vector.shape_cast %475 : vector<1x8xf32> to vector<1x8x1xf32>
    %477 = tpu.reciprocal %476 {approx = true} : vector<1x8x1xf32> -> vector<1x8x1xf32>
    %478 = vector.broadcast %477 : vector<1x8x1xf32> to vector<1x8x16xf32>
    %479 = arith.mulf %474, %478 : vector<1x8x16xf32>
    %480 = arith.truncf %479 : vector<1x8x16xf32> to vector<1x8x16xbf16>
    %481 = arith.truncf %464 : vector<1x16x8xf32> to vector<1x16x8xbf16>
    "tpu.trace_start"() <{level = 10 : i32, message = "bqk,bkd->bqd"}> : () -> ()
    %cst_225 = arith.constant dense<0.000000e+00> : vector<1x8x8xf32>
    %482 = tpu.matmul %480, %481, %cst_225 {dimension_numbers = #tpu.dot_dimension_numbers<[2], [1], [1], [2], [0, 0, 0, 1, 1, 2], [0], [0]>} : vector<1x8x16xbf16>, vector<1x16x8xbf16>, vector<1x8x8xf32> -> vector<1x8x8xf32>
    "tpu.trace_stop"() : () -> ()
    %483 = arith.addf %462, %482 : vector<1x8x8xf32>
    %484 = vector.extract_strided_slice %407 {offsets = [0, 0, 24], sizes = [1, 8, 8], strides = [1, 1, 1]} : vector<1x8x32xf32> to vector<1x8x8xf32>
    %485 = vector.extract_strided_slice %413 {offsets = [0, 0, 24], sizes = [1, 16, 8], strides = [1, 1, 1]} : vector<1x16x32xf32> to vector<1x16x8xf32>
    %486 = vector.extract_strided_slice %417 {offsets = [0, 0, 24], sizes = [1, 16, 8], strides = [1, 1, 1]} : vector<1x16x32xf32> to vector<1x16x8xf32>
    %487 = arith.truncf %484 : vector<1x8x8xf32> to vector<1x8x8xbf16>
    %488 = arith.truncf %485 : vector<1x16x8xf32> to vector<1x16x8xbf16>
    "tpu.trace_start"() <{level = 10 : i32, message = "bqd,bkd->bqk"}> : () -> ()
    %cst_226 = arith.constant dense<0.000000e+00> : vector<1x8x16xf32>
    %489 = tpu.matmul %487, %488, %cst_226 {dimension_numbers = #tpu.dot_dimension_numbers<[2], [2], [1], [1], [0, 0, 0, 1, 1, 1], [0], [0]>} : vector<1x8x8xbf16>, vector<1x16x8xbf16>, vector<1x8x16xf32> -> vector<1x8x16xf32>
    "tpu.trace_stop"() : () -> ()
    %cst_227 = arith.constant 0.176776692 : f32
    %490 = vector.broadcast %cst_227 : f32 to vector<1x8x16xf32>
    %491 = arith.mulf %489, %490 : vector<1x8x16xf32>
    %cst_228 = arith.constant dense<0xFF800000> : vector<1x8xf32>
    %492 = vector.multi_reduction <maximumf>, %491, %cst_228 [2] : vector<1x8x16xf32> to vector<1x8xf32>
    %493 = vector.shape_cast %492 : vector<1x8xf32> to vector<1x8x1xf32>
    %494 = vector.broadcast %493 : vector<1x8x1xf32> to vector<1x8x16xf32>
    %495 = arith.subf %491, %494 : vector<1x8x16xf32>
    %496 = math.exp %495 : vector<1x8x16xf32>
    %cst_229 = arith.constant dense<0.000000e+00> : vector<1x8xf32>
    %497 = vector.multi_reduction <add>, %496, %cst_229 [2] : vector<1x8x16xf32> to vector<1x8xf32>
    %498 = vector.shape_cast %497 : vector<1x8xf32> to vector<1x8x1xf32>
    %499 = tpu.reciprocal %498 {approx = true} : vector<1x8x1xf32> -> vector<1x8x1xf32>
    %500 = vector.broadcast %499 : vector<1x8x1xf32> to vector<1x8x16xf32>
    %501 = arith.mulf %496, %500 : vector<1x8x16xf32>
    %502 = arith.truncf %501 : vector<1x8x16xf32> to vector<1x8x16xbf16>
    %503 = arith.truncf %486 : vector<1x16x8xf32> to vector<1x16x8xbf16>
    "tpu.trace_start"() <{level = 10 : i32, message = "bqk,bkd->bqd"}> : () -> ()
    %cst_230 = arith.constant dense<0.000000e+00> : vector<1x8x8xf32>
    %504 = tpu.matmul %502, %503, %cst_230 {dimension_numbers = #tpu.dot_dimension_numbers<[2], [1], [1], [2], [0, 0, 0, 1, 1, 2], [0], [0]>} : vector<1x8x16xbf16>, vector<1x16x8xbf16>, vector<1x8x8xf32> -> vector<1x8x8xf32>
    "tpu.trace_stop"() : () -> ()
    %505 = arith.addf %484, %504 : vector<1x8x8xf32>
    %506 = tpu.concatenate %439, %461, %483, %505 in 2 : vector<1x8x8xf32>, vector<1x8x8xf32>, vector<1x8x8xf32>, vector<1x8x8xf32> -> vector<1x8x32xf32>
    %cst_231 = arith.constant dense<0.000000e+00> : vector<1x8xf32>
    %507 = vector.multi_reduction <add>, %506, %cst_231 [2] : vector<1x8x32xf32> to vector<1x8xf32>
    %508 = vector.shape_cast %507 : vector<1x8xf32> to vector<1x8x1xf32>
    %cst_232 = arith.constant 3.200000e+01 : f32
    %509 = vector.broadcast %cst_232 : f32 to vector<1x8x1xf32>
    %510 = arith.divf %508, %509 : vector<1x8x1xf32>
    %511 = vector.broadcast %510 : vector<1x8x1xf32> to vector<1x8x32xf32>
    %512 = arith.subf %506, %511 : vector<1x8x32xf32>
    %513 = arith.mulf %512, %512 : vector<1x8x32xf32>
    %cst_233 = arith.constant dense<0.000000e+00> : vector<1x8xf32>
    %514 = vector.multi_reduction <add>, %513, %cst_233 [2] : vector<1x8x32xf32> to vector<1x8xf32>
    %515 = vector.shape_cast %514 : vector<1x8xf32> to vector<1x8x1xf32>
    %cst_234 = arith.constant 3.200000e+01 : f32
    %516 = vector.broadcast %cst_234 : f32 to vector<1x8x1xf32>
    %517 = arith.divf %515, %516 : vector<1x8x1xf32>
    %518 = vector.broadcast %510 : vector<1x8x1xf32> to vector<1x8x32xf32>
    %519 = arith.subf %506, %518 : vector<1x8x32xf32>
    %cst_235 = arith.constant 9.99999974E-6 : f32
    %520 = vector.broadcast %cst_235 : f32 to vector<1x8x1xf32>
    %521 = arith.addf %517, %520 : vector<1x8x1xf32>
    %522 = math.rsqrt %521 : vector<1x8x1xf32>
    %523 = vector.broadcast %522 : vector<1x8x1xf32> to vector<1x8x32xf32>
    %524 = arith.mulf %519, %523 : vector<1x8x32xf32>
    %525 = vector.shape_cast %38 : vector<1x32xf32> to vector<1x1x32xf32>
    %526 = vector.broadcast %525 : vector<1x1x32xf32> to vector<1x8x32xf32>
    %527 = arith.mulf %524, %526 : vector<1x8x32xf32>
    %528 = vector.shape_cast %39 : vector<1x32xf32> to vector<1x1x32xf32>
    %529 = vector.broadcast %528 : vector<1x1x32xf32> to vector<1x8x32xf32>
    %530 = arith.addf %527, %529 : vector<1x8x32xf32>
    %531 = vector.shape_cast %530 : vector<1x8x32xf32> to vector<8x32xf32>
    %532 = arith.truncf %531 : vector<8x32xf32> to vector<8x32xbf16>
    %cst_236 = arith.constant dense<0.000000e+00> : vector<8x32xf32>
    %533 = tpu.matmul %532, %36, %cst_236 {dimension_numbers = #tpu.dot_dimension_numbers<[1], [0], [0], [1], [0, 0, 1, 1], [], []>} : vector<8x32xbf16>, vector<32x32xbf16>, vector<8x32xf32> -> vector<8x32xf32>
    %534 = vector.broadcast %37 : vector<1x32xf32> to vector<8x32xf32>
    %535 = arith.addf %533, %534 : vector<8x32xf32>
    %cst_237 = arith.constant 0.000000e+00 : f32
    %536 = vector.broadcast %cst_237 : f32 to vector<8x32xf32>
    %537 = arith.maximumf %535, %536 : vector<8x32xf32>
    %538 = vector.shape_cast %537 : vector<8x32xf32> to vector<1x8x32xf32>
    %539 = arith.addf %530, %538 : vector<1x8x32xf32>
    %cst_238 = arith.constant dense<0.000000e+00> : vector<1x8xf32>
    %540 = vector.multi_reduction <add>, %539, %cst_238 [2] : vector<1x8x32xf32> to vector<1x8xf32>
    %541 = vector.shape_cast %540 : vector<1x8xf32> to vector<1x8x1xf32>
    %cst_239 = arith.constant 3.200000e+01 : f32
    %542 = vector.broadcast %cst_239 : f32 to vector<1x8x1xf32>
    %543 = arith.divf %541, %542 : vector<1x8x1xf32>
    %544 = vector.broadcast %543 : vector<1x8x1xf32> to vector<1x8x32xf32>
    %545 = arith.subf %539, %544 : vector<1x8x32xf32>
    %546 = arith.mulf %545, %545 : vector<1x8x32xf32>
    %cst_240 = arith.constant dense<0.000000e+00> : vector<1x8xf32>
    %547 = vector.multi_reduction <add>, %546, %cst_240 [2] : vector<1x8x32xf32> to vector<1x8xf32>
    %548 = vector.shape_cast %547 : vector<1x8xf32> to vector<1x8x1xf32>
    %cst_241 = arith.constant 3.200000e+01 : f32
    %549 = vector.broadcast %cst_241 : f32 to vector<1x8x1xf32>
    %550 = arith.divf %548, %549 : vector<1x8x1xf32>
    %551 = vector.broadcast %543 : vector<1x8x1xf32> to vector<1x8x32xf32>
    %552 = arith.subf %539, %551 : vector<1x8x32xf32>
    %cst_242 = arith.constant 9.99999974E-6 : f32
    %553 = vector.broadcast %cst_242 : f32 to vector<1x8x1xf32>
    %554 = arith.addf %550, %553 : vector<1x8x1xf32>
    %555 = math.rsqrt %554 : vector<1x8x1xf32>
    %556 = vector.broadcast %555 : vector<1x8x1xf32> to vector<1x8x32xf32>
    %557 = arith.mulf %552, %556 : vector<1x8x32xf32>
    %558 = vector.shape_cast %40 : vector<1x32xf32> to vector<1x1x32xf32>
    %559 = vector.broadcast %558 : vector<1x1x32xf32> to vector<1x8x32xf32>
    %560 = arith.mulf %557, %559 : vector<1x8x32xf32>
    %561 = vector.shape_cast %41 : vector<1x32xf32> to vector<1x1x32xf32>
    %562 = vector.broadcast %561 : vector<1x1x32xf32> to vector<1x8x32xf32>
    %563 = arith.addf %560, %562 : vector<1x8x32xf32>
    %564 = arith.truncf %43 : vector<16x32xf32> to vector<16x32xbf16>
    %cst_243 = arith.constant dense<0.000000e+00> : vector<16x32xf32>
    %565 = tpu.matmul %564, %44, %cst_243 {dimension_numbers = #tpu.dot_dimension_numbers<[1], [0], [0], [1], [0, 0, 1, 1], [], []>} : vector<16x32xbf16>, vector<32x32xbf16>, vector<16x32xf32> -> vector<16x32xf32>
    %566 = vector.broadcast %45 : vector<1x32xf32> to vector<16x32xf32>
    %567 = arith.addf %565, %566 : vector<16x32xf32>
    %568 = vector.shape_cast %567 : vector<16x32xf32> to vector<1x16x32xf32>
    %569 = vector.shape_cast %563 : vector<1x8x32xf32> to vector<8x32xf32>
    %570 = arith.truncf %569 : vector<8x32xf32> to vector<8x32xbf16>
    %cst_244 = arith.constant dense<0.000000e+00> : vector<8x32xf32>
    %571 = tpu.matmul %570, %46, %cst_244 {dimension_numbers = #tpu.dot_dimension_numbers<[1], [0], [0], [1], [0, 0, 1, 1], [], []>} : vector<8x32xbf16>, vector<32x32xbf16>, vector<8x32xf32> -> vector<8x32xf32>
    %572 = vector.broadcast %47 : vector<1x32xf32> to vector<8x32xf32>
    %573 = arith.addf %571, %572 : vector<8x32xf32>
    %574 = vector.shape_cast %573 : vector<8x32xf32> to vector<1x8x32xf32>
    %cst_245 = arith.constant dense<0.000000e+00> : vector<8x32xf32>
    %575 = tpu.matmul %570, %48, %cst_245 {dimension_numbers = #tpu.dot_dimension_numbers<[1], [0], [0], [1], [0, 0, 1, 1], [], []>} : vector<8x32xbf16>, vector<32x32xbf16>, vector<8x32xf32> -> vector<8x32xf32>
    %576 = vector.broadcast %49 : vector<1x32xf32> to vector<8x32xf32>
    %577 = arith.addf %575, %576 : vector<8x32xf32>
    %578 = vector.shape_cast %577 : vector<8x32xf32> to vector<1x8x32xf32>
    %579 = vector.extract_strided_slice %568 {offsets = [0, 0, 0], sizes = [1, 16, 8], strides = [1, 1, 1]} : vector<1x16x32xf32> to vector<1x16x8xf32>
    %580 = vector.extract_strided_slice %574 {offsets = [0, 0, 0], sizes = [1, 8, 8], strides = [1, 1, 1]} : vector<1x8x32xf32> to vector<1x8x8xf32>
    %581 = vector.extract_strided_slice %578 {offsets = [0, 0, 0], sizes = [1, 8, 8], strides = [1, 1, 1]} : vector<1x8x32xf32> to vector<1x8x8xf32>
    %582 = arith.truncf %579 : vector<1x16x8xf32> to vector<1x16x8xbf16>
    %583 = arith.truncf %580 : vector<1x8x8xf32> to vector<1x8x8xbf16>
    "tpu.trace_start"() <{level = 10 : i32, message = "bqd,bkd->bqk"}> : () -> ()
    %cst_246 = arith.constant dense<0.000000e+00> : vector<1x16x8xf32>
    %584 = tpu.matmul %582, %583, %cst_246 {dimension_numbers = #tpu.dot_dimension_numbers<[2], [2], [1], [1], [0, 0, 0, 1, 1, 1], [0], [0]>} : vector<1x16x8xbf16>, vector<1x8x8xbf16>, vector<1x16x8xf32> -> vector<1x16x8xf32>
    "tpu.trace_stop"() : () -> ()
    %cst_247 = arith.constant 0.176776692 : f32
    %585 = vector.broadcast %cst_247 : f32 to vector<1x16x8xf32>
    %586 = arith.mulf %584, %585 : vector<1x16x8xf32>
    %cst_248 = arith.constant dense<0xFF800000> : vector<1x16xf32>
    %587 = vector.multi_reduction <maximumf>, %586, %cst_248 [2] : vector<1x16x8xf32> to vector<1x16xf32>
    %588 = vector.shape_cast %587 : vector<1x16xf32> to vector<1x16x1xf32>
    %589 = vector.broadcast %588 : vector<1x16x1xf32> to vector<1x16x8xf32>
    %590 = arith.subf %586, %589 : vector<1x16x8xf32>
    %591 = math.exp %590 : vector<1x16x8xf32>
    %cst_249 = arith.constant dense<0.000000e+00> : vector<1x16xf32>
    %592 = vector.multi_reduction <add>, %591, %cst_249 [2] : vector<1x16x8xf32> to vector<1x16xf32>
    %593 = vector.shape_cast %592 : vector<1x16xf32> to vector<1x16x1xf32>
    %594 = tpu.reciprocal %593 {approx = true} : vector<1x16x1xf32> -> vector<1x16x1xf32>
    %595 = vector.broadcast %594 : vector<1x16x1xf32> to vector<1x16x8xf32>
    %596 = arith.mulf %591, %595 : vector<1x16x8xf32>
    %597 = arith.truncf %596 : vector<1x16x8xf32> to vector<1x16x8xbf16>
    %598 = arith.truncf %581 : vector<1x8x8xf32> to vector<1x8x8xbf16>
    "tpu.trace_start"() <{level = 10 : i32, message = "bqk,bkd->bqd"}> : () -> ()
    %cst_250 = arith.constant dense<0.000000e+00> : vector<1x16x8xf32>
    %599 = tpu.matmul %597, %598, %cst_250 {dimension_numbers = #tpu.dot_dimension_numbers<[2], [1], [1], [2], [0, 0, 0, 1, 1, 2], [0], [0]>} : vector<1x16x8xbf16>, vector<1x8x8xbf16>, vector<1x16x8xf32> -> vector<1x16x8xf32>
    "tpu.trace_stop"() : () -> ()
    %600 = arith.addf %579, %599 : vector<1x16x8xf32>
    %601 = vector.extract_strided_slice %568 {offsets = [0, 0, 8], sizes = [1, 16, 8], strides = [1, 1, 1]} : vector<1x16x32xf32> to vector<1x16x8xf32>
    %602 = vector.extract_strided_slice %574 {offsets = [0, 0, 8], sizes = [1, 8, 8], strides = [1, 1, 1]} : vector<1x8x32xf32> to vector<1x8x8xf32>
    %603 = vector.extract_strided_slice %578 {offsets = [0, 0, 8], sizes = [1, 8, 8], strides = [1, 1, 1]} : vector<1x8x32xf32> to vector<1x8x8xf32>
    %604 = arith.truncf %601 : vector<1x16x8xf32> to vector<1x16x8xbf16>
    %605 = arith.truncf %602 : vector<1x8x8xf32> to vector<1x8x8xbf16>
    "tpu.trace_start"() <{level = 10 : i32, message = "bqd,bkd->bqk"}> : () -> ()
    %cst_251 = arith.constant dense<0.000000e+00> : vector<1x16x8xf32>
    %606 = tpu.matmul %604, %605, %cst_251 {dimension_numbers = #tpu.dot_dimension_numbers<[2], [2], [1], [1], [0, 0, 0, 1, 1, 1], [0], [0]>} : vector<1x16x8xbf16>, vector<1x8x8xbf16>, vector<1x16x8xf32> -> vector<1x16x8xf32>
    "tpu.trace_stop"() : () -> ()
    %cst_252 = arith.constant 0.176776692 : f32
    %607 = vector.broadcast %cst_252 : f32 to vector<1x16x8xf32>
    %608 = arith.mulf %606, %607 : vector<1x16x8xf32>
    %cst_253 = arith.constant dense<0xFF800000> : vector<1x16xf32>
    %609 = vector.multi_reduction <maximumf>, %608, %cst_253 [2] : vector<1x16x8xf32> to vector<1x16xf32>
    %610 = vector.shape_cast %609 : vector<1x16xf32> to vector<1x16x1xf32>
    %611 = vector.broadcast %610 : vector<1x16x1xf32> to vector<1x16x8xf32>
    %612 = arith.subf %608, %611 : vector<1x16x8xf32>
    %613 = math.exp %612 : vector<1x16x8xf32>
    %cst_254 = arith.constant dense<0.000000e+00> : vector<1x16xf32>
    %614 = vector.multi_reduction <add>, %613, %cst_254 [2] : vector<1x16x8xf32> to vector<1x16xf32>
    %615 = vector.shape_cast %614 : vector<1x16xf32> to vector<1x16x1xf32>
    %616 = tpu.reciprocal %615 {approx = true} : vector<1x16x1xf32> -> vector<1x16x1xf32>
    %617 = vector.broadcast %616 : vector<1x16x1xf32> to vector<1x16x8xf32>
    %618 = arith.mulf %613, %617 : vector<1x16x8xf32>
    %619 = arith.truncf %618 : vector<1x16x8xf32> to vector<1x16x8xbf16>
    %620 = arith.truncf %603 : vector<1x8x8xf32> to vector<1x8x8xbf16>
    "tpu.trace_start"() <{level = 10 : i32, message = "bqk,bkd->bqd"}> : () -> ()
    %cst_255 = arith.constant dense<0.000000e+00> : vector<1x16x8xf32>
    %621 = tpu.matmul %619, %620, %cst_255 {dimension_numbers = #tpu.dot_dimension_numbers<[2], [1], [1], [2], [0, 0, 0, 1, 1, 2], [0], [0]>} : vector<1x16x8xbf16>, vector<1x8x8xbf16>, vector<1x16x8xf32> -> vector<1x16x8xf32>
    "tpu.trace_stop"() : () -> ()
    %622 = arith.addf %601, %621 : vector<1x16x8xf32>
    %623 = vector.extract_strided_slice %568 {offsets = [0, 0, 16], sizes = [1, 16, 8], strides = [1, 1, 1]} : vector<1x16x32xf32> to vector<1x16x8xf32>
    %624 = vector.extract_strided_slice %574 {offsets = [0, 0, 16], sizes = [1, 8, 8], strides = [1, 1, 1]} : vector<1x8x32xf32> to vector<1x8x8xf32>
    %625 = vector.extract_strided_slice %578 {offsets = [0, 0, 16], sizes = [1, 8, 8], strides = [1, 1, 1]} : vector<1x8x32xf32> to vector<1x8x8xf32>
    %626 = arith.truncf %623 : vector<1x16x8xf32> to vector<1x16x8xbf16>
    %627 = arith.truncf %624 : vector<1x8x8xf32> to vector<1x8x8xbf16>
    "tpu.trace_start"() <{level = 10 : i32, message = "bqd,bkd->bqk"}> : () -> ()
    %cst_256 = arith.constant dense<0.000000e+00> : vector<1x16x8xf32>
    %628 = tpu.matmul %626, %627, %cst_256 {dimension_numbers = #tpu.dot_dimension_numbers<[2], [2], [1], [1], [0, 0, 0, 1, 1, 1], [0], [0]>} : vector<1x16x8xbf16>, vector<1x8x8xbf16>, vector<1x16x8xf32> -> vector<1x16x8xf32>
    "tpu.trace_stop"() : () -> ()
    %cst_257 = arith.constant 0.176776692 : f32
    %629 = vector.broadcast %cst_257 : f32 to vector<1x16x8xf32>
    %630 = arith.mulf %628, %629 : vector<1x16x8xf32>
    %cst_258 = arith.constant dense<0xFF800000> : vector<1x16xf32>
    %631 = vector.multi_reduction <maximumf>, %630, %cst_258 [2] : vector<1x16x8xf32> to vector<1x16xf32>
    %632 = vector.shape_cast %631 : vector<1x16xf32> to vector<1x16x1xf32>
    %633 = vector.broadcast %632 : vector<1x16x1xf32> to vector<1x16x8xf32>
    %634 = arith.subf %630, %633 : vector<1x16x8xf32>
    %635 = math.exp %634 : vector<1x16x8xf32>
    %cst_259 = arith.constant dense<0.000000e+00> : vector<1x16xf32>
    %636 = vector.multi_reduction <add>, %635, %cst_259 [2] : vector<1x16x8xf32> to vector<1x16xf32>
    %637 = vector.shape_cast %636 : vector<1x16xf32> to vector<1x16x1xf32>
    %638 = tpu.reciprocal %637 {approx = true} : vector<1x16x1xf32> -> vector<1x16x1xf32>
    %639 = vector.broadcast %638 : vector<1x16x1xf32> to vector<1x16x8xf32>
    %640 = arith.mulf %635, %639 : vector<1x16x8xf32>
    %641 = arith.truncf %640 : vector<1x16x8xf32> to vector<1x16x8xbf16>
    %642 = arith.truncf %625 : vector<1x8x8xf32> to vector<1x8x8xbf16>
    "tpu.trace_start"() <{level = 10 : i32, message = "bqk,bkd->bqd"}> : () -> ()
    %cst_260 = arith.constant dense<0.000000e+00> : vector<1x16x8xf32>
    %643 = tpu.matmul %641, %642, %cst_260 {dimension_numbers = #tpu.dot_dimension_numbers<[2], [1], [1], [2], [0, 0, 0, 1, 1, 2], [0], [0]>} : vector<1x16x8xbf16>, vector<1x8x8xbf16>, vector<1x16x8xf32> -> vector<1x16x8xf32>
    "tpu.trace_stop"() : () -> ()
    %644 = arith.addf %623, %643 : vector<1x16x8xf32>
    %645 = vector.extract_strided_slice %568 {offsets = [0, 0, 24], sizes = [1, 16, 8], strides = [1, 1, 1]} : vector<1x16x32xf32> to vector<1x16x8xf32>
    %646 = vector.extract_strided_slice %574 {offsets = [0, 0, 24], sizes = [1, 8, 8], strides = [1, 1, 1]} : vector<1x8x32xf32> to vector<1x8x8xf32>
    %647 = vector.extract_strided_slice %578 {offsets = [0, 0, 24], sizes = [1, 8, 8], strides = [1, 1, 1]} : vector<1x8x32xf32> to vector<1x8x8xf32>
    %648 = arith.truncf %645 : vector<1x16x8xf32> to vector<1x16x8xbf16>
    %649 = arith.truncf %646 : vector<1x8x8xf32> to vector<1x8x8xbf16>
    "tpu.trace_start"() <{level = 10 : i32, message = "bqd,bkd->bqk"}> : () -> ()
    %cst_261 = arith.constant dense<0.000000e+00> : vector<1x16x8xf32>
    %650 = tpu.matmul %648, %649, %cst_261 {dimension_numbers = #tpu.dot_dimension_numbers<[2], [2], [1], [1], [0, 0, 0, 1, 1, 1], [0], [0]>} : vector<1x16x8xbf16>, vector<1x8x8xbf16>, vector<1x16x8xf32> -> vector<1x16x8xf32>
    "tpu.trace_stop"() : () -> ()
    %cst_262 = arith.constant 0.176776692 : f32
    %651 = vector.broadcast %cst_262 : f32 to vector<1x16x8xf32>
    %652 = arith.mulf %650, %651 : vector<1x16x8xf32>
    %cst_263 = arith.constant dense<0xFF800000> : vector<1x16xf32>
    %653 = vector.multi_reduction <maximumf>, %652, %cst_263 [2] : vector<1x16x8xf32> to vector<1x16xf32>
    %654 = vector.shape_cast %653 : vector<1x16xf32> to vector<1x16x1xf32>
    %655 = vector.broadcast %654 : vector<1x16x1xf32> to vector<1x16x8xf32>
    %656 = arith.subf %652, %655 : vector<1x16x8xf32>
    %657 = math.exp %656 : vector<1x16x8xf32>
    %cst_264 = arith.constant dense<0.000000e+00> : vector<1x16xf32>
    %658 = vector.multi_reduction <add>, %657, %cst_264 [2] : vector<1x16x8xf32> to vector<1x16xf32>
    %659 = vector.shape_cast %658 : vector<1x16xf32> to vector<1x16x1xf32>
    %660 = tpu.reciprocal %659 {approx = true} : vector<1x16x1xf32> -> vector<1x16x1xf32>
    %661 = vector.broadcast %660 : vector<1x16x1xf32> to vector<1x16x8xf32>
    %662 = arith.mulf %657, %661 : vector<1x16x8xf32>
    %663 = arith.truncf %662 : vector<1x16x8xf32> to vector<1x16x8xbf16>
    %664 = arith.truncf %647 : vector<1x8x8xf32> to vector<1x8x8xbf16>
    "tpu.trace_start"() <{level = 10 : i32, message = "bqk,bkd->bqd"}> : () -> ()
    %cst_265 = arith.constant dense<0.000000e+00> : vector<1x16x8xf32>
    %665 = tpu.matmul %663, %664, %cst_265 {dimension_numbers = #tpu.dot_dimension_numbers<[2], [1], [1], [2], [0, 0, 0, 1, 1, 2], [0], [0]>} : vector<1x16x8xbf16>, vector<1x8x8xbf16>, vector<1x16x8xf32> -> vector<1x16x8xf32>
    "tpu.trace_stop"() : () -> ()
    %666 = arith.addf %645, %665 : vector<1x16x8xf32>
    %667 = tpu.concatenate %600, %622, %644, %666 in 2 : vector<1x16x8xf32>, vector<1x16x8xf32>, vector<1x16x8xf32>, vector<1x16x8xf32> -> vector<1x16x32xf32>
    %cst_266 = arith.constant dense<0.000000e+00> : vector<1x16xf32>
    %668 = vector.multi_reduction <add>, %667, %cst_266 [2] : vector<1x16x32xf32> to vector<1x16xf32>
    %669 = vector.shape_cast %668 : vector<1x16xf32> to vector<1x16x1xf32>
    %cst_267 = arith.constant 3.200000e+01 : f32
    %670 = vector.broadcast %cst_267 : f32 to vector<1x16x1xf32>
    %671 = arith.divf %669, %670 : vector<1x16x1xf32>
    %672 = vector.broadcast %671 : vector<1x16x1xf32> to vector<1x16x32xf32>
    %673 = arith.subf %667, %672 : vector<1x16x32xf32>
    %674 = arith.mulf %673, %673 : vector<1x16x32xf32>
    %cst_268 = arith.constant dense<0.000000e+00> : vector<1x16xf32>
    %675 = vector.multi_reduction <add>, %674, %cst_268 [2] : vector<1x16x32xf32> to vector<1x16xf32>
    %676 = vector.shape_cast %675 : vector<1x16xf32> to vector<1x16x1xf32>
    %cst_269 = arith.constant 3.200000e+01 : f32
    %677 = vector.broadcast %cst_269 : f32 to vector<1x16x1xf32>
    %678 = arith.divf %676, %677 : vector<1x16x1xf32>
    %679 = vector.broadcast %671 : vector<1x16x1xf32> to vector<1x16x32xf32>
    %680 = arith.subf %667, %679 : vector<1x16x32xf32>
    %cst_270 = arith.constant 9.99999974E-6 : f32
    %681 = vector.broadcast %cst_270 : f32 to vector<1x16x1xf32>
    %682 = arith.addf %678, %681 : vector<1x16x1xf32>
    %683 = math.rsqrt %682 : vector<1x16x1xf32>
    %684 = vector.broadcast %683 : vector<1x16x1xf32> to vector<1x16x32xf32>
    %685 = arith.mulf %680, %684 : vector<1x16x32xf32>
    %686 = vector.shape_cast %52 : vector<1x32xf32> to vector<1x1x32xf32>
    %687 = vector.broadcast %686 : vector<1x1x32xf32> to vector<1x16x32xf32>
    %688 = arith.mulf %685, %687 : vector<1x16x32xf32>
    %689 = vector.shape_cast %53 : vector<1x32xf32> to vector<1x1x32xf32>
    %690 = vector.broadcast %689 : vector<1x1x32xf32> to vector<1x16x32xf32>
    %691 = arith.addf %688, %690 : vector<1x16x32xf32>
    %692 = vector.shape_cast %691 : vector<1x16x32xf32> to vector<16x32xf32>
    %693 = arith.truncf %692 : vector<16x32xf32> to vector<16x32xbf16>
    %cst_271 = arith.constant dense<0.000000e+00> : vector<16x32xf32>
    %694 = tpu.matmul %693, %50, %cst_271 {dimension_numbers = #tpu.dot_dimension_numbers<[1], [0], [0], [1], [0, 0, 1, 1], [], []>} : vector<16x32xbf16>, vector<32x32xbf16>, vector<16x32xf32> -> vector<16x32xf32>
    %695 = vector.broadcast %51 : vector<1x32xf32> to vector<16x32xf32>
    %696 = arith.addf %694, %695 : vector<16x32xf32>
    %cst_272 = arith.constant 0.000000e+00 : f32
    %697 = vector.broadcast %cst_272 : f32 to vector<16x32xf32>
    %698 = arith.maximumf %696, %697 : vector<16x32xf32>
    %699 = vector.shape_cast %698 : vector<16x32xf32> to vector<1x16x32xf32>
    %700 = arith.addf %691, %699 : vector<1x16x32xf32>
    %cst_273 = arith.constant dense<0.000000e+00> : vector<1x16xf32>
    %701 = vector.multi_reduction <add>, %700, %cst_273 [2] : vector<1x16x32xf32> to vector<1x16xf32>
    %702 = vector.shape_cast %701 : vector<1x16xf32> to vector<1x16x1xf32>
    %cst_274 = arith.constant 3.200000e+01 : f32
    %703 = vector.broadcast %cst_274 : f32 to vector<1x16x1xf32>
    %704 = arith.divf %702, %703 : vector<1x16x1xf32>
    %705 = vector.broadcast %704 : vector<1x16x1xf32> to vector<1x16x32xf32>
    %706 = arith.subf %700, %705 : vector<1x16x32xf32>
    %707 = arith.mulf %706, %706 : vector<1x16x32xf32>
    %cst_275 = arith.constant dense<0.000000e+00> : vector<1x16xf32>
    %708 = vector.multi_reduction <add>, %707, %cst_275 [2] : vector<1x16x32xf32> to vector<1x16xf32>
    %709 = vector.shape_cast %708 : vector<1x16xf32> to vector<1x16x1xf32>
    %cst_276 = arith.constant 3.200000e+01 : f32
    %710 = vector.broadcast %cst_276 : f32 to vector<1x16x1xf32>
    %711 = arith.divf %709, %710 : vector<1x16x1xf32>
    %712 = vector.broadcast %704 : vector<1x16x1xf32> to vector<1x16x32xf32>
    %713 = arith.subf %700, %712 : vector<1x16x32xf32>
    %cst_277 = arith.constant 9.99999974E-6 : f32
    %714 = vector.broadcast %cst_277 : f32 to vector<1x16x1xf32>
    %715 = arith.addf %711, %714 : vector<1x16x1xf32>
    %716 = math.rsqrt %715 : vector<1x16x1xf32>
    %717 = vector.broadcast %716 : vector<1x16x1xf32> to vector<1x16x32xf32>
    %718 = arith.mulf %713, %717 : vector<1x16x32xf32>
    %719 = vector.shape_cast %54 : vector<1x32xf32> to vector<1x1x32xf32>
    %720 = vector.broadcast %719 : vector<1x1x32xf32> to vector<1x16x32xf32>
    %721 = arith.mulf %718, %720 : vector<1x16x32xf32>
    %722 = vector.shape_cast %55 : vector<1x32xf32> to vector<1x1x32xf32>
    %723 = vector.broadcast %722 : vector<1x1x32xf32> to vector<1x16x32xf32>
    %724 = arith.addf %721, %723 : vector<1x16x32xf32>
    %725 = vector.shape_cast %563 : vector<1x8x32xf32> to vector<8x32xf32>
    %726 = arith.truncf %725 : vector<8x32xf32> to vector<8x32xbf16>
    %cst_278 = arith.constant dense<0.000000e+00> : vector<8x32xf32>
    %727 = tpu.matmul %726, %56, %cst_278 {dimension_numbers = #tpu.dot_dimension_numbers<[1], [0], [0], [1], [0, 0, 1, 1], [], []>} : vector<8x32xbf16>, vector<32x32xbf16>, vector<8x32xf32> -> vector<8x32xf32>
    %728 = vector.broadcast %57 : vector<1x32xf32> to vector<8x32xf32>
    %729 = arith.addf %727, %728 : vector<8x32xf32>
    %730 = vector.shape_cast %729 : vector<8x32xf32> to vector<1x8x32xf32>
    %731 = vector.shape_cast %724 : vector<1x16x32xf32> to vector<16x32xf32>
    %732 = arith.truncf %731 : vector<16x32xf32> to vector<16x32xbf16>
    %cst_279 = arith.constant dense<0.000000e+00> : vector<16x32xf32>
    %733 = tpu.matmul %732, %58, %cst_279 {dimension_numbers = #tpu.dot_dimension_numbers<[1], [0], [0], [1], [0, 0, 1, 1], [], []>} : vector<16x32xbf16>, vector<32x32xbf16>, vector<16x32xf32> -> vector<16x32xf32>
    %734 = vector.broadcast %59 : vector<1x32xf32> to vector<16x32xf32>
    %735 = arith.addf %733, %734 : vector<16x32xf32>
    %736 = vector.shape_cast %735 : vector<16x32xf32> to vector<1x16x32xf32>
    %cst_280 = arith.constant dense<0.000000e+00> : vector<16x32xf32>
    %737 = tpu.matmul %732, %60, %cst_280 {dimension_numbers = #tpu.dot_dimension_numbers<[1], [0], [0], [1], [0, 0, 1, 1], [], []>} : vector<16x32xbf16>, vector<32x32xbf16>, vector<16x32xf32> -> vector<16x32xf32>
    %738 = vector.broadcast %61 : vector<1x32xf32> to vector<16x32xf32>
    %739 = arith.addf %737, %738 : vector<16x32xf32>
    %740 = vector.shape_cast %739 : vector<16x32xf32> to vector<1x16x32xf32>
    %741 = vector.extract_strided_slice %730 {offsets = [0, 0, 0], sizes = [1, 8, 8], strides = [1, 1, 1]} : vector<1x8x32xf32> to vector<1x8x8xf32>
    %742 = vector.extract_strided_slice %736 {offsets = [0, 0, 0], sizes = [1, 16, 8], strides = [1, 1, 1]} : vector<1x16x32xf32> to vector<1x16x8xf32>
    %743 = vector.extract_strided_slice %740 {offsets = [0, 0, 0], sizes = [1, 16, 8], strides = [1, 1, 1]} : vector<1x16x32xf32> to vector<1x16x8xf32>
    %744 = arith.truncf %741 : vector<1x8x8xf32> to vector<1x8x8xbf16>
    %745 = arith.truncf %742 : vector<1x16x8xf32> to vector<1x16x8xbf16>
    "tpu.trace_start"() <{level = 10 : i32, message = "bqd,bkd->bqk"}> : () -> ()
    %cst_281 = arith.constant dense<0.000000e+00> : vector<1x8x16xf32>
    %746 = tpu.matmul %744, %745, %cst_281 {dimension_numbers = #tpu.dot_dimension_numbers<[2], [2], [1], [1], [0, 0, 0, 1, 1, 1], [0], [0]>} : vector<1x8x8xbf16>, vector<1x16x8xbf16>, vector<1x8x16xf32> -> vector<1x8x16xf32>
    "tpu.trace_stop"() : () -> ()
    %cst_282 = arith.constant 0.176776692 : f32
    %747 = vector.broadcast %cst_282 : f32 to vector<1x8x16xf32>
    %748 = arith.mulf %746, %747 : vector<1x8x16xf32>
    %cst_283 = arith.constant dense<0xFF800000> : vector<1x8xf32>
    %749 = vector.multi_reduction <maximumf>, %748, %cst_283 [2] : vector<1x8x16xf32> to vector<1x8xf32>
    %750 = vector.shape_cast %749 : vector<1x8xf32> to vector<1x8x1xf32>
    %751 = vector.broadcast %750 : vector<1x8x1xf32> to vector<1x8x16xf32>
    %752 = arith.subf %748, %751 : vector<1x8x16xf32>
    %753 = math.exp %752 : vector<1x8x16xf32>
    %cst_284 = arith.constant dense<0.000000e+00> : vector<1x8xf32>
    %754 = vector.multi_reduction <add>, %753, %cst_284 [2] : vector<1x8x16xf32> to vector<1x8xf32>
    %755 = vector.shape_cast %754 : vector<1x8xf32> to vector<1x8x1xf32>
    %756 = tpu.reciprocal %755 {approx = true} : vector<1x8x1xf32> -> vector<1x8x1xf32>
    %757 = vector.broadcast %756 : vector<1x8x1xf32> to vector<1x8x16xf32>
    %758 = arith.mulf %753, %757 : vector<1x8x16xf32>
    %759 = arith.truncf %758 : vector<1x8x16xf32> to vector<1x8x16xbf16>
    %760 = arith.truncf %743 : vector<1x16x8xf32> to vector<1x16x8xbf16>
    "tpu.trace_start"() <{level = 10 : i32, message = "bqk,bkd->bqd"}> : () -> ()
    %cst_285 = arith.constant dense<0.000000e+00> : vector<1x8x8xf32>
    %761 = tpu.matmul %759, %760, %cst_285 {dimension_numbers = #tpu.dot_dimension_numbers<[2], [1], [1], [2], [0, 0, 0, 1, 1, 2], [0], [0]>} : vector<1x8x16xbf16>, vector<1x16x8xbf16>, vector<1x8x8xf32> -> vector<1x8x8xf32>
    "tpu.trace_stop"() : () -> ()
    %762 = arith.addf %741, %761 : vector<1x8x8xf32>
    %763 = vector.extract_strided_slice %730 {offsets = [0, 0, 8], sizes = [1, 8, 8], strides = [1, 1, 1]} : vector<1x8x32xf32> to vector<1x8x8xf32>
    %764 = vector.extract_strided_slice %736 {offsets = [0, 0, 8], sizes = [1, 16, 8], strides = [1, 1, 1]} : vector<1x16x32xf32> to vector<1x16x8xf32>
    %765 = vector.extract_strided_slice %740 {offsets = [0, 0, 8], sizes = [1, 16, 8], strides = [1, 1, 1]} : vector<1x16x32xf32> to vector<1x16x8xf32>
    %766 = arith.truncf %763 : vector<1x8x8xf32> to vector<1x8x8xbf16>
    %767 = arith.truncf %764 : vector<1x16x8xf32> to vector<1x16x8xbf16>
    "tpu.trace_start"() <{level = 10 : i32, message = "bqd,bkd->bqk"}> : () -> ()
    %cst_286 = arith.constant dense<0.000000e+00> : vector<1x8x16xf32>
    %768 = tpu.matmul %766, %767, %cst_286 {dimension_numbers = #tpu.dot_dimension_numbers<[2], [2], [1], [1], [0, 0, 0, 1, 1, 1], [0], [0]>} : vector<1x8x8xbf16>, vector<1x16x8xbf16>, vector<1x8x16xf32> -> vector<1x8x16xf32>
    "tpu.trace_stop"() : () -> ()
    %cst_287 = arith.constant 0.176776692 : f32
    %769 = vector.broadcast %cst_287 : f32 to vector<1x8x16xf32>
    %770 = arith.mulf %768, %769 : vector<1x8x16xf32>
    %cst_288 = arith.constant dense<0xFF800000> : vector<1x8xf32>
    %771 = vector.multi_reduction <maximumf>, %770, %cst_288 [2] : vector<1x8x16xf32> to vector<1x8xf32>
    %772 = vector.shape_cast %771 : vector<1x8xf32> to vector<1x8x1xf32>
    %773 = vector.broadcast %772 : vector<1x8x1xf32> to vector<1x8x16xf32>
    %774 = arith.subf %770, %773 : vector<1x8x16xf32>
    %775 = math.exp %774 : vector<1x8x16xf32>
    %cst_289 = arith.constant dense<0.000000e+00> : vector<1x8xf32>
    %776 = vector.multi_reduction <add>, %775, %cst_289 [2] : vector<1x8x16xf32> to vector<1x8xf32>
    %777 = vector.shape_cast %776 : vector<1x8xf32> to vector<1x8x1xf32>
    %778 = tpu.reciprocal %777 {approx = true} : vector<1x8x1xf32> -> vector<1x8x1xf32>
    %779 = vector.broadcast %778 : vector<1x8x1xf32> to vector<1x8x16xf32>
    %780 = arith.mulf %775, %779 : vector<1x8x16xf32>
    %781 = arith.truncf %780 : vector<1x8x16xf32> to vector<1x8x16xbf16>
    %782 = arith.truncf %765 : vector<1x16x8xf32> to vector<1x16x8xbf16>
    "tpu.trace_start"() <{level = 10 : i32, message = "bqk,bkd->bqd"}> : () -> ()
    %cst_290 = arith.constant dense<0.000000e+00> : vector<1x8x8xf32>
    %783 = tpu.matmul %781, %782, %cst_290 {dimension_numbers = #tpu.dot_dimension_numbers<[2], [1], [1], [2], [0, 0, 0, 1, 1, 2], [0], [0]>} : vector<1x8x16xbf16>, vector<1x16x8xbf16>, vector<1x8x8xf32> -> vector<1x8x8xf32>
    "tpu.trace_stop"() : () -> ()
    %784 = arith.addf %763, %783 : vector<1x8x8xf32>
    %785 = vector.extract_strided_slice %730 {offsets = [0, 0, 16], sizes = [1, 8, 8], strides = [1, 1, 1]} : vector<1x8x32xf32> to vector<1x8x8xf32>
    %786 = vector.extract_strided_slice %736 {offsets = [0, 0, 16], sizes = [1, 16, 8], strides = [1, 1, 1]} : vector<1x16x32xf32> to vector<1x16x8xf32>
    %787 = vector.extract_strided_slice %740 {offsets = [0, 0, 16], sizes = [1, 16, 8], strides = [1, 1, 1]} : vector<1x16x32xf32> to vector<1x16x8xf32>
    %788 = arith.truncf %785 : vector<1x8x8xf32> to vector<1x8x8xbf16>
    %789 = arith.truncf %786 : vector<1x16x8xf32> to vector<1x16x8xbf16>
    "tpu.trace_start"() <{level = 10 : i32, message = "bqd,bkd->bqk"}> : () -> ()
    %cst_291 = arith.constant dense<0.000000e+00> : vector<1x8x16xf32>
    %790 = tpu.matmul %788, %789, %cst_291 {dimension_numbers = #tpu.dot_dimension_numbers<[2], [2], [1], [1], [0, 0, 0, 1, 1, 1], [0], [0]>} : vector<1x8x8xbf16>, vector<1x16x8xbf16>, vector<1x8x16xf32> -> vector<1x8x16xf32>
    "tpu.trace_stop"() : () -> ()
    %cst_292 = arith.constant 0.176776692 : f32
    %791 = vector.broadcast %cst_292 : f32 to vector<1x8x16xf32>
    %792 = arith.mulf %790, %791 : vector<1x8x16xf32>
    %cst_293 = arith.constant dense<0xFF800000> : vector<1x8xf32>
    %793 = vector.multi_reduction <maximumf>, %792, %cst_293 [2] : vector<1x8x16xf32> to vector<1x8xf32>
    %794 = vector.shape_cast %793 : vector<1x8xf32> to vector<1x8x1xf32>
    %795 = vector.broadcast %794 : vector<1x8x1xf32> to vector<1x8x16xf32>
    %796 = arith.subf %792, %795 : vector<1x8x16xf32>
    %797 = math.exp %796 : vector<1x8x16xf32>
    %cst_294 = arith.constant dense<0.000000e+00> : vector<1x8xf32>
    %798 = vector.multi_reduction <add>, %797, %cst_294 [2] : vector<1x8x16xf32> to vector<1x8xf32>
    %799 = vector.shape_cast %798 : vector<1x8xf32> to vector<1x8x1xf32>
    %800 = tpu.reciprocal %799 {approx = true} : vector<1x8x1xf32> -> vector<1x8x1xf32>
    %801 = vector.broadcast %800 : vector<1x8x1xf32> to vector<1x8x16xf32>
    %802 = arith.mulf %797, %801 : vector<1x8x16xf32>
    %803 = arith.truncf %802 : vector<1x8x16xf32> to vector<1x8x16xbf16>
    %804 = arith.truncf %787 : vector<1x16x8xf32> to vector<1x16x8xbf16>
    "tpu.trace_start"() <{level = 10 : i32, message = "bqk,bkd->bqd"}> : () -> ()
    %cst_295 = arith.constant dense<0.000000e+00> : vector<1x8x8xf32>
    %805 = tpu.matmul %803, %804, %cst_295 {dimension_numbers = #tpu.dot_dimension_numbers<[2], [1], [1], [2], [0, 0, 0, 1, 1, 2], [0], [0]>} : vector<1x8x16xbf16>, vector<1x16x8xbf16>, vector<1x8x8xf32> -> vector<1x8x8xf32>
    "tpu.trace_stop"() : () -> ()
    %806 = arith.addf %785, %805 : vector<1x8x8xf32>
    %807 = vector.extract_strided_slice %730 {offsets = [0, 0, 24], sizes = [1, 8, 8], strides = [1, 1, 1]} : vector<1x8x32xf32> to vector<1x8x8xf32>
    %808 = vector.extract_strided_slice %736 {offsets = [0, 0, 24], sizes = [1, 16, 8], strides = [1, 1, 1]} : vector<1x16x32xf32> to vector<1x16x8xf32>
    %809 = vector.extract_strided_slice %740 {offsets = [0, 0, 24], sizes = [1, 16, 8], strides = [1, 1, 1]} : vector<1x16x32xf32> to vector<1x16x8xf32>
    %810 = arith.truncf %807 : vector<1x8x8xf32> to vector<1x8x8xbf16>
    %811 = arith.truncf %808 : vector<1x16x8xf32> to vector<1x16x8xbf16>
    "tpu.trace_start"() <{level = 10 : i32, message = "bqd,bkd->bqk"}> : () -> ()
    %cst_296 = arith.constant dense<0.000000e+00> : vector<1x8x16xf32>
    %812 = tpu.matmul %810, %811, %cst_296 {dimension_numbers = #tpu.dot_dimension_numbers<[2], [2], [1], [1], [0, 0, 0, 1, 1, 1], [0], [0]>} : vector<1x8x8xbf16>, vector<1x16x8xbf16>, vector<1x8x16xf32> -> vector<1x8x16xf32>
    "tpu.trace_stop"() : () -> ()
    %cst_297 = arith.constant 0.176776692 : f32
    %813 = vector.broadcast %cst_297 : f32 to vector<1x8x16xf32>
    %814 = arith.mulf %812, %813 : vector<1x8x16xf32>
    %cst_298 = arith.constant dense<0xFF800000> : vector<1x8xf32>
    %815 = vector.multi_reduction <maximumf>, %814, %cst_298 [2] : vector<1x8x16xf32> to vector<1x8xf32>
    %816 = vector.shape_cast %815 : vector<1x8xf32> to vector<1x8x1xf32>
    %817 = vector.broadcast %816 : vector<1x8x1xf32> to vector<1x8x16xf32>
    %818 = arith.subf %814, %817 : vector<1x8x16xf32>
    %819 = math.exp %818 : vector<1x8x16xf32>
    %cst_299 = arith.constant dense<0.000000e+00> : vector<1x8xf32>
    %820 = vector.multi_reduction <add>, %819, %cst_299 [2] : vector<1x8x16xf32> to vector<1x8xf32>
    %821 = vector.shape_cast %820 : vector<1x8xf32> to vector<1x8x1xf32>
    %822 = tpu.reciprocal %821 {approx = true} : vector<1x8x1xf32> -> vector<1x8x1xf32>
    %823 = vector.broadcast %822 : vector<1x8x1xf32> to vector<1x8x16xf32>
    %824 = arith.mulf %819, %823 : vector<1x8x16xf32>
    %825 = arith.truncf %824 : vector<1x8x16xf32> to vector<1x8x16xbf16>
    %826 = arith.truncf %809 : vector<1x16x8xf32> to vector<1x16x8xbf16>
    "tpu.trace_start"() <{level = 10 : i32, message = "bqk,bkd->bqd"}> : () -> ()
    %cst_300 = arith.constant dense<0.000000e+00> : vector<1x8x8xf32>
    %827 = tpu.matmul %825, %826, %cst_300 {dimension_numbers = #tpu.dot_dimension_numbers<[2], [1], [1], [2], [0, 0, 0, 1, 1, 2], [0], [0]>} : vector<1x8x16xbf16>, vector<1x16x8xbf16>, vector<1x8x8xf32> -> vector<1x8x8xf32>
    "tpu.trace_stop"() : () -> ()
    %828 = arith.addf %807, %827 : vector<1x8x8xf32>
    %829 = tpu.concatenate %762, %784, %806, %828 in 2 : vector<1x8x8xf32>, vector<1x8x8xf32>, vector<1x8x8xf32>, vector<1x8x8xf32> -> vector<1x8x32xf32>
    %cst_301 = arith.constant dense<0.000000e+00> : vector<1x8xf32>
    %830 = vector.multi_reduction <add>, %829, %cst_301 [2] : vector<1x8x32xf32> to vector<1x8xf32>
    %831 = vector.shape_cast %830 : vector<1x8xf32> to vector<1x8x1xf32>
    %cst_302 = arith.constant 3.200000e+01 : f32
    %832 = vector.broadcast %cst_302 : f32 to vector<1x8x1xf32>
    %833 = arith.divf %831, %832 : vector<1x8x1xf32>
    %834 = vector.broadcast %833 : vector<1x8x1xf32> to vector<1x8x32xf32>
    %835 = arith.subf %829, %834 : vector<1x8x32xf32>
    %836 = arith.mulf %835, %835 : vector<1x8x32xf32>
    %cst_303 = arith.constant dense<0.000000e+00> : vector<1x8xf32>
    %837 = vector.multi_reduction <add>, %836, %cst_303 [2] : vector<1x8x32xf32> to vector<1x8xf32>
    %838 = vector.shape_cast %837 : vector<1x8xf32> to vector<1x8x1xf32>
    %cst_304 = arith.constant 3.200000e+01 : f32
    %839 = vector.broadcast %cst_304 : f32 to vector<1x8x1xf32>
    %840 = arith.divf %838, %839 : vector<1x8x1xf32>
    %841 = vector.broadcast %833 : vector<1x8x1xf32> to vector<1x8x32xf32>
    %842 = arith.subf %829, %841 : vector<1x8x32xf32>
    %cst_305 = arith.constant 9.99999974E-6 : f32
    %843 = vector.broadcast %cst_305 : f32 to vector<1x8x1xf32>
    %844 = arith.addf %840, %843 : vector<1x8x1xf32>
    %845 = math.rsqrt %844 : vector<1x8x1xf32>
    %846 = vector.broadcast %845 : vector<1x8x1xf32> to vector<1x8x32xf32>
    %847 = arith.mulf %842, %846 : vector<1x8x32xf32>
    %848 = vector.shape_cast %64 : vector<1x32xf32> to vector<1x1x32xf32>
    %849 = vector.broadcast %848 : vector<1x1x32xf32> to vector<1x8x32xf32>
    %850 = arith.mulf %847, %849 : vector<1x8x32xf32>
    %851 = vector.shape_cast %65 : vector<1x32xf32> to vector<1x1x32xf32>
    %852 = vector.broadcast %851 : vector<1x1x32xf32> to vector<1x8x32xf32>
    %853 = arith.addf %850, %852 : vector<1x8x32xf32>
    %854 = vector.shape_cast %853 : vector<1x8x32xf32> to vector<8x32xf32>
    %855 = arith.truncf %854 : vector<8x32xf32> to vector<8x32xbf16>
    %cst_306 = arith.constant dense<0.000000e+00> : vector<8x32xf32>
    %856 = tpu.matmul %855, %62, %cst_306 {dimension_numbers = #tpu.dot_dimension_numbers<[1], [0], [0], [1], [0, 0, 1, 1], [], []>} : vector<8x32xbf16>, vector<32x32xbf16>, vector<8x32xf32> -> vector<8x32xf32>
    %857 = vector.broadcast %63 : vector<1x32xf32> to vector<8x32xf32>
    %858 = arith.addf %856, %857 : vector<8x32xf32>
    %cst_307 = arith.constant 0.000000e+00 : f32
    %859 = vector.broadcast %cst_307 : f32 to vector<8x32xf32>
    %860 = arith.maximumf %858, %859 : vector<8x32xf32>
    %861 = vector.shape_cast %860 : vector<8x32xf32> to vector<1x8x32xf32>
    %862 = arith.addf %853, %861 : vector<1x8x32xf32>
    %cst_308 = arith.constant dense<0.000000e+00> : vector<1x8xf32>
    %863 = vector.multi_reduction <add>, %862, %cst_308 [2] : vector<1x8x32xf32> to vector<1x8xf32>
    %864 = vector.shape_cast %863 : vector<1x8xf32> to vector<1x8x1xf32>
    %cst_309 = arith.constant 3.200000e+01 : f32
    %865 = vector.broadcast %cst_309 : f32 to vector<1x8x1xf32>
    %866 = arith.divf %864, %865 : vector<1x8x1xf32>
    %867 = vector.broadcast %866 : vector<1x8x1xf32> to vector<1x8x32xf32>
    %868 = arith.subf %862, %867 : vector<1x8x32xf32>
    %869 = arith.mulf %868, %868 : vector<1x8x32xf32>
    %cst_310 = arith.constant dense<0.000000e+00> : vector<1x8xf32>
    %870 = vector.multi_reduction <add>, %869, %cst_310 [2] : vector<1x8x32xf32> to vector<1x8xf32>
    %871 = vector.shape_cast %870 : vector<1x8xf32> to vector<1x8x1xf32>
    %cst_311 = arith.constant 3.200000e+01 : f32
    %872 = vector.broadcast %cst_311 : f32 to vector<1x8x1xf32>
    %873 = arith.divf %871, %872 : vector<1x8x1xf32>
    %874 = vector.broadcast %866 : vector<1x8x1xf32> to vector<1x8x32xf32>
    %875 = arith.subf %862, %874 : vector<1x8x32xf32>
    %cst_312 = arith.constant 9.99999974E-6 : f32
    %876 = vector.broadcast %cst_312 : f32 to vector<1x8x1xf32>
    %877 = arith.addf %873, %876 : vector<1x8x1xf32>
    %878 = math.rsqrt %877 : vector<1x8x1xf32>
    %879 = vector.broadcast %878 : vector<1x8x1xf32> to vector<1x8x32xf32>
    %880 = arith.mulf %875, %879 : vector<1x8x32xf32>
    %881 = vector.shape_cast %66 : vector<1x32xf32> to vector<1x1x32xf32>
    %882 = vector.broadcast %881 : vector<1x1x32xf32> to vector<1x8x32xf32>
    %883 = arith.mulf %880, %882 : vector<1x8x32xf32>
    %884 = vector.shape_cast %67 : vector<1x32xf32> to vector<1x1x32xf32>
    %885 = vector.broadcast %884 : vector<1x1x32xf32> to vector<1x8x32xf32>
    %886 = arith.addf %883, %885 : vector<1x8x32xf32>
    %887 = vector.shape_cast %886 : vector<1x8x32xf32> to vector<8x32xf32>
    %888 = arith.truncf %887 : vector<8x32xf32> to vector<8x32xbf16>
    %cst_313 = arith.constant dense<0.000000e+00> : vector<8x16xf32>
    %889 = tpu.matmul %888, %68, %cst_313 {dimension_numbers = #tpu.dot_dimension_numbers<[1], [0], [0], [1], [0, 0, 1, 1], [], []>} : vector<8x32xbf16>, vector<32x16xbf16>, vector<8x16xf32> -> vector<8x16xf32>
    %890 = vector.broadcast %69 : vector<1x16xf32> to vector<8x16xf32>
    %891 = arith.addf %889, %890 : vector<8x16xf32>
    %892 = vector.shape_cast %891 : vector<8x16xf32> to vector<1x8x16xf32>
    %c0_314 = arith.constant 0 : index
    %c0_315 = arith.constant 0 : index
    %c0_316 = arith.constant 0 : index
    %893 = vector.load %arg68[%c0_314, %c0_315, %c0_316] : memref<1x8x16xf32, #tpu.memory_space<vmem>>, vector<1x8x16xf32>
    tpu.vector_store %arg68[%c0_314, %c0_315, %c0_316], %892 {strides = array<i32>} : memref<1x8x16xf32, #tpu.memory_space<vmem>>, vector<1x8x16xf32>,
    return
  }
  func.func @transform_0(%arg0: i32) -> (i32, i32, i32) {
    %c0_i32 = arith.constant 0 : i32
    %c0_i32_0 = arith.constant 0 : i32
    %c0_i32_1 = arith.constant 0 : i32
    %c0_i32_2 = arith.constant 0 : i32
    return %c0_i32, %c0_i32_0, %c0_i32_1 : i32, i32, i32
  }
  func.func @transform_1(%arg0: i32) -> (i32, i32, i32) {
    %c0_i32 = arith.constant 0 : i32
    %c0_i32_0 = arith.constant 0 : i32
    %c0_i32_1 = arith.constant 0 : i32
    return %arg0, %c0_i32, %c0_i32_0 : i32, i32, i32
  }
  func.func @transform_2(%arg0: i32) -> (i32, i32, i32) {
    %c0_i32 = arith.constant 0 : i32
    %c0_i32_0 = arith.constant 0 : i32
    %c0_i32_1 = arith.constant 0 : i32
    return %arg0, %c0_i32, %c0_i32_0 : i32, i32, i32
  }
  func.func @transform_3(%arg0: i32) -> (i32, i32) {
    %c0_i32 = arith.constant 0 : i32
    %c0_i32_0 = arith.constant 0 : i32
    %c0_i32_1 = arith.constant 0 : i32
    return %c0_i32, %c0_i32_0 : i32, i32
  }
  func.func @transform_4(%arg0: i32) -> (i32, i32) {
    %c0_i32 = arith.constant 0 : i32
    %c0_i32_0 = arith.constant 0 : i32
    %c0_i32_1 = arith.constant 0 : i32
    return %c0_i32, %c0_i32_0 : i32, i32
  }
  func.func @transform_5(%arg0: i32) -> (i32, i32) {
    %c0_i32 = arith.constant 0 : i32
    %c0_i32_0 = arith.constant 0 : i32
    %c0_i32_1 = arith.constant 0 : i32
    return %c0_i32, %c0_i32_0 : i32, i32
  }
  func.func @transform_6(%arg0: i32) -> (i32, i32) {
    %c0_i32 = arith.constant 0 : i32
    %c0_i32_0 = arith.constant 0 : i32
    %c0_i32_1 = arith.constant 0 : i32
    return %c0_i32, %c0_i32_0 : i32, i32
  }
  func.func @transform_7(%arg0: i32) -> (i32, i32) {
    %c0_i32 = arith.constant 0 : i32
    %c0_i32_0 = arith.constant 0 : i32
    %c0_i32_1 = arith.constant 0 : i32
    return %c0_i32, %c0_i32_0 : i32, i32
  }
  func.func @transform_8(%arg0: i32) -> (i32, i32) {
    %c0_i32 = arith.constant 0 : i32
    %c0_i32_0 = arith.constant 0 : i32
    %c0_i32_1 = arith.constant 0 : i32
    return %c0_i32, %c0_i32_0 : i32, i32
  }
  func.func @transform_9(%arg0: i32) -> (i32, i32) {
    %c0_i32 = arith.constant 0 : i32
    %c0_i32_0 = arith.constant 0 : i32
    %c0_i32_1 = arith.constant 0 : i32
    return %c0_i32, %c0_i32_0 : i32, i32
  }
  func.func @transform_10(%arg0: i32) -> (i32, i32) {
    %c0_i32 = arith.constant 0 : i32
    %c0_i32_0 = arith.constant 0 : i32
    %c0_i32_1 = arith.constant 0 : i32
    return %c0_i32, %c0_i32_0 : i32, i32
  }
  func.func @transform_11(%arg0: i32) -> (i32, i32) {
    %c0_i32 = arith.constant 0 : i32
    %c0_i32_0 = arith.constant 0 : i32
    %c0_i32_1 = arith.constant 0 : i32
    return %c0_i32, %c0_i32_0 : i32, i32
  }
  func.func @transform_12(%arg0: i32) -> (i32, i32) {
    %c0_i32 = arith.constant 0 : i32
    %c0_i32_0 = arith.constant 0 : i32
    %c0_i32_1 = arith.constant 0 : i32
    return %c0_i32, %c0_i32_0 : i32, i32
  }
  func.func @transform_13(%arg0: i32) -> (i32, i32) {
    %c0_i32 = arith.constant 0 : i32
    %c0_i32_0 = arith.constant 0 : i32
    %c0_i32_1 = arith.constant 0 : i32
    return %c0_i32, %c0_i32_0 : i32, i32
  }
  func.func @transform_14(%arg0: i32) -> (i32, i32) {
    %c0_i32 = arith.constant 0 : i32
    %c0_i32_0 = arith.constant 0 : i32
    %c0_i32_1 = arith.constant 0 : i32
    return %c0_i32, %c0_i32_0 : i32, i32
  }
  func.func @transform_15(%arg0: i32) -> (i32, i32, i32) {
    %c0_i32 = arith.constant 0 : i32
    %c0_i32_0 = arith.constant 0 : i32
    %c0_i32_1 = arith.constant 0 : i32
    %c0_i32_2 = arith.constant 0 : i32
    return %c0_i32, %c0_i32_0, %c0_i32_1 : i32, i32, i32
  }
  func.func @transform_16(%arg0: i32) -> (i32, i32) {
    %c0_i32 = arith.constant 0 : i32
    %c0_i32_0 = arith.constant 0 : i32
    %c0_i32_1 = arith.constant 0 : i32
    return %c0_i32, %c0_i32_0 : i32, i32
  }
  func.func @transform_17(%arg0: i32) -> (i32, i32) {
    %c0_i32 = arith.constant 0 : i32
    %c0_i32_0 = arith.constant 0 : i32
    %c0_i32_1 = arith.constant 0 : i32
    return %c0_i32, %c0_i32_0 : i32, i32
  }
  func.func @transform_18(%arg0: i32) -> (i32, i32) {
    %c0_i32 = arith.constant 0 : i32
    %c0_i32_0 = arith.constant 0 : i32
    %c0_i32_1 = arith.constant 0 : i32
    return %c0_i32, %c0_i32_0 : i32, i32
  }
  func.func @transform_19(%arg0: i32) -> (i32, i32) {
    %c0_i32 = arith.constant 0 : i32
    %c0_i32_0 = arith.constant 0 : i32
    %c0_i32_1 = arith.constant 0 : i32
    return %c0_i32, %c0_i32_0 : i32, i32
  }
  func.func @transform_20(%arg0: i32) -> (i32, i32) {
    %c0_i32 = arith.constant 0 : i32
    %c0_i32_0 = arith.constant 0 : i32
    %c0_i32_1 = arith.constant 0 : i32
    return %c0_i32, %c0_i32_0 : i32, i32
  }
  func.func @transform_21(%arg0: i32) -> (i32, i32) {
    %c0_i32 = arith.constant 0 : i32
    %c0_i32_0 = arith.constant 0 : i32
    %c0_i32_1 = arith.constant 0 : i32
    return %c0_i32, %c0_i32_0 : i32, i32
  }
  func.func @transform_22(%arg0: i32) -> (i32, i32) {
    %c0_i32 = arith.constant 0 : i32
    %c0_i32_0 = arith.constant 0 : i32
    %c0_i32_1 = arith.constant 0 : i32
    return %c0_i32, %c0_i32_0 : i32, i32
  }
  func.func @transform_23(%arg0: i32) -> (i32, i32) {
    %c0_i32 = arith.constant 0 : i32
    %c0_i32_0 = arith.constant 0 : i32
    %c0_i32_1 = arith.constant 0 : i32
    return %c0_i32, %c0_i32_0 : i32, i32
  }
  func.func @transform_24(%arg0: i32) -> (i32, i32) {
    %c0_i32 = arith.constant 0 : i32
    %c0_i32_0 = arith.constant 0 : i32
    %c0_i32_1 = arith.constant 0 : i32
    return %c0_i32, %c0_i32_0 : i32, i32
  }
  func.func @transform_25(%arg0: i32) -> (i32, i32) {
    %c0_i32 = arith.constant 0 : i32
    %c0_i32_0 = arith.constant 0 : i32
    %c0_i32_1 = arith.constant 0 : i32
    return %c0_i32, %c0_i32_0 : i32, i32
  }
  func.func @transform_26(%arg0: i32) -> (i32, i32) {
    %c0_i32 = arith.constant 0 : i32
    %c0_i32_0 = arith.constant 0 : i32
    %c0_i32_1 = arith.constant 0 : i32
    return %c0_i32, %c0_i32_0 : i32, i32
  }
  func.func @transform_27(%arg0: i32) -> (i32, i32) {
    %c0_i32 = arith.constant 0 : i32
    %c0_i32_0 = arith.constant 0 : i32
    %c0_i32_1 = arith.constant 0 : i32
    return %c0_i32, %c0_i32_0 : i32, i32
  }
  func.func @transform_28(%arg0: i32) -> (i32, i32) {
    %c0_i32 = arith.constant 0 : i32
    %c0_i32_0 = arith.constant 0 : i32
    %c0_i32_1 = arith.constant 0 : i32
    return %c0_i32, %c0_i32_0 : i32, i32
  }
  func.func @transform_29(%arg0: i32) -> (i32, i32) {
    %c0_i32 = arith.constant 0 : i32
    %c0_i32_0 = arith.constant 0 : i32
    %c0_i32_1 = arith.constant 0 : i32
    return %c0_i32, %c0_i32_0 : i32, i32
  }
  func.func @transform_30(%arg0: i32) -> (i32, i32) {
    %c0_i32 = arith.constant 0 : i32
    %c0_i32_0 = arith.constant 0 : i32
    %c0_i32_1 = arith.constant 0 : i32
    return %c0_i32, %c0_i32_0 : i32, i32
  }
  func.func @transform_31(%arg0: i32) -> (i32, i32) {
    %c0_i32 = arith.constant 0 : i32
    %c0_i32_0 = arith.constant 0 : i32
    %c0_i32_1 = arith.constant 0 : i32
    return %c0_i32, %c0_i32_0 : i32, i32
  }
  func.func @transform_32(%arg0: i32) -> (i32, i32) {
    %c0_i32 = arith.constant 0 : i32
    %c0_i32_0 = arith.constant 0 : i32
    %c0_i32_1 = arith.constant 0 : i32
    return %c0_i32, %c0_i32_0 : i32, i32
  }
  func.func @transform_33(%arg0: i32) -> (i32, i32) {
    %c0_i32 = arith.constant 0 : i32
    %c0_i32_0 = arith.constant 0 : i32
    %c0_i32_1 = arith.constant 0 : i32
    return %c0_i32, %c0_i32_0 : i32, i32
  }
  func.func @transform_34(%arg0: i32) -> (i32, i32) {
    %c0_i32 = arith.constant 0 : i32
    %c0_i32_0 = arith.constant 0 : i32
    %c0_i32_1 = arith.constant 0 : i32
    return %c0_i32, %c0_i32_0 : i32, i32
  }
  func.func @transform_35(%arg0: i32) -> (i32, i32) {
    %c0_i32 = arith.constant 0 : i32
    %c0_i32_0 = arith.constant 0 : i32
    %c0_i32_1 = arith.constant 0 : i32
    return %c0_i32, %c0_i32_0 : i32, i32
  }
  func.func @transform_36(%arg0: i32) -> (i32, i32) {
    %c0_i32 = arith.constant 0 : i32
    %c0_i32_0 = arith.constant 0 : i32
    %c0_i32_1 = arith.constant 0 : i32
    return %c0_i32, %c0_i32_0 : i32, i32
  }
  func.func @transform_37(%arg0: i32) -> (i32, i32) {
    %c0_i32 = arith.constant 0 : i32
    %c0_i32_0 = arith.constant 0 : i32
    %c0_i32_1 = arith.constant 0 : i32
    return %c0_i32, %c0_i32_0 : i32, i32
  }
  func.func @transform_38(%arg0: i32) -> (i32, i32) {
    %c0_i32 = arith.constant 0 : i32
    %c0_i32_0 = arith.constant 0 : i32
    %c0_i32_1 = arith.constant 0 : i32
    return %c0_i32, %c0_i32_0 : i32, i32
  }
  func.func @transform_39(%arg0: i32) -> (i32, i32) {
    %c0_i32 = arith.constant 0 : i32
    %c0_i32_0 = arith.constant 0 : i32
    %c0_i32_1 = arith.constant 0 : i32
    return %c0_i32, %c0_i32_0 : i32, i32
  }
  func.func @transform_40(%arg0: i32) -> (i32, i32, i32) {
    %c0_i32 = arith.constant 0 : i32
    %c0_i32_0 = arith.constant 0 : i32
    %c0_i32_1 = arith.constant 0 : i32
    %c0_i32_2 = arith.constant 0 : i32
    return %c0_i32, %c0_i32_0, %c0_i32_1 : i32, i32, i32
  }
  func.func @transform_41(%arg0: i32) -> (i32, i32) {
    %c0_i32 = arith.constant 0 : i32
    %c0_i32_0 = arith.constant 0 : i32
    %c0_i32_1 = arith.constant 0 : i32
    return %c0_i32, %c0_i32_0 : i32, i32
  }
  func.func @transform_42(%arg0: i32) -> (i32, i32) {
    %c0_i32 = arith.constant 0 : i32
    %c0_i32_0 = arith.constant 0 : i32
    %c0_i32_1 = arith.constant 0 : i32
    return %c0_i32, %c0_i32_0 : i32, i32
  }
  func.func @transform_43(%arg0: i32) -> (i32, i32) {
    %c0_i32 = arith.constant 0 : i32
    %c0_i32_0 = arith.constant 0 : i32
    %c0_i32_1 = arith.constant 0 : i32
    return %c0_i32, %c0_i32_0 : i32, i32
  }
  func.func @transform_44(%arg0: i32) -> (i32, i32) {
    %c0_i32 = arith.constant 0 : i32
    %c0_i32_0 = arith.constant 0 : i32
    %c0_i32_1 = arith.constant 0 : i32
    return %c0_i32, %c0_i32_0 : i32, i32
  }
  func.func @transform_45(%arg0: i32) -> (i32, i32) {
    %c0_i32 = arith.constant 0 : i32
    %c0_i32_0 = arith.constant 0 : i32
    %c0_i32_1 = arith.constant 0 : i32
    return %c0_i32, %c0_i32_0 : i32, i32
  }
  func.func @transform_46(%arg0: i32) -> (i32, i32) {
    %c0_i32 = arith.constant 0 : i32
    %c0_i32_0 = arith.constant 0 : i32
    %c0_i32_1 = arith.constant 0 : i32
    return %c0_i32, %c0_i32_0 : i32, i32
  }
  func.func @transform_47(%arg0: i32) -> (i32, i32) {
    %c0_i32 = arith.constant 0 : i32
    %c0_i32_0 = arith.constant 0 : i32
    %c0_i32_1 = arith.constant 0 : i32
    return %c0_i32, %c0_i32_0 : i32, i32
  }
  func.func @transform_48(%arg0: i32) -> (i32, i32) {
    %c0_i32 = arith.constant 0 : i32
    %c0_i32_0 = arith.constant 0 : i32
    %c0_i32_1 = arith.constant 0 : i32
    return %c0_i32, %c0_i32_0 : i32, i32
  }
  func.func @transform_49(%arg0: i32) -> (i32, i32) {
    %c0_i32 = arith.constant 0 : i32
    %c0_i32_0 = arith.constant 0 : i32
    %c0_i32_1 = arith.constant 0 : i32
    return %c0_i32, %c0_i32_0 : i32, i32
  }
  func.func @transform_50(%arg0: i32) -> (i32, i32) {
    %c0_i32 = arith.constant 0 : i32
    %c0_i32_0 = arith.constant 0 : i32
    %c0_i32_1 = arith.constant 0 : i32
    return %c0_i32, %c0_i32_0 : i32, i32
  }
  func.func @transform_51(%arg0: i32) -> (i32, i32) {
    %c0_i32 = arith.constant 0 : i32
    %c0_i32_0 = arith.constant 0 : i32
    %c0_i32_1 = arith.constant 0 : i32
    return %c0_i32, %c0_i32_0 : i32, i32
  }
  func.func @transform_52(%arg0: i32) -> (i32, i32) {
    %c0_i32 = arith.constant 0 : i32
    %c0_i32_0 = arith.constant 0 : i32
    %c0_i32_1 = arith.constant 0 : i32
    return %c0_i32, %c0_i32_0 : i32, i32
  }
  func.func @transform_53(%arg0: i32) -> (i32, i32) {
    %c0_i32 = arith.constant 0 : i32
    %c0_i32_0 = arith.constant 0 : i32
    %c0_i32_1 = arith.constant 0 : i32
    return %c0_i32, %c0_i32_0 : i32, i32
  }
  func.func @transform_54(%arg0: i32) -> (i32, i32) {
    %c0_i32 = arith.constant 0 : i32
    %c0_i32_0 = arith.constant 0 : i32
    %c0_i32_1 = arith.constant 0 : i32
    return %c0_i32, %c0_i32_0 : i32, i32
  }
  func.func @transform_55(%arg0: i32) -> (i32, i32) {
    %c0_i32 = arith.constant 0 : i32
    %c0_i32_0 = arith.constant 0 : i32
    %c0_i32_1 = arith.constant 0 : i32
    return %c0_i32, %c0_i32_0 : i32, i32
  }
  func.func @transform_56(%arg0: i32) -> (i32, i32) {
    %c0_i32 = arith.constant 0 : i32
    %c0_i32_0 = arith.constant 0 : i32
    %c0_i32_1 = arith.constant 0 : i32
    return %c0_i32, %c0_i32_0 : i32, i32
  }
  func.func @transform_57(%arg0: i32) -> (i32, i32) {
    %c0_i32 = arith.constant 0 : i32
    %c0_i32_0 = arith.constant 0 : i32
    %c0_i32_1 = arith.constant 0 : i32
    return %c0_i32, %c0_i32_0 : i32, i32
  }
  func.func @transform_58(%arg0: i32) -> (i32, i32) {
    %c0_i32 = arith.constant 0 : i32
    %c0_i32_0 = arith.constant 0 : i32
    %c0_i32_1 = arith.constant 0 : i32
    return %c0_i32, %c0_i32_0 : i32, i32
  }
  func.func @transform_59(%arg0: i32) -> (i32, i32) {
    %c0_i32 = arith.constant 0 : i32
    %c0_i32_0 = arith.constant 0 : i32
    %c0_i32_1 = arith.constant 0 : i32
    return %c0_i32, %c0_i32_0 : i32, i32
  }
  func.func @transform_60(%arg0: i32) -> (i32, i32) {
    %c0_i32 = arith.constant 0 : i32
    %c0_i32_0 = arith.constant 0 : i32
    %c0_i32_1 = arith.constant 0 : i32
    return %c0_i32, %c0_i32_0 : i32, i32
  }
  func.func @transform_61(%arg0: i32) -> (i32, i32) {
    %c0_i32 = arith.constant 0 : i32
    %c0_i32_0 = arith.constant 0 : i32
    %c0_i32_1 = arith.constant 0 : i32
    return %c0_i32, %c0_i32_0 : i32, i32
  }
  func.func @transform_62(%arg0: i32) -> (i32, i32) {
    %c0_i32 = arith.constant 0 : i32
    %c0_i32_0 = arith.constant 0 : i32
    %c0_i32_1 = arith.constant 0 : i32
    return %c0_i32, %c0_i32_0 : i32, i32
  }
  func.func @transform_63(%arg0: i32) -> (i32, i32) {
    %c0_i32 = arith.constant 0 : i32
    %c0_i32_0 = arith.constant 0 : i32
    %c0_i32_1 = arith.constant 0 : i32
    return %c0_i32, %c0_i32_0 : i32, i32
  }
  func.func @transform_64(%arg0: i32) -> (i32, i32) {
    %c0_i32 = arith.constant 0 : i32
    %c0_i32_0 = arith.constant 0 : i32
    %c0_i32_1 = arith.constant 0 : i32
    return %c0_i32, %c0_i32_0 : i32, i32
  }
  func.func @transform_65(%arg0: i32) -> (i32, i32) {
    %c0_i32 = arith.constant 0 : i32
    %c0_i32_0 = arith.constant 0 : i32
    %c0_i32_1 = arith.constant 0 : i32
    return %c0_i32, %c0_i32_0 : i32, i32
  }
  func.func @transform_66(%arg0: i32) -> (i32, i32) {
    %c0_i32 = arith.constant 0 : i32
    %c0_i32_0 = arith.constant 0 : i32
    %c0_i32_1 = arith.constant 0 : i32
    return %c0_i32, %c0_i32_0 : i32, i32
  }
  func.func @transform_67(%arg0: i32) -> (i32, i32, i32) {
    %c0_i32 = arith.constant 0 : i32
    %c0_i32_0 = arith.constant 0 : i32
    %c0_i32_1 = arith.constant 0 : i32
    return %arg0, %c0_i32, %c0_i32_0 : i32, i32, i32
  }
}

</mosaic_0001>

<llo_original>
// kernel: tpu_custom_call.1
$region0: #{tpu_custom_call.1}
  #allocation0 [shape = 'u32[]', space=smem, size = 0x4, offset = 0x4, fixed_abs, tag = 'smem constant byte address 0x4 - core index']
  #allocation1 [shape = 'u32[144,128]{1,0:T(1,128)}', space=vmem, size = 0x12000, scoped, tag = 'internal scratch']
  %s0 = inlined_call_operand.smem [shape: u32[68], index: -1, kind: input, shape index: {}]
  %s1 = sld [smem:[%s0]]
  %s2 = scalar_lea.smem %s0, 1
  %s3 = sld [smem:[%s2]]
  %s4 = scalar_lea.smem %s0, 2
  %s5 = sld [smem:[%s4]]
  %s6 = scalar_lea.smem %s0, 3
  %s7 = sld [smem:[%s6]]
  %s8 = scalar_lea.smem %s0, 4
  %s9 = sld [smem:[%s8]]
  %s10 = scalar_lea.smem %s0, 5
  %s11 = sld [smem:[%s10]]
  %s12 = scalar_lea.smem %s0, 6
  %s13 = sld [smem:[%s12]]
  %s14 = scalar_lea.smem %s0, 7
  %s15 = sld [smem:[%s14]]
  %s16 = scalar_lea.smem %s0, 8
  %s17 = sld [smem:[%s16]]
  %s18 = scalar_lea.smem %s0, 9
  %s19 = sld [smem:[%s18]]
  %s20 = scalar_lea.smem %s0, 10
  %s21 = sld [smem:[%s20]]
  %s22 = scalar_lea.smem %s0, 11
  %s23 = sld [smem:[%s22]]
  %s24 = scalar_lea.smem %s0, 12
  %s25 = sld [smem:[%s24]]
  %s26 = scalar_lea.smem %s0, 13
  %s27 = sld [smem:[%s26]]
  %s28 = scalar_lea.smem %s0, 14
  %s29 = sld [smem:[%s28]]
  %s30 = scalar_lea.smem %s0, 15
  %s31 = sld [smem:[%s30]]
  %s32 = scalar_lea.smem %s0, 16
  %s33 = sld [smem:[%s32]]
  %s34 = scalar_lea.smem %s0, 17
  %s35 = sld [smem:[%s34]]
  %s36 = scalar_lea.smem %s0, 18
  %s37 = sld [smem:[%s36]]
  %s38 = scalar_lea.smem %s0, 19
  %s39 = sld [smem:[%s38]]
  %s40 = scalar_lea.smem %s0, 20
  %s41 = sld [smem:[%s40]]
  %s42 = scalar_lea.smem %s0, 21
  %s43 = sld [smem:[%s42]]
  %s44 = scalar_lea.smem %s0, 22
  %s45 = sld [smem:[%s44]]
  %s46 = scalar_lea.smem %s0, 23
  %s47 = sld [smem:[%s46]]
  %s48 = scalar_lea.smem %s0, 24
  %s49 = sld [smem:[%s48]]
  %s50 = scalar_lea.smem %s0, 25
  %s51 = sld [smem:[%s50]]
  %s52 = scalar_lea.smem %s0, 26
  %s53 = sld [smem:[%s52]]
  %s54 = scalar_lea.smem %s0, 27
  %s55 = sld [smem:[%s54]]
  %s56 = scalar_lea.smem %s0, 28
  %s57 = sld [smem:[%s56]]
  %s58 = scalar_lea.smem %s0, 29
  %s59 = sld [smem:[%s58]]
  %s60 = scalar_lea.smem %s0, 30
  %s61 = sld [smem:[%s60]]
  %s62 = scalar_lea.smem %s0, 31
  %s63 = sld [smem:[%s62]]
  %s64 = scalar_lea.smem %s0, 32
  %s65 = sld [smem:[%s64]]
  %s66 = scalar_lea.smem %s0, 33
  %s67 = sld [smem:[%s66]]
  %s68 = scalar_lea.smem %s0, 34
  %s69 = sld [smem:[%s68]]
  %s70 = scalar_lea.smem %s0, 35
  %s71 = sld [smem:[%s70]]
  %s72 = scalar_lea.smem %s0, 36
  %s73 = sld [smem:[%s72]]
  %s74 = scalar_lea.smem %s0, 37
  %s75 = sld [smem:[%s74]]
  %s76 = scalar_lea.smem %s0, 38
  %s77 = sld [smem:[%s76]]
  %s78 = scalar_lea.smem %s0, 39
  %s79 = sld [smem:[%s78]]
  %s80 = scalar_lea.smem %s0, 40
  %s81 = sld [smem:[%s80]]
  %s82 = scalar_lea.smem %s0, 41
  %s83 = sld [smem:[%s82]]
  %s84 = scalar_lea.smem %s0, 42
  %s85 = sld [smem:[%s84]]
  %s86 = scalar_lea.smem %s0, 43
  %s87 = sld [smem:[%s86]]
  %s88 = scalar_lea.smem %s0, 44
  %s89 = sld [smem:[%s88]]
  %s90 = scalar_lea.smem %s0, 45
  %s91 = sld [smem:[%s90]]
  %s92 = scalar_lea.smem %s0, 46
  %s93 = sld [smem:[%s92]]
  %s94 = scalar_lea.smem %s0, 47
  %s95 = sld [smem:[%s94]]
  %s96 = scalar_lea.smem %s0, 48
  %s97 = sld [smem:[%s96]]
  %s98 = scalar_lea.smem %s0, 49
  %s99 = sld [smem:[%s98]]
  %s100 = scalar_lea.smem %s0, 50
  %s101 = sld [smem:[%s100]]
  %s102 = scalar_lea.smem %s0, 51
  %s103 = sld [smem:[%s102]]
  %s104 = scalar_lea.smem %s0, 52
  %s105 = sld [smem:[%s104]]
  %s106 = scalar_lea.smem %s0, 53
  %s107 = sld [smem:[%s106]]
  %s108 = scalar_lea.smem %s0, 54
  %s109 = sld [smem:[%s108]]
  %s110 = scalar_lea.smem %s0, 55
  %s111 = sld [smem:[%s110]]
  %s112 = scalar_lea.smem %s0, 56
  %s113 = sld [smem:[%s112]]
  %s114 = scalar_lea.smem %s0, 57
  %s115 = sld [smem:[%s114]]
  %s116 = scalar_lea.smem %s0, 58
  %s117 = sld [smem:[%s116]]
  %s118 = scalar_lea.smem %s0, 59
  %s119 = sld [smem:[%s118]]
  %s120 = scalar_lea.smem %s0, 60
  %s121 = sld [smem:[%s120]]
  %s122 = scalar_lea.smem %s0, 61
  %s123 = sld [smem:[%s122]]
  %s124 = scalar_lea.smem %s0, 62
  %s125 = sld [smem:[%s124]]
  %s126 = scalar_lea.smem %s0, 63
  %s127 = sld [smem:[%s126]]
  %s128 = scalar_lea.smem %s0, 64
  %s129 = sld [smem:[%s128]]
  %s130 = scalar_lea.smem %s0, 65
  %s131 = sld [smem:[%s130]]
  %s132 = scalar_lea.smem %s0, 66
  %s133 = sld [smem:[%s132]]
  %s134 = scalar_lea.smem %s0, 67
  %s135 = sld [smem:[%s134]]
  %s136 = sld [smem:[#allocation0]]
  $region473: #{tpu_custom_call.1} parent=0
    _
  %s138 = ssub.s32 1, %s136
  %s139 = scalar_select 0, %s138, %s136
  $region1: #{tpu_custom_call.1} parent=0
    #allocation2 [shape = 'u8[4096]{0}', space=vmem, size = 0x1000, scoped, tag = 'input window, operand 0, single buffered']
    #allocation3 [shape = 's32[2]{0}', space=sflag, size = 0x8, scoped, tag = 'scoped memory for tpu_custom_call.1']
    #allocation4 [shape = 's32[2]{0}', space=sflag, size = 0x8, scoped, tag = 'scoped memory for tpu_custom_call.1']
    #allocation5 [shape = 'u8[16384]{0}', space=vmem, size = 0x4000, scoped, tag = 'input window, operand 1']
    #allocation6 [shape = 's32[2]{0}', space=sflag, size = 0x8, scoped, tag = 'scoped memory for tpu_custom_call.1']
    #allocation7 [shape = 'u8[1024]{0}', space=vmem, size = 0x400, scoped, tag = 'input window, operand 2']
    #allocation8 [shape = 'u8[512]{0}', space=vmem, size = 0x400, scoped, tag = 'input window, operand 4, single buffered']
    #allocation9 [shape = 's32[1]{0}', space=sflag, size = 0x4, scoped, tag = 'scoped memory for tpu_custom_call.1']
    #allocation10 [shape = 'u8[512]{0}', space=vmem, size = 0x400, scoped, tag = 'input window, operand 6, single buffered']
    #allocation11 [shape = 'u8[512]{0}', space=vmem, size = 0x400, scoped, tag = 'input window, operand 8, single buffered']
    #allocation12 [shape = 's32[1]{0}', space=sflag, size = 0x4, scoped, tag = 'scoped memory for tpu_custom_call.1']
    #allocation13 [shape = 'u8[8192]{0}', space=vmem, size = 0x2000, scoped, tag = 'input window, operand 9, single buffered']
    #allocation14 [shape = 'u8[512]{0}', space=vmem, size = 0x400, scoped, tag = 'input window, operand 10, single buffered']
    #allocation15 [shape = 's32[1]{0}', space=sflag, size = 0x4, scoped, tag = 'scoped memory for tpu_custom_call.1']
    #allocation16 [shape = 'u8[512]{0}', space=vmem, size = 0x400, scoped, tag = 'input window, operand 11, single buffered']
    #allocation17 [shape = 'u8[512]{0}', space=vmem, size = 0x400, scoped, tag = 'input window, operand 12, single buffered']
    #allocation18 [shape = 's32[1]{0}', space=sflag, size = 0x4, scoped, tag = 'scoped memory for tpu_custom_call.1']
    #allocation19 [shape = 'u8[512]{0}', space=vmem, size = 0x400, scoped, tag = 'input window, operand 13, single buffered']
    #allocation20 [shape = 'u8[512]{0}', space=vmem, size = 0x400, scoped, tag = 'input window, operand 14, single buffered']
    #allocation21 [shape = 's32[1]{0}', space=sflag, size = 0x4, scoped, tag = 'scoped memory for tpu_custom_call.1']
    #allocation22 [shape = 'u8[512]{0}', space=vmem, size = 0x400, scoped, tag = 'input window, operand 17, single buffered']
    #allocation23 [shape = 'u8[8192]{0}', space=vmem, size = 0x2000, scoped, tag = 'input window, operand 18, single buffered']
    #allocation24 [shape = 's32[1]{0}', space=sflag, size = 0x4, scoped, tag = 'scoped memory for tpu_custom_call.1']
    #allocation25 [shape = 'u8[512]{0}', space=vmem, size = 0x400, scoped, tag = 'input window, operand 19, single buffered']
    #allocation26 [shape = 'u8[512]{0}', space=vmem, size = 0x400, scoped, tag = 'input window, operand 21, single buffered']
    #allocation27 [shape = 's32[1]{0}', space=sflag, size = 0x4, scoped, tag = 'scoped memory for tpu_custom_call.1']
    #allocation28 [shape = 'u8[8192]{0}', space=vmem, size = 0x2000, scoped, tag = 'input window, operand 22, single buffered']
    #allocation29 [shape = 'u8[512]{0}', space=vmem, size = 0x400, scoped, tag = 'input window, operand 23, single buffered']
    #allocation30 [shape = 's32[1]{0}', space=sflag, size = 0x4, scoped, tag = 'scoped memory for tpu_custom_call.1']
    #allocation31 [shape = 'u8[512]{0}', space=vmem, size = 0x400, scoped, tag = 'input window, operand 24, single buffered']
    #allocation32 [shape = 'u8[512]{0}', space=vmem, size = 0x400, scoped, tag = 'input window, operand 25, single buffered']
    #allocation33 [shape = 's32[1]{0}', space=sflag, size = 0x4, scoped, tag = 'scoped memory for tpu_custom_call.1']
    #allocation34 [shape = 'u8[512]{0}', space=vmem, size = 0x400, scoped, tag = 'input window, operand 26, single buffered']
    #allocation35 [shape = 'u8[512]{0}', space=vmem, size = 0x400, scoped, tag = 'input window, operand 27, single buffered']
    #allocation36 [shape = 's32[1]{0}', space=sflag, size = 0x4, scoped, tag = 'scoped memory for tpu_custom_call.1']
    #allocation37 [shape = 'u8[512]{0}', space=vmem, size = 0x400, scoped, tag = 'input window, operand 29, single buffered']
    #allocation38 [shape = 'u8[512]{0}', space=vmem, size = 0x400, scoped, tag = 'input window, operand 31, single buffered']
    #allocation39 [shape = 's32[1]{0}', space=sflag, size = 0x4, scoped, tag = 'scoped memory for tpu_custom_call.1']
    #allocation40 [shape = 'u8[512]{0}', space=vmem, size = 0x400, scoped, tag = 'input window, operand 33, single buffered']
    #allocation41 [shape = 'u8[8192]{0}', space=vmem, size = 0x2000, scoped, tag = 'input window, operand 34, single buffered']
    #allocation42 [shape = 's32[1]{0}', space=sflag, size = 0x4, scoped, tag = 'scoped memory for tpu_custom_call.1']
    #allocation43 [shape = 'u8[512]{0}', space=vmem, size = 0x400, scoped, tag = 'input window, operand 35, single buffered']
    #allocation44 [shape = 'u8[512]{0}', space=vmem, size = 0x400, scoped, tag = 'input window, operand 36, single buffered']
    #allocation45 [shape = 's32[1]{0}', space=sflag, size = 0x4, scoped, tag = 'scoped memory for tpu_custom_call.1']
    #allocation46 [shape = 'u8[512]{0}', space=vmem, size = 0x400, scoped, tag = 'input window, operand 37, single buffered']
    #allocation47 [shape = 'u8[512]{0}', space=vmem, size = 0x400, scoped, tag = 'input window, operand 38, single buffered']
    #allocation48 [shape = 's32[1]{0}', space=sflag, size = 0x4, scoped, tag = 'scoped memory for tpu_custom_call.1']
    #allocation49 [shape = 'u8[512]{0}', space=vmem, size = 0x400, scoped, tag = 'input window, operand 39, single buffered']
    #allocation50 [shape = 'u8[512]{0}', space=vmem, size = 0x400, scoped, tag = 'input window, operand 42, single buffered']
    #allocation51 [shape = 's32[1]{0}', space=sflag, size = 0x4, scoped, tag = 'scoped memory for tpu_custom_call.1']
    #allocation52 [shape = 'u8[8192]{0}', space=vmem, size = 0x2000, scoped, tag = 'input window, operand 43, single buffered']
    #allocation53 [shape = 'u8[512]{0}', space=vmem, size = 0x400, scoped, tag = 'input window, operand 44, single buffered']
    #allocation54 [shape = 's32[1]{0}', space=sflag, size = 0x4, scoped, tag = 'scoped memory for tpu_custom_call.1']
    #allocation55 [shape = 'u8[512]{0}', space=vmem, size = 0x400, scoped, tag = 'input window, operand 46, single buffered']
    #allocation56 [shape = 'u8[8192]{0}', space=vmem, size = 0x2000, scoped, tag = 'input window, operand 47, single buffered']
    #allocation57 [shape = 's32[1]{0}', space=sflag, size = 0x4, scoped, tag = 'scoped memory for tpu_custom_call.1']
    #allocation58 [shape = 'u8[512]{0}', space=vmem, size = 0x400, scoped, tag = 'input window, operand 48, single buffered']
    #allocation59 [shape = 'u8[512]{0}', space=vmem, size = 0x400, scoped, tag = 'input window, operand 49, single buffered']
    #allocation60 [shape = 's32[1]{0}', space=sflag, size = 0x4, scoped, tag = 'scoped memory for tpu_custom_call.1']
    #allocation61 [shape = 'u8[512]{0}', space=vmem, size = 0x400, scoped, tag = 'input window, operand 50, single buffered']
    #allocation62 [shape = 'u8[512]{0}', space=vmem, size = 0x400, scoped, tag = 'input window, operand 51, single buffered']
    #allocation63 [shape = 's32[1]{0}', space=sflag, size = 0x4, scoped, tag = 'scoped memory for tpu_custom_call.1']
    #allocation64 [shape = 'u8[512]{0}', space=vmem, size = 0x400, scoped, tag = 'input window, operand 52, single buffered']
    #allocation65 [shape = 'u8[8192]{0}', space=vmem, size = 0x2000, scoped, tag = 'input window, operand 57, single buffered']
    #allocation66 [shape = 's32[1]{0}', space=sflag, size = 0x4, scoped, tag = 'scoped memory for tpu_custom_call.1']
    #allocation67 [shape = 'u8[512]{0}', space=vmem, size = 0x400, scoped, tag = 'input window, operand 60, single buffered']
    #allocation68 [shape = 'u8[8192]{0}', space=vmem, size = 0x2000, scoped, tag = 'output window, operand 0']
    %140 = vsyncpa [#allocation3], 0
    %141 = vsyncpa [#allocation6], 0
    %s142 = scalar_lea.sflag [#allocation6], 1
    %143 = vsyncpa %s142, 0
    %144 = vsyncpa [#allocation9], 0
    %145 = vsyncpa [#allocation12], 0
    %146 = vsyncpa [#allocation15], 0
    %147 = vsyncpa [#allocation18], 0
    %148 = vsyncpa [#allocation21], 0
    %149 = vsyncpa [#allocation24], 0
    %150 = vsyncpa [#allocation27], 0
    %151 = vsyncpa [#allocation30], 0
    %152 = vsyncpa [#allocation33], 0
    %153 = vsyncpa [#allocation36], 0
    %154 = vsyncpa [#allocation39], 0
    %155 = vsyncpa [#allocation42], 0
    %156 = vsyncpa [#allocation45], 0
    %157 = vsyncpa [#allocation48], 0
    %158 = vsyncpa [#allocation51], 0
    %159 = vsyncpa [#allocation54], 0
    %160 = vsyncpa [#allocation57], 0
    %161 = vsyncpa [#allocation60], 0
    %162 = vsyncpa [#allocation63], 0
    %163 = vsyncpa [#allocation66], 0
    %164 = vsyncpa [#allocation4], 0
    %s165 = scalar_lea.sflag [#allocation4], 1
    %166 = vsyncpa %s165, 0
    loop: start=0, step=1, limit=4
    $region2: #{tpu_custom_call.1} parent=1 // loop_pre_header
      _
    $region3: #{tpu_custom_call.1} parent=1 // loop_header
      %s168 = sphi 0, %s172
      %p169 = scmp.ge.s32.totalorder %s168, 4
      %s176 = sphi 0, %s176
      %s178 = sphi 0, %s176
      %s179 = sphi 0, %s178
      %s193 = sphi 0, %s179
      %s199 = sphi 0, %s201
      %s202 = sphi 0, %s199
      %s203 = sphi 0, %s202
      %s219 = sphi 0, %s203
      %s225 = sphi 0, %s227
      %s228 = sphi 0, %s225
      %s229 = sphi 0, %s228
      %s245 = sphi 0, %s229
      %s249 = sphi 0, %s249
      %s251 = sphi 0, %s249
      %s252 = sphi 0, %s251
      %s266 = sphi 0, %s252
      %s270 = sphi 0, %s270
      %s272 = sphi 0, %s270
      %s273 = sphi 0, %s272
      %s287 = sphi 0, %s273
      %s291 = sphi 0, %s291
      %s293 = sphi 0, %s291
      %s294 = sphi 0, %s293
      %s308 = sphi 0, %s294
      %s312 = sphi 0, %s312
      %s314 = sphi 0, %s312
      %s315 = sphi 0, %s314
      %s329 = sphi 0, %s315
      %s333 = sphi 0, %s333
      %s335 = sphi 0, %s333
      %s336 = sphi 0, %s335
      %s350 = sphi 0, %s336
      %s354 = sphi 0, %s354
      %s356 = sphi 0, %s354
      %s357 = sphi 0, %s356
      %s371 = sphi 0, %s357
      %s375 = sphi 0, %s375
      %s377 = sphi 0, %s375
      %s378 = sphi 0, %s377
      %s392 = sphi 0, %s378
      %s396 = sphi 0, %s396
      %s398 = sphi 0, %s396
      %s399 = sphi 0, %s398
      %s413 = sphi 0, %s399
      %s417 = sphi 0, %s417
      %s419 = sphi 0, %s417
      %s420 = sphi 0, %s419
      %s434 = sphi 0, %s420
      %s438 = sphi 0, %s438
      %s440 = sphi 0, %s438
      %s441 = sphi 0, %s440
      %s455 = sphi 0, %s441
      %s459 = sphi 0, %s459
      %s461 = sphi 0, %s459
      %s462 = sphi 0, %s461
      %s476 = sphi 0, %s462
      %s480 = sphi 0, %s480
      %s482 = sphi 0, %s480
      %s483 = sphi 0, %s482
      %s497 = sphi 0, %s483
      %s501 = sphi 0, %s501
      %s503 = sphi 0, %s501
      %s504 = sphi 0, %s503
      %s518 = sphi 0, %s504
      %s522 = sphi 0, %s522
      %s524 = sphi 0, %s522
      %s525 = sphi 0, %s524
      %s539 = sphi 0, %s525
      %s543 = sphi 0, %s543
      %s545 = sphi 0, %s543
      %s546 = sphi 0, %s545
      %s560 = sphi 0, %s546
      %s564 = sphi 0, %s564
      %s566 = sphi 0, %s564
      %s567 = sphi 0, %s566
      %s581 = sphi 0, %s567
      %s585 = sphi 0, %s585
      %s587 = sphi 0, %s585
      %s588 = sphi 0, %s587
      %s602 = sphi 0, %s588
      %s606 = sphi 0, %s606
      %s608 = sphi 0, %s606
      %s609 = sphi 0, %s608
      %s623 = sphi 0, %s609
      %s627 = sphi 0, %s627
      %s629 = sphi 0, %s627
      %s630 = sphi 0, %s629
      %s644 = sphi 0, %s630
      %s648 = sphi 0, %s648
      %s650 = sphi 0, %s648
      %s651 = sphi 0, %s650
      %s665 = sphi 0, %s651
      %s669 = sphi 0, %s669
      %s671 = sphi 0, %s669
      %s672 = sphi 0, %s671
      %s686 = sphi 0, %s672
      %s690 = sphi 0, %s690
      %s692 = sphi 0, %s690
      %s693 = sphi 0, %s692
      %s707 = sphi 0, %s693
      %s711 = sphi 0, %s711
      %s713 = sphi 0, %s711
      %s714 = sphi 0, %s713
      %s728 = sphi 0, %s714
      %s732 = sphi 0, %s732
      %s734 = sphi 0, %s732
      %s735 = sphi 0, %s734
      %s749 = sphi 0, %s735
      %s753 = sphi 0, %s753
      %s755 = sphi 0, %s753
      %s756 = sphi 0, %s755
      %s770 = sphi 0, %s756
      %s774 = sphi 0, %s774
      %s776 = sphi 0, %s774
      %s777 = sphi 0, %s776
      %s791 = sphi 0, %s777
      %s795 = sphi 0, %s795
      %s797 = sphi 0, %s795
      %s798 = sphi 0, %s797
      %s812 = sphi 0, %s798
      %s816 = sphi 0, %s816
      %s818 = sphi 0, %s816
      %s819 = sphi 0, %s818
      %s833 = sphi 0, %s819
      %s837 = sphi 0, %s837
      %s839 = sphi 0, %s837
      %s840 = sphi 0, %s839
      %s854 = sphi 0, %s840
      %s858 = sphi 0, %s858
      %s860 = sphi 0, %s858
      %s861 = sphi 0, %s860
      %s875 = sphi 0, %s861
      %s879 = sphi 0, %s879
      %s881 = sphi 0, %s879
      %s882 = sphi 0, %s881
      %s896 = sphi 0, %s882
      %s900 = sphi 0, %s900
      %s902 = sphi 0, %s900
      %s903 = sphi 0, %s902
      %s917 = sphi 0, %s903
      %s921 = sphi 0, %s921
      %s923 = sphi 0, %s921
      %s924 = sphi 0, %s923
      %s938 = sphi 0, %s924
      %s942 = sphi 0, %s942
      %s944 = sphi 0, %s942
      %s945 = sphi 0, %s944
      %s959 = sphi 0, %s945
      %s963 = sphi 0, %s963
      %s965 = sphi 0, %s963
      %s966 = sphi 0, %s965
      %s980 = sphi 0, %s966
      %s984 = sphi 0, %s984
      %s986 = sphi 0, %s984
      %s987 = sphi 0, %s986
      %s1001 = sphi 0, %s987
      %s1005 = sphi 0, %s1005
      %s1007 = sphi 0, %s1005
      %s1008 = sphi 0, %s1007
      %s1022 = sphi 0, %s1008
      %s1026 = sphi 0, %s1026
      %s1028 = sphi 0, %s1026
      %s1029 = sphi 0, %s1028
      %s1043 = sphi 0, %s1029
      %s1047 = sphi 0, %s1047
      %s1049 = sphi 0, %s1047
      %s1050 = sphi 0, %s1049
      %s1064 = sphi 0, %s1050
      %s1068 = sphi 0, %s1068
      %s1070 = sphi 0, %s1068
      %s1071 = sphi 0, %s1070
      %s1085 = sphi 0, %s1071
      %s1089 = sphi 0, %s1089
      %s1091 = sphi 0, %s1089
      %s1092 = sphi 0, %s1091
      %s1106 = sphi 0, %s1092
      %s1110 = sphi 0, %s1110
      %s1112 = sphi 0, %s1110
      %s1113 = sphi 0, %s1112
      %s1127 = sphi 0, %s1113
      %s1131 = sphi 0, %s1131
      %s1133 = sphi 0, %s1131
      %s1134 = sphi 0, %s1133
      %s1148 = sphi 0, %s1134
      %s1152 = sphi 0, %s1152
      %s1154 = sphi 0, %s1152
      %s1155 = sphi 0, %s1154
      %s1169 = sphi 0, %s1155
      %s1173 = sphi 0, %s1173
      %s1175 = sphi 0, %s1173
      %s1176 = sphi 0, %s1175
      %s1190 = sphi 0, %s1176
      %s1194 = sphi 0, %s1194
      %s1196 = sphi 0, %s1194
      %s1197 = sphi 0, %s1196
      %s1211 = sphi 0, %s1197
      %s1215 = sphi 0, %s1215
      %s1217 = sphi 0, %s1215
      %s1218 = sphi 0, %s1217
      %s1232 = sphi 0, %s1218
      %s1236 = sphi 0, %s1236
      %s1238 = sphi 0, %s1236
      %s1239 = sphi 0, %s1238
      %s1253 = sphi 0, %s1239
      %s1257 = sphi 0, %s1257
      %s1259 = sphi 0, %s1257
      %s1260 = sphi 0, %s1259
      %s1274 = sphi 0, %s1260
      %s1278 = sphi 0, %s1278
      %s1280 = sphi 0, %s1278
      %s1281 = sphi 0, %s1280
      %s1295 = sphi 0, %s1281
      %s1299 = sphi 0, %s1299
      %s1301 = sphi 0, %s1299
      %s1302 = sphi 0, %s1301
      %s1316 = sphi 0, %s1302
      %s1320 = sphi 0, %s1320
      %s1322 = sphi 0, %s1320
      %s1323 = sphi 0, %s1322
      %s1337 = sphi 0, %s1323
      %s1341 = sphi 0, %s1341
      %s1343 = sphi 0, %s1341
      %s1344 = sphi 0, %s1343
      %s1358 = sphi 0, %s1344
      %s1362 = sphi 0, %s1362
      %s1364 = sphi 0, %s1362
      %s1365 = sphi 0, %s1364
      %s1379 = sphi 0, %s1365
      %s1383 = sphi 0, %s1383
      %s1385 = sphi 0, %s1383
      %s1386 = sphi 0, %s1385
      %s1400 = sphi 0, %s1386
      %s1404 = sphi 0, %s1404
      %s1406 = sphi 0, %s1404
      %s1407 = sphi 0, %s1406
      %s1421 = sphi 0, %s1407
      %s1425 = sphi 0, %s1425
      %s1427 = sphi 0, %s1425
      %s1428 = sphi 0, %s1427
      %s1442 = sphi 0, %s1428
      %s1446 = sphi 0, %s1446
      %s1448 = sphi 0, %s1446
      %s1449 = sphi 0, %s1448
      %s1463 = sphi 0, %s1449
      %s1467 = sphi 0, %s1467
      %s1469 = sphi 0, %s1467
      %s1470 = sphi 0, %s1469
      %s1484 = sphi 0, %s1470
      %s1488 = sphi 0, %s1488
      %s1490 = sphi 0, %s1488
      %s1491 = sphi 0, %s1490
      %s1505 = sphi 0, %s1491
      %s1509 = sphi 0, %s1509
      %s1511 = sphi 0, %s1509
      %s1512 = sphi 0, %s1511
      %s1526 = sphi 0, %s1512
      %s1530 = sphi 0, %s1530
      %s1532 = sphi 0, %s1530
      %s1533 = sphi 0, %s1532
      %s1547 = sphi 0, %s1533
      %s1551 = sphi 0, %s1551
      %s1553 = sphi 0, %s1551
      %s1554 = sphi 0, %s1553
      %s1568 = sphi 0, %s1554
      %s1572 = sphi 0, %s1572
      %s1574 = sphi 0, %s1572
      %s1575 = sphi 0, %s1574
      %s1589 = sphi 0, %s1575
      %s1595 = sphi 0, %s1597
      %s1598 = sphi 0, %s1595
      %s1599 = sphi 0, %s1598
      %s1615 = sphi 0, %s1599
    $region4: #{tpu_custom_call.1} parent=1 // loop_header_branch
      %171 = sbr.rel (%p169) target = $region8
    $region5: #{tpu_custom_call.1} parent=1 // loop_body
      %s173 = ssub.s32 %s168, 1
      %s174 = ssub.s32 %s168, 2
      %s175 = sadd.s32 %s168, 1
      %s177 = sadd.s32 %s176, 1
      %p180 = scmp.eq.s32.totalorder %s168, 1
      %p181 = scmp.ne.s32.totalorder %s176, %s178
      %p182 = scmp.eq.s32.totalorder %s168, 0
      %p183 = por %p181, %p182
      %p184 = scmp.ne.s32.totalorder %s176, %s178
      %p185 = scmp.eq.s32.totalorder %s173, 1
      %p186 = por %p184, %p185
      %p187 = scmp.ne.s32.totalorder %s178, %s179
      %p188 = scmp.eq.s32.totalorder %s173, 0
      %p189 = por %p187, %p188
      %p190 = scmp.ne.s32.totalorder %s178, %s179
      %p191 = scmp.eq.s32.totalorder %s174, 1
      %p192 = por %p190, %p191
      %p194 = scmp.ne.s32.totalorder %s179, %s193
      %p195 = scmp.eq.s32.totalorder %s174, 0
      %p196 = por %p194, %p195
      %s197 = ssub.s32 %s168, %s175
      %p198 = scmp.eq.s32.totalorder %s197, 0
      %s200 = sadd.s32 %s199, 1
      %s201 = scalar_select %p198, %s199, %s200
      %p204 = pneg %p198
      %p205 = scmp.eq.s32.totalorder %s168, 1
      %p206 = por %p204, %p205
      %p207 = scmp.ne.s32.totalorder %s199, %s202
      %p208 = scmp.eq.s32.totalorder %s168, 0
      %p209 = por %p207, %p208
      %p210 = scmp.ne.s32.totalorder %s199, %s202
      %p211 = scmp.eq.s32.totalorder %s173, 1
      %p212 = por %p210, %p211
      %p213 = scmp.ne.s32.totalorder %s202, %s203
      %p214 = scmp.eq.s32.totalorder %s173, 0
      %p215 = por %p213, %p214
      %p216 = scmp.ne.s32.totalorder %s202, %s203
      %p217 = scmp.eq.s32.totalorder %s174, 1
      %p218 = por %p216, %p217
      %p220 = scmp.ne.s32.totalorder %s203, %s219
      %p221 = scmp.eq.s32.totalorder %s174, 0
      %p222 = por %p220, %p221
      %s223 = ssub.s32 %s168, %s175
      %p224 = scmp.eq.s32.totalorder %s223, 0
      %s226 = sadd.s32 %s225, 1
      %s227 = scalar_select %p224, %s225, %s226
      %p230 = pneg %p224
      %p231 = scmp.eq.s32.totalorder %s168, 1
      %p232 = por %p230, %p231
      %p233 = scmp.ne.s32.totalorder %s225, %s228
      %p234 = scmp.eq.s32.totalorder %s168, 0
      %p235 = por %p233, %p234
      %p236 = scmp.ne.s32.totalorder %s225, %s228
      %p237 = scmp.eq.s32.totalorder %s173, 1
      %p238 = por %p236, %p237
      %p239 = scmp.ne.s32.totalorder %s228, %s229
      %p240 = scmp.eq.s32.totalorder %s173, 0
      %p241 = por %p239, %p240
      %p242 = scmp.ne.s32.totalorder %s228, %s229
      %p243 = scmp.eq.s32.totalorder %s174, 1
      %p244 = por %p242, %p243
      %p246 = scmp.ne.s32.totalorder %s229, %s245
      %p247 = scmp.eq.s32.totalorder %s174, 0
      %p248 = por %p246, %p247
      %s250 = sadd.s32 %s249, 1
      %p253 = scmp.eq.s32.totalorder %s168, 1
      %p254 = scmp.ne.s32.totalorder %s249, %s251
      %p255 = scmp.eq.s32.totalorder %s168, 0
      %p256 = por %p254, %p255
      %p257 = scmp.ne.s32.totalorder %s249, %s251
      %p258 = scmp.eq.s32.totalorder %s173, 1
      %p259 = por %p257, %p258
      %p260 = scmp.ne.s32.totalorder %s251, %s252
      %p261 = scmp.eq.s32.totalorder %s173, 0
      %p262 = por %p260, %p261
      %p263 = scmp.ne.s32.totalorder %s251, %s252
      %p264 = scmp.eq.s32.totalorder %s174, 1
      %p265 = por %p263, %p264
      %p267 = scmp.ne.s32.totalorder %s252, %s266
      %p268 = scmp.eq.s32.totalorder %s174, 0
      %p269 = por %p267, %p268
      %s271 = sadd.s32 %s270, 1
      %p274 = scmp.eq.s32.totalorder %s168, 1
      %p275 = scmp.ne.s32.totalorder %s270, %s272
      %p276 = scmp.eq.s32.totalorder %s168, 0
      %p277 = por %p275, %p276
      %p278 = scmp.ne.s32.totalorder %s270, %s272
      %p279 = scmp.eq.s32.totalorder %s173, 1
      %p280 = por %p278, %p279
      %p281 = scmp.ne.s32.totalorder %s272, %s273
      %p282 = scmp.eq.s32.totalorder %s173, 0
      %p283 = por %p281, %p282
      %p284 = scmp.ne.s32.totalorder %s272, %s273
      %p285 = scmp.eq.s32.totalorder %s174, 1
      %p286 = por %p284, %p285
      %p288 = scmp.ne.s32.totalorder %s273, %s287
      %p289 = scmp.eq.s32.totalorder %s174, 0
      %p290 = por %p288, %p289
      %s292 = sadd.s32 %s291, 1
      %p295 = scmp.eq.s32.totalorder %s168, 1
      %p296 = scmp.ne.s32.totalorder %s291, %s293
      %p297 = scmp.eq.s32.totalorder %s168, 0
      %p298 = por %p296, %p297
      %p299 = scmp.ne.s32.totalorder %s291, %s293
      %p300 = scmp.eq.s32.totalorder %s173, 1
      %p301 = por %p299, %p300
      %p302 = scmp.ne.s32.totalorder %s293, %s294
      %p303 = scmp.eq.s32.totalorder %s173, 0
      %p304 = por %p302, %p303
      %p305 = scmp.ne.s32.totalorder %s293, %s294
      %p306 = scmp.eq.s32.totalorder %s174, 1
      %p307 = por %p305, %p306
      %p309 = scmp.ne.s32.totalorder %s294, %s308
      %p310 = scmp.eq.s32.totalorder %s174, 0
      %p311 = por %p309, %p310
      %s313 = sadd.s32 %s312, 1
      %p316 = scmp.eq.s32.totalorder %s168, 1
      %p317 = scmp.ne.s32.totalorder %s312, %s314
      %p318 = scmp.eq.s32.totalorder %s168, 0
      %p319 = por %p317, %p318
      %p320 = scmp.ne.s32.totalorder %s312, %s314
      %p321 = scmp.eq.s32.totalorder %s173, 1
      %p322 = por %p320, %p321
      %p323 = scmp.ne.s32.totalorder %s314, %s315
      %p324 = scmp.eq.s32.totalorder %s173, 0
      %p325 = por %p323, %p324
      %p326 = scmp.ne.s32.totalorder %s314, %s315
      %p327 = scmp.eq.s32.totalorder %s174, 1
      %p328 = por %p326, %p327
      %p330 = scmp.ne.s32.totalorder %s315, %s329
      %p331 = scmp.eq.s32.totalorder %s174, 0
      %p332 = por %p330, %p331
      %s334 = sadd.s32 %s333, 1
      %p337 = scmp.eq.s32.totalorder %s168, 1
      %p338 = scmp.ne.s32.totalorder %s333, %s335
      %p339 = scmp.eq.s32.totalorder %s168, 0
      %p340 = por %p338, %p339
      %p341 = scmp.ne.s32.totalorder %s333, %s335
      %p342 = scmp.eq.s32.totalorder %s173, 1
      %p343 = por %p341, %p342
      %p344 = scmp.ne.s32.totalorder %s335, %s336
      %p345 = scmp.eq.s32.totalorder %s173, 0
      %p346 = por %p344, %p345
      %p347 = scmp.ne.s32.totalorder %s335, %s336
      %p348 = scmp.eq.s32.totalorder %s174, 1
      %p349 = por %p347, %p348
      %p351 = scmp.ne.s32.totalorder %s336, %s350
      %p352 = scmp.eq.s32.totalorder %s174, 0
      %p353 = por %p351, %p352
      %s355 = sadd.s32 %s354, 1
      %p358 = scmp.eq.s32.totalorder %s168, 1
      %p359 = scmp.ne.s32.totalorder %s354, %s356
      %p360 = scmp.eq.s32.totalorder %s168, 0
      %p361 = por %p359, %p360
      %p362 = scmp.ne.s32.totalorder %s354, %s356
      %p363 = scmp.eq.s32.totalorder %s173, 1
      %p364 = por %p362, %p363
      %p365 = scmp.ne.s32.totalorder %s356, %s357
      %p366 = scmp.eq.s32.totalorder %s173, 0
      %p367 = por %p365, %p366
      %p368 = scmp.ne.s32.totalorder %s356, %s357
      %p369 = scmp.eq.s32.totalorder %s174, 1
      %p370 = por %p368, %p369
      %p372 = scmp.ne.s32.totalorder %s357, %s371
      %p373 = scmp.eq.s32.totalorder %s174, 0
      %p374 = por %p372, %p373
      %s376 = sadd.s32 %s375, 1
      %p379 = scmp.eq.s32.totalorder %s168, 1
      %p380 = scmp.ne.s32.totalorder %s375, %s377
      %p381 = scmp.eq.s32.totalorder %s168, 0
      %p382 = por %p380, %p381
      %p383 = scmp.ne.s32.totalorder %s375, %s377
      %p384 = scmp.eq.s32.totalorder %s173, 1
      %p385 = por %p383, %p384
      %p386 = scmp.ne.s32.totalorder %s377, %s378
      %p387 = scmp.eq.s32.totalorder %s173, 0
      %p388 = por %p386, %p387
      %p389 = scmp.ne.s32.totalorder %s377, %s378
      %p390 = scmp.eq.s32.totalorder %s174, 1
      %p391 = por %p389, %p390
      %p393 = scmp.ne.s32.totalorder %s378, %s392
      %p394 = scmp.eq.s32.totalorder %s174, 0
      %p395 = por %p393, %p394
      %s397 = sadd.s32 %s396, 1
      %p400 = scmp.eq.s32.totalorder %s168, 1
      %p401 = scmp.ne.s32.totalorder %s396, %s398
      %p402 = scmp.eq.s32.totalorder %s168, 0
      %p403 = por %p401, %p402
      %p404 = scmp.ne.s32.totalorder %s396, %s398
      %p405 = scmp.eq.s32.totalorder %s173, 1
      %p406 = por %p404, %p405
      %p407 = scmp.ne.s32.totalorder %s398, %s399
      %p408 = scmp.eq.s32.totalorder %s173, 0
      %p409 = por %p407, %p408
      %p410 = scmp.ne.s32.totalorder %s398, %s399
      %p411 = scmp.eq.s32.totalorder %s174, 1
      %p412 = por %p410, %p411
      %p414 = scmp.ne.s32.totalorder %s399, %s413
      %p415 = scmp.eq.s32.totalorder %s174, 0
      %p416 = por %p414, %p415
      %s418 = sadd.s32 %s417, 1
      %p421 = scmp.eq.s32.totalorder %s168, 1
      %p422 = scmp.ne.s32.totalorder %s417, %s419
      %p423 = scmp.eq.s32.totalorder %s168, 0
      %p424 = por %p422, %p423
      %p425 = scmp.ne.s32.totalorder %s417, %s419
      %p426 = scmp.eq.s32.totalorder %s173, 1
      %p427 = por %p425, %p426
      %p428 = scmp.ne.s32.totalorder %s419, %s420
      %p429 = scmp.eq.s32.totalorder %s173, 0
      %p430 = por %p428, %p429
      %p431 = scmp.ne.s32.totalorder %s419, %s420
      %p432 = scmp.eq.s32.totalorder %s174, 1
      %p433 = por %p431, %p432
      %p435 = scmp.ne.s32.totalorder %s420, %s434
      %p436 = scmp.eq.s32.totalorder %s174, 0
      %p437 = por %p435, %p436
      %s439 = sadd.s32 %s438, 1
      %p442 = scmp.eq.s32.totalorder %s168, 1
      %p443 = scmp.ne.s32.totalorder %s438, %s440
      %p444 = scmp.eq.s32.totalorder %s168, 0
      %p445 = por %p443, %p444
      %p446 = scmp.ne.s32.totalorder %s438, %s440
      %p447 = scmp.eq.s32.totalorder %s173, 1
      %p448 = por %p446, %p447
      %p449 = scmp.ne.s32.totalorder %s440, %s441
      %p450 = scmp.eq.s32.totalorder %s173, 0
      %p451 = por %p449, %p450
      %p452 = scmp.ne.s32.totalorder %s440, %s441
      %p453 = scmp.eq.s32.totalorder %s174, 1
      %p454 = por %p452, %p453
      %p456 = scmp.ne.s32.totalorder %s441, %s455
      %p457 = scmp.eq.s32.totalorder %s174, 0
      %p458 = por %p456, %p457
      %s460 = sadd.s32 %s459, 1
      %p463 = scmp.eq.s32.totalorder %s168, 1
      %p464 = scmp.ne.s32.totalorder %s459, %s461
      %p465 = scmp.eq.s32.totalorder %s168, 0
      %p466 = por %p464, %p465
      %p467 = scmp.ne.s32.totalorder %s459, %s461
      %p468 = scmp.eq.s32.totalorder %s173, 1
      %p469 = por %p467, %p468
      %p470 = scmp.ne.s32.totalorder %s461, %s462
      %p471 = scmp.eq.s32.totalorder %s173, 0
      %p472 = por %p470, %p471
      %p473 = scmp.ne.s32.totalorder %s461, %s462
      %p474 = scmp.eq.s32.totalorder %s174, 1
      %p475 = por %p473, %p474
      %p477 = scmp.ne.s32.totalorder %s462, %s476
      %p478 = scmp.eq.s32.totalorder %s174, 0
      %p479 = por %p477, %p478
      %s481 = sadd.s32 %s480, 1
      %p484 = scmp.eq.s32.totalorder %s168, 1
      %p485 = scmp.ne.s32.totalorder %s480, %s482
      %p486 = scmp.eq.s32.totalorder %s168, 0
      %p487 = por %p485, %p486
      %p488 = scmp.ne.s32.totalorder %s480, %s482
      %p489 = scmp.eq.s32.totalorder %s173, 1
      %p490 = por %p488, %p489
      %p491 = scmp.ne.s32.totalorder %s482, %s483
      %p492 = scmp.eq.s32.totalorder %s173, 0
      %p493 = por %p491, %p492
      %p494 = scmp.ne.s32.totalorder %s482, %s483
      %p495 = scmp.eq.s32.totalorder %s174, 1
      %p496 = por %p494, %p495
      %p498 = scmp.ne.s32.totalorder %s483, %s497
      %p499 = scmp.eq.s32.totalorder %s174, 0
      %p500 = por %p498, %p499
      %s502 = sadd.s32 %s501, 1
      %p505 = scmp.eq.s32.totalorder %s168, 1
      %p506 = scmp.ne.s32.totalorder %s501, %s503
      %p507 = scmp.eq.s32.totalorder %s168, 0
      %p508 = por %p506, %p507
      %p509 = scmp.ne.s32.totalorder %s501, %s503
      %p510 = scmp.eq.s32.totalorder %s173, 1
      %p511 = por %p509, %p510
      %p512 = scmp.ne.s32.totalorder %s503, %s504
      %p513 = scmp.eq.s32.totalorder %s173, 0
      %p514 = por %p512, %p513
      %p515 = scmp.ne.s32.totalorder %s503, %s504
      %p516 = scmp.eq.s32.totalorder %s174, 1
      %p517 = por %p515, %p516
      %p519 = scmp.ne.s32.totalorder %s504, %s518
      %p520 = scmp.eq.s32.totalorder %s174, 0
      %p521 = por %p519, %p520
      %s523 = sadd.s32 %s522, 1
      %p526 = scmp.eq.s32.totalorder %s168, 1
      %p527 = scmp.ne.s32.totalorder %s522, %s524
      %p528 = scmp.eq.s32.totalorder %s168, 0
      %p529 = por %p527, %p528
      %p530 = scmp.ne.s32.totalorder %s522, %s524
      %p531 = scmp.eq.s32.totalorder %s173, 1
      %p532 = por %p530, %p531
      %p533 = scmp.ne.s32.totalorder %s524, %s525
      %p534 = scmp.eq.s32.totalorder %s173, 0
      %p535 = por %p533, %p534
      %p536 = scmp.ne.s32.totalorder %s524, %s525
      %p537 = scmp.eq.s32.totalorder %s174, 1
      %p538 = por %p536, %p537
      %p540 = scmp.ne.s32.totalorder %s525, %s539
      %p541 = scmp.eq.s32.totalorder %s174, 0
      %p542 = por %p540, %p541
      %s544 = sadd.s32 %s543, 1
      %p547 = scmp.eq.s32.totalorder %s168, 1
      %p548 = scmp.ne.s32.totalorder %s543, %s545
      %p549 = scmp.eq.s32.totalorder %s168, 0
      %p550 = por %p548, %p549
      %p551 = scmp.ne.s32.totalorder %s543, %s545
      %p552 = scmp.eq.s32.totalorder %s173, 1
      %p553 = por %p551, %p552
      %p554 = scmp.ne.s32.totalorder %s545, %s546
      %p555 = scmp.eq.s32.totalorder %s173, 0
      %p556 = por %p554, %p555
      %p557 = scmp.ne.s32.totalorder %s545, %s546
      %p558 = scmp.eq.s32.totalorder %s174, 1
      %p559 = por %p557, %p558
      %p561 = scmp.ne.s32.totalorder %s546, %s560
      %p562 = scmp.eq.s32.totalorder %s174, 0
      %p563 = por %p561, %p562
      %s565 = sadd.s32 %s564, 1
      %p568 = scmp.eq.s32.totalorder %s168, 1
      %p569 = scmp.ne.s32.totalorder %s564, %s566
      %p570 = scmp.eq.s32.totalorder %s168, 0
      %p571 = por %p569, %p570
      %p572 = scmp.ne.s32.totalorder %s564, %s566
      %p573 = scmp.eq.s32.totalorder %s173, 1
      %p574 = por %p572, %p573
      %p575 = scmp.ne.s32.totalorder %s566, %s567
      %p576 = scmp.eq.s32.totalorder %s173, 0
      %p577 = por %p575, %p576
      %p578 = scmp.ne.s32.totalorder %s566, %s567
      %p579 = scmp.eq.s32.totalorder %s174, 1
      %p580 = por %p578, %p579
      %p582 = scmp.ne.s32.totalorder %s567, %s581
      %p583 = scmp.eq.s32.totalorder %s174, 0
      %p584 = por %p582, %p583
      %s586 = sadd.s32 %s585, 1
      %p589 = scmp.eq.s32.totalorder %s168, 1
      %p590 = scmp.ne.s32.totalorder %s585, %s587
      %p591 = scmp.eq.s32.totalorder %s168, 0
      %p592 = por %p590, %p591
      %p593 = scmp.ne.s32.totalorder %s585, %s587
      %p594 = scmp.eq.s32.totalorder %s173, 1
      %p595 = por %p593, %p594
      %p596 = scmp.ne.s32.totalorder %s587, %s588
      %p597 = scmp.eq.s32.totalorder %s173, 0
      %p598 = por %p596, %p597
      %p599 = scmp.ne.s32.totalorder %s587, %s588
      %p600 = scmp.eq.s32.totalorder %s174, 1
      %p601 = por %p599, %p600
      %p603 = scmp.ne.s32.totalorder %s588, %s602
      %p604 = scmp.eq.s32.totalorder %s174, 0
      %p605 = por %p603, %p604
      %s607 = sadd.s32 %s606, 1
      %p610 = scmp.eq.s32.totalorder %s168, 1
      %p611 = scmp.ne.s32.totalorder %s606, %s608
      %p612 = scmp.eq.s32.totalorder %s168, 0
      %p613 = por %p611, %p612
      %p614 = scmp.ne.s32.totalorder %s606, %s608
      %p615 = scmp.eq.s32.totalorder %s173, 1
      %p616 = por %p614, %p615
      %p617 = scmp.ne.s32.totalorder %s608, %s609
      %p618 = scmp.eq.s32.totalorder %s173, 0
      %p619 = por %p617, %p618
      %p620 = scmp.ne.s32.totalorder %s608, %s609
      %p621 = scmp.eq.s32.totalorder %s174, 1
      %p622 = por %p620, %p621
      %p624 = scmp.ne.s32.totalorder %s609, %s623
      %p625 = scmp.eq.s32.totalorder %s174, 0
      %p626 = por %p624, %p625
      %s628 = sadd.s32 %s627, 1
      %p631 = scmp.eq.s32.totalorder %s168, 1
      %p632 = scmp.ne.s32.totalorder %s627, %s629
      %p633 = scmp.eq.s32.totalorder %s168, 0
      %p634 = por %p632, %p633
      %p635 = scmp.ne.s32.totalorder %s627, %s629
      %p636 = scmp.eq.s32.totalorder %s173, 1
      %p637 = por %p635, %p636
      %p638 = scmp.ne.s32.totalorder %s629, %s630
      %p639 = scmp.eq.s32.totalorder %s173, 0
      %p640 = por %p638, %p639
      %p641 = scmp.ne.s32.totalorder %s629, %s630
      %p642 = scmp.eq.s32.totalorder %s174, 1
      %p643 = por %p641, %p642
      %p645 = scmp.ne.s32.totalorder %s630, %s644
      %p646 = scmp.eq.s32.totalorder %s174, 0
      %p647 = por %p645, %p646
      %s649 = sadd.s32 %s648, 1
      %p652 = scmp.eq.s32.totalorder %s168, 1
      %p653 = scmp.ne.s32.totalorder %s648, %s650
      %p654 = scmp.eq.s32.totalorder %s168, 0
      %p655 = por %p653, %p654
      %p656 = scmp.ne.s32.totalorder %s648, %s650
      %p657 = scmp.eq.s32.totalorder %s173, 1
      %p658 = por %p656, %p657
      %p659 = scmp.ne.s32.totalorder %s650, %s651
      %p660 = scmp.eq.s32.totalorder %s173, 0
      %p661 = por %p659, %p660
      %p662 = scmp.ne.s32.totalorder %s650, %s651
      %p663 = scmp.eq.s32.totalorder %s174, 1
      %p664 = por %p662, %p663
      %p666 = scmp.ne.s32.totalorder %s651, %s665
      %p667 = scmp.eq.s32.totalorder %s174, 0
      %p668 = por %p666, %p667
      %s670 = sadd.s32 %s669, 1
      %p673 = scmp.eq.s32.totalorder %s168, 1
      %p674 = scmp.ne.s32.totalorder %s669, %s671
      %p675 = scmp.eq.s32.totalorder %s168, 0
      %p676 = por %p674, %p675
      %p677 = scmp.ne.s32.totalorder %s669, %s671
      %p678 = scmp.eq.s32.totalorder %s173, 1
      %p679 = por %p677, %p678
      %p680 = scmp.ne.s32.totalorder %s671, %s672
      %p681 = scmp.eq.s32.totalorder %s173, 0
      %p682 = por %p680, %p681
      %p683 = scmp.ne.s32.totalorder %s671, %s672
      %p684 = scmp.eq.s32.totalorder %s174, 1
      %p685 = por %p683, %p684
      %p687 = scmp.ne.s32.totalorder %s672, %s686
      %p688 = scmp.eq.s32.totalorder %s174, 0
      %p689 = por %p687, %p688
      %s691 = sadd.s32 %s690, 1
      %p694 = scmp.eq.s32.totalorder %s168, 1
      %p695 = scmp.ne.s32.totalorder %s690, %s692
      %p696 = scmp.eq.s32.totalorder %s168, 0
      %p697 = por %p695, %p696
      %p698 = scmp.ne.s32.totalorder %s690, %s692
      %p699 = scmp.eq.s32.totalorder %s173, 1
      %p700 = por %p698, %p699
      %p701 = scmp.ne.s32.totalorder %s692, %s693
      %p702 = scmp.eq.s32.totalorder %s173, 0
      %p703 = por %p701, %p702
      %p704 = scmp.ne.s32.totalorder %s692, %s693
      %p705 = scmp.eq.s32.totalorder %s174, 1
      %p706 = por %p704, %p705
      %p708 = scmp.ne.s32.totalorder %s693, %s707
      %p709 = scmp.eq.s32.totalorder %s174, 0
      %p710 = por %p708, %p709
      %s712 = sadd.s32 %s711, 1
      %p715 = scmp.eq.s32.totalorder %s168, 1
      %p716 = scmp.ne.s32.totalorder %s711, %s713
      %p717 = scmp.eq.s32.totalorder %s168, 0
      %p718 = por %p716, %p717
      %p719 = scmp.ne.s32.totalorder %s711, %s713
      %p720 = scmp.eq.s32.totalorder %s173, 1
      %p721 = por %p719, %p720
      %p722 = scmp.ne.s32.totalorder %s713, %s714
      %p723 = scmp.eq.s32.totalorder %s173, 0
      %p724 = por %p722, %p723
      %p725 = scmp.ne.s32.totalorder %s713, %s714
      %p726 = scmp.eq.s32.totalorder %s174, 1
      %p727 = por %p725, %p726
      %p729 = scmp.ne.s32.totalorder %s714, %s728
      %p730 = scmp.eq.s32.totalorder %s174, 0
      %p731 = por %p729, %p730
      %s733 = sadd.s32 %s732, 1
      %p736 = scmp.eq.s32.totalorder %s168, 1
      %p737 = scmp.ne.s32.totalorder %s732, %s734
      %p738 = scmp.eq.s32.totalorder %s168, 0
      %p739 = por %p737, %p738
      %p740 = scmp.ne.s32.totalorder %s732, %s734
      %p741 = scmp.eq.s32.totalorder %s173, 1
      %p742 = por %p740, %p741
      %p743 = scmp.ne.s32.totalorder %s734, %s735
      %p744 = scmp.eq.s32.totalorder %s173, 0
      %p745 = por %p743, %p744
      %p746 = scmp.ne.s32.totalorder %s734, %s735
      %p747 = scmp.eq.s32.totalorder %s174, 1
      %p748 = por %p746, %p747
      %p750 = scmp.ne.s32.totalorder %s735, %s749
      %p751 = scmp.eq.s32.totalorder %s174, 0
      %p752 = por %p750, %p751
      %s754 = sadd.s32 %s753, 1
      %p757 = scmp.eq.s32.totalorder %s168, 1
      %p758 = scmp.ne.s32.totalorder %s753, %s755
      %p759 = scmp.eq.s32.totalorder %s168, 0
      %p760 = por %p758, %p759
      %p761 = scmp.ne.s32.totalorder %s753, %s755
      %p762 = scmp.eq.s32.totalorder %s173, 1
      %p763 = por %p761, %p762
      %p764 = scmp.ne.s32.totalorder %s755, %s756
      %p765 = scmp.eq.s32.totalorder %s173, 0
      %p766 = por %p764, %p765
      %p767 = scmp.ne.s32.totalorder %s755, %s756
      %p768 = scmp.eq.s32.totalorder %s174, 1
      %p769 = por %p767, %p768
      %p771 = scmp.ne.s32.totalorder %s756, %s770
      %p772 = scmp.eq.s32.totalorder %s174, 0
      %p773 = por %p771, %p772
      %s775 = sadd.s32 %s774, 1
      %p778 = scmp.eq.s32.totalorder %s168, 1
      %p779 = scmp.ne.s32.totalorder %s774, %s776
      %p780 = scmp.eq.s32.totalorder %s168, 0
      %p781 = por %p779, %p780
      %p782 = scmp.ne.s32.totalorder %s774, %s776
      %p783 = scmp.eq.s32.totalorder %s173, 1
      %p784 = por %p782, %p783
      %p785 = scmp.ne.s32.totalorder %s776, %s777
      %p786 = scmp.eq.s32.totalorder %s173, 0
      %p787 = por %p785, %p786
      %p788 = scmp.ne.s32.totalorder %s776, %s777
      %p789 = scmp.eq.s32.totalorder %s174, 1
      %p790 = por %p788, %p789
      %p792 = scmp.ne.s32.totalorder %s777, %s791
      %p793 = scmp.eq.s32.totalorder %s174, 0
      %p794 = por %p792, %p793
      %s796 = sadd.s32 %s795, 1
      %p799 = scmp.eq.s32.totalorder %s168, 1
      %p800 = scmp.ne.s32.totalorder %s795, %s797
      %p801 = scmp.eq.s32.totalorder %s168, 0
      %p802 = por %p800, %p801
      %p803 = scmp.ne.s32.totalorder %s795, %s797
      %p804 = scmp.eq.s32.totalorder %s173, 1
      %p805 = por %p803, %p804
      %p806 = scmp.ne.s32.totalorder %s797, %s798
      %p807 = scmp.eq.s32.totalorder %s173, 0
      %p808 = por %p806, %p807
      %p809 = scmp.ne.s32.totalorder %s797, %s798
      %p810 = scmp.eq.s32.totalorder %s174, 1
      %p811 = por %p809, %p810
      %p813 = scmp.ne.s32.totalorder %s798, %s812
      %p814 = scmp.eq.s32.totalorder %s174, 0
      %p815 = por %p813, %p814
      %s817 = sadd.s32 %s816, 1
      %p820 = scmp.eq.s32.totalorder %s168, 1
      %p821 = scmp.ne.s32.totalorder %s816, %s818
      %p822 = scmp.eq.s32.totalorder %s168, 0
      %p823 = por %p821, %p822
      %p824 = scmp.ne.s32.totalorder %s816, %s818
      %p825 = scmp.eq.s32.totalorder %s173, 1
      %p826 = por %p824, %p825
      %p827 = scmp.ne.s32.totalorder %s818, %s819
      %p828 = scmp.eq.s32.totalorder %s173, 0
      %p829 = por %p827, %p828
      %p830 = scmp.ne.s32.totalorder %s818, %s819
      %p831 = scmp.eq.s32.totalorder %s174, 1
      %p832 = por %p830, %p831
      %p834 = scmp.ne.s32.totalorder %s819, %s833
      %p835 = scmp.eq.s32.totalorder %s174, 0
      %p836 = por %p834, %p835
      %s838 = sadd.s32 %s837, 1
      %p841 = scmp.eq.s32.totalorder %s168, 1
      %p842 = scmp.ne.s32.totalorder %s837, %s839
      %p843 = scmp.eq.s32.totalorder %s168, 0
      %p844 = por %p842, %p843
      %p845 = scmp.ne.s32.totalorder %s837, %s839
      %p846 = scmp.eq.s32.totalorder %s173, 1
      %p847 = por %p845, %p846
      %p848 = scmp.ne.s32.totalorder %s839, %s840
      %p849 = scmp.eq.s32.totalorder %s173, 0
      %p850 = por %p848, %p849
      %p851 = scmp.ne.s32.totalorder %s839, %s840
      %p852 = scmp.eq.s32.totalorder %s174, 1
      %p853 = por %p851, %p852
      %p855 = scmp.ne.s32.totalorder %s840, %s854
      %p856 = scmp.eq.s32.totalorder %s174, 0
      %p857 = por %p855, %p856
      %s859 = sadd.s32 %s858, 1
      %p862 = scmp.eq.s32.totalorder %s168, 1
      %p863 = scmp.ne.s32.totalorder %s858, %s860
      %p864 = scmp.eq.s32.totalorder %s168, 0
      %p865 = por %p863, %p864
      %p866 = scmp.ne.s32.totalorder %s858, %s860
      %p867 = scmp.eq.s32.totalorder %s173, 1
      %p868 = por %p866, %p867
      %p869 = scmp.ne.s32.totalorder %s860, %s861
      %p870 = scmp.eq.s32.totalorder %s173, 0
      %p871 = por %p869, %p870
      %p872 = scmp.ne.s32.totalorder %s860, %s861
      %p873 = scmp.eq.s32.totalorder %s174, 1
      %p874 = por %p872, %p873
      %p876 = scmp.ne.s32.totalorder %s861, %s875
      %p877 = scmp.eq.s32.totalorder %s174, 0
      %p878 = por %p876, %p877
      %s880 = sadd.s32 %s879, 1
      %p883 = scmp.eq.s32.totalorder %s168, 1
      %p884 = scmp.ne.s32.totalorder %s879, %s881
      %p885 = scmp.eq.s32.totalorder %s168, 0
      %p886 = por %p884, %p885
      %p887 = scmp.ne.s32.totalorder %s879, %s881
      %p888 = scmp.eq.s32.totalorder %s173, 1
      %p889 = por %p887, %p888
      %p890 = scmp.ne.s32.totalorder %s881, %s882
      %p891 = scmp.eq.s32.totalorder %s173, 0
      %p892 = por %p890, %p891
      %p893 = scmp.ne.s32.totalorder %s881, %s882
      %p894 = scmp.eq.s32.totalorder %s174, 1
      %p895 = por %p893, %p894
      %p897 = scmp.ne.s32.totalorder %s882, %s896
      %p898 = scmp.eq.s32.totalorder %s174, 0
      %p899 = por %p897, %p898
      %s901 = sadd.s32 %s900, 1
      %p904 = scmp.eq.s32.totalorder %s168, 1
      %p905 = scmp.ne.s32.totalorder %s900, %s902
      %p906 = scmp.eq.s32.totalorder %s168, 0
      %p907 = por %p905, %p906
      %p908 = scmp.ne.s32.totalorder %s900, %s902
      %p909 = scmp.eq.s32.totalorder %s173, 1
      %p910 = por %p908, %p909
      %p911 = scmp.ne.s32.totalorder %s902, %s903
      %p912 = scmp.eq.s32.totalorder %s173, 0
      %p913 = por %p911, %p912
      %p914 = scmp.ne.s32.totalorder %s902, %s903
      %p915 = scmp.eq.s32.totalorder %s174, 1
      %p916 = por %p914, %p915
      %p918 = scmp.ne.s32.totalorder %s903, %s917
      %p919 = scmp.eq.s32.totalorder %s174, 0
      %p920 = por %p918, %p919
      %s922 = sadd.s32 %s921, 1
      %p925 = scmp.eq.s32.totalorder %s168, 1
      %p926 = scmp.ne.s32.totalorder %s921, %s923
      %p927 = scmp.eq.s32.totalorder %s168, 0
      %p928 = por %p926, %p927
      %p929 = scmp.ne.s32.totalorder %s921, %s923
      %p930 = scmp.eq.s32.totalorder %s173, 1
      %p931 = por %p929, %p930
      %p932 = scmp.ne.s32.totalorder %s923, %s924
      %p933 = scmp.eq.s32.totalorder %s173, 0
      %p934 = por %p932, %p933
      %p935 = scmp.ne.s32.totalorder %s923, %s924
      %p936 = scmp.eq.s32.totalorder %s174, 1
      %p937 = por %p935, %p936
      %p939 = scmp.ne.s32.totalorder %s924, %s938
      %p940 = scmp.eq.s32.totalorder %s174, 0
      %p941 = por %p939, %p940
      %s943 = sadd.s32 %s942, 1
      %p946 = scmp.eq.s32.totalorder %s168, 1
      %p947 = scmp.ne.s32.totalorder %s942, %s944
      %p948 = scmp.eq.s32.totalorder %s168, 0
      %p949 = por %p947, %p948
      %p950 = scmp.ne.s32.totalorder %s942, %s944
      %p951 = scmp.eq.s32.totalorder %s173, 1
      %p952 = por %p950, %p951
      %p953 = scmp.ne.s32.totalorder %s944, %s945
      %p954 = scmp.eq.s32.totalorder %s173, 0
      %p955 = por %p953, %p954
      %p956 = scmp.ne.s32.totalorder %s944, %s945
      %p957 = scmp.eq.s32.totalorder %s174, 1
      %p958 = por %p956, %p957
      %p960 = scmp.ne.s32.totalorder %s945, %s959
      %p961 = scmp.eq.s32.totalorder %s174, 0
      %p962 = por %p960, %p961
      %s964 = sadd.s32 %s963, 1
      %p967 = scmp.eq.s32.totalorder %s168, 1
      %p968 = scmp.ne.s32.totalorder %s963, %s965
      %p969 = scmp.eq.s32.totalorder %s168, 0
      %p970 = por %p968, %p969
      %p971 = scmp.ne.s32.totalorder %s963, %s965
      %p972 = scmp.eq.s32.totalorder %s173, 1
      %p973 = por %p971, %p972
      %p974 = scmp.ne.s32.totalorder %s965, %s966
      %p975 = scmp.eq.s32.totalorder %s173, 0
      %p976 = por %p974, %p975
      %p977 = scmp.ne.s32.totalorder %s965, %s966
      %p978 = scmp.eq.s32.totalorder %s174, 1
      %p979 = por %p977, %p978
      %p981 = scmp.ne.s32.totalorder %s966, %s980
      %p982 = scmp.eq.s32.totalorder %s174, 0
      %p983 = por %p981, %p982
      %s985 = sadd.s32 %s984, 1
      %p988 = scmp.eq.s32.totalorder %s168, 1
      %p989 = scmp.ne.s32.totalorder %s984, %s986
      %p990 = scmp.eq.s32.totalorder %s168, 0
      %p991 = por %p989, %p990
      %p992 = scmp.ne.s32.totalorder %s984, %s986
      %p993 = scmp.eq.s32.totalorder %s173, 1
      %p994 = por %p992, %p993
      %p995 = scmp.ne.s32.totalorder %s986, %s987
      %p996 = scmp.eq.s32.totalorder %s173, 0
      %p997 = por %p995, %p996
      %p998 = scmp.ne.s32.totalorder %s986, %s987
      %p999 = scmp.eq.s32.totalorder %s174, 1
      %p1000 = por %p998, %p999
      %p1002 = scmp.ne.s32.totalorder %s987, %s1001
      %p1003 = scmp.eq.s32.totalorder %s174, 0
      %p1004 = por %p1002, %p1003
      %s1006 = sadd.s32 %s1005, 1
      %p1009 = scmp.eq.s32.totalorder %s168, 1
      %p1010 = scmp.ne.s32.totalorder %s1005, %s1007
      %p1011 = scmp.eq.s32.totalorder %s168, 0
      %p1012 = por %p1010, %p1011
      %p1013 = scmp.ne.s32.totalorder %s1005, %s1007
      %p1014 = scmp.eq.s32.totalorder %s173, 1
      %p1015 = por %p1013, %p1014
      %p1016 = scmp.ne.s32.totalorder %s1007, %s1008
      %p1017 = scmp.eq.s32.totalorder %s173, 0
      %p1018 = por %p1016, %p1017
      %p1019 = scmp.ne.s32.totalorder %s1007, %s1008
      %p1020 = scmp.eq.s32.totalorder %s174, 1
      %p1021 = por %p1019, %p1020
      %p1023 = scmp.ne.s32.totalorder %s1008, %s1022
      %p1024 = scmp.eq.s32.totalorder %s174, 0
      %p1025 = por %p1023, %p1024
      %s1027 = sadd.s32 %s1026, 1
      %p1030 = scmp.eq.s32.totalorder %s168, 1
      %p1031 = scmp.ne.s32.totalorder %s1026, %s1028
      %p1032 = scmp.eq.s32.totalorder %s168, 0
      %p1033 = por %p1031, %p1032
      %p1034 = scmp.ne.s32.totalorder %s1026, %s1028
      %p1035 = scmp.eq.s32.totalorder %s173, 1
      %p1036 = por %p1034, %p1035
      %p1037 = scmp.ne.s32.totalorder %s1028, %s1029
      %p1038 = scmp.eq.s32.totalorder %s173, 0
      %p1039 = por %p1037, %p1038
      %p1040 = scmp.ne.s32.totalorder %s1028, %s1029
      %p1041 = scmp.eq.s32.totalorder %s174, 1
      %p1042 = por %p1040, %p1041
      %p1044 = scmp.ne.s32.totalorder %s1029, %s1043
      %p1045 = scmp.eq.s32.totalorder %s174, 0
      %p1046 = por %p1044, %p1045
      %s1048 = sadd.s32 %s1047, 1
      %p1051 = scmp.eq.s32.totalorder %s168, 1
      %p1052 = scmp.ne.s32.totalorder %s1047, %s1049
      %p1053 = scmp.eq.s32.totalorder %s168, 0
      %p1054 = por %p1052, %p1053
      %p1055 = scmp.ne.s32.totalorder %s1047, %s1049
      %p1056 = scmp.eq.s32.totalorder %s173, 1
      %p1057 = por %p1055, %p1056
      %p1058 = scmp.ne.s32.totalorder %s1049, %s1050
      %p1059 = scmp.eq.s32.totalorder %s173, 0
      %p1060 = por %p1058, %p1059
      %p1061 = scmp.ne.s32.totalorder %s1049, %s1050
      %p1062 = scmp.eq.s32.totalorder %s174, 1
      %p1063 = por %p1061, %p1062
      %p1065 = scmp.ne.s32.totalorder %s1050, %s1064
      %p1066 = scmp.eq.s32.totalorder %s174, 0
      %p1067 = por %p1065, %p1066
      %s1069 = sadd.s32 %s1068, 1
      %p1072 = scmp.eq.s32.totalorder %s168, 1
      %p1073 = scmp.ne.s32.totalorder %s1068, %s1070
      %p1074 = scmp.eq.s32.totalorder %s168, 0
      %p1075 = por %p1073, %p1074
      %p1076 = scmp.ne.s32.totalorder %s1068, %s1070
      %p1077 = scmp.eq.s32.totalorder %s173, 1
      %p1078 = por %p1076, %p1077
      %p1079 = scmp.ne.s32.totalorder %s1070, %s1071
      %p1080 = scmp.eq.s32.totalorder %s173, 0
      %p1081 = por %p1079, %p1080
      %p1082 = scmp.ne.s32.totalorder %s1070, %s1071
      %p1083 = scmp.eq.s32.totalorder %s174, 1
      %p1084 = por %p1082, %p1083
      %p1086 = scmp.ne.s32.totalorder %s1071, %s1085
      %p1087 = scmp.eq.s32.totalorder %s174, 0
      %p1088 = por %p1086, %p1087
      %s1090 = sadd.s32 %s1089, 1
      %p1093 = scmp.eq.s32.totalorder %s168, 1
      %p1094 = scmp.ne.s32.totalorder %s1089, %s1091
      %p1095 = scmp.eq.s32.totalorder %s168, 0
      %p1096 = por %p1094, %p1095
      %p1097 = scmp.ne.s32.totalorder %s1089, %s1091
      %p1098 = scmp.eq.s32.totalorder %s173, 1
      %p1099 = por %p1097, %p1098
      %p1100 = scmp.ne.s32.totalorder %s1091, %s1092
      %p1101 = scmp.eq.s32.totalorder %s173, 0
      %p1102 = por %p1100, %p1101
      %p1103 = scmp.ne.s32.totalorder %s1091, %s1092
      %p1104 = scmp.eq.s32.totalorder %s174, 1
      %p1105 = por %p1103, %p1104
      %p1107 = scmp.ne.s32.totalorder %s1092, %s1106
      %p1108 = scmp.eq.s32.totalorder %s174, 0
      %p1109 = por %p1107, %p1108
      %s1111 = sadd.s32 %s1110, 1
      %p1114 = scmp.eq.s32.totalorder %s168, 1
      %p1115 = scmp.ne.s32.totalorder %s1110, %s1112
      %p1116 = scmp.eq.s32.totalorder %s168, 0
      %p1117 = por %p1115, %p1116
      %p1118 = scmp.ne.s32.totalorder %s1110, %s1112
      %p1119 = scmp.eq.s32.totalorder %s173, 1
      %p1120 = por %p1118, %p1119
      %p1121 = scmp.ne.s32.totalorder %s1112, %s1113
      %p1122 = scmp.eq.s32.totalorder %s173, 0
      %p1123 = por %p1121, %p1122
      %p1124 = scmp.ne.s32.totalorder %s1112, %s1113
      %p1125 = scmp.eq.s32.totalorder %s174, 1
      %p1126 = por %p1124, %p1125
      %p1128 = scmp.ne.s32.totalorder %s1113, %s1127
      %p1129 = scmp.eq.s32.totalorder %s174, 0
      %p1130 = por %p1128, %p1129
      %s1132 = sadd.s32 %s1131, 1
      %p1135 = scmp.eq.s32.totalorder %s168, 1
      %p1136 = scmp.ne.s32.totalorder %s1131, %s1133
      %p1137 = scmp.eq.s32.totalorder %s168, 0
      %p1138 = por %p1136, %p1137
      %p1139 = scmp.ne.s32.totalorder %s1131, %s1133
      %p1140 = scmp.eq.s32.totalorder %s173, 1
      %p1141 = por %p1139, %p1140
      %p1142 = scmp.ne.s32.totalorder %s1133, %s1134
      %p1143 = scmp.eq.s32.totalorder %s173, 0
      %p1144 = por %p1142, %p1143
      %p1145 = scmp.ne.s32.totalorder %s1133, %s1134
      %p1146 = scmp.eq.s32.totalorder %s174, 1
      %p1147 = por %p1145, %p1146
      %p1149 = scmp.ne.s32.totalorder %s1134, %s1148
      %p1150 = scmp.eq.s32.totalorder %s174, 0
      %p1151 = por %p1149, %p1150
      %s1153 = sadd.s32 %s1152, 1
      %p1156 = scmp.eq.s32.totalorder %s168, 1
      %p1157 = scmp.ne.s32.totalorder %s1152, %s1154
      %p1158 = scmp.eq.s32.totalorder %s168, 0
      %p1159 = por %p1157, %p1158
      %p1160 = scmp.ne.s32.totalorder %s1152, %s1154
      %p1161 = scmp.eq.s32.totalorder %s173, 1
      %p1162 = por %p1160, %p1161
      %p1163 = scmp.ne.s32.totalorder %s1154, %s1155
      %p1164 = scmp.eq.s32.totalorder %s173, 0
      %p1165 = por %p1163, %p1164
      %p1166 = scmp.ne.s32.totalorder %s1154, %s1155
      %p1167 = scmp.eq.s32.totalorder %s174, 1
      %p1168 = por %p1166, %p1167
      %p1170 = scmp.ne.s32.totalorder %s1155, %s1169
      %p1171 = scmp.eq.s32.totalorder %s174, 0
      %p1172 = por %p1170, %p1171
      %s1174 = sadd.s32 %s1173, 1
      %p1177 = scmp.eq.s32.totalorder %s168, 1
      %p1178 = scmp.ne.s32.totalorder %s1173, %s1175
      %p1179 = scmp.eq.s32.totalorder %s168, 0
      %p1180 = por %p1178, %p1179
      %p1181 = scmp.ne.s32.totalorder %s1173, %s1175
      %p1182 = scmp.eq.s32.totalorder %s173, 1
      %p1183 = por %p1181, %p1182
      %p1184 = scmp.ne.s32.totalorder %s1175, %s1176
      %p1185 = scmp.eq.s32.totalorder %s173, 0
      %p1186 = por %p1184, %p1185
      %p1187 = scmp.ne.s32.totalorder %s1175, %s1176
      %p1188 = scmp.eq.s32.totalorder %s174, 1
      %p1189 = por %p1187, %p1188
      %p1191 = scmp.ne.s32.totalorder %s1176, %s1190
      %p1192 = scmp.eq.s32.totalorder %s174, 0
      %p1193 = por %p1191, %p1192
      %s1195 = sadd.s32 %s1194, 1
      %p1198 = scmp.eq.s32.totalorder %s168, 1
      %p1199 = scmp.ne.s32.totalorder %s1194, %s1196
      %p1200 = scmp.eq.s32.totalorder %s168, 0
      %p1201 = por %p1199, %p1200
      %p1202 = scmp.ne.s32.totalorder %s1194, %s1196
      %p1203 = scmp.eq.s32.totalorder %s173, 1
      %p1204 = por %p1202, %p1203
      %p1205 = scmp.ne.s32.totalorder %s1196, %s1197
      %p1206 = scmp.eq.s32.totalorder %s173, 0
      %p1207 = por %p1205, %p1206
      %p1208 = scmp.ne.s32.totalorder %s1196, %s1197
      %p1209 = scmp.eq.s32.totalorder %s174, 1
      %p1210 = por %p1208, %p1209
      %p1212 = scmp.ne.s32.totalorder %s1197, %s1211
      %p1213 = scmp.eq.s32.totalorder %s174, 0
      %p1214 = por %p1212, %p1213
      %s1216 = sadd.s32 %s1215, 1
      %p1219 = scmp.eq.s32.totalorder %s168, 1
      %p1220 = scmp.ne.s32.totalorder %s1215, %s1217
      %p1221 = scmp.eq.s32.totalorder %s168, 0
      %p1222 = por %p1220, %p1221
      %p1223 = scmp.ne.s32.totalorder %s1215, %s1217
      %p1224 = scmp.eq.s32.totalorder %s173, 1
      %p1225 = por %p1223, %p1224
      %p1226 = scmp.ne.s32.totalorder %s1217, %s1218
      %p1227 = scmp.eq.s32.totalorder %s173, 0
      %p1228 = por %p1226, %p1227
      %p1229 = scmp.ne.s32.totalorder %s1217, %s1218
      %p1230 = scmp.eq.s32.totalorder %s174, 1
      %p1231 = por %p1229, %p1230
      %p1233 = scmp.ne.s32.totalorder %s1218, %s1232
      %p1234 = scmp.eq.s32.totalorder %s174, 0
      %p1235 = por %p1233, %p1234
      %s1237 = sadd.s32 %s1236, 1
      %p1240 = scmp.eq.s32.totalorder %s168, 1
      %p1241 = scmp.ne.s32.totalorder %s1236, %s1238
      %p1242 = scmp.eq.s32.totalorder %s168, 0
      %p1243 = por %p1241, %p1242
      %p1244 = scmp.ne.s32.totalorder %s1236, %s1238
      %p1245 = scmp.eq.s32.totalorder %s173, 1
      %p1246 = por %p1244, %p1245
      %p1247 = scmp.ne.s32.totalorder %s1238, %s1239
      %p1248 = scmp.eq.s32.totalorder %s173, 0
      %p1249 = por %p1247, %p1248
      %p1250 = scmp.ne.s32.totalorder %s1238, %s1239
      %p1251 = scmp.eq.s32.totalorder %s174, 1
      %p1252 = por %p1250, %p1251
      %p1254 = scmp.ne.s32.totalorder %s1239, %s1253
      %p1255 = scmp.eq.s32.totalorder %s174, 0
      %p1256 = por %p1254, %p1255
      %s1258 = sadd.s32 %s1257, 1
      %p1261 = scmp.eq.s32.totalorder %s168, 1
      %p1262 = scmp.ne.s32.totalorder %s1257, %s1259
      %p1263 = scmp.eq.s32.totalorder %s168, 0
      %p1264 = por %p1262, %p1263
      %p1265 = scmp.ne.s32.totalorder %s1257, %s1259
      %p1266 = scmp.eq.s32.totalorder %s173, 1
      %p1267 = por %p1265, %p1266
      %p1268 = scmp.ne.s32.totalorder %s1259, %s1260
      %p1269 = scmp.eq.s32.totalorder %s173, 0
      %p1270 = por %p1268, %p1269
      %p1271 = scmp.ne.s32.totalorder %s1259, %s1260
      %p1272 = scmp.eq.s32.totalorder %s174, 1
      %p1273 = por %p1271, %p1272
      %p1275 = scmp.ne.s32.totalorder %s1260, %s1274
      %p1276 = scmp.eq.s32.totalorder %s174, 0
      %p1277 = por %p1275, %p1276
      %s1279 = sadd.s32 %s1278, 1
      %p1282 = scmp.eq.s32.totalorder %s168, 1
      %p1283 = scmp.ne.s32.totalorder %s1278, %s1280
      %p1284 = scmp.eq.s32.totalorder %s168, 0
      %p1285 = por %p1283, %p1284
      %p1286 = scmp.ne.s32.totalorder %s1278, %s1280
      %p1287 = scmp.eq.s32.totalorder %s173, 1
      %p1288 = por %p1286, %p1287
      %p1289 = scmp.ne.s32.totalorder %s1280, %s1281
      %p1290 = scmp.eq.s32.totalorder %s173, 0
      %p1291 = por %p1289, %p1290
      %p1292 = scmp.ne.s32.totalorder %s1280, %s1281
      %p1293 = scmp.eq.s32.totalorder %s174, 1
      %p1294 = por %p1292, %p1293
      %p1296 = scmp.ne.s32.totalorder %s1281, %s1295
      %p1297 = scmp.eq.s32.totalorder %s174, 0
      %p1298 = por %p1296, %p1297
      %s1300 = sadd.s32 %s1299, 1
      %p1303 = scmp.eq.s32.totalorder %s168, 1
      %p1304 = scmp.ne.s32.totalorder %s1299, %s1301
      %p1305 = scmp.eq.s32.totalorder %s168, 0
      %p1306 = por %p1304, %p1305
      %p1307 = scmp.ne.s32.totalorder %s1299, %s1301
      %p1308 = scmp.eq.s32.totalorder %s173, 1
      %p1309 = por %p1307, %p1308
      %p1310 = scmp.ne.s32.totalorder %s1301, %s1302
      %p1311 = scmp.eq.s32.totalorder %s173, 0
      %p1312 = por %p1310, %p1311
      %p1313 = scmp.ne.s32.totalorder %s1301, %s1302
      %p1314 = scmp.eq.s32.totalorder %s174, 1
      %p1315 = por %p1313, %p1314
      %p1317 = scmp.ne.s32.totalorder %s1302, %s1316
      %p1318 = scmp.eq.s32.totalorder %s174, 0
      %p1319 = por %p1317, %p1318
      %s1321 = sadd.s32 %s1320, 1
      %p1324 = scmp.eq.s32.totalorder %s168, 1
      %p1325 = scmp.ne.s32.totalorder %s1320, %s1322
      %p1326 = scmp.eq.s32.totalorder %s168, 0
      %p1327 = por %p1325, %p1326
      %p1328 = scmp.ne.s32.totalorder %s1320, %s1322
      %p1329 = scmp.eq.s32.totalorder %s173, 1
      %p1330 = por %p1328, %p1329
      %p1331 = scmp.ne.s32.totalorder %s1322, %s1323
      %p1332 = scmp.eq.s32.totalorder %s173, 0
      %p1333 = por %p1331, %p1332
      %p1334 = scmp.ne.s32.totalorder %s1322, %s1323
      %p1335 = scmp.eq.s32.totalorder %s174, 1
      %p1336 = por %p1334, %p1335
      %p1338 = scmp.ne.s32.totalorder %s1323, %s1337
      %p1339 = scmp.eq.s32.totalorder %s174, 0
      %p1340 = por %p1338, %p1339
      %s1342 = sadd.s32 %s1341, 1
      %p1345 = scmp.eq.s32.totalorder %s168, 1
      %p1346 = scmp.ne.s32.totalorder %s1341, %s1343
      %p1347 = scmp.eq.s32.totalorder %s168, 0
      %p1348 = por %p1346, %p1347
      %p1349 = scmp.ne.s32.totalorder %s1341, %s1343
      %p1350 = scmp.eq.s32.totalorder %s173, 1
      %p1351 = por %p1349, %p1350
      %p1352 = scmp.ne.s32.totalorder %s1343, %s1344
      %p1353 = scmp.eq.s32.totalorder %s173, 0
      %p1354 = por %p1352, %p1353
      %p1355 = scmp.ne.s32.totalorder %s1343, %s1344
      %p1356 = scmp.eq.s32.totalorder %s174, 1
      %p1357 = por %p1355, %p1356
      %p1359 = scmp.ne.s32.totalorder %s1344, %s1358
      %p1360 = scmp.eq.s32.totalorder %s174, 0
      %p1361 = por %p1359, %p1360
      %s1363 = sadd.s32 %s1362, 1
      %p1366 = scmp.eq.s32.totalorder %s168, 1
      %p1367 = scmp.ne.s32.totalorder %s1362, %s1364
      %p1368 = scmp.eq.s32.totalorder %s168, 0
      %p1369 = por %p1367, %p1368
      %p1370 = scmp.ne.s32.totalorder %s1362, %s1364
      %p1371 = scmp.eq.s32.totalorder %s173, 1
      %p1372 = por %p1370, %p1371
      %p1373 = scmp.ne.s32.totalorder %s1364, %s1365
      %p1374 = scmp.eq.s32.totalorder %s173, 0
      %p1375 = por %p1373, %p1374
      %p1376 = scmp.ne.s32.totalorder %s1364, %s1365
      %p1377 = scmp.eq.s32.totalorder %s174, 1
      %p1378 = por %p1376, %p1377
      %p1380 = scmp.ne.s32.totalorder %s1365, %s1379
      %p1381 = scmp.eq.s32.totalorder %s174, 0
      %p1382 = por %p1380, %p1381
      %s1384 = sadd.s32 %s1383, 1
      %p1387 = scmp.eq.s32.totalorder %s168, 1
      %p1388 = scmp.ne.s32.totalorder %s1383, %s1385
      %p1389 = scmp.eq.s32.totalorder %s168, 0
      %p1390 = por %p1388, %p1389
      %p1391 = scmp.ne.s32.totalorder %s1383, %s1385
      %p1392 = scmp.eq.s32.totalorder %s173, 1
      %p1393 = por %p1391, %p1392
      %p1394 = scmp.ne.s32.totalorder %s1385, %s1386
      %p1395 = scmp.eq.s32.totalorder %s173, 0
      %p1396 = por %p1394, %p1395
      %p1397 = scmp.ne.s32.totalorder %s1385, %s1386
      %p1398 = scmp.eq.s32.totalorder %s174, 1
      %p1399 = por %p1397, %p1398
      %p1401 = scmp.ne.s32.totalorder %s1386, %s1400
      %p1402 = scmp.eq.s32.totalorder %s174, 0
      %p1403 = por %p1401, %p1402
      %s1405 = sadd.s32 %s1404, 1
      %p1408 = scmp.eq.s32.totalorder %s168, 1
      %p1409 = scmp.ne.s32.totalorder %s1404, %s1406
      %p1410 = scmp.eq.s32.totalorder %s168, 0
      %p1411 = por %p1409, %p1410
      %p1412 = scmp.ne.s32.totalorder %s1404, %s1406
      %p1413 = scmp.eq.s32.totalorder %s173, 1
      %p1414 = por %p1412, %p1413
      %p1415 = scmp.ne.s32.totalorder %s1406, %s1407
      %p1416 = scmp.eq.s32.totalorder %s173, 0
      %p1417 = por %p1415, %p1416
      %p1418 = scmp.ne.s32.totalorder %s1406, %s1407
      %p1419 = scmp.eq.s32.totalorder %s174, 1
      %p1420 = por %p1418, %p1419
      %p1422 = scmp.ne.s32.totalorder %s1407, %s1421
      %p1423 = scmp.eq.s32.totalorder %s174, 0
      %p1424 = por %p1422, %p1423
      %s1426 = sadd.s32 %s1425, 1
      %p1429 = scmp.eq.s32.totalorder %s168, 1
      %p1430 = scmp.ne.s32.totalorder %s1425, %s1427
      %p1431 = scmp.eq.s32.totalorder %s168, 0
      %p1432 = por %p1430, %p1431
      %p1433 = scmp.ne.s32.totalorder %s1425, %s1427
      %p1434 = scmp.eq.s32.totalorder %s173, 1
      %p1435 = por %p1433, %p1434
      %p1436 = scmp.ne.s32.totalorder %s1427, %s1428
      %p1437 = scmp.eq.s32.totalorder %s173, 0
      %p1438 = por %p1436, %p1437
      %p1439 = scmp.ne.s32.totalorder %s1427, %s1428
      %p1440 = scmp.eq.s32.totalorder %s174, 1
      %p1441 = por %p1439, %p1440
      %p1443 = scmp.ne.s32.totalorder %s1428, %s1442
      %p1444 = scmp.eq.s32.totalorder %s174, 0
      %p1445 = por %p1443, %p1444
      %s1447 = sadd.s32 %s1446, 1
      %p1450 = scmp.eq.s32.totalorder %s168, 1
      %p1451 = scmp.ne.s32.totalorder %s1446, %s1448
      %p1452 = scmp.eq.s32.totalorder %s168, 0
      %p1453 = por %p1451, %p1452
      %p1454 = scmp.ne.s32.totalorder %s1446, %s1448
      %p1455 = scmp.eq.s32.totalorder %s173, 1
      %p1456 = por %p1454, %p1455
      %p1457 = scmp.ne.s32.totalorder %s1448, %s1449
      %p1458 = scmp.eq.s32.totalorder %s173, 0
      %p1459 = por %p1457, %p1458
      %p1460 = scmp.ne.s32.totalorder %s1448, %s1449
      %p1461 = scmp.eq.s32.totalorder %s174, 1
      %p1462 = por %p1460, %p1461
      %p1464 = scmp.ne.s32.totalorder %s1449, %s1463
      %p1465 = scmp.eq.s32.totalorder %s174, 0
      %p1466 = por %p1464, %p1465
      %s1468 = sadd.s32 %s1467, 1
      %p1471 = scmp.eq.s32.totalorder %s168, 1
      %p1472 = scmp.ne.s32.totalorder %s1467, %s1469
      %p1473 = scmp.eq.s32.totalorder %s168, 0
      %p1474 = por %p1472, %p1473
      %p1475 = scmp.ne.s32.totalorder %s1467, %s1469
      %p1476 = scmp.eq.s32.totalorder %s173, 1
      %p1477 = por %p1475, %p1476
      %p1478 = scmp.ne.s32.totalorder %s1469, %s1470
      %p1479 = scmp.eq.s32.totalorder %s173, 0
      %p1480 = por %p1478, %p1479
      %p1481 = scmp.ne.s32.totalorder %s1469, %s1470
      %p1482 = scmp.eq.s32.totalorder %s174, 1
      %p1483 = por %p1481, %p1482
      %p1485 = scmp.ne.s32.totalorder %s1470, %s1484
      %p1486 = scmp.eq.s32.totalorder %s174, 0
      %p1487 = por %p1485, %p1486
      %s1489 = sadd.s32 %s1488, 1
      %p1492 = scmp.eq.s32.totalorder %s168, 1
      %p1493 = scmp.ne.s32.totalorder %s1488, %s1490
      %p1494 = scmp.eq.s32.totalorder %s168, 0
      %p1495 = por %p1493, %p1494
      %p1496 = scmp.ne.s32.totalorder %s1488, %s1490
      %p1497 = scmp.eq.s32.totalorder %s173, 1
      %p1498 = por %p1496, %p1497
      %p1499 = scmp.ne.s32.totalorder %s1490, %s1491
      %p1500 = scmp.eq.s32.totalorder %s173, 0
      %p1501 = por %p1499, %p1500
      %p1502 = scmp.ne.s32.totalorder %s1490, %s1491
      %p1503 = scmp.eq.s32.totalorder %s174, 1
      %p1504 = por %p1502, %p1503
      %p1506 = scmp.ne.s32.totalorder %s1491, %s1505
      %p1507 = scmp.eq.s32.totalorder %s174, 0
      %p1508 = por %p1506, %p1507
      %s1510 = sadd.s32 %s1509, 1
      %p1513 = scmp.eq.s32.totalorder %s168, 1
      %p1514 = scmp.ne.s32.totalorder %s1509, %s1511
      %p1515 = scmp.eq.s32.totalorder %s168, 0
      %p1516 = por %p1514, %p1515
      %p1517 = scmp.ne.s32.totalorder %s1509, %s1511
      %p1518 = scmp.eq.s32.totalorder %s173, 1
      %p1519 = por %p1517, %p1518
      %p1520 = scmp.ne.s32.totalorder %s1511, %s1512
      %p1521 = scmp.eq.s32.totalorder %s173, 0
      %p1522 = por %p1520, %p1521
      %p1523 = scmp.ne.s32.totalorder %s1511, %s1512
      %p1524 = scmp.eq.s32.totalorder %s174, 1
      %p1525 = por %p1523, %p1524
      %p1527 = scmp.ne.s32.totalorder %s1512, %s1526
      %p1528 = scmp.eq.s32.totalorder %s174, 0
      %p1529 = por %p1527, %p1528
      %s1531 = sadd.s32 %s1530, 1
      %p1534 = scmp.eq.s32.totalorder %s168, 1
      %p1535 = scmp.ne.s32.totalorder %s1530, %s1532
      %p1536 = scmp.eq.s32.totalorder %s168, 0
      %p1537 = por %p1535, %p1536
      %p1538 = scmp.ne.s32.totalorder %s1530, %s1532
      %p1539 = scmp.eq.s32.totalorder %s173, 1
      %p1540 = por %p1538, %p1539
      %p1541 = scmp.ne.s32.totalorder %s1532, %s1533
      %p1542 = scmp.eq.s32.totalorder %s173, 0
      %p1543 = por %p1541, %p1542
      %p1544 = scmp.ne.s32.totalorder %s1532, %s1533
      %p1545 = scmp.eq.s32.totalorder %s174, 1
      %p1546 = por %p1544, %p1545
      %p1548 = scmp.ne.s32.totalorder %s1533, %s1547
      %p1549 = scmp.eq.s32.totalorder %s174, 0
      %p1550 = por %p1548, %p1549
      %s1552 = sadd.s32 %s1551, 1
      %p1555 = scmp.eq.s32.totalorder %s168, 1
      %p1556 = scmp.ne.s32.totalorder %s1551, %s1553
      %p1557 = scmp.eq.s32.totalorder %s168, 0
      %p1558 = por %p1556, %p1557
      %p1559 = scmp.ne.s32.totalorder %s1551, %s1553
      %p1560 = scmp.eq.s32.totalorder %s173, 1
      %p1561 = por %p1559, %p1560
      %p1562 = scmp.ne.s32.totalorder %s1553, %s1554
      %p1563 = scmp.eq.s32.totalorder %s173, 0
      %p1564 = por %p1562, %p1563
      %p1565 = scmp.ne.s32.totalorder %s1553, %s1554
      %p1566 = scmp.eq.s32.totalorder %s174, 1
      %p1567 = por %p1565, %p1566
      %p1569 = scmp.ne.s32.totalorder %s1554, %s1568
      %p1570 = scmp.eq.s32.totalorder %s174, 0
      %p1571 = por %p1569, %p1570
      %s1573 = sadd.s32 %s1572, 1
      %p1576 = scmp.eq.s32.totalorder %s168, 1
      %p1577 = scmp.ne.s32.totalorder %s1572, %s1574
      %p1578 = scmp.eq.s32.totalorder %s168, 0
      %p1579 = por %p1577, %p1578
      %p1580 = scmp.ne.s32.totalorder %s1572, %s1574
      %p1581 = scmp.eq.s32.totalorder %s173, 1
      %p1582 = por %p1580, %p1581
      %p1583 = scmp.ne.s32.totalorder %s1574, %s1575
      %p1584 = scmp.eq.s32.totalorder %s173, 0
      %p1585 = por %p1583, %p1584
      %p1586 = scmp.ne.s32.totalorder %s1574, %s1575
      %p1587 = scmp.eq.s32.totalorder %s174, 1
      %p1588 = por %p1586, %p1587
      %p1590 = scmp.ne.s32.totalorder %s1575, %s1589
      %p1591 = scmp.eq.s32.totalorder %s174, 0
      %p1592 = por %p1590, %p1591
      %s1593 = ssub.s32 %s168, %s175
      %p1594 = scmp.eq.s32.totalorder %s1593, 0
      %s1596 = sadd.s32 %s1595, 1
      %s1597 = scalar_select %p1594, %s1595, %s1596
      %p1600 = pneg %p1594
      %p1601 = scmp.eq.s32.totalorder %s168, 1
      %p1602 = por %p1600, %p1601
      %p1603 = scmp.ne.s32.totalorder %s1595, %s1598
      %p1604 = scmp.eq.s32.totalorder %s168, 0
      %p1605 = por %p1603, %p1604
      %p1606 = scmp.ne.s32.totalorder %s1595, %s1598
      %p1607 = scmp.eq.s32.totalorder %s173, 1
      %p1608 = por %p1606, %p1607
      %p1609 = scmp.ne.s32.totalorder %s1598, %s1599
      %p1610 = scmp.eq.s32.totalorder %s173, 0
      %p1611 = por %p1609, %p1610
      %p1612 = scmp.ne.s32.totalorder %s1598, %s1599
      %p1613 = scmp.eq.s32.totalorder %s174, 1
      %p1614 = por %p1612, %p1613
      %p1616 = scmp.ne.s32.totalorder %s1599, %s1615
      %p1617 = scmp.eq.s32.totalorder %s174, 0
      %p1618 = por %p1616, %p1617
      %p1619 = scmp.le.s32.totalorder 1, %s168
      %p1620 = scmp.lt.s32.totalorder %s168, 3
      %p1621 = pnand %p1619, %p1620
      %p1622 = pneg %p1621
      // Predicated region
      $region9: #{tpu_custom_call.1} parent=5 // pred_check
        _
      $region10: #{tpu_custom_call.1} parent=5 // pred_check_branch
        %1624 = sbr.rel (%p1621) target = $region12
      $region11: #{tpu_custom_call.1} parent=5 // pred_region
        %s1625 = ssub.s32 %s168, 1
        // Predicated region
        $region13: #{tpu_custom_call.1} parent=11 // pred_check
          %p1626 = pneg %p189
        $region14: #{tpu_custom_call.1} parent=11 // pred_check_branch
          %1628 = sbr.rel (%p1626) target = $region16
        $region15: #{tpu_custom_call.1} parent=11 // pred_region
          %s1630 = ssub.s32 128, 128
          %1631 = vsyncadd [#allocation3], %s1630
          %s1633 = sshll.u32 [#allocation2], 4
          %s1634 = int_to_ptr.vmem [resolvable:$true] %s1633
          %1636 = dma.hbm_to_vmem [thread:$0]  %s1, 128, %s1634, [#allocation3]
        $region16: #{tpu_custom_call.1} parent=11 // pred_fallthru
          _
        // Predicated region
        $region17: #{tpu_custom_call.1} parent=11 // pred_check
          %p1637 = pneg %p262
        $region18: #{tpu_custom_call.1} parent=11 // pred_check_branch
          %1639 = sbr.rel (%p1637) target = $region20
        $region19: #{tpu_custom_call.1} parent=11 // pred_region
          _
        $region20: #{tpu_custom_call.1} parent=11 // pred_fallthru
          _
        // Predicated region
        $region21: #{tpu_custom_call.1} parent=11 // pred_check
          %p1640 = pneg %p283
        $region22: #{tpu_custom_call.1} parent=11 // pred_check_branch
          %1642 = sbr.rel (%p1640) target = $region24
        $region23: #{tpu_custom_call.1} parent=11 // pred_region
          %s1644 = ssub.s32 16, 16
          %1645 = vsyncadd [#allocation9], %s1644
          %s1647 = sshll.u32 [#allocation8], 4
          %s1648 = int_to_ptr.vmem [resolvable:$true] %s1647
          %1650 = dma.hbm_to_vmem [thread:$0]  %s9, 16, %s1648, [#allocation9]
        $region24: #{tpu_custom_call.1} parent=11 // pred_fallthru
          _
        // Predicated region
        $region25: #{tpu_custom_call.1} parent=11 // pred_check
          %p1651 = pneg %p304
        $region26: #{tpu_custom_call.1} parent=11 // pred_check_branch
          %1653 = sbr.rel (%p1651) target = $region28
        $region27: #{tpu_custom_call.1} parent=11 // pred_region
          _
        $region28: #{tpu_custom_call.1} parent=11 // pred_fallthru
          _
        // Predicated region
        $region29: #{tpu_custom_call.1} parent=11 // pred_check
          %p1654 = pneg %p325
        $region30: #{tpu_custom_call.1} parent=11 // pred_check_branch
          %1656 = sbr.rel (%p1654) target = $region32
        $region31: #{tpu_custom_call.1} parent=11 // pred_region
          %s1658 = ssub.s32 16, 16
          %1659 = vsyncadd [#allocation9], %s1658
          %s1661 = sshll.u32 [#allocation10], 4
          %s1662 = int_to_ptr.vmem [resolvable:$true] %s1661
          %1664 = dma.hbm_to_vmem [thread:$0]  %s13, 16, %s1662, [#allocation9]
        $region32: #{tpu_custom_call.1} parent=11 // pred_fallthru
          _
        // Predicated region
        $region33: #{tpu_custom_call.1} parent=11 // pred_check
          %p1665 = pneg %p346
        $region34: #{tpu_custom_call.1} parent=11 // pred_check_branch
          %1667 = sbr.rel (%p1665) target = $region36
        $region35: #{tpu_custom_call.1} parent=11 // pred_region
          _
        $region36: #{tpu_custom_call.1} parent=11 // pred_fallthru
          _
        // Predicated region
        $region37: #{tpu_custom_call.1} parent=11 // pred_check
          %p1668 = pneg %p367
        $region38: #{tpu_custom_call.1} parent=11 // pred_check_branch
          %1670 = sbr.rel (%p1668) target = $region40
        $region39: #{tpu_custom_call.1} parent=11 // pred_region
          %s1672 = ssub.s32 16, 16
          %1673 = vsyncadd [#allocation12], %s1672
          %s1675 = sshll.u32 [#allocation11], 4
          %s1676 = int_to_ptr.vmem [resolvable:$true] %s1675
          %1678 = dma.hbm_to_vmem [thread:$0]  %s17, 16, %s1676, [#allocation12]
        $region40: #{tpu_custom_call.1} parent=11 // pred_fallthru
          _
        // Predicated region
        $region41: #{tpu_custom_call.1} parent=11 // pred_check
          %p1679 = pneg %p388
        $region42: #{tpu_custom_call.1} parent=11 // pred_check_branch
          %1681 = sbr.rel (%p1679) target = $region44
        $region43: #{tpu_custom_call.1} parent=11 // pred_region
          %s1683 = ssub.s32 256, 256
          %1684 = vsyncadd [#allocation12], %s1683
          %s1685 = sshll.u32 [#allocation13], 4
          %s1686 = int_to_ptr.vmem [resolvable:$true] %s1685
          %1691 = dma.hbm_to_vmem [thread:$0]  %s19, 256, %s1686, [#allocation12], 64, 64, 4
        $region44: #{tpu_custom_call.1} parent=11 // pred_fallthru
          _
        // Predicated region
        $region45: #{tpu_custom_call.1} parent=11 // pred_check
          %p1692 = pneg %p409
        $region46: #{tpu_custom_call.1} parent=11 // pred_check_branch
          %1694 = sbr.rel (%p1692) target = $region48
        $region47: #{tpu_custom_call.1} parent=11 // pred_region
          %s1696 = ssub.s32 16, 16
          %1697 = vsyncadd [#allocation15], %s1696
          %s1699 = sshll.u32 [#allocation14], 4
          %s1700 = int_to_ptr.vmem [resolvable:$true] %s1699
          %1702 = dma.hbm_to_vmem [thread:$0]  %s21, 16, %s1700, [#allocation15]
        $region48: #{tpu_custom_call.1} parent=11 // pred_fallthru
          _
        // Predicated region
        $region49: #{tpu_custom_call.1} parent=11 // pred_check
          %p1703 = pneg %p430
        $region50: #{tpu_custom_call.1} parent=11 // pred_check_branch
          %1705 = sbr.rel (%p1703) target = $region52
        $region51: #{tpu_custom_call.1} parent=11 // pred_region
          %s1707 = ssub.s32 16, 16
          %1708 = vsyncadd [#allocation15], %s1707
          %s1710 = sshll.u32 [#allocation16], 4
          %s1711 = int_to_ptr.vmem [resolvable:$true] %s1710
          %1713 = dma.hbm_to_vmem [thread:$0]  %s23, 16, %s1711, [#allocation15]
        $region52: #{tpu_custom_call.1} parent=11 // pred_fallthru
          _
        // Predicated region
        $region53: #{tpu_custom_call.1} parent=11 // pred_check
          %p1714 = pneg %p451
        $region54: #{tpu_custom_call.1} parent=11 // pred_check_branch
          %1716 = sbr.rel (%p1714) target = $region56
        $region55: #{tpu_custom_call.1} parent=11 // pred_region
          %s1718 = ssub.s32 16, 16
          %1719 = vsyncadd [#allocation18], %s1718
          %s1721 = sshll.u32 [#allocation17], 4
          %s1722 = int_to_ptr.vmem [resolvable:$true] %s1721
          %1724 = dma.hbm_to_vmem [thread:$0]  %s25, 16, %s1722, [#allocation18]
        $region56: #{tpu_custom_call.1} parent=11 // pred_fallthru
          _
        // Predicated region
        $region57: #{tpu_custom_call.1} parent=11 // pred_check
          %p1725 = pneg %p472
        $region58: #{tpu_custom_call.1} parent=11 // pred_check_branch
          %1727 = sbr.rel (%p1725) target = $region60
        $region59: #{tpu_custom_call.1} parent=11 // pred_region
          %s1729 = ssub.s32 16, 16
          %1730 = vsyncadd [#allocation18], %s1729
          %s1732 = sshll.u32 [#allocation19], 4
          %s1733 = int_to_ptr.vmem [resolvable:$true] %s1732
          %1735 = dma.hbm_to_vmem [thread:$0]  %s27, 16, %s1733, [#allocation18]
        $region60: #{tpu_custom_call.1} parent=11 // pred_fallthru
          _
        // Predicated region
        $region61: #{tpu_custom_call.1} parent=11 // pred_check
          %p1736 = pneg %p493
        $region62: #{tpu_custom_call.1} parent=11 // pred_check_branch
          %1738 = sbr.rel (%p1736) target = $region64
        $region63: #{tpu_custom_call.1} parent=11 // pred_region
          %s1740 = ssub.s32 16, 16
          %1741 = vsyncadd [#allocation21], %s1740
          %s1743 = sshll.u32 [#allocation20], 4
          %s1744 = int_to_ptr.vmem [resolvable:$true] %s1743
          %1746 = dma.hbm_to_vmem [thread:$0]  %s29, 16, %s1744, [#allocation21]
        $region64: #{tpu_custom_call.1} parent=11 // pred_fallthru
          _
        // Predicated region
        $region65: #{tpu_custom_call.1} parent=11 // pred_check
          %p1747 = pneg %p514
        $region66: #{tpu_custom_call.1} parent=11 // pred_check_branch
          %1749 = sbr.rel (%p1747) target = $region68
        $region67: #{tpu_custom_call.1} parent=11 // pred_region
          _
        $region68: #{tpu_custom_call.1} parent=11 // pred_fallthru
          _
        // Predicated region
        $region69: #{tpu_custom_call.1} parent=11 // pred_check
          %p1750 = pneg %p535
        $region70: #{tpu_custom_call.1} parent=11 // pred_check_branch
          %1752 = sbr.rel (%p1750) target = $region72
        $region71: #{tpu_custom_call.1} parent=11 // pred_region
          _
        $region72: #{tpu_custom_call.1} parent=11 // pred_fallthru
          _
        // Predicated region
        $region73: #{tpu_custom_call.1} parent=11 // pred_check
          %p1753 = pneg %p556
        $region74: #{tpu_custom_call.1} parent=11 // pred_check_branch
          %1755 = sbr.rel (%p1753) target = $region76
        $region75: #{tpu_custom_call.1} parent=11 // pred_region
          %s1757 = ssub.s32 16, 16
          %1758 = vsyncadd [#allocation21], %s1757
          %s1760 = sshll.u32 [#allocation22], 4
          %s1761 = int_to_ptr.vmem [resolvable:$true] %s1760
          %1763 = dma.hbm_to_vmem [thread:$0]  %s35, 16, %s1761, [#allocation21]
        $region76: #{tpu_custom_call.1} parent=11 // pred_fallthru
          _
        // Predicated region
        $region77: #{tpu_custom_call.1} parent=11 // pred_check
          %p1764 = pneg %p577
        $region78: #{tpu_custom_call.1} parent=11 // pred_check_branch
          %1766 = sbr.rel (%p1764) target = $region80
        $region79: #{tpu_custom_call.1} parent=11 // pred_region
          %s1768 = ssub.s32 256, 256
          %1769 = vsyncadd [#allocation24], %s1768
          %s1770 = sshll.u32 [#allocation23], 4
          %s1771 = int_to_ptr.vmem [resolvable:$true] %s1770
          %1776 = dma.hbm_to_vmem [thread:$0]  %s37, 256, %s1771, [#allocation24], 64, 64, 4
        $region80: #{tpu_custom_call.1} parent=11 // pred_fallthru
          _
        // Predicated region
        $region81: #{tpu_custom_call.1} parent=11 // pred_check
          %p1777 = pneg %p598
        $region82: #{tpu_custom_call.1} parent=11 // pred_check_branch
          %1779 = sbr.rel (%p1777) target = $region84
        $region83: #{tpu_custom_call.1} parent=11 // pred_region
          %s1781 = ssub.s32 16, 16
          %1782 = vsyncadd [#allocation24], %s1781
          %s1784 = sshll.u32 [#allocation25], 4
          %s1785 = int_to_ptr.vmem [resolvable:$true] %s1784
          %1787 = dma.hbm_to_vmem [thread:$0]  %s39, 16, %s1785, [#allocation24]
        $region84: #{tpu_custom_call.1} parent=11 // pred_fallthru
          _
        // Predicated region
        $region85: #{tpu_custom_call.1} parent=11 // pred_check
          %p1788 = pneg %p619
        $region86: #{tpu_custom_call.1} parent=11 // pred_check_branch
          %1790 = sbr.rel (%p1788) target = $region88
        $region87: #{tpu_custom_call.1} parent=11 // pred_region
          _
        $region88: #{tpu_custom_call.1} parent=11 // pred_fallthru
          _
        // Predicated region
        $region89: #{tpu_custom_call.1} parent=11 // pred_check
          %p1791 = pneg %p640
        $region90: #{tpu_custom_call.1} parent=11 // pred_check_branch
          %1793 = sbr.rel (%p1791) target = $region92
        $region91: #{tpu_custom_call.1} parent=11 // pred_region
          %s1795 = ssub.s32 16, 16
          %1796 = vsyncadd [#allocation27], %s1795
          %s1798 = sshll.u32 [#allocation26], 4
          %s1799 = int_to_ptr.vmem [resolvable:$true] %s1798
          %1801 = dma.hbm_to_vmem [thread:$0]  %s43, 16, %s1799, [#allocation27]
        $region92: #{tpu_custom_call.1} parent=11 // pred_fallthru
          _
        // Predicated region
        $region93: #{tpu_custom_call.1} parent=11 // pred_check
          %p1802 = pneg %p661
        $region94: #{tpu_custom_call.1} parent=11 // pred_check_branch
          %1804 = sbr.rel (%p1802) target = $region96
        $region95: #{tpu_custom_call.1} parent=11 // pred_region
          %s1806 = ssub.s32 256, 256
          %1807 = vsyncadd [#allocation27], %s1806
          %s1808 = sshll.u32 [#allocation28], 4
          %s1809 = int_to_ptr.vmem [resolvable:$true] %s1808
          %1814 = dma.hbm_to_vmem [thread:$0]  %s45, 256, %s1809, [#allocation27], 64, 64, 4
        $region96: #{tpu_custom_call.1} parent=11 // pred_fallthru
          _
        // Predicated region
        $region97: #{tpu_custom_call.1} parent=11 // pred_check
          %p1815 = pneg %p682
        $region98: #{tpu_custom_call.1} parent=11 // pred_check_branch
          %1817 = sbr.rel (%p1815) target = $region100
        $region99: #{tpu_custom_call.1} parent=11 // pred_region
          %s1819 = ssub.s32 16, 16
          %1820 = vsyncadd [#allocation30], %s1819
          %s1822 = sshll.u32 [#allocation29], 4
          %s1823 = int_to_ptr.vmem [resolvable:$true] %s1822
          %1825 = dma.hbm_to_vmem [thread:$0]  %s47, 16, %s1823, [#allocation30]
        $region100: #{tpu_custom_call.1} parent=11 // pred_fallthru
          _
        // Predicated region
        $region101: #{tpu_custom_call.1} parent=11 // pred_check
          %p1826 = pneg %p703
        $region102: #{tpu_custom_call.1} parent=11 // pred_check_branch
          %1828 = sbr.rel (%p1826) target = $region104
        $region103: #{tpu_custom_call.1} parent=11 // pred_region
          %s1830 = ssub.s32 16, 16
          %1831 = vsyncadd [#allocation30], %s1830
          %s1833 = sshll.u32 [#allocation31], 4
          %s1834 = int_to_ptr.vmem [resolvable:$true] %s1833
          %1836 = dma.hbm_to_vmem [thread:$0]  %s49, 16, %s1834, [#allocation30]
        $region104: #{tpu_custom_call.1} parent=11 // pred_fallthru
          _
        // Predicated region
        $region105: #{tpu_custom_call.1} parent=11 // pred_check
          %p1837 = pneg %p724
        $region106: #{tpu_custom_call.1} parent=11 // pred_check_branch
          %1839 = sbr.rel (%p1837) target = $region108
        $region107: #{tpu_custom_call.1} parent=11 // pred_region
          %s1841 = ssub.s32 16, 16
          %1842 = vsyncadd [#allocation33], %s1841
          %s1844 = sshll.u32 [#allocation32], 4
          %s1845 = int_to_ptr.vmem [resolvable:$true] %s1844
          %1847 = dma.hbm_to_vmem [thread:$0]  %s51, 16, %s1845, [#allocation33]
        $region108: #{tpu_custom_call.1} parent=11 // pred_fallthru
          _
        // Predicated region
        $region109: #{tpu_custom_call.1} parent=11 // pred_check
          %p1848 = pneg %p745
        $region110: #{tpu_custom_call.1} parent=11 // pred_check_branch
          %1850 = sbr.rel (%p1848) target = $region112
        $region111: #{tpu_custom_call.1} parent=11 // pred_region
          %s1852 = ssub.s32 16, 16
          %1853 = vsyncadd [#allocation33], %s1852
          %s1855 = sshll.u32 [#allocation34], 4
          %s1856 = int_to_ptr.vmem [resolvable:$true] %s1855
          %1858 = dma.hbm_to_vmem [thread:$0]  %s53, 16, %s1856, [#allocation33]
        $region112: #{tpu_custom_call.1} parent=11 // pred_fallthru
          _
        // Predicated region
        $region113: #{tpu_custom_call.1} parent=11 // pred_check
          %p1859 = pneg %p766
        $region114: #{tpu_custom_call.1} parent=11 // pred_check_branch
          %1861 = sbr.rel (%p1859) target = $region116
        $region115: #{tpu_custom_call.1} parent=11 // pred_region
          %s1863 = ssub.s32 16, 16
          %1864 = vsyncadd [#allocation36], %s1863
          %s1866 = sshll.u32 [#allocation35], 4
          %s1867 = int_to_ptr.vmem [resolvable:$true] %s1866
          %1869 = dma.hbm_to_vmem [thread:$0]  %s55, 16, %s1867, [#allocation36]
        $region116: #{tpu_custom_call.1} parent=11 // pred_fallthru
          _
        // Predicated region
        $region117: #{tpu_custom_call.1} parent=11 // pred_check
          %p1870 = pneg %p787
        $region118: #{tpu_custom_call.1} parent=11 // pred_check_branch
          %1872 = sbr.rel (%p1870) target = $region120
        $region119: #{tpu_custom_call.1} parent=11 // pred_region
          _
        $region120: #{tpu_custom_call.1} parent=11 // pred_fallthru
          _
        // Predicated region
        $region121: #{tpu_custom_call.1} parent=11 // pred_check
          %p1873 = pneg %p808
        $region122: #{tpu_custom_call.1} parent=11 // pred_check_branch
          %1875 = sbr.rel (%p1873) target = $region124
        $region123: #{tpu_custom_call.1} parent=11 // pred_region
          %s1877 = ssub.s32 16, 16
          %1878 = vsyncadd [#allocation36], %s1877
          %s1880 = sshll.u32 [#allocation37], 4
          %s1881 = int_to_ptr.vmem [resolvable:$true] %s1880
          %1883 = dma.hbm_to_vmem [thread:$0]  %s59, 16, %s1881, [#allocation36]
        $region124: #{tpu_custom_call.1} parent=11 // pred_fallthru
          _
        // Predicated region
        $region125: #{tpu_custom_call.1} parent=11 // pred_check
          %p1884 = pneg %p829
        $region126: #{tpu_custom_call.1} parent=11 // pred_check_branch
          %1886 = sbr.rel (%p1884) target = $region128
        $region127: #{tpu_custom_call.1} parent=11 // pred_region
          _
        $region128: #{tpu_custom_call.1} parent=11 // pred_fallthru
          _
        // Predicated region
        $region129: #{tpu_custom_call.1} parent=11 // pred_check
          %p1887 = pneg %p850
        $region130: #{tpu_custom_call.1} parent=11 // pred_check_branch
          %1889 = sbr.rel (%p1887) target = $region132
        $region131: #{tpu_custom_call.1} parent=11 // pred_region
          %s1891 = ssub.s32 16, 16
          %1892 = vsyncadd [#allocation39], %s1891
          %s1894 = sshll.u32 [#allocation38], 4
          %s1895 = int_to_ptr.vmem [resolvable:$true] %s1894
          %1897 = dma.hbm_to_vmem [thread:$0]  %s63, 16, %s1895, [#allocation39]
        $region132: #{tpu_custom_call.1} parent=11 // pred_fallthru
          _
        // Predicated region
        $region133: #{tpu_custom_call.1} parent=11 // pred_check
          %p1898 = pneg %p871
        $region134: #{tpu_custom_call.1} parent=11 // pred_check_branch
          %1900 = sbr.rel (%p1898) target = $region136
        $region135: #{tpu_custom_call.1} parent=11 // pred_region
          _
        $region136: #{tpu_custom_call.1} parent=11 // pred_fallthru
          _
        // Predicated region
        $region137: #{tpu_custom_call.1} parent=11 // pred_check
          %p1901 = pneg %p892
        $region138: #{tpu_custom_call.1} parent=11 // pred_check_branch
          %1903 = sbr.rel (%p1901) target = $region140
        $region139: #{tpu_custom_call.1} parent=11 // pred_region
          %s1905 = ssub.s32 16, 16
          %1906 = vsyncadd [#allocation39], %s1905
          %s1908 = sshll.u32 [#allocation40], 4
          %s1909 = int_to_ptr.vmem [resolvable:$true] %s1908
          %1911 = dma.hbm_to_vmem [thread:$0]  %s67, 16, %s1909, [#allocation39]
        $region140: #{tpu_custom_call.1} parent=11 // pred_fallthru
          _
        // Predicated region
        $region141: #{tpu_custom_call.1} parent=11 // pred_check
          %p1912 = pneg %p913
        $region142: #{tpu_custom_call.1} parent=11 // pred_check_branch
          %1914 = sbr.rel (%p1912) target = $region144
        $region143: #{tpu_custom_call.1} parent=11 // pred_region
          %s1916 = ssub.s32 256, 256
          %1917 = vsyncadd [#allocation42], %s1916
          %s1918 = sshll.u32 [#allocation41], 4
          %s1919 = int_to_ptr.vmem [resolvable:$true] %s1918
          %1924 = dma.hbm_to_vmem [thread:$0]  %s69, 256, %s1919, [#allocation42], 64, 64, 4
        $region144: #{tpu_custom_call.1} parent=11 // pred_fallthru
          _
        // Predicated region
        $region145: #{tpu_custom_call.1} parent=11 // pred_check
          %p1925 = pneg %p934
        $region146: #{tpu_custom_call.1} parent=11 // pred_check_branch
          %1927 = sbr.rel (%p1925) target = $region148
        $region147: #{tpu_custom_call.1} parent=11 // pred_region
          %s1929 = ssub.s32 16, 16
          %1930 = vsyncadd [#allocation42], %s1929
          %s1932 = sshll.u32 [#allocation43], 4
          %s1933 = int_to_ptr.vmem [resolvable:$true] %s1932
          %1935 = dma.hbm_to_vmem [thread:$0]  %s71, 16, %s1933, [#allocation42]
        $region148: #{tpu_custom_call.1} parent=11 // pred_fallthru
          _
        // Predicated region
        $region149: #{tpu_custom_call.1} parent=11 // pred_check
          %p1936 = pneg %p955
        $region150: #{tpu_custom_call.1} parent=11 // pred_check_branch
          %1938 = sbr.rel (%p1936) target = $region152
        $region151: #{tpu_custom_call.1} parent=11 // pred_region
          %s1940 = ssub.s32 16, 16
          %1941 = vsyncadd [#allocation45], %s1940
          %s1943 = sshll.u32 [#allocation44], 4
          %s1944 = int_to_ptr.vmem [resolvable:$true] %s1943
          %1946 = dma.hbm_to_vmem [thread:$0]  %s73, 16, %s1944, [#allocation45]
        $region152: #{tpu_custom_call.1} parent=11 // pred_fallthru
          _
        // Predicated region
        $region153: #{tpu_custom_call.1} parent=11 // pred_check
          %p1947 = pneg %p976
        $region154: #{tpu_custom_call.1} parent=11 // pred_check_branch
          %1949 = sbr.rel (%p1947) target = $region156
        $region155: #{tpu_custom_call.1} parent=11 // pred_region
          %s1951 = ssub.s32 16, 16
          %1952 = vsyncadd [#allocation45], %s1951
          %s1954 = sshll.u32 [#allocation46], 4
          %s1955 = int_to_ptr.vmem [resolvable:$true] %s1954
          %1957 = dma.hbm_to_vmem [thread:$0]  %s75, 16, %s1955, [#allocation45]
        $region156: #{tpu_custom_call.1} parent=11 // pred_fallthru
          _
        // Predicated region
        $region157: #{tpu_custom_call.1} parent=11 // pred_check
          %p1958 = pneg %p997
        $region158: #{tpu_custom_call.1} parent=11 // pred_check_branch
          %1960 = sbr.rel (%p1958) target = $region160
        $region159: #{tpu_custom_call.1} parent=11 // pred_region
          %s1962 = ssub.s32 16, 16
          %1963 = vsyncadd [#allocation48], %s1962
          %s1965 = sshll.u32 [#allocation47], 4
          %s1966 = int_to_ptr.vmem [resolvable:$true] %s1965
          %1968 = dma.hbm_to_vmem [thread:$0]  %s77, 16, %s1966, [#allocation48]
        $region160: #{tpu_custom_call.1} parent=11 // pred_fallthru
          _
        // Predicated region
        $region161: #{tpu_custom_call.1} parent=11 // pred_check
          %p1969 = pneg %p1018
        $region162: #{tpu_custom_call.1} parent=11 // pred_check_branch
          %1971 = sbr.rel (%p1969) target = $region164
        $region163: #{tpu_custom_call.1} parent=11 // pred_region
          %s1973 = ssub.s32 16, 16
          %1974 = vsyncadd [#allocation48], %s1973
          %s1976 = sshll.u32 [#allocation49], 4
          %s1977 = int_to_ptr.vmem [resolvable:$true] %s1976
          %1979 = dma.hbm_to_vmem [thread:$0]  %s79, 16, %s1977, [#allocation48]
        $region164: #{tpu_custom_call.1} parent=11 // pred_fallthru
          _
        // Predicated region
        $region165: #{tpu_custom_call.1} parent=11 // pred_check
          %p1980 = pneg %p1039
        $region166: #{tpu_custom_call.1} parent=11 // pred_check_branch
          %1982 = sbr.rel (%p1980) target = $region168
        $region167: #{tpu_custom_call.1} parent=11 // pred_region
          _
        $region168: #{tpu_custom_call.1} parent=11 // pred_fallthru
          _
        // Predicated region
        $region169: #{tpu_custom_call.1} parent=11 // pred_check
          %p1983 = pneg %p1060
        $region170: #{tpu_custom_call.1} parent=11 // pred_check_branch
          %1985 = sbr.rel (%p1983) target = $region172
        $region171: #{tpu_custom_call.1} parent=11 // pred_region
          _
        $region172: #{tpu_custom_call.1} parent=11 // pred_fallthru
          _
        // Predicated region
        $region173: #{tpu_custom_call.1} parent=11 // pred_check
          %p1986 = pneg %p1081
        $region174: #{tpu_custom_call.1} parent=11 // pred_check_branch
          %1988 = sbr.rel (%p1986) target = $region176
        $region175: #{tpu_custom_call.1} parent=11 // pred_region
          %s1990 = ssub.s32 16, 16
          %1991 = vsyncadd [#allocation51], %s1990
          %s1993 = sshll.u32 [#allocation50], 4
          %s1994 = int_to_ptr.vmem [resolvable:$true] %s1993
          %1996 = dma.hbm_to_vmem [thread:$0]  %s85, 16, %s1994, [#allocation51]
        $region176: #{tpu_custom_call.1} parent=11 // pred_fallthru
          _
        // Predicated region
        $region177: #{tpu_custom_call.1} parent=11 // pred_check
          %p1997 = pneg %p1102
        $region178: #{tpu_custom_call.1} parent=11 // pred_check_branch
          %1999 = sbr.rel (%p1997) target = $region180
        $region179: #{tpu_custom_call.1} parent=11 // pred_region
          %s2001 = ssub.s32 256, 256
          %2002 = vsyncadd [#allocation51], %s2001
          %s2003 = sshll.u32 [#allocation52], 4
          %s2004 = int_to_ptr.vmem [resolvable:$true] %s2003
          %2009 = dma.hbm_to_vmem [thread:$0]  %s87, 256, %s2004, [#allocation51], 64, 64, 4
        $region180: #{tpu_custom_call.1} parent=11 // pred_fallthru
          _
        // Predicated region
        $region181: #{tpu_custom_call.1} parent=11 // pred_check
          %p2010 = pneg %p1123
        $region182: #{tpu_custom_call.1} parent=11 // pred_check_branch
          %2012 = sbr.rel (%p2010) target = $region184
        $region183: #{tpu_custom_call.1} parent=11 // pred_region
          %s2014 = ssub.s32 16, 16
          %2015 = vsyncadd [#allocation54], %s2014
          %s2017 = sshll.u32 [#allocation53], 4
          %s2018 = int_to_ptr.vmem [resolvable:$true] %s2017
          %2020 = dma.hbm_to_vmem [thread:$0]  %s89, 16, %s2018, [#allocation54]
        $region184: #{tpu_custom_call.1} parent=11 // pred_fallthru
          _
        // Predicated region
        $region185: #{tpu_custom_call.1} parent=11 // pred_check
          %p2021 = pneg %p1144
        $region186: #{tpu_custom_call.1} parent=11 // pred_check_branch
          %2023 = sbr.rel (%p2021) target = $region188
        $region187: #{tpu_custom_call.1} parent=11 // pred_region
          _
        $region188: #{tpu_custom_call.1} parent=11 // pred_fallthru
          _
        // Predicated region
        $region189: #{tpu_custom_call.1} parent=11 // pred_check
          %p2024 = pneg %p1165
        $region190: #{tpu_custom_call.1} parent=11 // pred_check_branch
          %2026 = sbr.rel (%p2024) target = $region192
        $region191: #{tpu_custom_call.1} parent=11 // pred_region
          %s2028 = ssub.s32 16, 16
          %2029 = vsyncadd [#allocation54], %s2028
          %s2031 = sshll.u32 [#allocation55], 4
          %s2032 = int_to_ptr.vmem [resolvable:$true] %s2031
          %2034 = dma.hbm_to_vmem [thread:$0]  %s93, 16, %s2032, [#allocation54]
        $region192: #{tpu_custom_call.1} parent=11 // pred_fallthru
          _
        // Predicated region
        $region193: #{tpu_custom_call.1} parent=11 // pred_check
          %p2035 = pneg %p1186
        $region194: #{tpu_custom_call.1} parent=11 // pred_check_branch
          %2037 = sbr.rel (%p2035) target = $region196
        $region195: #{tpu_custom_call.1} parent=11 // pred_region
          %s2039 = ssub.s32 256, 256
          %2040 = vsyncadd [#allocation57], %s2039
          %s2041 = sshll.u32 [#allocation56], 4
          %s2042 = int_to_ptr.vmem [resolvable:$true] %s2041
          %2047 = dma.hbm_to_vmem [thread:$0]  %s95, 256, %s2042, [#allocation57], 64, 64, 4
        $region196: #{tpu_custom_call.1} parent=11 // pred_fallthru
          _
        // Predicated region
        $region197: #{tpu_custom_call.1} parent=11 // pred_check
          %p2048 = pneg %p1207
        $region198: #{tpu_custom_call.1} parent=11 // pred_check_branch
          %2050 = sbr.rel (%p2048) target = $region200
        $region199: #{tpu_custom_call.1} parent=11 // pred_region
          %s2052 = ssub.s32 16, 16
          %2053 = vsyncadd [#allocation57], %s2052
          %s2055 = sshll.u32 [#allocation58], 4
          %s2056 = int_to_ptr.vmem [resolvable:$true] %s2055
          %2058 = dma.hbm_to_vmem [thread:$0]  %s97, 16, %s2056, [#allocation57]
        $region200: #{tpu_custom_call.1} parent=11 // pred_fallthru
          _
        // Predicated region
        $region201: #{tpu_custom_call.1} parent=11 // pred_check
          %p2059 = pneg %p1228
        $region202: #{tpu_custom_call.1} parent=11 // pred_check_branch
          %2061 = sbr.rel (%p2059) target = $region204
        $region203: #{tpu_custom_call.1} parent=11 // pred_region
          %s2063 = ssub.s32 16, 16
          %2064 = vsyncadd [#allocation60], %s2063
          %s2066 = sshll.u32 [#allocation59], 4
          %s2067 = int_to_ptr.vmem [resolvable:$true] %s2066
          %2069 = dma.hbm_to_vmem [thread:$0]  %s99, 16, %s2067, [#allocation60]
        $region204: #{tpu_custom_call.1} parent=11 // pred_fallthru
          _
        // Predicated region
        $region205: #{tpu_custom_call.1} parent=11 // pred_check
          %p2070 = pneg %p1249
        $region206: #{tpu_custom_call.1} parent=11 // pred_check_branch
          %2072 = sbr.rel (%p2070) target = $region208
        $region207: #{tpu_custom_call.1} parent=11 // pred_region
          %s2074 = ssub.s32 16, 16
          %2075 = vsyncadd [#allocation60], %s2074
          %s2077 = sshll.u32 [#allocation61], 4
          %s2078 = int_to_ptr.vmem [resolvable:$true] %s2077
          %2080 = dma.hbm_to_vmem [thread:$0]  %s101, 16, %s2078, [#allocation60]
        $region208: #{tpu_custom_call.1} parent=11 // pred_fallthru
          _
        // Predicated region
        $region209: #{tpu_custom_call.1} parent=11 // pred_check
          %p2081 = pneg %p1270
        $region210: #{tpu_custom_call.1} parent=11 // pred_check_branch
          %2083 = sbr.rel (%p2081) target = $region212
        $region211: #{tpu_custom_call.1} parent=11 // pred_region
          %s2085 = ssub.s32 16, 16
          %2086 = vsyncadd [#allocation63], %s2085
          %s2088 = sshll.u32 [#allocation62], 4
          %s2089 = int_to_ptr.vmem [resolvable:$true] %s2088
          %2091 = dma.hbm_to_vmem [thread:$0]  %s103, 16, %s2089, [#allocation63]
        $region212: #{tpu_custom_call.1} parent=11 // pred_fallthru
          _
        // Predicated region
        $region213: #{tpu_custom_call.1} parent=11 // pred_check
          %p2092 = pneg %p1291
        $region214: #{tpu_custom_call.1} parent=11 // pred_check_branch
          %2094 = sbr.rel (%p2092) target = $region216
        $region215: #{tpu_custom_call.1} parent=11 // pred_region
          %s2096 = ssub.s32 16, 16
          %2097 = vsyncadd [#allocation63], %s2096
          %s2099 = sshll.u32 [#allocation64], 4
          %s2100 = int_to_ptr.vmem [resolvable:$true] %s2099
          %2102 = dma.hbm_to_vmem [thread:$0]  %s105, 16, %s2100, [#allocation63]
        $region216: #{tpu_custom_call.1} parent=11 // pred_fallthru
          _
        // Predicated region
        $region217: #{tpu_custom_call.1} parent=11 // pred_check
          %p2103 = pneg %p1312
        $region218: #{tpu_custom_call.1} parent=11 // pred_check_branch
          %2105 = sbr.rel (%p2103) target = $region220
        $region219: #{tpu_custom_call.1} parent=11 // pred_region
          _
        $region220: #{tpu_custom_call.1} parent=11 // pred_fallthru
          _
        // Predicated region
        $region221: #{tpu_custom_call.1} parent=11 // pred_check
          %p2106 = pneg %p1333
        $region222: #{tpu_custom_call.1} parent=11 // pred_check_branch
          %2108 = sbr.rel (%p2106) target = $region224
        $region223: #{tpu_custom_call.1} parent=11 // pred_region
          _
        $region224: #{tpu_custom_call.1} parent=11 // pred_fallthru
          _
        // Predicated region
        $region225: #{tpu_custom_call.1} parent=11 // pred_check
          %p2109 = pneg %p1354
        $region226: #{tpu_custom_call.1} parent=11 // pred_check_branch
          %2111 = sbr.rel (%p2109) target = $region228
        $region227: #{tpu_custom_call.1} parent=11 // pred_region
          _
        $region228: #{tpu_custom_call.1} parent=11 // pred_fallthru
          _
        // Predicated region
        $region229: #{tpu_custom_call.1} parent=11 // pred_check
          %p2112 = pneg %p1375
        $region230: #{tpu_custom_call.1} parent=11 // pred_check_branch
          %2114 = sbr.rel (%p2112) target = $region232
        $region231: #{tpu_custom_call.1} parent=11 // pred_region
          _
        $region232: #{tpu_custom_call.1} parent=11 // pred_fallthru
          _
        // Predicated region
        $region233: #{tpu_custom_call.1} parent=11 // pred_check
          %p2115 = pneg %p1396
        $region234: #{tpu_custom_call.1} parent=11 // pred_check_branch
          %2117 = sbr.rel (%p2115) target = $region236
        $region235: #{tpu_custom_call.1} parent=11 // pred_region
          %s2119 = ssub.s32 256, 256
          %2120 = vsyncadd [#allocation66], %s2119
          %s2121 = sshll.u32 [#allocation65], 4
          %s2122 = int_to_ptr.vmem [resolvable:$true] %s2121
          %2127 = dma.hbm_to_vmem [thread:$0]  %s115, 256, %s2122, [#allocation66], 64, 64, 4
        $region236: #{tpu_custom_call.1} parent=11 // pred_fallthru
          _
        // Predicated region
        $region237: #{tpu_custom_call.1} parent=11 // pred_check
          %p2128 = pneg %p1417
        $region238: #{tpu_custom_call.1} parent=11 // pred_check_branch
          %2130 = sbr.rel (%p2128) target = $region240
        $region239: #{tpu_custom_call.1} parent=11 // pred_region
          _
        $region240: #{tpu_custom_call.1} parent=11 // pred_fallthru
          _
        // Predicated region
        $region241: #{tpu_custom_call.1} parent=11 // pred_check
          %p2131 = pneg %p1438
        $region242: #{tpu_custom_call.1} parent=11 // pred_check_branch
          %2133 = sbr.rel (%p2131) target = $region244
        $region243: #{tpu_custom_call.1} parent=11 // pred_region
          _
        $region244: #{tpu_custom_call.1} parent=11 // pred_fallthru
          _
        // Predicated region
        $region245: #{tpu_custom_call.1} parent=11 // pred_check
          %p2134 = pneg %p1459
        $region246: #{tpu_custom_call.1} parent=11 // pred_check_branch
          %2136 = sbr.rel (%p2134) target = $region248
        $region247: #{tpu_custom_call.1} parent=11 // pred_region
          %s2138 = ssub.s32 16, 16
          %2139 = vsyncadd [#allocation66], %s2138
          %s2141 = sshll.u32 [#allocation67], 4
          %s2142 = int_to_ptr.vmem [resolvable:$true] %s2141
          %2144 = dma.hbm_to_vmem [thread:$0]  %s121, 16, %s2142, [#allocation66]
        $region248: #{tpu_custom_call.1} parent=11 // pred_fallthru
          _
        // Predicated region
        $region249: #{tpu_custom_call.1} parent=11 // pred_check
          %p2145 = pneg %p1480
        $region250: #{tpu_custom_call.1} parent=11 // pred_check_branch
          %2147 = sbr.rel (%p2145) target = $region252
        $region251: #{tpu_custom_call.1} parent=11 // pred_region
          _
        $region252: #{tpu_custom_call.1} parent=11 // pred_fallthru
          _
        // Predicated region
        $region253: #{tpu_custom_call.1} parent=11 // pred_check
          %p2148 = pneg %p1501
        $region254: #{tpu_custom_call.1} parent=11 // pred_check_branch
          %2150 = sbr.rel (%p2148) target = $region256
        $region255: #{tpu_custom_call.1} parent=11 // pred_region
          _
        $region256: #{tpu_custom_call.1} parent=11 // pred_fallthru
          _
        // Predicated region
        $region257: #{tpu_custom_call.1} parent=11 // pred_check
          %p2151 = pneg %p1522
        $region258: #{tpu_custom_call.1} parent=11 // pred_check_branch
          %2153 = sbr.rel (%p2151) target = $region260
        $region259: #{tpu_custom_call.1} parent=11 // pred_region
          _
        $region260: #{tpu_custom_call.1} parent=11 // pred_fallthru
          _
        // Predicated region
        $region261: #{tpu_custom_call.1} parent=11 // pred_check
          %p2154 = pneg %p1543
        $region262: #{tpu_custom_call.1} parent=11 // pred_check_branch
          %2156 = sbr.rel (%p2154) target = $region264
        $region263: #{tpu_custom_call.1} parent=11 // pred_region
          _
        $region264: #{tpu_custom_call.1} parent=11 // pred_fallthru
          _
        // Predicated region
        $region265: #{tpu_custom_call.1} parent=11 // pred_check
          %p2157 = pneg %p1564
        $region266: #{tpu_custom_call.1} parent=11 // pred_check_branch
          %2159 = sbr.rel (%p2157) target = $region268
        $region267: #{tpu_custom_call.1} parent=11 // pred_region
          _
        $region268: #{tpu_custom_call.1} parent=11 // pred_fallthru
          _
        // Predicated region
        $region269: #{tpu_custom_call.1} parent=11 // pred_check
          %p2160 = pneg %p1585
        $region270: #{tpu_custom_call.1} parent=11 // pred_check_branch
          %2162 = sbr.rel (%p2160) target = $region272
        $region271: #{tpu_custom_call.1} parent=11 // pred_region
          _
        $region272: #{tpu_custom_call.1} parent=11 // pred_fallthru
          _
      $region12: #{tpu_custom_call.1} parent=5 // pred_fallthru
        _
      %p2163 = scmp.lt.s32.totalorder %s168, 2
      // Predicated region
      $region273: #{tpu_custom_call.1} parent=5 // pred_check
        %p2164 = pneg %p2163
      $region274: #{tpu_custom_call.1} parent=5 // pred_check_branch
        %2166 = sbr.rel (%p2164) target = $region276
      $region275: #{tpu_custom_call.1} parent=5 // pred_region
        // Predicated region
        $region277: #{tpu_custom_call.1} parent=275 // pred_check
          %p2167 = pneg %p209
        $region278: #{tpu_custom_call.1} parent=275 // pred_check_branch
          %2169 = sbr.rel (%p2167) target = $region280
        $region279: #{tpu_custom_call.1} parent=275 // pred_region
          %s2170 = sand.u32 %s168, 1
          %s2171 = scalar_lea.sflag [#allocation6], %s2170
          %s2172 = sand.u32 %s199, 1
          %s2173 = smul.addr %s2172, 16
          %s2174 = scalar_lea.vmem [#allocation5], %s2173
          %s2176 = ssub.s32 256, 256
          %2177 = vsyncadd %s2171, %s2176
          %s2178 = smul.addr %s168, 2
          %s2179 = smul.addr %s2178, 128
          %s2180 = scalar_lea.hbm %s3, %s2179
          %s2181 = sshll.u32 %s2174, 4
          %s2182 = int_to_ptr.vmem [resolvable:$true] %s2181
          %2187 = dma.hbm_to_vmem [thread:$0]  %s2180, 256, %s2182, %s2171, 128, 128, 8
        $region280: #{tpu_custom_call.1} parent=275 // pred_fallthru
          _
        // Predicated region
        $region281: #{tpu_custom_call.1} parent=275 // pred_check
          %p2188 = pneg %p235
        $region282: #{tpu_custom_call.1} parent=275 // pred_check_branch
          %2190 = sbr.rel (%p2188) target = $region284
        $region283: #{tpu_custom_call.1} parent=275 // pred_region
          %s2191 = sand.u32 %s168, 1
          %s2192 = scalar_lea.sflag [#allocation6], %s2191
          %s2193 = sand.u32 %s225, 1
          %s2194 = scalar_lea.vmem [#allocation7], %s2193
          %s2196 = ssub.s32 16, 16
          %2197 = vsyncadd %s2192, %s2196
          %s2198 = smul.addr %s168, 16
          %s2199 = scalar_lea.hbm %s5, %s2198
          %s2201 = sshll.u32 %s2194, 4
          %s2202 = int_to_ptr.vmem [resolvable:$true] %s2201
          %2204 = dma.hbm_to_vmem [thread:$0]  %s2199, 16, %s2202, %s2192
        $region284: #{tpu_custom_call.1} parent=275 // pred_fallthru
          _
      $region276: #{tpu_custom_call.1} parent=5 // pred_fallthru
        _
      %p2205 = scmp.le.s32.totalorder 1, %s168
      %p2206 = scmp.lt.s32.totalorder %s168, 3
      %p2207 = pnand %p2205, %p2206
      %p2208 = pneg %p2207
      // Predicated region
      $region285: #{tpu_custom_call.1} parent=5 // pred_check
        _
      $region286: #{tpu_custom_call.1} parent=5 // pred_check_branch
        %2210 = sbr.rel (%p2207) target = $region288
      $region287: #{tpu_custom_call.1} parent=5 // pred_region
        %s2211 = ssub.s32 %s168, 1
        // Predicated region
        $region289: #{tpu_custom_call.1} parent=287 // pred_check
          %p2212 = pneg %p189
        $region290: #{tpu_custom_call.1} parent=287 // pred_check_branch
          %2214 = sbr.rel (%p2212) target = $region292
        $region291: #{tpu_custom_call.1} parent=287 // pred_region
          %2215 = dma.done [#allocation3], 128
        $region292: #{tpu_custom_call.1} parent=287 // pred_fallthru
          _
        %s2216 = sand.u32 %s173, 1
        %s2217 = scalar_lea.sflag [#allocation6], %s2216
        %s2218 = sand.u32 %s202, 1
        %s2219 = smul.addr %s2218, 16
        %s2220 = scalar_lea.vmem [#allocation5], %s2219
        // Predicated region
        $region293: #{tpu_custom_call.1} parent=287 // pred_check
          %p2221 = pneg %p215
        $region294: #{tpu_custom_call.1} parent=287 // pred_check_branch
          %2223 = sbr.rel (%p2221) target = $region296
        $region295: #{tpu_custom_call.1} parent=287 // pred_region
          %2224 = dma.done %s2217, 256
        $region296: #{tpu_custom_call.1} parent=287 // pred_fallthru
          _
        %s2225 = sand.u32 %s173, 1
        %s2226 = scalar_lea.sflag [#allocation6], %s2225
        %s2227 = sand.u32 %s228, 1
        %s2228 = scalar_lea.vmem [#allocation7], %s2227
        // Predicated region
        $region297: #{tpu_custom_call.1} parent=287 // pred_check
          %p2229 = pneg %p241
        $region298: #{tpu_custom_call.1} parent=287 // pred_check_branch
          %2231 = sbr.rel (%p2229) target = $region300
        $region299: #{tpu_custom_call.1} parent=287 // pred_region
          %2232 = dma.done %s2226, 16
        $region300: #{tpu_custom_call.1} parent=287 // pred_fallthru
          _
        // Predicated region
        $region301: #{tpu_custom_call.1} parent=287 // pred_check
          %p2233 = pneg %p283
        $region302: #{tpu_custom_call.1} parent=287 // pred_check_branch
          %2235 = sbr.rel (%p2233) target = $region304
        $region303: #{tpu_custom_call.1} parent=287 // pred_region
          %2236 = dma.done [#allocation9], 16
        $region304: #{tpu_custom_call.1} parent=287 // pred_fallthru
          _
        // Predicated region
        $region305: #{tpu_custom_call.1} parent=287 // pred_check
          %p2237 = pneg %p325
        $region306: #{tpu_custom_call.1} parent=287 // pred_check_branch
          %2239 = sbr.rel (%p2237) target = $region308
        $region307: #{tpu_custom_call.1} parent=287 // pred_region
          %2240 = dma.done [#allocation9], 16
        $region308: #{tpu_custom_call.1} parent=287 // pred_fallthru
          _
        // Predicated region
        $region309: #{tpu_custom_call.1} parent=287 // pred_check
          %p2241 = pneg %p367
        $region310: #{tpu_custom_call.1} parent=287 // pred_check_branch
          %2243 = sbr.rel (%p2241) target = $region312
        $region311: #{tpu_custom_call.1} parent=287 // pred_region
          %2244 = dma.done [#allocation12], 16
        $region312: #{tpu_custom_call.1} parent=287 // pred_fallthru
          _
        // Predicated region
        $region313: #{tpu_custom_call.1} parent=287 // pred_check
          %p2245 = pneg %p388
        $region314: #{tpu_custom_call.1} parent=287 // pred_check_branch
          %2247 = sbr.rel (%p2245) target = $region316
        $region315: #{tpu_custom_call.1} parent=287 // pred_region
          %2248 = dma.done [#allocation12], 256
        $region316: #{tpu_custom_call.1} parent=287 // pred_fallthru
          _
        // Predicated region
        $region317: #{tpu_custom_call.1} parent=287 // pred_check
          %p2249 = pneg %p409
        $region318: #{tpu_custom_call.1} parent=287 // pred_check_branch
          %2251 = sbr.rel (%p2249) target = $region320
        $region319: #{tpu_custom_call.1} parent=287 // pred_region
          %2252 = dma.done [#allocation15], 16
        $region320: #{tpu_custom_call.1} parent=287 // pred_fallthru
          _
        // Predicated region
        $region321: #{tpu_custom_call.1} parent=287 // pred_check
          %p2253 = pneg %p430
        $region322: #{tpu_custom_call.1} parent=287 // pred_check_branch
          %2255 = sbr.rel (%p2253) target = $region324
        $region323: #{tpu_custom_call.1} parent=287 // pred_region
          %2256 = dma.done [#allocation15], 16
        $region324: #{tpu_custom_call.1} parent=287 // pred_fallthru
          _
        // Predicated region
        $region325: #{tpu_custom_call.1} parent=287 // pred_check
          %p2257 = pneg %p451
        $region326: #{tpu_custom_call.1} parent=287 // pred_check_branch
          %2259 = sbr.rel (%p2257) target = $region328
        $region327: #{tpu_custom_call.1} parent=287 // pred_region
          %2260 = dma.done [#allocation18], 16
        $region328: #{tpu_custom_call.1} parent=287 // pred_fallthru
          _
        // Predicated region
        $region329: #{tpu_custom_call.1} parent=287 // pred_check
          %p2261 = pneg %p472
        $region330: #{tpu_custom_call.1} parent=287 // pred_check_branch
          %2263 = sbr.rel (%p2261) target = $region332
        $region331: #{tpu_custom_call.1} parent=287 // pred_region
          %2264 = dma.done [#allocation18], 16
        $region332: #{tpu_custom_call.1} parent=287 // pred_fallthru
          _
        // Predicated region
        $region333: #{tpu_custom_call.1} parent=287 // pred_check
          %p2265 = pneg %p493
        $region334: #{tpu_custom_call.1} parent=287 // pred_check_branch
          %2267 = sbr.rel (%p2265) target = $region336
        $region335: #{tpu_custom_call.1} parent=287 // pred_region
          %2268 = dma.done [#allocation21], 16
        $region336: #{tpu_custom_call.1} parent=287 // pred_fallthru
          _
        // Predicated region
        $region337: #{tpu_custom_call.1} parent=287 // pred_check
          %p2269 = pneg %p556
        $region338: #{tpu_custom_call.1} parent=287 // pred_check_branch
          %2271 = sbr.rel (%p2269) target = $region340
        $region339: #{tpu_custom_call.1} parent=287 // pred_region
          %2272 = dma.done [#allocation21], 16
        $region340: #{tpu_custom_call.1} parent=287 // pred_fallthru
          _
        // Predicated region
        $region341: #{tpu_custom_call.1} parent=287 // pred_check
          %p2273 = pneg %p577
        $region342: #{tpu_custom_call.1} parent=287 // pred_check_branch
          %2275 = sbr.rel (%p2273) target = $region344
        $region343: #{tpu_custom_call.1} parent=287 // pred_region
          %2276 = dma.done [#allocation24], 256
        $region344: #{tpu_custom_call.1} parent=287 // pred_fallthru
          _
        // Predicated region
        $region345: #{tpu_custom_call.1} parent=287 // pred_check
          %p2277 = pneg %p598
        $region346: #{tpu_custom_call.1} parent=287 // pred_check_branch
          %2279 = sbr.rel (%p2277) target = $region348
        $region347: #{tpu_custom_call.1} parent=287 // pred_region
          %2280 = dma.done [#allocation24], 16
        $region348: #{tpu_custom_call.1} parent=287 // pred_fallthru
          _
        // Predicated region
        $region349: #{tpu_custom_call.1} parent=287 // pred_check
          %p2281 = pneg %p640
        $region350: #{tpu_custom_call.1} parent=287 // pred_check_branch
          %2283 = sbr.rel (%p2281) target = $region352
        $region351: #{tpu_custom_call.1} parent=287 // pred_region
          %2284 = dma.done [#allocation27], 16
        $region352: #{tpu_custom_call.1} parent=287 // pred_fallthru
          _
        // Predicated region
        $region353: #{tpu_custom_call.1} parent=287 // pred_check
          %p2285 = pneg %p661
        $region354: #{tpu_custom_call.1} parent=287 // pred_check_branch
          %2287 = sbr.rel (%p2285) target = $region356
        $region355: #{tpu_custom_call.1} parent=287 // pred_region
          %2288 = dma.done [#allocation27], 256
        $region356: #{tpu_custom_call.1} parent=287 // pred_fallthru
          _
        // Predicated region
        $region357: #{tpu_custom_call.1} parent=287 // pred_check
          %p2289 = pneg %p682
        $region358: #{tpu_custom_call.1} parent=287 // pred_check_branch
          %2291 = sbr.rel (%p2289) target = $region360
        $region359: #{tpu_custom_call.1} parent=287 // pred_region
          %2292 = dma.done [#allocation30], 16
        $region360: #{tpu_custom_call.1} parent=287 // pred_fallthru
          _
        // Predicated region
        $region361: #{tpu_custom_call.1} parent=287 // pred_check
          %p2293 = pneg %p703
        $region362: #{tpu_custom_call.1} parent=287 // pred_check_branch
          %2295 = sbr.rel (%p2293) target = $region364
        $region363: #{tpu_custom_call.1} parent=287 // pred_region
          %2296 = dma.done [#allocation30], 16
        $region364: #{tpu_custom_call.1} parent=287 // pred_fallthru
          _
        // Predicated region
        $region365: #{tpu_custom_call.1} parent=287 // pred_check
          %p2297 = pneg %p724
        $region366: #{tpu_custom_call.1} parent=287 // pred_check_branch
          %2299 = sbr.rel (%p2297) target = $region368
        $region367: #{tpu_custom_call.1} parent=287 // pred_region
          %2300 = dma.done [#allocation33], 16
        $region368: #{tpu_custom_call.1} parent=287 // pred_fallthru
          _
        // Predicated region
        $region369: #{tpu_custom_call.1} parent=287 // pred_check
          %p2301 = pneg %p745
        $region370: #{tpu_custom_call.1} parent=287 // pred_check_branch
          %2303 = sbr.rel (%p2301) target = $region372
        $region371: #{tpu_custom_call.1} parent=287 // pred_region
          %2304 = dma.done [#allocation33], 16
        $region372: #{tpu_custom_call.1} parent=287 // pred_fallthru
          _
        // Predicated region
        $region373: #{tpu_custom_call.1} parent=287 // pred_check
          %p2305 = pneg %p766
        $region374: #{tpu_custom_call.1} parent=287 // pred_check_branch
          %2307 = sbr.rel (%p2305) target = $region376
        $region375: #{tpu_custom_call.1} parent=287 // pred_region
          %2308 = dma.done [#allocation36], 16
        $region376: #{tpu_custom_call.1} parent=287 // pred_fallthru
          _
        // Predicated region
        $region377: #{tpu_custom_call.1} parent=287 // pred_check
          %p2309 = pneg %p808
        $region378: #{tpu_custom_call.1} parent=287 // pred_check_branch
          %2311 = sbr.rel (%p2309) target = $region380
        $region379: #{tpu_custom_call.1} parent=287 // pred_region
          %2312 = dma.done [#allocation36], 16
        $region380: #{tpu_custom_call.1} parent=287 // pred_fallthru
          _
        // Predicated region
        $region381: #{tpu_custom_call.1} parent=287 // pred_check
          %p2313 = pneg %p850
        $region382: #{tpu_custom_call.1} parent=287 // pred_check_branch
          %2315 = sbr.rel (%p2313) target = $region384
        $region383: #{tpu_custom_call.1} parent=287 // pred_region
          %2316 = dma.done [#allocation39], 16
        $region384: #{tpu_custom_call.1} parent=287 // pred_fallthru
          _
        // Predicated region
        $region385: #{tpu_custom_call.1} parent=287 // pred_check
          %p2317 = pneg %p892
        $region386: #{tpu_custom_call.1} parent=287 // pred_check_branch
          %2319 = sbr.rel (%p2317) target = $region388
        $region387: #{tpu_custom_call.1} parent=287 // pred_region
          %2320 = dma.done [#allocation39], 16
        $region388: #{tpu_custom_call.1} parent=287 // pred_fallthru
          _
        // Predicated region
        $region389: #{tpu_custom_call.1} parent=287 // pred_check
          %p2321 = pneg %p913
        $region390: #{tpu_custom_call.1} parent=287 // pred_check_branch
          %2323 = sbr.rel (%p2321) target = $region392
        $region391: #{tpu_custom_call.1} parent=287 // pred_region
          %2324 = dma.done [#allocation42], 256
        $region392: #{tpu_custom_call.1} parent=287 // pred_fallthru
          _
        // Predicated region
        $region393: #{tpu_custom_call.1} parent=287 // pred_check
          %p2325 = pneg %p934
        $region394: #{tpu_custom_call.1} parent=287 // pred_check_branch
          %2327 = sbr.rel (%p2325) target = $region396
        $region395: #{tpu_custom_call.1} parent=287 // pred_region
          %2328 = dma.done [#allocation42], 16
        $region396: #{tpu_custom_call.1} parent=287 // pred_fallthru
          _
        // Predicated region
        $region397: #{tpu_custom_call.1} parent=287 // pred_check
          %p2329 = pneg %p955
        $region398: #{tpu_custom_call.1} parent=287 // pred_check_branch
          %2331 = sbr.rel (%p2329) target = $region400
        $region399: #{tpu_custom_call.1} parent=287 // pred_region
          %2332 = dma.done [#allocation45], 16
        $region400: #{tpu_custom_call.1} parent=287 // pred_fallthru
          _
        // Predicated region
        $region401: #{tpu_custom_call.1} parent=287 // pred_check
          %p2333 = pneg %p976
        $region402: #{tpu_custom_call.1} parent=287 // pred_check_branch
          %2335 = sbr.rel (%p2333) target = $region404
        $region403: #{tpu_custom_call.1} parent=287 // pred_region
          %2336 = dma.done [#allocation45], 16
        $region404: #{tpu_custom_call.1} parent=287 // pred_fallthru
          _
        // Predicated region
        $region405: #{tpu_custom_call.1} parent=287 // pred_check
          %p2337 = pneg %p997
        $region406: #{tpu_custom_call.1} parent=287 // pred_check_branch
          %2339 = sbr.rel (%p2337) target = $region408
        $region407: #{tpu_custom_call.1} parent=287 // pred_region
          %2340 = dma.done [#allocation48], 16
        $region408: #{tpu_custom_call.1} parent=287 // pred_fallthru
          _
        // Predicated region
        $region409: #{tpu_custom_call.1} parent=287 // pred_check
          %p2341 = pneg %p1018
        $region410: #{tpu_custom_call.1} parent=287 // pred_check_branch
          %2343 = sbr.rel (%p2341) target = $region412
        $region411: #{tpu_custom_call.1} parent=287 // pred_region
          %2344 = dma.done [#allocation48], 16
        $region412: #{tpu_custom_call.1} parent=287 // pred_fallthru
          _
        // Predicated region
        $region413: #{tpu_custom_call.1} parent=287 // pred_check
          %p2345 = pneg %p1081
        $region414: #{tpu_custom_call.1} parent=287 // pred_check_branch
          %2347 = sbr.rel (%p2345) target = $region416
        $region415: #{tpu_custom_call.1} parent=287 // pred_region
          %2348 = dma.done [#allocation51], 16
        $region416: #{tpu_custom_call.1} parent=287 // pred_fallthru
          _
        // Predicated region
        $region417: #{tpu_custom_call.1} parent=287 // pred_check
          %p2349 = pneg %p1102
        $region418: #{tpu_custom_call.1} parent=287 // pred_check_branch
          %2351 = sbr.rel (%p2349) target = $region420
        $region419: #{tpu_custom_call.1} parent=287 // pred_region
          %2352 = dma.done [#allocation51], 256
        $region420: #{tpu_custom_call.1} parent=287 // pred_fallthru
          _
        // Predicated region
        $region421: #{tpu_custom_call.1} parent=287 // pred_check
          %p2353 = pneg %p1123
        $region422: #{tpu_custom_call.1} parent=287 // pred_check_branch
          %2355 = sbr.rel (%p2353) target = $region424
        $region423: #{tpu_custom_call.1} parent=287 // pred_region
          %2356 = dma.done [#allocation54], 16
        $region424: #{tpu_custom_call.1} parent=287 // pred_fallthru
          _
        // Predicated region
        $region425: #{tpu_custom_call.1} parent=287 // pred_check
          %p2357 = pneg %p1165
        $region426: #{tpu_custom_call.1} parent=287 // pred_check_branch
          %2359 = sbr.rel (%p2357) target = $region428
        $region427: #{tpu_custom_call.1} parent=287 // pred_region
          %2360 = dma.done [#allocation54], 16
        $region428: #{tpu_custom_call.1} parent=287 // pred_fallthru
          _
        // Predicated region
        $region429: #{tpu_custom_call.1} parent=287 // pred_check
          %p2361 = pneg %p1186
        $region430: #{tpu_custom_call.1} parent=287 // pred_check_branch
          %2363 = sbr.rel (%p2361) target = $region432
        $region431: #{tpu_custom_call.1} parent=287 // pred_region
          %2364 = dma.done [#allocation57], 256
        $region432: #{tpu_custom_call.1} parent=287 // pred_fallthru
          _
        // Predicated region
        $region433: #{tpu_custom_call.1} parent=287 // pred_check
          %p2365 = pneg %p1207
        $region434: #{tpu_custom_call.1} parent=287 // pred_check_branch
          %2367 = sbr.rel (%p2365) target = $region436
        $region435: #{tpu_custom_call.1} parent=287 // pred_region
          %2368 = dma.done [#allocation57], 16
        $region436: #{tpu_custom_call.1} parent=287 // pred_fallthru
          _
        // Predicated region
        $region437: #{tpu_custom_call.1} parent=287 // pred_check
          %p2369 = pneg %p1228
        $region438: #{tpu_custom_call.1} parent=287 // pred_check_branch
          %2371 = sbr.rel (%p2369) target = $region440
        $region439: #{tpu_custom_call.1} parent=287 // pred_region
          %2372 = dma.done [#allocation60], 16
        $region440: #{tpu_custom_call.1} parent=287 // pred_fallthru
          _
        // Predicated region
        $region441: #{tpu_custom_call.1} parent=287 // pred_check
          %p2373 = pneg %p1249
        $region442: #{tpu_custom_call.1} parent=287 // pred_check_branch
          %2375 = sbr.rel (%p2373) target = $region444
        $region443: #{tpu_custom_call.1} parent=287 // pred_region
          %2376 = dma.done [#allocation60], 16
        $region444: #{tpu_custom_call.1} parent=287 // pred_fallthru
          _
        // Predicated region
        $region445: #{tpu_custom_call.1} parent=287 // pred_check
          %p2377 = pneg %p1270
        $region446: #{tpu_custom_call.1} parent=287 // pred_check_branch
          %2379 = sbr.rel (%p2377) target = $region448
        $region447: #{tpu_custom_call.1} parent=287 // pred_region
          %2380 = dma.done [#allocation63], 16
        $region448: #{tpu_custom_call.1} parent=287 // pred_fallthru
          _
        // Predicated region
        $region449: #{tpu_custom_call.1} parent=287 // pred_check
          %p2381 = pneg %p1291
        $region450: #{tpu_custom_call.1} parent=287 // pred_check_branch
          %2383 = sbr.rel (%p2381) target = $region452
        $region451: #{tpu_custom_call.1} parent=287 // pred_region
          %2384 = dma.done [#allocation63], 16
        $region452: #{tpu_custom_call.1} parent=287 // pred_fallthru
          _
        // Predicated region
        $region453: #{tpu_custom_call.1} parent=287 // pred_check
          %p2385 = pneg %p1396
        $region454: #{tpu_custom_call.1} parent=287 // pred_check_branch
          %2387 = sbr.rel (%p2385) target = $region456
        $region455: #{tpu_custom_call.1} parent=287 // pred_region
          %2388 = dma.done [#allocation66], 256
        $region456: #{tpu_custom_call.1} parent=287 // pred_fallthru
          _
        // Predicated region
        $region457: #{tpu_custom_call.1} parent=287 // pred_check
          %p2389 = pneg %p1459
        $region458: #{tpu_custom_call.1} parent=287 // pred_check_branch
          %2391 = sbr.rel (%p2389) target = $region460
        $region459: #{tpu_custom_call.1} parent=287 // pred_region
          %2392 = dma.done [#allocation66], 16
        $region460: #{tpu_custom_call.1} parent=287 // pred_fallthru
          _
        %p2393 = pneg %p189
        %p2394 = pneg %p186
        %s2395 = sand.u32 %s173, 1
        %s2396 = scalar_lea.sflag [#allocation6], %s2395
        %s2397 = sand.u32 %s202, 1
        %s2398 = smul.addr %s2397, 16
        %s2399 = scalar_lea.vmem [#allocation5], %s2398
        %p2400 = pneg %p215
        %p2401 = pneg %p212
        %s2402 = sand.u32 %s173, 1
        %s2403 = scalar_lea.sflag [#allocation6], %s2402
        %s2404 = sand.u32 %s228, 1
        %s2405 = scalar_lea.vmem [#allocation7], %s2404
        %p2406 = pneg %p241
        %p2407 = pneg %p238
        %p2408 = pneg %p262
        %p2409 = pneg %p259
        %p2410 = pneg %p283
        %p2411 = pneg %p280
        %p2412 = pneg %p304
        %p2413 = pneg %p301
        %p2414 = pneg %p325
        %p2415 = pneg %p322
        %p2416 = pneg %p346
        %p2417 = pneg %p343
        %p2418 = pneg %p367
        %p2419 = pneg %p364
        %p2420 = pneg %p388
        %p2421 = pneg %p385
        %p2422 = pneg %p409
        %p2423 = pneg %p406
        %p2424 = pneg %p430
        %p2425 = pneg %p427
        %p2426 = pneg %p451
        %p2427 = pneg %p448
        %p2428 = pneg %p472
        %p2429 = pneg %p469
        %p2430 = pneg %p493
        %p2431 = pneg %p490
        %p2432 = pneg %p514
        %p2433 = pneg %p511
        %p2434 = pneg %p535
        %p2435 = pneg %p532
        %p2436 = pneg %p556
        %p2437 = pneg %p553
        %p2438 = pneg %p577
        %p2439 = pneg %p574
        %p2440 = pneg %p598
        %p2441 = pneg %p595
        %p2442 = pneg %p619
        %p2443 = pneg %p616
        %p2444 = pneg %p640
        %p2445 = pneg %p637
        %p2446 = pneg %p661
        %p2447 = pneg %p658
        %p2448 = pneg %p682
        %p2449 = pneg %p679
        %p2450 = pneg %p703
        %p2451 = pneg %p700
        %p2452 = pneg %p724
        %p2453 = pneg %p721
        %p2454 = pneg %p745
        %p2455 = pneg %p742
        %p2456 = pneg %p766
        %p2457 = pneg %p763
        %p2458 = pneg %p787
        %p2459 = pneg %p784
        %p2460 = pneg %p808
        %p2461 = pneg %p805
        %p2462 = pneg %p829
        %p2463 = pneg %p826
        %p2464 = pneg %p850
        %p2465 = pneg %p847
        %p2466 = pneg %p871
        %p2467 = pneg %p868
        %p2468 = pneg %p892
        %p2469 = pneg %p889
        %p2470 = pneg %p913
        %p2471 = pneg %p910
        %p2472 = pneg %p934
        %p2473 = pneg %p931
        %p2474 = pneg %p955
        %p2475 = pneg %p952
        %p2476 = pneg %p976
        %p2477 = pneg %p973
        %p2478 = pneg %p997
        %p2479 = pneg %p994
        %p2480 = pneg %p1018
        %p2481 = pneg %p1015
        %p2482 = pneg %p1039
        %p2483 = pneg %p1036
        %p2484 = pneg %p1060
        %p2485 = pneg %p1057
        %p2486 = pneg %p1081
        %p2487 = pneg %p1078
        %p2488 = pneg %p1102
        %p2489 = pneg %p1099
        %p2490 = pneg %p1123
        %p2491 = pneg %p1120
        %p2492 = pneg %p1144
        %p2493 = pneg %p1141
        %p2494 = pneg %p1165
        %p2495 = pneg %p1162
        %p2496 = pneg %p1186
        %p2497 = pneg %p1183
        %p2498 = pneg %p1207
        %p2499 = pneg %p1204
        %p2500 = pneg %p1228
        %p2501 = pneg %p1225
        %p2502 = pneg %p1249
        %p2503 = pneg %p1246
        %p2504 = pneg %p1270
        %p2505 = pneg %p1267
        %p2506 = pneg %p1291
        %p2507 = pneg %p1288
        %p2508 = pneg %p1312
        %p2509 = pneg %p1309
        %p2510 = pneg %p1333
        %p2511 = pneg %p1330
        %p2512 = pneg %p1354
        %p2513 = pneg %p1351
        %p2514 = pneg %p1375
        %p2515 = pneg %p1372
        %p2516 = pneg %p1396
        %p2517 = pneg %p1393
        %p2518 = pneg %p1417
        %p2519 = pneg %p1414
        %p2520 = pneg %p1438
        %p2521 = pneg %p1435
        %p2522 = pneg %p1459
        %p2523 = pneg %p1456
        %p2524 = pneg %p1480
        %p2525 = pneg %p1477
        %p2526 = pneg %p1501
        %p2527 = pneg %p1498
        %p2528 = pneg %p1522
        %p2529 = pneg %p1519
        %p2530 = pneg %p1543
        %p2531 = pneg %p1540
        %p2532 = pneg %p1564
        %p2533 = pneg %p1561
        %p2534 = pneg %p1585
        %p2535 = pneg %p1582
        %p2536 = pneg %p1611
        %p2537 = pneg %p1608
        %s2538 = sand.u32 %s1598, 1
        %s2539 = scalar_lea.sflag [#allocation4], %s2538
        %s2540 = sand.u32 %s1598, 1
        %s2541 = smul.addr %s2540, 8
        %s2542 = scalar_lea.vmem [#allocation68], %s2541
        %v2544 = vld [vmem:[#allocation2] sm:$0xff]
        %v2545 = vld [vmem:[%s2220] sm:$0xff]
        %v2546 = vld [vmem:[%s2220 + $0x8] sm:$0xff]
        %v2547 = vld [vmem:[%s2228] sm:$0x1]
        %v2548 = vld [vmem:[%s7] sm:$0xf]
        %v2549 = vld [vmem:[%s7 + $0x4] sm:$0xf]
        %v2550 = vld [vmem:[%s7 + $0x8] sm:$0xf]
        %v2551 = vld [vmem:[%s7 + $0xc] sm:$0xf]
        %v2552 = vld [vmem:[#allocation8] sm:$0x1]
        %v2553 = vld [vmem:[%s11] sm:$0xf]
        %v2554 = vld [vmem:[%s11 + $0x4] sm:$0xf]
        %v2555 = vld [vmem:[%s11 + $0x8] sm:$0xf]
        %v2556 = vld [vmem:[%s11 + $0xc] sm:$0xf]
        %v2557 = vld [vmem:[#allocation10] sm:$0x1]
        %v2558 = vld [vmem:[%s15] sm:$0xf]
        %v2559 = vld [vmem:[%s15 + $0x4] sm:$0xf]
        %v2560 = vld [vmem:[%s15 + $0x8] sm:$0xf]
        %v2561 = vld [vmem:[%s15 + $0xc] sm:$0xf]
        %v2562 = vld [vmem:[#allocation11] sm:$0x1]
        %v2563 = vld [vmem:[#allocation13] sm:$0xf]
        %v2564 = vld [vmem:[#allocation13 + $0x4] sm:$0xf]
        %v2565 = vld [vmem:[#allocation13 + $0x8] sm:$0xf]
        %v2566 = vld [vmem:[#allocation13 + $0xc] sm:$0xf]
        %v2567 = vld [vmem:[#allocation14] sm:$0x1]
        %v2568 = vld [vmem:[#allocation16] sm:$0x1]
        %v2569 = vld [vmem:[#allocation17] sm:$0x1]
        %v2570 = vld [vmem:[#allocation19] sm:$0x1]
        %v2571 = vld [vmem:[#allocation20] sm:$0x1]
        %v2572 = vld [vmem:[%s31] sm:$0xff]
        %v2573 = vld [vmem:[%s31 + $0x8] sm:$0xff]
        %v2574 = vld [vmem:[%s33] sm:$0xf]
        %v2575 = vld [vmem:[%s33 + $0x4] sm:$0xf]
        %v2576 = vld [vmem:[%s33 + $0x8] sm:$0xf]
        %v2577 = vld [vmem:[%s33 + $0xc] sm:$0xf]
        %v2578 = vld [vmem:[#allocation22] sm:$0x1]
        %v2579 = vld [vmem:[#allocation23] sm:$0xf]
        %v2580 = vld [vmem:[#allocation23 + $0x4] sm:$0xf]
        %v2581 = vld [vmem:[#allocation23 + $0x8] sm:$0xf]
        %v2582 = vld [vmem:[#allocation23 + $0xc] sm:$0xf]
        %v2583 = vld [vmem:[#allocation25] sm:$0x1]
        %v2584 = vld [vmem:[%s41] sm:$0xf]
        %v2585 = vld [vmem:[%s41 + $0x4] sm:$0xf]
        %v2586 = vld [vmem:[%s41 + $0x8] sm:$0xf]
        %v2587 = vld [vmem:[%s41 + $0xc] sm:$0xf]
        %v2588 = vld [vmem:[#allocation26] sm:$0x1]
        %v2589 = vld [vmem:[#allocation28] sm:$0xf]
        %v2590 = vld [vmem:[#allocation28 + $0x4] sm:$0xf]
        %v2591 = vld [vmem:[#allocation28 + $0x8] sm:$0xf]
        %v2592 = vld [vmem:[#allocation28 + $0xc] sm:$0xf]
        %v2593 = vld [vmem:[#allocation29] sm:$0x1]
        %v2594 = vld [vmem:[#allocation31] sm:$0x1]
        %v2595 = vld [vmem:[#allocation32] sm:$0x1]
        %v2596 = vld [vmem:[#allocation34] sm:$0x1]
        %v2597 = vld [vmem:[#allocation35] sm:$0x1]
        %v2598 = vld [vmem:[%s57] sm:$0xf]
        %v2599 = vld [vmem:[%s57 + $0x4] sm:$0xf]
        %v2600 = vld [vmem:[%s57 + $0x8] sm:$0xf]
        %v2601 = vld [vmem:[%s57 + $0xc] sm:$0xf]
        %v2602 = vld [vmem:[#allocation37] sm:$0x1]
        %v2603 = vld [vmem:[%s61] sm:$0xf]
        %v2604 = vld [vmem:[%s61 + $0x4] sm:$0xf]
        %v2605 = vld [vmem:[%s61 + $0x8] sm:$0xf]
        %v2606 = vld [vmem:[%s61 + $0xc] sm:$0xf]
        %v2607 = vld [vmem:[#allocation38] sm:$0x1]
        %v2608 = vld [vmem:[%s65] sm:$0xf]
        %v2609 = vld [vmem:[%s65 + $0x4] sm:$0xf]
        %v2610 = vld [vmem:[%s65 + $0x8] sm:$0xf]
        %v2611 = vld [vmem:[%s65 + $0xc] sm:$0xf]
        %v2612 = vld [vmem:[#allocation40] sm:$0x1]
        %v2613 = vld [vmem:[#allocation41] sm:$0xf]
        %v2614 = vld [vmem:[#allocation41 + $0x4] sm:$0xf]
        %v2615 = vld [vmem:[#allocation41 + $0x8] sm:$0xf]
        %v2616 = vld [vmem:[#allocation41 + $0xc] sm:$0xf]
        %v2617 = vld [vmem:[#allocation43] sm:$0x1]
        %v2618 = vld [vmem:[#allocation44] sm:$0x1]
        %v2619 = vld [vmem:[#allocation46] sm:$0x1]
        %v2620 = vld [vmem:[#allocation47] sm:$0x1]
        %v2621 = vld [vmem:[#allocation49] sm:$0x1]
        %v2622 = vld [vmem:[%s81] sm:$0xff]
        %v2623 = vld [vmem:[%s81 + $0x8] sm:$0xff]
        %v2624 = vld [vmem:[%s83] sm:$0xf]
        %v2625 = vld [vmem:[%s83 + $0x4] sm:$0xf]
        %v2626 = vld [vmem:[%s83 + $0x8] sm:$0xf]
        %v2627 = vld [vmem:[%s83 + $0xc] sm:$0xf]
        %v2628 = vld [vmem:[#allocation50] sm:$0x1]
        %v2629 = vld [vmem:[#allocation52] sm:$0xf]
        %v2630 = vld [vmem:[#allocation52 + $0x4] sm:$0xf]
        %v2631 = vld [vmem:[#allocation52 + $0x8] sm:$0xf]
        %v2632 = vld [vmem:[#allocation52 + $0xc] sm:$0xf]
        %v2633 = vld [vmem:[#allocation53] sm:$0x1]
        %v2634 = vld [vmem:[%s91] sm:$0xf]
        %v2635 = vld [vmem:[%s91 + $0x4] sm:$0xf]
        %v2636 = vld [vmem:[%s91 + $0x8] sm:$0xf]
        %v2637 = vld [vmem:[%s91 + $0xc] sm:$0xf]
        %v2638 = vld [vmem:[#allocation55] sm:$0x1]
        %v2639 = vld [vmem:[#allocation56] sm:$0xf]
        %v2640 = vld [vmem:[#allocation56 + $0x4] sm:$0xf]
        %v2641 = vld [vmem:[#allocation56 + $0x8] sm:$0xf]
        %v2642 = vld [vmem:[#allocation56 + $0xc] sm:$0xf]
        %v2643 = vld [vmem:[#allocation58] sm:$0x1]
        %v2644 = vld [vmem:[#allocation59] sm:$0x1]
        %v2645 = vld [vmem:[#allocation61] sm:$0x1]
        %v2646 = vld [vmem:[#allocation62] sm:$0x1]
        %v2647 = vld [vmem:[#allocation64] sm:$0x1]
        %v2648 = vld [vmem:[%s107] sm:$0xf]
        %v2649 = vld [vmem:[%s107 + $0x4] sm:$0xf]
        %v2650 = vld [vmem:[%s107 + $0x8] sm:$0xf]
        %v2651 = vld [vmem:[%s107 + $0xc] sm:$0xf]
        %v2652 = vld [vmem:[%s109] sm:$0x1]
        %v2653 = vld [vmem:[%s111] sm:$0xf]
        %v2654 = vld [vmem:[%s111 + $0x4] sm:$0xf]
        %v2655 = vld [vmem:[%s111 + $0x8] sm:$0xf]
        %v2656 = vld [vmem:[%s111 + $0xc] sm:$0xf]
        %v2657 = vld [vmem:[%s113] sm:$0x1]
        %v2658 = vld [vmem:[#allocation65] sm:$0xf]
        %v2659 = vld [vmem:[#allocation65 + $0x4] sm:$0xf]
        %v2660 = vld [vmem:[#allocation65 + $0x8] sm:$0xf]
        %v2661 = vld [vmem:[#allocation65 + $0xc] sm:$0xf]
        %v2662 = vld [vmem:[%s117] sm:$0x1]
        %v2663 = vld [vmem:[%s119] sm:$0xf]
        %v2664 = vld [vmem:[%s119 + $0x4] sm:$0xf]
        %v2665 = vld [vmem:[%s119 + $0x8] sm:$0xf]
        %v2666 = vld [vmem:[%s119 + $0xc] sm:$0xf]
        %v2667 = vld [vmem:[#allocation67] sm:$0x1]
        %v2668 = vld [vmem:[%s123] sm:$0x1]
        %v2669 = vld [vmem:[%s125] sm:$0x1]
        %v2670 = vld [vmem:[%s127] sm:$0x1]
        %v2671 = vld [vmem:[%s129] sm:$0x1]
        %v2672 = vld [vmem:[%s131] sm:$0xf]
        %v2673 = vld [vmem:[%s131 + $0x4] sm:$0xf]
        %v2674 = vld [vmem:[%s131 + $0x8] sm:$0xf]
        %v2675 = vld [vmem:[%s131 + $0xc] sm:$0xf]
        %v2676 = vld [vmem:[%s133] sm:$0x1]
        %v2677 = vpack.c.bf16 %v2544, %v2544
        %v2679 = vlaneseq
        %v2680 = vshrl.u32 %v2679, 7
        %v2681 = vsub.s32 0, %v2680
        %v2682 = vrot.slane %v2552, %v2681
        %v2688 = vunpack.c.l.b16 %v2548
        %v2689 = vunpack.c.l.b16 %v2549
        %v2690 = vunpack.c.l.b16 %v2550
        %v2691 = vunpack.c.l.b16 %v2551
        %v2692 = vpack.c.b16 %v2689, %v2688
        %v2693 = vpack.c.b16 %v2691, %v2690
        %vm2696 = vcmask 261120
        %v2698 = vsel %vm2696, %v2677, 0
        %2700 = vmatprep.subr.bf16.mxu0 0
        %2701 = vmatpush1.bf16.msra.mxu0 %v2692
        %2702 = vmatprep.subr.bf16.mxu0 0
        %2703 = vmatpush1.bf16.msra.mxu0 %v2693
        %2704 = vmatprep.subr.bf16.mxu0 0
        %2705 = vmatpush1.bf16.msra.mxu0 0
        %2706 = vmatprep.subr.bf16.mxu0 0
        %2707 = vmatpush1.bf16.msra.mxu0 0
        %2708 = vmatprep.subr.bf16.mxu0 0
        %2709 = vmatpush1.bf16.msra.mxu0 0
        %2710 = vmatprep.subr.bf16.mxu0 0
        %2711 = vmatpush1.bf16.msra.mxu0 0
        %2712 = vmatprep.subr.bf16.mxu0 0
        %2713 = vmatpush1.bf16.msra.mxu0 0
        %2714 = vmatprep.subr.bf16.mxu0 0
        %2715 = vmatpush1.bf16.msra.mxu0 0
        %2716 = vmatprep.subr.bf16.mxu0 0
        %2717 = vmatpush1.bf16.msra.mxu0 0
        %2718 = vmatprep.subr.bf16.mxu0 0
        %2719 = vmatpush1.bf16.msra.mxu0 0
        %2720 = vmatprep.subr.bf16.mxu0 0
        %2721 = vmatpush1.bf16.msra.mxu0 0
        %2722 = vmatprep.subr.bf16.mxu0 0
        %2723 = vmatpush1.bf16.msra.mxu0 0
        %2724 = vmatprep.subr.bf16.mxu0 0
        %2725 = vmatpush1.bf16.msra.mxu0 0
        %2726 = vmatprep.subr.bf16.mxu0 0
        %2727 = vmatpush1.bf16.msra.mxu0 0
        %2728 = vmatprep.subr.bf16.mxu0 0
        %2729 = vmatpush1.bf16.msra.mxu0 0
        %2730 = vmatprep.subr.bf16.mxu0 0
        %2731 = vmatpush1.bf16.msra.mxu0 0
        %2732 = vmatprep.mubr.bf16.mxu0 0
        %2733 = vmatmul.mubr.bf16.gmra.mrb[0].mxu0 %v2698
        %v2734 = vpop.f32.mrb[0].mxu0
        %v2735 = vadd.f32 %v2682, %v2734
        %v2736 = vpop.f32.mrb[0].mxu0
        %v2737 = vpop.f32.mrb[0].mxu0
        %v2738 = vpop.f32.mrb[0].mxu0
        %2739 = vdwg.mxu0
        %v2740 = vpack.c.bf16 %v2546, %v2545
        %v2742 = vlaneseq
        %v2743 = vshrl.u32 %v2742, 7
        %v2744 = vsub.s32 0, %v2743
        %v2745 = vrot.slane %v2557, %v2744
        %v2751 = vunpack.c.l.b16 %v2553
        %v2752 = vunpack.c.l.b16 %v2554
        %v2753 = vunpack.c.l.b16 %v2555
        %v2754 = vunpack.c.l.b16 %v2556
        %v2755 = vpack.c.b16 %v2752, %v2751
        %v2756 = vpack.c.b16 %v2754, %v2753
        %v2760 = vsel %vm2696, %v2740, 0
        %2762 = vmatprep.subr.bf16.mxu0 0
        %2763 = vmatpush1.bf16.msra.mxu0 %v2755
        %2764 = vmatprep.subr.bf16.mxu0 0
        %2765 = vmatpush1.bf16.msra.mxu0 %v2756
        %2766 = vmatprep.subr.bf16.mxu0 0
        %2767 = vmatpush1.bf16.msra.mxu0 0
        %2768 = vmatprep.subr.bf16.mxu0 0
        %2769 = vmatpush1.bf16.msra.mxu0 0
        %2770 = vmatprep.subr.bf16.mxu0 0
        %2771 = vmatpush1.bf16.msra.mxu0 0
        %2772 = vmatprep.subr.bf16.mxu0 0
        %2773 = vmatpush1.bf16.msra.mxu0 0
        %2774 = vmatprep.subr.bf16.mxu0 0
        %2775 = vmatpush1.bf16.msra.mxu0 0
        %2776 = vmatprep.subr.bf16.mxu0 0
        %2777 = vmatpush1.bf16.msra.mxu0 0
        %2778 = vmatprep.subr.bf16.mxu0 0
        %2779 = vmatpush1.bf16.msra.mxu0 0
        %2780 = vmatprep.subr.bf16.mxu0 0
        %2781 = vmatpush1.bf16.msra.mxu0 0
        %2782 = vmatprep.subr.bf16.mxu0 0
        %2783 = vmatpush1.bf16.msra.mxu0 0
        %2784 = vmatprep.subr.bf16.mxu0 0
        %2785 = vmatpush1.bf16.msra.mxu0 0
        %2786 = vmatprep.subr.bf16.mxu0 0
        %2787 = vmatpush1.bf16.msra.mxu0 0
        %2788 = vmatprep.subr.bf16.mxu0 0
        %2789 = vmatpush1.bf16.msra.mxu0 0
        %2790 = vmatprep.subr.bf16.mxu0 0
        %2791 = vmatpush1.bf16.msra.mxu0 0
        %2792 = vmatprep.subr.bf16.mxu0 0
        %2793 = vmatpush1.bf16.msra.mxu0 0
        %2794 = vmatprep.mubr.bf16.mxu0 0
        %2795 = vmatmul.mubr.bf16.gmra.mrb[0].mxu0 %v2760
        %v2796 = vpop.f32.mrb[0].mxu0
        %v2797 = vadd.f32 %v2745, %v2796
        %v2798 = vpop.f32.mrb[0].mxu0
        %v2799 = vpop.f32.mrb[0].mxu0
        %v2800 = vadd.f32 %v2745, %v2799
        %v2801 = vpop.f32.mrb[0].mxu0
        %2802 = vdwg.mxu0
        %v2804 = vlaneseq
        %v2805 = vshrl.u32 %v2804, 7
        %v2806 = vsub.s32 0, %v2805
        %v2807 = vrot.slane %v2562, %v2806
        %v2813 = vunpack.c.l.b16 %v2558
        %v2814 = vunpack.c.l.b16 %v2559
        %v2815 = vunpack.c.l.b16 %v2560
        %v2816 = vunpack.c.l.b16 %v2561
        %v2817 = vpack.c.b16 %v2814, %v2813
        %v2818 = vpack.c.b16 %v2816, %v2815
        %2821 = vmatprep.subr.bf16.mxu0 0
        %2822 = vmatpush1.bf16.msra.mxu0 %v2817
        %2823 = vmatprep.subr.bf16.mxu0 0
        %2824 = vmatpush1.bf16.msra.mxu0 %v2818
        %2825 = vmatprep.subr.bf16.mxu0 0
        %2826 = vmatpush1.bf16.msra.mxu0 0
        %2827 = vmatprep.subr.bf16.mxu0 0
        %2828 = vmatpush1.bf16.msra.mxu0 0
        %2829 = vmatprep.subr.bf16.mxu0 0
        %2830 = vmatpush1.bf16.msra.mxu0 0
        %2831 = vmatprep.subr.bf16.mxu0 0
        %2832 = vmatpush1.bf16.msra.mxu0 0
        %2833 = vmatprep.subr.bf16.mxu0 0
        %2834 = vmatpush1.bf16.msra.mxu0 0
        %2835 = vmatprep.subr.bf16.mxu0 0
        %2836 = vmatpush1.bf16.msra.mxu0 0
        %2837 = vmatprep.subr.bf16.mxu0 0
        %2838 = vmatpush1.bf16.msra.mxu0 0
        %2839 = vmatprep.subr.bf16.mxu0 0
        %2840 = vmatpush1.bf16.msra.mxu0 0
        %2841 = vmatprep.subr.bf16.mxu0 0
        %2842 = vmatpush1.bf16.msra.mxu0 0
        %2843 = vmatprep.subr.bf16.mxu0 0
        %2844 = vmatpush1.bf16.msra.mxu0 0
        %2845 = vmatprep.subr.bf16.mxu0 0
        %2846 = vmatpush1.bf16.msra.mxu0 0
        %2847 = vmatprep.subr.bf16.mxu0 0
        %2848 = vmatpush1.bf16.msra.mxu0 0
        %2849 = vmatprep.subr.bf16.mxu0 0
        %2850 = vmatpush1.bf16.msra.mxu0 0
        %2851 = vmatprep.subr.bf16.mxu0 0
        %2852 = vmatpush1.bf16.msra.mxu0 0
        %2853 = vmatprep.mubr.bf16.mxu0 0
        %2854 = vmatmul.mubr.bf16.gmra.mrb[0].mxu0 %v2760
        %v2855 = vpop.f32.mrb[0].mxu0
        %v2856 = vadd.f32 %v2807, %v2855
        %v2857 = vpop.f32.mrb[0].mxu0
        %v2858 = vpop.f32.mrb[0].mxu0
        %v2859 = vadd.f32 %v2807, %v2858
        %v2860 = vpop.f32.mrb[0].mxu0
        %2861 = vdwg.mxu0
        %v2862 = vmul.f32 %v2547, 1e+09
        %v2863 = vpack.c.bf16 %v2735, %v2735
        %v2864 = vpack.c.bf16 %v2800, %v2797
        %vm2865 = vcmask 64512
        %v2867 = vsel %vm2865, %v2863, 0
        %v2870 = vsel %vm2865, %v2864, 0
        %2872 = vmatprep.subr.bf16.mxu0 0
        %2873 = vmatpush1.bf16.xpose.msra.mxu0 %v2870
        %2874 = vmatprep.subr.bf16.mxu0 0
        %2875 = vmatpush1.bf16.xpose.msra.mxu0 0
        %2876 = vmatprep.subr.bf16.mxu0 0
        %2877 = vmatpush1.bf16.xpose.msra.mxu0 0
        %2878 = vmatprep.subr.bf16.mxu0 0
        %2879 = vmatpush1.bf16.xpose.msra.mxu0 0
        %2880 = vmatprep.subr.bf16.mxu0 0
        %2881 = vmatpush1.bf16.xpose.msra.mxu0 0
        %2882 = vmatprep.subr.bf16.mxu0 0
        %2883 = vmatpush1.bf16.xpose.msra.mxu0 0
        %2884 = vmatprep.subr.bf16.mxu0 0
        %2885 = vmatpush1.bf16.xpose.msra.mxu0 0
        %2886 = vmatprep.subr.bf16.mxu0 0
        %2887 = vmatpush1.bf16.xpose.msra.mxu0 0
        %2888 = vmatprep.subr.bf16.mxu0 0
        %2889 = vmatpush1.bf16.xpose.msra.mxu0 0
        %2890 = vmatprep.subr.bf16.mxu0 0
        %2891 = vmatpush1.bf16.xpose.msra.mxu0 0
        %2892 = vmatprep.subr.bf16.mxu0 0
        %2893 = vmatpush1.bf16.xpose.msra.mxu0 0
        %2894 = vmatprep.subr.bf16.mxu0 0
        %2895 = vmatpush1.bf16.xpose.msra.mxu0 0
        %2896 = vmatprep.subr.bf16.mxu0 0
        %2897 = vmatpush1.bf16.xpose.msra.mxu0 0
        %2898 = vmatprep.subr.bf16.mxu0 0
        %2899 = vmatpush1.bf16.xpose.msra.mxu0 0
        %2900 = vmatprep.subr.bf16.mxu0 0
        %2901 = vmatpush1.bf16.xpose.msra.mxu0 0
        %2902 = vmatprep.subr.bf16.mxu0 0
        %2903 = vmatpush1.bf16.xpose.msra.mxu0 0
        %2904 = vmatprep.mubr.bf16.mxu0 0
        %2905 = vmatmul.mubr.bf16.gmra.mrb[0].mxu0 %v2867
        %v2906 = vpop.f32.mrb[0].mxu0
        %v2907 = vadd.f32 0.0, %v2906
        %v2908 = vpop.f32.mrb[0].mxu0
        %v2909 = vpop.f32.mrb[0].mxu0
        %v2910 = vpop.f32.mrb[0].mxu0
        %2911 = vdwg.mxu0
        %v2912 = vmul.f32 %v2907, 0.17677669
        %v2914 = vlaneseq
        %v2915 = vshrl.u32 %v2914, 7
        %v2916 = vsub.s32 0, %v2915
        %v2917 = vrot.slane %v2862, %v2916
        %v2919 = vsub.f32 %v2912, %v2917
        %vm2920 = vcmask 130048
        %v2921 = vsel %vm2920, %v2919, -inf
        %2922 = vmax.xlane.f32.xlu0 %v2921
        %v2923 = vpop.xlane.xlu0 %2922
        %v2924 = vsub.f32 %v2919, %v2923
        %v2925 = vmul.f32 %v2924, 1.442695
        %v2926 = vpow.pop %v2925
        %v2927 = vsel %vm2920, %v2926, 0.0
        %2928 = vadd.xlane.f32.xlu0 %v2927
        %v2929 = vpop.xlane.xlu0 %2928
        %v2930 = vrcp.pop %v2929
        %v2931 = vmul.f32 %v2926, %v2930
        %v2932 = vpack.c.bf16 %v2931, %v2931
        %v2933 = vpack.c.bf16 %v2859, %v2856
        %v2935 = vsel %vm2920, %v2932, 0
        %2937 = vmatprep.subr.bf16.mxu0 0
        %2938 = vmatpush1.bf16.msra.mxu0 %v2933
        %2939 = vmatprep.subr.bf16.mxu0 0
        %2940 = vmatpush1.bf16.msra.mxu0 0
        %2941 = vmatprep.subr.bf16.mxu0 0
        %2942 = vmatpush1.bf16.msra.mxu0 0
        %2943 = vmatprep.subr.bf16.mxu0 0
        %2944 = vmatpush1.bf16.msra.mxu0 0
        %2945 = vmatprep.subr.bf16.mxu0 0
        %2946 = vmatpush1.bf16.msra.mxu0 0
        %2947 = vmatprep.subr.bf16.mxu0 0
        %2948 = vmatpush1.bf16.msra.mxu0 0
        %2949 = vmatprep.subr.bf16.mxu0 0
        %2950 = vmatpush1.bf16.msra.mxu0 0
        %2951 = vmatprep.subr.bf16.mxu0 0
        %2952 = vmatpush1.bf16.msra.mxu0 0
        %2953 = vmatprep.subr.bf16.mxu0 0
        %2954 = vmatpush1.bf16.msra.mxu0 0
        %2955 = vmatprep.subr.bf16.mxu0 0
        %2956 = vmatpush1.bf16.msra.mxu0 0
        %2957 = vmatprep.subr.bf16.mxu0 0
        %2958 = vmatpush1.bf16.msra.mxu0 0
        %2959 = vmatprep.subr.bf16.mxu0 0
        %2960 = vmatpush1.bf16.msra.mxu0 0
        %2961 = vmatprep.subr.bf16.mxu0 0
        %2962 = vmatpush1.bf16.msra.mxu0 0
        %2963 = vmatprep.subr.bf16.mxu0 0
        %2964 = vmatpush1.bf16.msra.mxu0 0
        %2965 = vmatprep.subr.bf16.mxu0 0
        %2966 = vmatpush1.bf16.msra.mxu0 0
        %2967 = vmatprep.subr.bf16.mxu0 0
        %2968 = vmatpush1.bf16.msra.mxu0 0
        %2969 = vmatprep.mubr.bf16.mxu0 0
        %2970 = vmatmul.mubr.bf16.gmra.mrb[0].mxu0 %v2935
        %v2971 = vpop.f32.mrb[0].mxu0
        %v2972 = vadd.f32 0.0, %v2971
        %v2973 = vpop.f32.mrb[0].mxu0
        %v2974 = vpop.f32.mrb[0].mxu0
        %v2975 = vpop.f32.mrb[0].mxu0
        %2976 = vdwg.mxu0
        %v2977 = vadd.f32 %v2735, %v2972
        %2979 = vrot.lane.b32.xlu0 %v2863, 120
        %v2980 = vpop.permute.xlu0 %2979
        %2982 = vrot.lane.b32.xlu0 %v2864, 120
        %v2983 = vpop.permute.xlu0 %2982
        %v2985 = vsel %vm2865, %v2980, 0
        %v2988 = vsel %vm2865, %v2983, 0
        %2990 = vmatprep.subr.bf16.mxu0 0
        %2991 = vmatpush1.bf16.xpose.msra.mxu0 %v2988
        %2992 = vmatprep.subr.bf16.mxu0 0
        %2993 = vmatpush1.bf16.xpose.msra.mxu0 0
        %2994 = vmatprep.subr.bf16.mxu0 0
        %2995 = vmatpush1.bf16.xpose.msra.mxu0 0
        %2996 = vmatprep.subr.bf16.mxu0 0
        %2997 = vmatpush1.bf16.xpose.msra.mxu0 0
        %2998 = vmatprep.subr.bf16.mxu0 0
        %2999 = vmatpush1.bf16.xpose.msra.mxu0 0
        %3000 = vmatprep.subr.bf16.mxu0 0
        %3001 = vmatpush1.bf16.xpose.msra.mxu0 0
        %3002 = vmatprep.subr.bf16.mxu0 0
        %3003 = vmatpush1.bf16.xpose.msra.mxu0 0
        %3004 = vmatprep.subr.bf16.mxu0 0
        %3005 = vmatpush1.bf16.xpose.msra.mxu0 0
        %3006 = vmatprep.subr.bf16.mxu0 0
        %3007 = vmatpush1.bf16.xpose.msra.mxu0 0
        %3008 = vmatprep.subr.bf16.mxu0 0
        %3009 = vmatpush1.bf16.xpose.msra.mxu0 0
        %3010 = vmatprep.subr.bf16.mxu0 0
        %3011 = vmatpush1.bf16.xpose.msra.mxu0 0
        %3012 = vmatprep.subr.bf16.mxu0 0
        %3013 = vmatpush1.bf16.xpose.msra.mxu0 0
        %3014 = vmatprep.subr.bf16.mxu0 0
        %3015 = vmatpush1.bf16.xpose.msra.mxu0 0
        %3016 = vmatprep.subr.bf16.mxu0 0
        %3017 = vmatpush1.bf16.xpose.msra.mxu0 0
        %3018 = vmatprep.subr.bf16.mxu0 0
        %3019 = vmatpush1.bf16.xpose.msra.mxu0 0
        %3020 = vmatprep.subr.bf16.mxu0 0
        %3021 = vmatpush1.bf16.xpose.msra.mxu0 0
        %3022 = vmatprep.mubr.bf16.mxu0 0
        %3023 = vmatmul.mubr.bf16.gmra.mrb[0].mxu0 %v2985
        %v3024 = vpop.f32.mrb[0].mxu0
        %v3025 = vadd.f32 0.0, %v3024
        %v3026 = vpop.f32.mrb[0].mxu0
        %v3027 = vpop.f32.mrb[0].mxu0
        %v3028 = vpop.f32.mrb[0].mxu0
        %3029 = vdwg.mxu0
        %v3030 = vmul.f32 %v3025, 0.17677669
        %v3031 = vsub.f32 %v3030, %v2917
        %v3032 = vsel %vm2920, %v3031, -inf
        %3033 = vmax.xlane.f32.xlu0 %v3032
        %v3034 = vpop.xlane.xlu0 %3033
        %v3035 = vsub.f32 %v3031, %v3034
        %v3036 = vmul.f32 %v3035, 1.442695
        %v3037 = vpow.pop %v3036
        %v3038 = vsel %vm2920, %v3037, 0.0
        %3039 = vadd.xlane.f32.xlu0 %v3038
        %v3040 = vpop.xlane.xlu0 %3039
        %v3041 = vrcp.pop %v3040
        %v3042 = vmul.f32 %v3037, %v3041
        %v3043 = vpack.c.bf16 %v3042, %v3042
        %3045 = vrot.lane.b32.xlu0 %v2933, 120
        %v3046 = vpop.permute.xlu0 %3045
        %v3049 = vsel %vm2920, %v3043, 0
        %3051 = vmatprep.subr.bf16.mxu0 0
        %3052 = vmatpush1.bf16.msra.mxu0 %v3046
        %3053 = vmatprep.subr.bf16.mxu0 0
        %3054 = vmatpush1.bf16.msra.mxu0 0
        %3055 = vmatprep.subr.bf16.mxu0 0
        %3056 = vmatpush1.bf16.msra.mxu0 0
        %3057 = vmatprep.subr.bf16.mxu0 0
        %3058 = vmatpush1.bf16.msra.mxu0 0
        %3059 = vmatprep.subr.bf16.mxu0 0
        %3060 = vmatpush1.bf16.msra.mxu0 0
        %3061 = vmatprep.subr.bf16.mxu0 0
        %3062 = vmatpush1.bf16.msra.mxu0 0
        %3063 = vmatprep.subr.bf16.mxu0 0
        %3064 = vmatpush1.bf16.msra.mxu0 0
        %3065 = vmatprep.subr.bf16.mxu0 0
        %3066 = vmatpush1.bf16.msra.mxu0 0
        %3067 = vmatprep.subr.bf16.mxu0 0
        %3068 = vmatpush1.bf16.msra.mxu0 0
        %3069 = vmatprep.subr.bf16.mxu0 0
        %3070 = vmatpush1.bf16.msra.mxu0 0
        %3071 = vmatprep.subr.bf16.mxu0 0
        %3072 = vmatpush1.bf16.msra.mxu0 0
        %3073 = vmatprep.subr.bf16.mxu0 0
        %3074 = vmatpush1.bf16.msra.mxu0 0
        %3075 = vmatprep.subr.bf16.mxu0 0
        %3076 = vmatpush1.bf16.msra.mxu0 0
        %3077 = vmatprep.subr.bf16.mxu0 0
        %3078 = vmatpush1.bf16.msra.mxu0 0
        %3079 = vmatprep.subr.bf16.mxu0 0
        %3080 = vmatpush1.bf16.msra.mxu0 0
        %3081 = vmatprep.subr.bf16.mxu0 0
        %3082 = vmatpush1.bf16.msra.mxu0 0
        %3083 = vmatprep.mubr.bf16.mxu0 0
        %3084 = vmatmul.mubr.bf16.gmra.mrb[0].mxu0 %v3049
        %v3085 = vpop.f32.mrb[0].mxu0
        %v3086 = vadd.f32 0.0, %v3085
        %v3087 = vpop.f32.mrb[0].mxu0
        %v3088 = vpop.f32.mrb[0].mxu0
        %v3089 = vpop.f32.mrb[0].mxu0
        %3090 = vdwg.mxu0
        %3092 = vrot.lane.b32.xlu0 %v3086, 8
        %v3093 = vpop.permute.xlu0 %3092
        %v3095 = vadd.f32 %v2735, %v3093
        %3096 = vrot.lane.b32.xlu0 %v2863, 112
        %v3097 = vpop.permute.xlu0 %3096
        %3098 = vrot.lane.b32.xlu0 %v2864, 112
        %v3099 = vpop.permute.xlu0 %3098
        %v3101 = vsel %vm2865, %v3097, 0
        %v3104 = vsel %vm2865, %v3099, 0
        %3106 = vmatprep.subr.bf16.mxu0 0
        %3107 = vmatpush1.bf16.xpose.msra.mxu0 %v3104
        %3108 = vmatprep.subr.bf16.mxu0 0
        %3109 = vmatpush1.bf16.xpose.msra.mxu0 0
        %3110 = vmatprep.subr.bf16.mxu0 0
        %3111 = vmatpush1.bf16.xpose.msra.mxu0 0
        %3112 = vmatprep.subr.bf16.mxu0 0
        %3113 = vmatpush1.bf16.xpose.msra.mxu0 0
        %3114 = vmatprep.subr.bf16.mxu0 0
        %3115 = vmatpush1.bf16.xpose.msra.mxu0 0
        %3116 = vmatprep.subr.bf16.mxu0 0
        %3117 = vmatpush1.bf16.xpose.msra.mxu0 0
        %3118 = vmatprep.subr.bf16.mxu0 0
        %3119 = vmatpush1.bf16.xpose.msra.mxu0 0
        %3120 = vmatprep.subr.bf16.mxu0 0
        %3121 = vmatpush1.bf16.xpose.msra.mxu0 0
        %3122 = vmatprep.subr.bf16.mxu0 0
        %3123 = vmatpush1.bf16.xpose.msra.mxu0 0
        %3124 = vmatprep.subr.bf16.mxu0 0
        %3125 = vmatpush1.bf16.xpose.msra.mxu0 0
        %3126 = vmatprep.subr.bf16.mxu0 0
        %3127 = vmatpush1.bf16.xpose.msra.mxu0 0
        %3128 = vmatprep.subr.bf16.mxu0 0
        %3129 = vmatpush1.bf16.xpose.msra.mxu0 0
        %3130 = vmatprep.subr.bf16.mxu0 0
        %3131 = vmatpush1.bf16.xpose.msra.mxu0 0
        %3132 = vmatprep.subr.bf16.mxu0 0
        %3133 = vmatpush1.bf16.xpose.msra.mxu0 0
        %3134 = vmatprep.subr.bf16.mxu0 0
        %3135 = vmatpush1.bf16.xpose.msra.mxu0 0
        %3136 = vmatprep.subr.bf16.mxu0 0
        %3137 = vmatpush1.bf16.xpose.msra.mxu0 0
        %3138 = vmatprep.mubr.bf16.mxu0 0
        %3139 = vmatmul.mubr.bf16.gmra.mrb[0].mxu0 %v3101
        %v3140 = vpop.f32.mrb[0].mxu0
        %v3141 = vadd.f32 0.0, %v3140
        %v3142 = vpop.f32.mrb[0].mxu0
        %v3143 = vpop.f32.mrb[0].mxu0
        %v3144 = vpop.f32.mrb[0].mxu0
        %3145 = vdwg.mxu0
        %v3146 = vmul.f32 %v3141, 0.17677669
        %v3147 = vsub.f32 %v3146, %v2917
        %v3148 = vsel %vm2920, %v3147, -inf
        %3149 = vmax.xlane.f32.xlu0 %v3148
        %v3150 = vpop.xlane.xlu0 %3149
        %v3151 = vsub.f32 %v3147, %v3150
        %v3152 = vmul.f32 %v3151, 1.442695
        %v3153 = vpow.pop %v3152
        %v3154 = vsel %vm2920, %v3153, 0.0
        %3155 = vadd.xlane.f32.xlu0 %v3154
        %v3156 = vpop.xlane.xlu0 %3155
        %v3157 = vrcp.pop %v3156
        %v3158 = vmul.f32 %v3153, %v3157
        %v3159 = vpack.c.bf16 %v3158, %v3158
        %3160 = vrot.lane.b32.xlu0 %v2933, 112
        %v3161 = vpop.permute.xlu0 %3160
        %v3164 = vsel %vm2920, %v3159, 0
        %3166 = vmatprep.subr.bf16.mxu0 0
        %3167 = vmatpush1.bf16.msra.mxu0 %v3161
        %3168 = vmatprep.subr.bf16.mxu0 0
        %3169 = vmatpush1.bf16.msra.mxu0 0
        %3170 = vmatprep.subr.bf16.mxu0 0
        %3171 = vmatpush1.bf16.msra.mxu0 0
        %3172 = vmatprep.subr.bf16.mxu0 0
        %3173 = vmatpush1.bf16.msra.mxu0 0
        %3174 = vmatprep.subr.bf16.mxu0 0
        %3175 = vmatpush1.bf16.msra.mxu0 0
        %3176 = vmatprep.subr.bf16.mxu0 0
        %3177 = vmatpush1.bf16.msra.mxu0 0
        %3178 = vmatprep.subr.bf16.mxu0 0
        %3179 = vmatpush1.bf16.msra.mxu0 0
        %3180 = vmatprep.subr.bf16.mxu0 0
        %3181 = vmatpush1.bf16.msra.mxu0 0
        %3182 = vmatprep.subr.bf16.mxu0 0
        %3183 = vmatpush1.bf16.msra.mxu0 0
        %3184 = vmatprep.subr.bf16.mxu0 0
        %3185 = vmatpush1.bf16.msra.mxu0 0
        %3186 = vmatprep.subr.bf16.mxu0 0
        %3187 = vmatpush1.bf16.msra.mxu0 0
        %3188 = vmatprep.subr.bf16.mxu0 0
        %3189 = vmatpush1.bf16.msra.mxu0 0
        %3190 = vmatprep.subr.bf16.mxu0 0
        %3191 = vmatpush1.bf16.msra.mxu0 0
        %3192 = vmatprep.subr.bf16.mxu0 0
        %3193 = vmatpush1.bf16.msra.mxu0 0
        %3194 = vmatprep.subr.bf16.mxu0 0
        %3195 = vmatpush1.bf16.msra.mxu0 0
        %3196 = vmatprep.subr.bf16.mxu0 0
        %3197 = vmatpush1.bf16.msra.mxu0 0
        %3198 = vmatprep.mubr.bf16.mxu0 0
        %3199 = vmatmul.mubr.bf16.gmra.mrb[0].mxu0 %v3164
        %v3200 = vpop.f32.mrb[0].mxu0
        %v3201 = vadd.f32 0.0, %v3200
        %v3202 = vpop.f32.mrb[0].mxu0
        %v3203 = vpop.f32.mrb[0].mxu0
        %v3204 = vpop.f32.mrb[0].mxu0
        %3205 = vdwg.mxu0
        %3207 = vrot.lane.b32.xlu0 %v3201, 16
        %v3208 = vpop.permute.xlu0 %3207
        %v3210 = vadd.f32 %v2735, %v3208
        %3211 = vrot.lane.b32.xlu0 %v2863, 104
        %v3212 = vpop.permute.xlu0 %3211
        %3213 = vrot.lane.b32.xlu0 %v2864, 104
        %v3214 = vpop.permute.xlu0 %3213
        %v3216 = vsel %vm2865, %v3212, 0
        %v3219 = vsel %vm2865, %v3214, 0
        %3221 = vmatprep.subr.bf16.mxu0 0
        %3222 = vmatpush1.bf16.xpose.msra.mxu0 %v3219
        %3223 = vmatprep.subr.bf16.mxu0 0
        %3224 = vmatpush1.bf16.xpose.msra.mxu0 0
        %3225 = vmatprep.subr.bf16.mxu0 0
        %3226 = vmatpush1.bf16.xpose.msra.mxu0 0
        %3227 = vmatprep.subr.bf16.mxu0 0
        %3228 = vmatpush1.bf16.xpose.msra.mxu0 0
        %3229 = vmatprep.subr.bf16.mxu0 0
        %3230 = vmatpush1.bf16.xpose.msra.mxu0 0
        %3231 = vmatprep.subr.bf16.mxu0 0
        %3232 = vmatpush1.bf16.xpose.msra.mxu0 0
        %3233 = vmatprep.subr.bf16.mxu0 0
        %3234 = vmatpush1.bf16.xpose.msra.mxu0 0
        %3235 = vmatprep.subr.bf16.mxu0 0
        %3236 = vmatpush1.bf16.xpose.msra.mxu0 0
        %3237 = vmatprep.subr.bf16.mxu0 0
        %3238 = vmatpush1.bf16.xpose.msra.mxu0 0
        %3239 = vmatprep.subr.bf16.mxu0 0
        %3240 = vmatpush1.bf16.xpose.msra.mxu0 0
        %3241 = vmatprep.subr.bf16.mxu0 0
        %3242 = vmatpush1.bf16.xpose.msra.mxu0 0
        %3243 = vmatprep.subr.bf16.mxu0 0
        %3244 = vmatpush1.bf16.xpose.msra.mxu0 0
        %3245 = vmatprep.subr.bf16.mxu0 0
        %3246 = vmatpush1.bf16.xpose.msra.mxu0 0
        %3247 = vmatprep.subr.bf16.mxu0 0
        %3248 = vmatpush1.bf16.xpose.msra.mxu0 0
        %3249 = vmatprep.subr.bf16.mxu0 0
        %3250 = vmatpush1.bf16.xpose.msra.mxu0 0
        %3251 = vmatprep.subr.bf16.mxu0 0
        %3252 = vmatpush1.bf16.xpose.msra.mxu0 0
        %3253 = vmatprep.mubr.bf16.mxu0 0
        %3254 = vmatmul.mubr.bf16.gmra.mrb[0].mxu0 %v3216
        %v3255 = vpop.f32.mrb[0].mxu0
        %v3256 = vadd.f32 0.0, %v3255
        %v3257 = vpop.f32.mrb[0].mxu0
        %v3258 = vpop.f32.mrb[0].mxu0
        %v3259 = vpop.f32.mrb[0].mxu0
        %3260 = vdwg.mxu0
        %v3261 = vmul.f32 %v3256, 0.17677669
        %v3262 = vsub.f32 %v3261, %v2917
        %v3263 = vsel %vm2920, %v3262, -inf
        %3264 = vmax.xlane.f32.xlu0 %v3263
        %v3265 = vpop.xlane.xlu0 %3264
        %v3266 = vsub.f32 %v3262, %v3265
        %v3267 = vmul.f32 %v3266, 1.442695
        %v3268 = vpow.pop %v3267
        %v3269 = vsel %vm2920, %v3268, 0.0
        %3270 = vadd.xlane.f32.xlu0 %v3269
        %v3271 = vpop.xlane.xlu0 %3270
        %v3272 = vrcp.pop %v3271
        %v3273 = vmul.f32 %v3268, %v3272
        %v3274 = vpack.c.bf16 %v3273, %v3273
        %3275 = vrot.lane.b32.xlu0 %v2933, 104
        %v3276 = vpop.permute.xlu0 %3275
        %v3279 = vsel %vm2920, %v3274, 0
        %3281 = vmatprep.subr.bf16.mxu0 0
        %3282 = vmatpush1.bf16.msra.mxu0 %v3276
        %3283 = vmatprep.subr.bf16.mxu0 0
        %3284 = vmatpush1.bf16.msra.mxu0 0
        %3285 = vmatprep.subr.bf16.mxu0 0
        %3286 = vmatpush1.bf16.msra.mxu0 0
        %3287 = vmatprep.subr.bf16.mxu0 0
        %3288 = vmatpush1.bf16.msra.mxu0 0
        %3289 = vmatprep.subr.bf16.mxu0 0
        %3290 = vmatpush1.bf16.msra.mxu0 0
        %3291 = vmatprep.subr.bf16.mxu0 0
        %3292 = vmatpush1.bf16.msra.mxu0 0
        %3293 = vmatprep.subr.bf16.mxu0 0
        %3294 = vmatpush1.bf16.msra.mxu0 0
        %3295 = vmatprep.subr.bf16.mxu0 0
        %3296 = vmatpush1.bf16.msra.mxu0 0
        %3297 = vmatprep.subr.bf16.mxu0 0
        %3298 = vmatpush1.bf16.msra.mxu0 0
        %3299 = vmatprep.subr.bf16.mxu0 0
        %3300 = vmatpush1.bf16.msra.mxu0 0
        %3301 = vmatprep.subr.bf16.mxu0 0
        %3302 = vmatpush1.bf16.msra.mxu0 0
        %3303 = vmatprep.subr.bf16.mxu0 0
        %3304 = vmatpush1.bf16.msra.mxu0 0
        %3305 = vmatprep.subr.bf16.mxu0 0
        %3306 = vmatpush1.bf16.msra.mxu0 0
        %3307 = vmatprep.subr.bf16.mxu0 0
        %3308 = vmatpush1.bf16.msra.mxu0 0
        %3309 = vmatprep.subr.bf16.mxu0 0
        %3310 = vmatpush1.bf16.msra.mxu0 0
        %3311 = vmatprep.subr.bf16.mxu0 0
        %3312 = vmatpush1.bf16.msra.mxu0 0
        %3313 = vmatprep.mubr.bf16.mxu0 0
        %3314 = vmatmul.mubr.bf16.gmra.mrb[0].mxu0 %v3279
        %v3315 = vpop.f32.mrb[0].mxu0
        %v3316 = vadd.f32 0.0, %v3315
        %v3317 = vpop.f32.mrb[0].mxu0
        %v3318 = vpop.f32.mrb[0].mxu0
        %v3319 = vpop.f32.mrb[0].mxu0
        %3320 = vdwg.mxu0
        %3322 = vrot.lane.b32.xlu0 %v3316, 24
        %v3323 = vpop.permute.xlu0 %3322
        %v3325 = vadd.f32 %v2735, %v3323
        %v3326 = vsel %vm2865, %v2977, %v3095
        %v3327 = vsel %vm2920, %v3326, %v3210
        %vm3328 = vcmask 195584
        %v3329 = vsel %vm3328, %v3327, %v3325
        %v3330 = vsel %vm2696, %v3329, 0.0
        %3331 = vadd.xlane.f32.xlu0 %v3330
        %v3332 = vpop.xlane.xlu0 %3331
        %v3333 = vrcp.pop 32.0
        %v3334 = vmul.f32 %v3332, %v3333
        %v3335 = vsub.f32 %v3329, %v3334
        %v3336 = vmul.f32 %v3335, %v3335
        %v3337 = vsel %vm2696, %v3336, 0.0
        %3338 = vadd.xlane.f32.xlu0 %v3337
        %v3339 = vpop.xlane.xlu0 %3338
        %v3340 = vmul.f32 %v3339, %v3333
        %v3341 = vadd.f32 %v3340, 1e-05
        %v3342 = vrsqrt.pop %v3341
        %v3343 = vmul.f32 %v3335, %v3342
        %v3345 = vlaneseq
        %v3346 = vshrl.u32 %v3345, 7
        %v3347 = vsub.s32 0, %v3346
        %v3348 = vrot.slane %v2568, %v3347
        %v3350 = vmul.f32 %v3343, %v3348
        %v3352 = vlaneseq
        %v3353 = vshrl.u32 %v3352, 7
        %v3354 = vsub.s32 0, %v3353
        %v3355 = vrot.slane %v2569, %v3354
        %v3357 = vadd.f32 %v3350, %v3355
        %v3358 = vpack.c.bf16 %v3357, %v3357
        %v3360 = vlaneseq
        %v3361 = vshrl.u32 %v3360, 7
        %v3362 = vsub.s32 0, %v3361
        %v3363 = vrot.slane %v2567, %v3362
        %v3369 = vunpack.c.l.b16 %v2563
        %v3370 = vunpack.c.l.b16 %v2564
        %v3371 = vunpack.c.l.b16 %v2565
        %v3372 = vunpack.c.l.b16 %v2566
        %v3373 = vpack.c.b16 %v3370, %v3369
        %v3374 = vpack.c.b16 %v3372, %v3371
        %v3378 = vsel %vm2696, %v3358, 0
        %3380 = vmatprep.subr.bf16.mxu0 0
        %3381 = vmatpush1.bf16.msra.mxu0 %v3373
        %3382 = vmatprep.subr.bf16.mxu0 0
        %3383 = vmatpush1.bf16.msra.mxu0 %v3374
        %3384 = vmatprep.subr.bf16.mxu0 0
        %3385 = vmatpush1.bf16.msra.mxu0 0
        %3386 = vmatprep.subr.bf16.mxu0 0
        %3387 = vmatpush1.bf16.msra.mxu0 0
        %3388 = vmatprep.subr.bf16.mxu0 0
        %3389 = vmatpush1.bf16.msra.mxu0 0
        %3390 = vmatprep.subr.bf16.mxu0 0
        %3391 = vmatpush1.bf16.msra.mxu0 0
        %3392 = vmatprep.subr.bf16.mxu0 0
        %3393 = vmatpush1.bf16.msra.mxu0 0
        %3394 = vmatprep.subr.bf16.mxu0 0
        %3395 = vmatpush1.bf16.msra.mxu0 0
        %3396 = vmatprep.subr.bf16.mxu0 0
        %3397 = vmatpush1.bf16.msra.mxu0 0
        %3398 = vmatprep.subr.bf16.mxu0 0
        %3399 = vmatpush1.bf16.msra.mxu0 0
        %3400 = vmatprep.subr.bf16.mxu0 0
        %3401 = vmatpush1.bf16.msra.mxu0 0
        %3402 = vmatprep.subr.bf16.mxu0 0
        %3403 = vmatpush1.bf16.msra.mxu0 0
        %3404 = vmatprep.subr.bf16.mxu0 0
        %3405 = vmatpush1.bf16.msra.mxu0 0
        %3406 = vmatprep.subr.bf16.mxu0 0
        %3407 = vmatpush1.bf16.msra.mxu0 0
        %3408 = vmatprep.subr.bf16.mxu0 0
        %3409 = vmatpush1.bf16.msra.mxu0 0
        %3410 = vmatprep.subr.bf16.mxu0 0
        %3411 = vmatpush1.bf16.msra.mxu0 0
        %3412 = vmatprep.mubr.bf16.mxu0 0
        %3413 = vmatmul.mubr.bf16.gmra.mrb[0].mxu0 %v3378
        %v3414 = vpop.f32.mrb[0].mxu0
        %v3415 = vadd.f32 %v3363, %v3414
        %v3416 = vpop.f32.mrb[0].mxu0
        %v3417 = vpop.f32.mrb[0].mxu0
        %v3418 = vpop.f32.mrb[0].mxu0
        %3419 = vdwg.mxu0
        %v3420 = vmax.f32 %v3415, 0.0
        %v3421 = vadd.f32 %v3357, %v3420
        %v3422 = vsel %vm2696, %v3421, 0.0
        %3423 = vadd.xlane.f32.xlu0 %v3422
        %v3424 = vpop.xlane.xlu0 %3423
        %v3425 = vmul.f32 %v3424, %v3333
        %v3426 = vsub.f32 %v3421, %v3425
        %v3427 = vmul.f32 %v3426, %v3426
        %v3428 = vsel %vm2696, %v3427, 0.0
        %3429 = vadd.xlane.f32.xlu0 %v3428
        %v3430 = vpop.xlane.xlu0 %3429
        %v3431 = vmul.f32 %v3430, %v3333
        %v3432 = vadd.f32 %v3431, 1e-05
        %v3433 = vrsqrt.pop %v3432
        %v3434 = vmul.f32 %v3426, %v3433
        %v3436 = vlaneseq
        %v3437 = vshrl.u32 %v3436, 7
        %v3438 = vsub.s32 0, %v3437
        %v3439 = vrot.slane %v2570, %v3438
        %v3441 = vmul.f32 %v3434, %v3439
        %v3443 = vlaneseq
        %v3444 = vshrl.u32 %v3443, 7
        %v3445 = vsub.s32 0, %v3444
        %v3446 = vrot.slane %v2571, %v3445
        %v3448 = vadd.f32 %v3441, %v3446
        %v3449 = vpack.c.bf16 %v2573, %v2572
        %v3451 = vlaneseq
        %v3452 = vshrl.u32 %v3451, 7
        %v3453 = vsub.s32 0, %v3452
        %v3454 = vrot.slane %v2578, %v3453
        %v3460 = vunpack.c.l.b16 %v2574
        %v3461 = vunpack.c.l.b16 %v2575
        %v3462 = vunpack.c.l.b16 %v2576
        %v3463 = vunpack.c.l.b16 %v2577
        %v3464 = vpack.c.b16 %v3461, %v3460
        %v3465 = vpack.c.b16 %v3463, %v3462
        %v3469 = vsel %vm2696, %v3449, 0
        %3471 = vmatprep.subr.bf16.mxu0 0
        %3472 = vmatpush1.bf16.msra.mxu0 %v3464
        %3473 = vmatprep.subr.bf16.mxu0 0
        %3474 = vmatpush1.bf16.msra.mxu0 %v3465
        %3475 = vmatprep.subr.bf16.mxu0 0
        %3476 = vmatpush1.bf16.msra.mxu0 0
        %3477 = vmatprep.subr.bf16.mxu0 0
        %3478 = vmatpush1.bf16.msra.mxu0 0
        %3479 = vmatprep.subr.bf16.mxu0 0
        %3480 = vmatpush1.bf16.msra.mxu0 0
        %3481 = vmatprep.subr.bf16.mxu0 0
        %3482 = vmatpush1.bf16.msra.mxu0 0
        %3483 = vmatprep.subr.bf16.mxu0 0
        %3484 = vmatpush1.bf16.msra.mxu0 0
        %3485 = vmatprep.subr.bf16.mxu0 0
        %3486 = vmatpush1.bf16.msra.mxu0 0
        %3487 = vmatprep.subr.bf16.mxu0 0
        %3488 = vmatpush1.bf16.msra.mxu0 0
        %3489 = vmatprep.subr.bf16.mxu0 0
        %3490 = vmatpush1.bf16.msra.mxu0 0
        %3491 = vmatprep.subr.bf16.mxu0 0
        %3492 = vmatpush1.bf16.msra.mxu0 0
        %3493 = vmatprep.subr.bf16.mxu0 0
        %3494 = vmatpush1.bf16.msra.mxu0 0
        %3495 = vmatprep.subr.bf16.mxu0 0
        %3496 = vmatpush1.bf16.msra.mxu0 0
        %3497 = vmatprep.subr.bf16.mxu0 0
        %3498 = vmatpush1.bf16.msra.mxu0 0
        %3499 = vmatprep.subr.bf16.mxu0 0
        %3500 = vmatpush1.bf16.msra.mxu0 0
        %3501 = vmatprep.subr.bf16.mxu0 0
        %3502 = vmatpush1.bf16.msra.mxu0 0
        %3503 = vmatprep.mubr.bf16.mxu0 0
        %3504 = vmatmul.mubr.bf16.gmra.mrb[0].mxu0 %v3469
        %v3505 = vpop.f32.mrb[0].mxu0
        %v3506 = vadd.f32 %v3454, %v3505
        %v3507 = vpop.f32.mrb[0].mxu0
        %v3508 = vpop.f32.mrb[0].mxu0
        %v3509 = vadd.f32 %v3454, %v3508
        %v3510 = vpop.f32.mrb[0].mxu0
        %3511 = vdwg.mxu0
        %v3512 = vpack.c.bf16 %v3448, %v3448
        %v3514 = vlaneseq
        %v3515 = vshrl.u32 %v3514, 7
        %v3516 = vsub.s32 0, %v3515
        %v3517 = vrot.slane %v2583, %v3516
        %v3523 = vunpack.c.l.b16 %v2579
        %v3524 = vunpack.c.l.b16 %v2580
        %v3525 = vunpack.c.l.b16 %v2581
        %v3526 = vunpack.c.l.b16 %v2582
        %v3527 = vpack.c.b16 %v3524, %v3523
        %v3528 = vpack.c.b16 %v3526, %v3525
        %v3532 = vsel %vm2696, %v3512, 0
        %3534 = vmatprep.subr.bf16.mxu0 0
        %3535 = vmatpush1.bf16.msra.mxu0 %v3527
        %3536 = vmatprep.subr.bf16.mxu0 0
        %3537 = vmatpush1.bf16.msra.mxu0 %v3528
        %3538 = vmatprep.subr.bf16.mxu0 0
        %3539 = vmatpush1.bf16.msra.mxu0 0
        %3540 = vmatprep.subr.bf16.mxu0 0
        %3541 = vmatpush1.bf16.msra.mxu0 0
        %3542 = vmatprep.subr.bf16.mxu0 0
        %3543 = vmatpush1.bf16.msra.mxu0 0
        %3544 = vmatprep.subr.bf16.mxu0 0
        %3545 = vmatpush1.bf16.msra.mxu0 0
        %3546 = vmatprep.subr.bf16.mxu0 0
        %3547 = vmatpush1.bf16.msra.mxu0 0
        %3548 = vmatprep.subr.bf16.mxu0 0
        %3549 = vmatpush1.bf16.msra.mxu0 0
        %3550 = vmatprep.subr.bf16.mxu0 0
        %3551 = vmatpush1.bf16.msra.mxu0 0
        %3552 = vmatprep.subr.bf16.mxu0 0
        %3553 = vmatpush1.bf16.msra.mxu0 0
        %3554 = vmatprep.subr.bf16.mxu0 0
        %3555 = vmatpush1.bf16.msra.mxu0 0
        %3556 = vmatprep.subr.bf16.mxu0 0
        %3557 = vmatpush1.bf16.msra.mxu0 0
        %3558 = vmatprep.subr.bf16.mxu0 0
        %3559 = vmatpush1.bf16.msra.mxu0 0
        %3560 = vmatprep.subr.bf16.mxu0 0
        %3561 = vmatpush1.bf16.msra.mxu0 0
        %3562 = vmatprep.subr.bf16.mxu0 0
        %3563 = vmatpush1.bf16.msra.mxu0 0
        %3564 = vmatprep.subr.bf16.mxu0 0
        %3565 = vmatpush1.bf16.msra.mxu0 0
        %3566 = vmatprep.mubr.bf16.mxu0 0
        %3567 = vmatmul.mubr.bf16.gmra.mrb[0].mxu0 %v3532
        %v3568 = vpop.f32.mrb[0].mxu0
        %v3569 = vadd.f32 %v3517, %v3568
        %v3570 = vpop.f32.mrb[0].mxu0
        %v3571 = vpop.f32.mrb[0].mxu0
        %v3572 = vpop.f32.mrb[0].mxu0
        %3573 = vdwg.mxu0
        %v3575 = vlaneseq
        %v3576 = vshrl.u32 %v3575, 7
        %v3577 = vsub.s32 0, %v3576
        %v3578 = vrot.slane %v2588, %v3577
        %v3584 = vunpack.c.l.b16 %v2584
        %v3585 = vunpack.c.l.b16 %v2585
        %v3586 = vunpack.c.l.b16 %v2586
        %v3587 = vunpack.c.l.b16 %v2587
        %v3588 = vpack.c.b16 %v3585, %v3584
        %v3589 = vpack.c.b16 %v3587, %v3586
        %3592 = vmatprep.subr.bf16.mxu0 0
        %3593 = vmatpush1.bf16.msra.mxu0 %v3588
        %3594 = vmatprep.subr.bf16.mxu0 0
        %3595 = vmatpush1.bf16.msra.mxu0 %v3589
        %3596 = vmatprep.subr.bf16.mxu0 0
        %3597 = vmatpush1.bf16.msra.mxu0 0
        %3598 = vmatprep.subr.bf16.mxu0 0
        %3599 = vmatpush1.bf16.msra.mxu0 0
        %3600 = vmatprep.subr.bf16.mxu0 0
        %3601 = vmatpush1.bf16.msra.mxu0 0
        %3602 = vmatprep.subr.bf16.mxu0 0
        %3603 = vmatpush1.bf16.msra.mxu0 0
        %3604 = vmatprep.subr.bf16.mxu0 0
        %3605 = vmatpush1.bf16.msra.mxu0 0
        %3606 = vmatprep.subr.bf16.mxu0 0
        %3607 = vmatpush1.bf16.msra.mxu0 0
        %3608 = vmatprep.subr.bf16.mxu0 0
        %3609 = vmatpush1.bf16.msra.mxu0 0
        %3610 = vmatprep.subr.bf16.mxu0 0
        %3611 = vmatpush1.bf16.msra.mxu0 0
        %3612 = vmatprep.subr.bf16.mxu0 0
        %3613 = vmatpush1.bf16.msra.mxu0 0
        %3614 = vmatprep.subr.bf16.mxu0 0
        %3615 = vmatpush1.bf16.msra.mxu0 0
        %3616 = vmatprep.subr.bf16.mxu0 0
        %3617 = vmatpush1.bf16.msra.mxu0 0
        %3618 = vmatprep.subr.bf16.mxu0 0
        %3619 = vmatpush1.bf16.msra.mxu0 0
        %3620 = vmatprep.subr.bf16.mxu0 0
        %3621 = vmatpush1.bf16.msra.mxu0 0
        %3622 = vmatprep.subr.bf16.mxu0 0
        %3623 = vmatpush1.bf16.msra.mxu0 0
        %3624 = vmatprep.mubr.bf16.mxu0 0
        %3625 = vmatmul.mubr.bf16.gmra.mrb[0].mxu0 %v3532
        %v3626 = vpop.f32.mrb[0].mxu0
        %v3627 = vadd.f32 %v3578, %v3626
        %v3628 = vpop.f32.mrb[0].mxu0
        %v3629 = vpop.f32.mrb[0].mxu0
        %v3630 = vpop.f32.mrb[0].mxu0
        %3631 = vdwg.mxu0
        %v3632 = vpack.c.bf16 %v3509, %v3506
        %v3633 = vpack.c.bf16 %v3569, %v3569
        %v3635 = vsel %vm2865, %v3632, 0
        %v3638 = vsel %vm2865, %v3633, 0
        %3640 = vmatprep.subr.bf16.mxu0 0
        %3641 = vmatpush1.bf16.xpose.msra.mxu0 %v3638
        %3642 = vmatprep.subr.bf16.mxu0 0
        %3643 = vmatpush1.bf16.xpose.msra.mxu0 0
        %3644 = vmatprep.subr.bf16.mxu0 0
        %3645 = vmatpush1.bf16.xpose.msra.mxu0 0
        %3646 = vmatprep.subr.bf16.mxu0 0
        %3647 = vmatpush1.bf16.xpose.msra.mxu0 0
        %3648 = vmatprep.subr.bf16.mxu0 0
        %3649 = vmatpush1.bf16.xpose.msra.mxu0 0
        %3650 = vmatprep.subr.bf16.mxu0 0
        %3651 = vmatpush1.bf16.xpose.msra.mxu0 0
        %3652 = vmatprep.subr.bf16.mxu0 0
        %3653 = vmatpush1.bf16.xpose.msra.mxu0 0
        %3654 = vmatprep.subr.bf16.mxu0 0
        %3655 = vmatpush1.bf16.xpose.msra.mxu0 0
        %3656 = vmatprep.subr.bf16.mxu0 0
        %3657 = vmatpush1.bf16.xpose.msra.mxu0 0
        %3658 = vmatprep.subr.bf16.mxu0 0
        %3659 = vmatpush1.bf16.xpose.msra.mxu0 0
        %3660 = vmatprep.subr.bf16.mxu0 0
        %3661 = vmatpush1.bf16.xpose.msra.mxu0 0
        %3662 = vmatprep.subr.bf16.mxu0 0
        %3663 = vmatpush1.bf16.xpose.msra.mxu0 0
        %3664 = vmatprep.subr.bf16.mxu0 0
        %3665 = vmatpush1.bf16.xpose.msra.mxu0 0
        %3666 = vmatprep.subr.bf16.mxu0 0
        %3667 = vmatpush1.bf16.xpose.msra.mxu0 0
        %3668 = vmatprep.subr.bf16.mxu0 0
        %3669 = vmatpush1.bf16.xpose.msra.mxu0 0
        %3670 = vmatprep.subr.bf16.mxu0 0
        %3671 = vmatpush1.bf16.xpose.msra.mxu0 0
        %3672 = vmatprep.mubr.bf16.mxu0 0
        %3673 = vmatmul.mubr.bf16.gmra.mrb[0].mxu0 %v3635
        %v3674 = vpop.f32.mrb[0].mxu0
        %v3675 = vadd.f32 0.0, %v3674
        %v3676 = vpop.f32.mrb[0].mxu0
        %v3677 = vpop.f32.mrb[0].mxu0
        %v3678 = vadd.f32 0.0, %v3677
        %v3679 = vpop.f32.mrb[0].mxu0
        %3680 = vdwg.mxu0
        %v3681 = vmul.f32 %v3675, 0.17677669
        %v3682 = vmul.f32 %v3678, 0.17677669
        %v3683 = vsel %vm2865, %v3681, -inf
        %3684 = vmax.xlane.f32.xlu0 %v3683
        %v3685 = vpop.xlane.xlu0 %3684
        %v3686 = vsel %vm2865, %v3682, -inf
        %3687 = vmax.xlane.f32.xlu0 %v3686
        %v3688 = vpop.xlane.xlu0 %3687
        %v3689 = vsub.f32 %v3681, %v3685
        %v3690 = vsub.f32 %v3682, %v3688
        %v3691 = vmul.f32 %v3689, 1.442695
        %v3692 = vpow.pop %v3691
        %v3693 = vmul.f32 %v3690, 1.442695
        %v3694 = vpow.pop %v3693
        %v3695 = vsel %vm2865, %v3692, 0.0
        %3696 = vadd.xlane.f32.xlu0 %v3695
        %v3697 = vpop.xlane.xlu0 %3696
        %v3698 = vsel %vm2865, %v3694, 0.0
        %3699 = vadd.xlane.f32.xlu0 %v3698
        %v3700 = vpop.xlane.xlu0 %3699
        %v3701 = vrcp.pop %v3697
        %v3702 = vrcp.pop %v3700
        %v3703 = vmul.f32 %v3692, %v3701
        %v3704 = vmul.f32 %v3694, %v3702
        %v3705 = vpack.c.bf16 %v3704, %v3703
        %v3706 = vpack.c.bf16 %v3627, %v3627
        %v3708 = vsel %vm2865, %v3705, 0
        %vm3710 = vcmask 1043456
        %v3712 = vsel %vm3710, %v3706, 0
        %3714 = vmatprep.subr.bf16.mxu0 0
        %3715 = vmatpush1.bf16.msra.mxu0 %v3712
        %3716 = vmatprep.subr.bf16.mxu0 0
        %3717 = vmatpush1.bf16.msra.mxu0 0
        %3718 = vmatprep.subr.bf16.mxu0 0
        %3719 = vmatpush1.bf16.msra.mxu0 0
        %3720 = vmatprep.subr.bf16.mxu0 0
        %3721 = vmatpush1.bf16.msra.mxu0 0
        %3722 = vmatprep.subr.bf16.mxu0 0
        %3723 = vmatpush1.bf16.msra.mxu0 0
        %3724 = vmatprep.subr.bf16.mxu0 0
        %3725 = vmatpush1.bf16.msra.mxu0 0
        %3726 = vmatprep.subr.bf16.mxu0 0
        %3727 = vmatpush1.bf16.msra.mxu0 0
        %3728 = vmatprep.subr.bf16.mxu0 0
        %3729 = vmatpush1.bf16.msra.mxu0 0
        %3730 = vmatprep.subr.bf16.mxu0 0
        %3731 = vmatpush1.bf16.msra.mxu0 0
        %3732 = vmatprep.subr.bf16.mxu0 0
        %3733 = vmatpush1.bf16.msra.mxu0 0
        %3734 = vmatprep.subr.bf16.mxu0 0
        %3735 = vmatpush1.bf16.msra.mxu0 0
        %3736 = vmatprep.subr.bf16.mxu0 0
        %3737 = vmatpush1.bf16.msra.mxu0 0
        %3738 = vmatprep.subr.bf16.mxu0 0
        %3739 = vmatpush1.bf16.msra.mxu0 0
        %3740 = vmatprep.subr.bf16.mxu0 0
        %3741 = vmatpush1.bf16.msra.mxu0 0
        %3742 = vmatprep.subr.bf16.mxu0 0
        %3743 = vmatpush1.bf16.msra.mxu0 0
        %3744 = vmatprep.subr.bf16.mxu0 0
        %3745 = vmatpush1.bf16.msra.mxu0 0
        %3746 = vmatprep.mubr.bf16.mxu0 0
        %3747 = vmatmul.mubr.bf16.gmra.mrb[0].mxu0 %v3708
        %v3748 = vpop.f32.mrb[0].mxu0
        %v3749 = vadd.f32 0.0, %v3748
        %v3750 = vpop.f32.mrb[0].mxu0
        %v3751 = vpop.f32.mrb[0].mxu0
        %v3752 = vadd.f32 0.0, %v3751
        %v3753 = vpop.f32.mrb[0].mxu0
        %3754 = vdwg.mxu0
        %v3755 = vadd.f32 %v3506, %v3749
        %v3756 = vadd.f32 %v3509, %v3752
        %3758 = vrot.lane.b32.xlu0 %v3632, 120
        %v3759 = vpop.permute.xlu0 %3758
        %3761 = vrot.lane.b32.xlu0 %v3633, 120
        %v3762 = vpop.permute.xlu0 %3761
        %v3764 = vsel %vm2865, %v3759, 0
        %v3767 = vsel %vm2865, %v3762, 0
        %3769 = vmatprep.subr.bf16.mxu0 0
        %3770 = vmatpush1.bf16.xpose.msra.mxu0 %v3767
        %3771 = vmatprep.subr.bf16.mxu0 0
        %3772 = vmatpush1.bf16.xpose.msra.mxu0 0
        %3773 = vmatprep.subr.bf16.mxu0 0
        %3774 = vmatpush1.bf16.xpose.msra.mxu0 0
        %3775 = vmatprep.subr.bf16.mxu0 0
        %3776 = vmatpush1.bf16.xpose.msra.mxu0 0
        %3777 = vmatprep.subr.bf16.mxu0 0
        %3778 = vmatpush1.bf16.xpose.msra.mxu0 0
        %3779 = vmatprep.subr.bf16.mxu0 0
        %3780 = vmatpush1.bf16.xpose.msra.mxu0 0
        %3781 = vmatprep.subr.bf16.mxu0 0
        %3782 = vmatpush1.bf16.xpose.msra.mxu0 0
        %3783 = vmatprep.subr.bf16.mxu0 0
        %3784 = vmatpush1.bf16.xpose.msra.mxu0 0
        %3785 = vmatprep.subr.bf16.mxu0 0
        %3786 = vmatpush1.bf16.xpose.msra.mxu0 0
        %3787 = vmatprep.subr.bf16.mxu0 0
        %3788 = vmatpush1.bf16.xpose.msra.mxu0 0
        %3789 = vmatprep.subr.bf16.mxu0 0
        %3790 = vmatpush1.bf16.xpose.msra.mxu0 0
        %3791 = vmatprep.subr.bf16.mxu0 0
        %3792 = vmatpush1.bf16.xpose.msra.mxu0 0
        %3793 = vmatprep.subr.bf16.mxu0 0
        %3794 = vmatpush1.bf16.xpose.msra.mxu0 0
        %3795 = vmatprep.subr.bf16.mxu0 0
        %3796 = vmatpush1.bf16.xpose.msra.mxu0 0
        %3797 = vmatprep.subr.bf16.mxu0 0
        %3798 = vmatpush1.bf16.xpose.msra.mxu0 0
        %3799 = vmatprep.subr.bf16.mxu0 0
        %3800 = vmatpush1.bf16.xpose.msra.mxu0 0
        %3801 = vmatprep.mubr.bf16.mxu0 0
        %3802 = vmatmul.mubr.bf16.gmra.mrb[0].mxu0 %v3764
        %v3803 = vpop.f32.mrb[0].mxu0
        %v3804 = vadd.f32 0.0, %v3803
        %v3805 = vpop.f32.mrb[0].mxu0
        %v3806 = vpop.f32.mrb[0].mxu0
        %v3807 = vadd.f32 0.0, %v3806
        %v3808 = vpop.f32.mrb[0].mxu0
        %3809 = vdwg.mxu0
        %v3810 = vmul.f32 %v3804, 0.17677669
        %v3811 = vmul.f32 %v3807, 0.17677669
        %v3812 = vsel %vm2865, %v3810, -inf
        %3813 = vmax.xlane.f32.xlu0 %v3812
        %v3814 = vpop.xlane.xlu0 %3813
        %v3815 = vsel %vm2865, %v3811, -inf
        %3816 = vmax.xlane.f32.xlu0 %v3815
        %v3817 = vpop.xlane.xlu0 %3816
        %v3818 = vsub.f32 %v3810, %v3814
        %v3819 = vsub.f32 %v3811, %v3817
        %v3820 = vmul.f32 %v3818, 1.442695
        %v3821 = vpow.pop %v3820
        %v3822 = vmul.f32 %v3819, 1.442695
        %v3823 = vpow.pop %v3822
        %v3824 = vsel %vm2865, %v3821, 0.0
        %3825 = vadd.xlane.f32.xlu0 %v3824
        %v3826 = vpop.xlane.xlu0 %3825
        %v3827 = vsel %vm2865, %v3823, 0.0
        %3828 = vadd.xlane.f32.xlu0 %v3827
        %v3829 = vpop.xlane.xlu0 %3828
        %v3830 = vrcp.pop %v3826
        %v3831 = vrcp.pop %v3829
        %v3832 = vmul.f32 %v3821, %v3830
        %v3833 = vmul.f32 %v3823, %v3831
        %v3834 = vpack.c.bf16 %v3833, %v3832
        %3836 = vrot.lane.b32.xlu0 %v3706, 120
        %v3837 = vpop.permute.xlu0 %3836
        %v3839 = vsel %vm2865, %v3834, 0
        %v3842 = vsel %vm3710, %v3837, 0
        %3844 = vmatprep.subr.bf16.mxu0 0
        %3845 = vmatpush1.bf16.msra.mxu0 %v3842
        %3846 = vmatprep.subr.bf16.mxu0 0
        %3847 = vmatpush1.bf16.msra.mxu0 0
        %3848 = vmatprep.subr.bf16.mxu0 0
        %3849 = vmatpush1.bf16.msra.mxu0 0
        %3850 = vmatprep.subr.bf16.mxu0 0
        %3851 = vmatpush1.bf16.msra.mxu0 0
        %3852 = vmatprep.subr.bf16.mxu0 0
        %3853 = vmatpush1.bf16.msra.mxu0 0
        %3854 = vmatprep.subr.bf16.mxu0 0
        %3855 = vmatpush1.bf16.msra.mxu0 0
        %3856 = vmatprep.subr.bf16.mxu0 0
        %3857 = vmatpush1.bf16.msra.mxu0 0
        %3858 = vmatprep.subr.bf16.mxu0 0
        %3859 = vmatpush1.bf16.msra.mxu0 0
        %3860 = vmatprep.subr.bf16.mxu0 0
        %3861 = vmatpush1.bf16.msra.mxu0 0
        %3862 = vmatprep.subr.bf16.mxu0 0
        %3863 = vmatpush1.bf16.msra.mxu0 0
        %3864 = vmatprep.subr.bf16.mxu0 0
        %3865 = vmatpush1.bf16.msra.mxu0 0
        %3866 = vmatprep.subr.bf16.mxu0 0
        %3867 = vmatpush1.bf16.msra.mxu0 0
        %3868 = vmatprep.subr.bf16.mxu0 0
        %3869 = vmatpush1.bf16.msra.mxu0 0
        %3870 = vmatprep.subr.bf16.mxu0 0
        %3871 = vmatpush1.bf16.msra.mxu0 0
        %3872 = vmatprep.subr.bf16.mxu0 0
        %3873 = vmatpush1.bf16.msra.mxu0 0
        %3874 = vmatprep.subr.bf16.mxu0 0
        %3875 = vmatpush1.bf16.msra.mxu0 0
        %3876 = vmatprep.mubr.bf16.mxu0 0
        %3877 = vmatmul.mubr.bf16.gmra.mrb[0].mxu0 %v3839
        %v3878 = vpop.f32.mrb[0].mxu0
        %v3879 = vadd.f32 0.0, %v3878
        %v3880 = vpop.f32.mrb[0].mxu0
        %v3881 = vpop.f32.mrb[0].mxu0
        %v3882 = vadd.f32 0.0, %v3881
        %v3883 = vpop.f32.mrb[0].mxu0
        %3884 = vdwg.mxu0
        %3887 = vrot.lane.b32.xlu0 %v3879, 8
        %v3888 = vpop.permute.xlu0 %3887
        %3889 = vrot.lane.b32.xlu0 %v3882, 8
        %v3890 = vpop.permute.xlu0 %3889
        %v3893 = vadd.f32 %v3506, %v3888
        %v3894 = vadd.f32 %v3509, %v3890
        %3895 = vrot.lane.b32.xlu0 %v3632, 112
        %v3896 = vpop.permute.xlu0 %3895
        %3897 = vrot.lane.b32.xlu0 %v3633, 112
        %v3898 = vpop.permute.xlu0 %3897
        %v3900 = vsel %vm2865, %v3896, 0
        %v3903 = vsel %vm2865, %v3898, 0
        %3905 = vmatprep.subr.bf16.mxu0 0
        %3906 = vmatpush1.bf16.xpose.msra.mxu0 %v3903
        %3907 = vmatprep.subr.bf16.mxu0 0
        %3908 = vmatpush1.bf16.xpose.msra.mxu0 0
        %3909 = vmatprep.subr.bf16.mxu0 0
        %3910 = vmatpush1.bf16.xpose.msra.mxu0 0
        %3911 = vmatprep.subr.bf16.mxu0 0
        %3912 = vmatpush1.bf16.xpose.msra.mxu0 0
        %3913 = vmatprep.subr.bf16.mxu0 0
        %3914 = vmatpush1.bf16.xpose.msra.mxu0 0
        %3915 = vmatprep.subr.bf16.mxu0 0
        %3916 = vmatpush1.bf16.xpose.msra.mxu0 0
        %3917 = vmatprep.subr.bf16.mxu0 0
        %3918 = vmatpush1.bf16.xpose.msra.mxu0 0
        %3919 = vmatprep.subr.bf16.mxu0 0
        %3920 = vmatpush1.bf16.xpose.msra.mxu0 0
        %3921 = vmatprep.subr.bf16.mxu0 0
        %3922 = vmatpush1.bf16.xpose.msra.mxu0 0
        %3923 = vmatprep.subr.bf16.mxu0 0
        %3924 = vmatpush1.bf16.xpose.msra.mxu0 0
        %3925 = vmatprep.subr.bf16.mxu0 0
        %3926 = vmatpush1.bf16.xpose.msra.mxu0 0
        %3927 = vmatprep.subr.bf16.mxu0 0
        %3928 = vmatpush1.bf16.xpose.msra.mxu0 0
        %3929 = vmatprep.subr.bf16.mxu0 0
        %3930 = vmatpush1.bf16.xpose.msra.mxu0 0
        %3931 = vmatprep.subr.bf16.mxu0 0
        %3932 = vmatpush1.bf16.xpose.msra.mxu0 0
        %3933 = vmatprep.subr.bf16.mxu0 0
        %3934 = vmatpush1.bf16.xpose.msra.mxu0 0
        %3935 = vmatprep.subr.bf16.mxu0 0
        %3936 = vmatpush1.bf16.xpose.msra.mxu0 0
        %3937 = vmatprep.mubr.bf16.mxu0 0
        %3938 = vmatmul.mubr.bf16.gmra.mrb[0].mxu0 %v3900
        %v3939 = vpop.f32.mrb[0].mxu0
        %v3940 = vadd.f32 0.0, %v3939
        %v3941 = vpop.f32.mrb[0].mxu0
        %v3942 = vpop.f32.mrb[0].mxu0
        %v3943 = vadd.f32 0.0, %v3942
        %v3944 = vpop.f32.mrb[0].mxu0
        %3945 = vdwg.mxu0
        %v3946 = vmul.f32 %v3940, 0.17677669
        %v3947 = vmul.f32 %v3943, 0.17677669
        %v3948 = vsel %vm2865, %v3946, -inf
        %3949 = vmax.xlane.f32.xlu0 %v3948
        %v3950 = vpop.xlane.xlu0 %3949
        %v3951 = vsel %vm2865, %v3947, -inf
        %3952 = vmax.xlane.f32.xlu0 %v3951
        %v3953 = vpop.xlane.xlu0 %3952
        %v3954 = vsub.f32 %v3946, %v3950
        %v3955 = vsub.f32 %v3947, %v3953
        %v3956 = vmul.f32 %v3954, 1.442695
        %v3957 = vpow.pop %v3956
        %v3958 = vmul.f32 %v3955, 1.442695
        %v3959 = vpow.pop %v3958
        %v3960 = vsel %vm2865, %v3957, 0.0
        %3961 = vadd.xlane.f32.xlu0 %v3960
        %v3962 = vpop.xlane.xlu0 %3961
        %v3963 = vsel %vm2865, %v3959, 0.0
        %3964 = vadd.xlane.f32.xlu0 %v3963
        %v3965 = vpop.xlane.xlu0 %3964
        %v3966 = vrcp.pop %v3962
        %v3967 = vrcp.pop %v3965
        %v3968 = vmul.f32 %v3957, %v3966
        %v3969 = vmul.f32 %v3959, %v3967
        %v3970 = vpack.c.bf16 %v3969, %v3968
        %3971 = vrot.lane.b32.xlu0 %v3706, 112
        %v3972 = vpop.permute.xlu0 %3971
        %v3974 = vsel %vm2865, %v3970, 0
        %v3977 = vsel %vm3710, %v3972, 0
        %3979 = vmatprep.subr.bf16.mxu0 0
        %3980 = vmatpush1.bf16.msra.mxu0 %v3977
        %3981 = vmatprep.subr.bf16.mxu0 0
        %3982 = vmatpush1.bf16.msra.mxu0 0
        %3983 = vmatprep.subr.bf16.mxu0 0
        %3984 = vmatpush1.bf16.msra.mxu0 0
        %3985 = vmatprep.subr.bf16.mxu0 0
        %3986 = vmatpush1.bf16.msra.mxu0 0
        %3987 = vmatprep.subr.bf16.mxu0 0
        %3988 = vmatpush1.bf16.msra.mxu0 0
        %3989 = vmatprep.subr.bf16.mxu0 0
        %3990 = vmatpush1.bf16.msra.mxu0 0
        %3991 = vmatprep.subr.bf16.mxu0 0
        %3992 = vmatpush1.bf16.msra.mxu0 0
        %3993 = vmatprep.subr.bf16.mxu0 0
        %3994 = vmatpush1.bf16.msra.mxu0 0
        %3995 = vmatprep.subr.bf16.mxu0 0
        %3996 = vmatpush1.bf16.msra.mxu0 0
        %3997 = vmatprep.subr.bf16.mxu0 0
        %3998 = vmatpush1.bf16.msra.mxu0 0
        %3999 = vmatprep.subr.bf16.mxu0 0
        %4000 = vmatpush1.bf16.msra.mxu0 0
        %4001 = vmatprep.subr.bf16.mxu0 0
        %4002 = vmatpush1.bf16.msra.mxu0 0
        %4003 = vmatprep.subr.bf16.mxu0 0
        %4004 = vmatpush1.bf16.msra.mxu0 0
        %4005 = vmatprep.subr.bf16.mxu0 0
        %4006 = vmatpush1.bf16.msra.mxu0 0
        %4007 = vmatprep.subr.bf16.mxu0 0
        %4008 = vmatpush1.bf16.msra.mxu0 0
        %4009 = vmatprep.subr.bf16.mxu0 0
        %4010 = vmatpush1.bf16.msra.mxu0 0
        %4011 = vmatprep.mubr.bf16.mxu0 0
        %4012 = vmatmul.mubr.bf16.gmra.mrb[0].mxu0 %v3974
        %v4013 = vpop.f32.mrb[0].mxu0
        %v4014 = vadd.f32 0.0, %v4013
        %v4015 = vpop.f32.mrb[0].mxu0
        %v4016 = vpop.f32.mrb[0].mxu0
        %v4017 = vadd.f32 0.0, %v4016
        %v4018 = vpop.f32.mrb[0].mxu0
        %4019 = vdwg.mxu0
        %4022 = vrot.lane.b32.xlu0 %v4014, 16
        %v4023 = vpop.permute.xlu0 %4022
        %4024 = vrot.lane.b32.xlu0 %v4017, 16
        %v4025 = vpop.permute.xlu0 %4024
        %v4028 = vadd.f32 %v3506, %v4023
        %v4029 = vadd.f32 %v3509, %v4025
        %4030 = vrot.lane.b32.xlu0 %v3632, 104
        %v4031 = vpop.permute.xlu0 %4030
        %4032 = vrot.lane.b32.xlu0 %v3633, 104
        %v4033 = vpop.permute.xlu0 %4032
        %v4035 = vsel %vm2865, %v4031, 0
        %v4038 = vsel %vm2865, %v4033, 0
        %4040 = vmatprep.subr.bf16.mxu0 0
        %4041 = vmatpush1.bf16.xpose.msra.mxu0 %v4038
        %4042 = vmatprep.subr.bf16.mxu0 0
        %4043 = vmatpush1.bf16.xpose.msra.mxu0 0
        %4044 = vmatprep.subr.bf16.mxu0 0
        %4045 = vmatpush1.bf16.xpose.msra.mxu0 0
        %4046 = vmatprep.subr.bf16.mxu0 0
        %4047 = vmatpush1.bf16.xpose.msra.mxu0 0
        %4048 = vmatprep.subr.bf16.mxu0 0
        %4049 = vmatpush1.bf16.xpose.msra.mxu0 0
        %4050 = vmatprep.subr.bf16.mxu0 0
        %4051 = vmatpush1.bf16.xpose.msra.mxu0 0
        %4052 = vmatprep.subr.bf16.mxu0 0
        %4053 = vmatpush1.bf16.xpose.msra.mxu0 0
        %4054 = vmatprep.subr.bf16.mxu0 0
        %4055 = vmatpush1.bf16.xpose.msra.mxu0 0
        %4056 = vmatprep.subr.bf16.mxu0 0
        %4057 = vmatpush1.bf16.xpose.msra.mxu0 0
        %4058 = vmatprep.subr.bf16.mxu0 0
        %4059 = vmatpush1.bf16.xpose.msra.mxu0 0
        %4060 = vmatprep.subr.bf16.mxu0 0
        %4061 = vmatpush1.bf16.xpose.msra.mxu0 0
        %4062 = vmatprep.subr.bf16.mxu0 0
        %4063 = vmatpush1.bf16.xpose.msra.mxu0 0
        %4064 = vmatprep.subr.bf16.mxu0 0
        %4065 = vmatpush1.bf16.xpose.msra.mxu0 0
        %4066 = vmatprep.subr.bf16.mxu0 0
        %4067 = vmatpush1.bf16.xpose.msra.mxu0 0
        %4068 = vmatprep.subr.bf16.mxu0 0
        %4069 = vmatpush1.bf16.xpose.msra.mxu0 0
        %4070 = vmatprep.subr.bf16.mxu0 0
        %4071 = vmatpush1.bf16.xpose.msra.mxu0 0
        %4072 = vmatprep.mubr.bf16.mxu0 0
        %4073 = vmatmul.mubr.bf16.gmra.mrb[0].mxu0 %v4035
        %v4074 = vpop.f32.mrb[0].mxu0
        %v4075 = vadd.f32 0.0, %v4074
        %v4076 = vpop.f32.mrb[0].mxu0
        %v4077 = vpop.f32.mrb[0].mxu0
        %v4078 = vadd.f32 0.0, %v4077
        %v4079 = vpop.f32.mrb[0].mxu0
        %4080 = vdwg.mxu0
        %v4081 = vmul.f32 %v4075, 0.17677669
        %v4082 = vmul.f32 %v4078, 0.17677669
        %v4083 = vsel %vm2865, %v4081, -inf
        %4084 = vmax.xlane.f32.xlu0 %v4083
        %v4085 = vpop.xlane.xlu0 %4084
        %v4086 = vsel %vm2865, %v4082, -inf
        %4087 = vmax.xlane.f32.xlu0 %v4086
        %v4088 = vpop.xlane.xlu0 %4087
        %v4089 = vsub.f32 %v4081, %v4085
        %v4090 = vsub.f32 %v4082, %v4088
        %v4091 = vmul.f32 %v4089, 1.442695
        %v4092 = vpow.pop %v4091
        %v4093 = vmul.f32 %v4090, 1.442695
        %v4094 = vpow.pop %v4093
        %v4095 = vsel %vm2865, %v4092, 0.0
        %4096 = vadd.xlane.f32.xlu0 %v4095
        %v4097 = vpop.xlane.xlu0 %4096
        %v4098 = vsel %vm2865, %v4094, 0.0
        %4099 = vadd.xlane.f32.xlu0 %v4098
        %v4100 = vpop.xlane.xlu0 %4099
        %v4101 = vrcp.pop %v4097
        %v4102 = vrcp.pop %v4100
        %v4103 = vmul.f32 %v4092, %v4101
        %v4104 = vmul.f32 %v4094, %v4102
        %v4105 = vpack.c.bf16 %v4104, %v4103
        %4106 = vrot.lane.b32.xlu0 %v3706, 104
        %v4107 = vpop.permute.xlu0 %4106
        %v4109 = vsel %vm2865, %v4105, 0
        %v4112 = vsel %vm3710, %v4107, 0
        %4114 = vmatprep.subr.bf16.mxu0 0
        %4115 = vmatpush1.bf16.msra.mxu0 %v4112
        %4116 = vmatprep.subr.bf16.mxu0 0
        %4117 = vmatpush1.bf16.msra.mxu0 0
        %4118 = vmatprep.subr.bf16.mxu0 0
        %4119 = vmatpush1.bf16.msra.mxu0 0
        %4120 = vmatprep.subr.bf16.mxu0 0
        %4121 = vmatpush1.bf16.msra.mxu0 0
        %4122 = vmatprep.subr.bf16.mxu0 0
        %4123 = vmatpush1.bf16.msra.mxu0 0
        %4124 = vmatprep.subr.bf16.mxu0 0
        %4125 = vmatpush1.bf16.msra.mxu0 0
        %4126 = vmatprep.subr.bf16.mxu0 0
        %4127 = vmatpush1.bf16.msra.mxu0 0
        %4128 = vmatprep.subr.bf16.mxu0 0
        %4129 = vmatpush1.bf16.msra.mxu0 0
        %4130 = vmatprep.subr.bf16.mxu0 0
        %4131 = vmatpush1.bf16.msra.mxu0 0
        %4132 = vmatprep.subr.bf16.mxu0 0
        %4133 = vmatpush1.bf16.msra.mxu0 0
        %4134 = vmatprep.subr.bf16.mxu0 0
        %4135 = vmatpush1.bf16.msra.mxu0 0
        %4136 = vmatprep.subr.bf16.mxu0 0
        %4137 = vmatpush1.bf16.msra.mxu0 0
        %4138 = vmatprep.subr.bf16.mxu0 0
        %4139 = vmatpush1.bf16.msra.mxu0 0
        %4140 = vmatprep.subr.bf16.mxu0 0
        %4141 = vmatpush1.bf16.msra.mxu0 0
        %4142 = vmatprep.subr.bf16.mxu0 0
        %4143 = vmatpush1.bf16.msra.mxu0 0
        %4144 = vmatprep.subr.bf16.mxu0 0
        %4145 = vmatpush1.bf16.msra.mxu0 0
        %4146 = vmatprep.mubr.bf16.mxu0 0
        %4147 = vmatmul.mubr.bf16.gmra.mrb[0].mxu0 %v4109
        %v4148 = vpop.f32.mrb[0].mxu0
        %v4149 = vadd.f32 0.0, %v4148
        %v4150 = vpop.f32.mrb[0].mxu0
        %v4151 = vpop.f32.mrb[0].mxu0
        %v4152 = vadd.f32 0.0, %v4151
        %v4153 = vpop.f32.mrb[0].mxu0
        %4154 = vdwg.mxu0
        %4157 = vrot.lane.b32.xlu0 %v4149, 24
        %v4158 = vpop.permute.xlu0 %4157
        %4159 = vrot.lane.b32.xlu0 %v4152, 24
        %v4160 = vpop.permute.xlu0 %4159
        %v4163 = vadd.f32 %v3506, %v4158
        %v4164 = vadd.f32 %v3509, %v4160
        %v4165 = vsel %vm2865, %v3755, %v3893
        %v4166 = vsel %vm2865, %v3756, %v3894
        %v4167 = vsel %vm2920, %v4165, %v4028
        %v4168 = vsel %vm2920, %v4166, %v4029
        %v4169 = vsel %vm3328, %v4167, %v4163
        %v4170 = vsel %vm3328, %v4168, %v4164
        %v4171 = vsel %vm2696, %v4169, 0.0
        %4172 = vadd.xlane.f32.xlu0 %v4171
        %v4173 = vpop.xlane.xlu0 %4172
        %v4174 = vsel %vm2696, %v4170, 0.0
        %4175 = vadd.xlane.f32.xlu0 %v4174
        %v4176 = vpop.xlane.xlu0 %4175
        %v4177 = vmul.f32 %v4173, %v3333
        %v4178 = vmul.f32 %v4176, %v3333
        %v4179 = vsub.f32 %v4169, %v4177
        %v4180 = vsub.f32 %v4170, %v4178
        %v4181 = vmul.f32 %v4179, %v4179
        %v4182 = vmul.f32 %v4180, %v4180
        %v4183 = vsel %vm2696, %v4181, 0.0
        %4184 = vadd.xlane.f32.xlu0 %v4183
        %v4185 = vpop.xlane.xlu0 %4184
        %v4186 = vsel %vm2696, %v4182, 0.0
        %4187 = vadd.xlane.f32.xlu0 %v4186
        %v4188 = vpop.xlane.xlu0 %4187
        %v4189 = vmul.f32 %v4185, %v3333
        %v4190 = vmul.f32 %v4188, %v3333
        %v4191 = vadd.f32 %v4189, 1e-05
        %v4192 = vadd.f32 %v4190, 1e-05
        %v4193 = vrsqrt.pop %v4191
        %v4194 = vrsqrt.pop %v4192
        %v4195 = vmul.f32 %v4179, %v4193
        %v4196 = vmul.f32 %v4180, %v4194
        %v4198 = vlaneseq
        %v4199 = vshrl.u32 %v4198, 7
        %v4200 = vsub.s32 0, %v4199
        %v4201 = vrot.slane %v2594, %v4200
        %v4203 = vmul.f32 %v4195, %v4201
        %v4204 = vmul.f32 %v4196, %v4201
        %v4206 = vlaneseq
        %v4207 = vshrl.u32 %v4206, 7
        %v4208 = vsub.s32 0, %v4207
        %v4209 = vrot.slane %v2595, %v4208
        %v4211 = vadd.f32 %v4203, %v4209
        %v4212 = vadd.f32 %v4204, %v4209
        %v4213 = vpack.c.bf16 %v4212, %v4211
        %v4215 = vlaneseq
        %v4216 = vshrl.u32 %v4215, 7
        %v4217 = vsub.s32 0, %v4216
        %v4218 = vrot.slane %v2593, %v4217
        %v4224 = vunpack.c.l.b16 %v2589
        %v4225 = vunpack.c.l.b16 %v2590
        %v4226 = vunpack.c.l.b16 %v2591
        %v4227 = vunpack.c.l.b16 %v2592
        %v4228 = vpack.c.b16 %v4225, %v4224
        %v4229 = vpack.c.b16 %v4227, %v4226
        %v4233 = vsel %vm2696, %v4213, 0
        %4235 = vmatprep.subr.bf16.mxu0 0
        %4236 = vmatpush1.bf16.msra.mxu0 %v4228
        %4237 = vmatprep.subr.bf16.mxu0 0
        %4238 = vmatpush1.bf16.msra.mxu0 %v4229
        %4239 = vmatprep.subr.bf16.mxu0 0
        %4240 = vmatpush1.bf16.msra.mxu0 0
        %4241 = vmatprep.subr.bf16.mxu0 0
        %4242 = vmatpush1.bf16.msra.mxu0 0
        %4243 = vmatprep.subr.bf16.mxu0 0
        %4244 = vmatpush1.bf16.msra.mxu0 0
        %4245 = vmatprep.subr.bf16.mxu0 0
        %4246 = vmatpush1.bf16.msra.mxu0 0
        %4247 = vmatprep.subr.bf16.mxu0 0
        %4248 = vmatpush1.bf16.msra.mxu0 0
        %4249 = vmatprep.subr.bf16.mxu0 0
        %4250 = vmatpush1.bf16.msra.mxu0 0
        %4251 = vmatprep.subr.bf16.mxu0 0
        %4252 = vmatpush1.bf16.msra.mxu0 0
        %4253 = vmatprep.subr.bf16.mxu0 0
        %4254 = vmatpush1.bf16.msra.mxu0 0
        %4255 = vmatprep.subr.bf16.mxu0 0
        %4256 = vmatpush1.bf16.msra.mxu0 0
        %4257 = vmatprep.subr.bf16.mxu0 0
        %4258 = vmatpush1.bf16.msra.mxu0 0
        %4259 = vmatprep.subr.bf16.mxu0 0
        %4260 = vmatpush1.bf16.msra.mxu0 0
        %4261 = vmatprep.subr.bf16.mxu0 0
        %4262 = vmatpush1.bf16.msra.mxu0 0
        %4263 = vmatprep.subr.bf16.mxu0 0
        %4264 = vmatpush1.bf16.msra.mxu0 0
        %4265 = vmatprep.subr.bf16.mxu0 0
        %4266 = vmatpush1.bf16.msra.mxu0 0
        %4267 = vmatprep.mubr.bf16.mxu0 0
        %4268 = vmatmul.mubr.bf16.gmra.mrb[0].mxu0 %v4233
        %v4269 = vpop.f32.mrb[0].mxu0
        %v4270 = vadd.f32 %v4218, %v4269
        %v4271 = vpop.f32.mrb[0].mxu0
        %v4272 = vpop.f32.mrb[0].mxu0
        %v4273 = vadd.f32 %v4218, %v4272
        %v4274 = vpop.f32.mrb[0].mxu0
        %4275 = vdwg.mxu0
        %v4276 = vmax.f32 %v4270, 0.0
        %v4277 = vmax.f32 %v4273, 0.0
        %v4278 = vadd.f32 %v4211, %v4276
        %v4279 = vadd.f32 %v4212, %v4277
        %v4280 = vsel %vm2696, %v4278, 0.0
        %4281 = vadd.xlane.f32.xlu0 %v4280
        %v4282 = vpop.xlane.xlu0 %4281
        %v4283 = vsel %vm2696, %v4279, 0.0
        %4284 = vadd.xlane.f32.xlu0 %v4283
        %v4285 = vpop.xlane.xlu0 %4284
        %v4286 = vmul.f32 %v4282, %v3333
        %v4287 = vmul.f32 %v4285, %v3333
        %v4288 = vsub.f32 %v4278, %v4286
        %v4289 = vsub.f32 %v4279, %v4287
        %v4290 = vmul.f32 %v4288, %v4288
        %v4291 = vmul.f32 %v4289, %v4289
        %v4292 = vsel %vm2696, %v4290, 0.0
        %4293 = vadd.xlane.f32.xlu0 %v4292
        %v4294 = vpop.xlane.xlu0 %4293
        %v4295 = vsel %vm2696, %v4291, 0.0
        %4296 = vadd.xlane.f32.xlu0 %v4295
        %v4297 = vpop.xlane.xlu0 %4296
        %v4298 = vmul.f32 %v4294, %v3333
        %v4299 = vmul.f32 %v4297, %v3333
        %v4300 = vadd.f32 %v4298, 1e-05
        %v4301 = vadd.f32 %v4299, 1e-05
        %v4302 = vrsqrt.pop %v4300
        %v4303 = vrsqrt.pop %v4301
        %v4304 = vmul.f32 %v4288, %v4302
        %v4305 = vmul.f32 %v4289, %v4303
        %v4307 = vlaneseq
        %v4308 = vshrl.u32 %v4307, 7
        %v4309 = vsub.s32 0, %v4308
        %v4310 = vrot.slane %v2596, %v4309
        %v4312 = vmul.f32 %v4304, %v4310
        %v4313 = vmul.f32 %v4305, %v4310
        %v4315 = vlaneseq
        %v4316 = vshrl.u32 %v4315, 7
        %v4317 = vsub.s32 0, %v4316
        %v4318 = vrot.slane %v2597, %v4317
        %v4320 = vadd.f32 %v4312, %v4318
        %v4321 = vadd.f32 %v4313, %v4318
        %v4323 = vlaneseq
        %v4324 = vshrl.u32 %v4323, 7
        %v4325 = vsub.s32 0, %v4324
        %v4326 = vrot.slane %v2602, %v4325
        %v4332 = vunpack.c.l.b16 %v2598
        %v4333 = vunpack.c.l.b16 %v2599
        %v4334 = vunpack.c.l.b16 %v2600
        %v4335 = vunpack.c.l.b16 %v2601
        %v4336 = vpack.c.b16 %v4333, %v4332
        %v4337 = vpack.c.b16 %v4335, %v4334
        %4340 = vmatprep.subr.bf16.mxu0 0
        %4341 = vmatpush1.bf16.msra.mxu0 %v4336
        %4342 = vmatprep.subr.bf16.mxu0 0
        %4343 = vmatpush1.bf16.msra.mxu0 %v4337
        %4344 = vmatprep.subr.bf16.mxu0 0
        %4345 = vmatpush1.bf16.msra.mxu0 0
        %4346 = vmatprep.subr.bf16.mxu0 0
        %4347 = vmatpush1.bf16.msra.mxu0 0
        %4348 = vmatprep.subr.bf16.mxu0 0
        %4349 = vmatpush1.bf16.msra.mxu0 0
        %4350 = vmatprep.subr.bf16.mxu0 0
        %4351 = vmatpush1.bf16.msra.mxu0 0
        %4352 = vmatprep.subr.bf16.mxu0 0
        %4353 = vmatpush1.bf16.msra.mxu0 0
        %4354 = vmatprep.subr.bf16.mxu0 0
        %4355 = vmatpush1.bf16.msra.mxu0 0
        %4356 = vmatprep.subr.bf16.mxu0 0
        %4357 = vmatpush1.bf16.msra.mxu0 0
        %4358 = vmatprep.subr.bf16.mxu0 0
        %4359 = vmatpush1.bf16.msra.mxu0 0
        %4360 = vmatprep.subr.bf16.mxu0 0
        %4361 = vmatpush1.bf16.msra.mxu0 0
        %4362 = vmatprep.subr.bf16.mxu0 0
        %4363 = vmatpush1.bf16.msra.mxu0 0
        %4364 = vmatprep.subr.bf16.mxu0 0
        %4365 = vmatpush1.bf16.msra.mxu0 0
        %4366 = vmatprep.subr.bf16.mxu0 0
        %4367 = vmatpush1.bf16.msra.mxu0 0
        %4368 = vmatprep.subr.bf16.mxu0 0
        %4369 = vmatpush1.bf16.msra.mxu0 0
        %4370 = vmatprep.subr.bf16.mxu0 0
        %4371 = vmatpush1.bf16.msra.mxu0 0
        %4372 = vmatprep.mubr.bf16.mxu0 0
        %4373 = vmatmul.mubr.bf16.gmra.mrb[0].mxu0 %v3532
        %v4374 = vpop.f32.mrb[0].mxu0
        %v4375 = vadd.f32 %v4326, %v4374
        %v4376 = vpop.f32.mrb[0].mxu0
        %v4377 = vpop.f32.mrb[0].mxu0
        %v4378 = vpop.f32.mrb[0].mxu0
        %4379 = vdwg.mxu0
        %v4380 = vpack.c.bf16 %v4321, %v4320
        %v4382 = vlaneseq
        %v4383 = vshrl.u32 %v4382, 7
        %v4384 = vsub.s32 0, %v4383
        %v4385 = vrot.slane %v2607, %v4384
        %v4391 = vunpack.c.l.b16 %v2603
        %v4392 = vunpack.c.l.b16 %v2604
        %v4393 = vunpack.c.l.b16 %v2605
        %v4394 = vunpack.c.l.b16 %v2606
        %v4395 = vpack.c.b16 %v4392, %v4391
        %v4396 = vpack.c.b16 %v4394, %v4393
        %v4400 = vsel %vm2696, %v4380, 0
        %4402 = vmatprep.subr.bf16.mxu0 0
        %4403 = vmatpush1.bf16.msra.mxu0 %v4395
        %4404 = vmatprep.subr.bf16.mxu0 0
        %4405 = vmatpush1.bf16.msra.mxu0 %v4396
        %4406 = vmatprep.subr.bf16.mxu0 0
        %4407 = vmatpush1.bf16.msra.mxu0 0
        %4408 = vmatprep.subr.bf16.mxu0 0
        %4409 = vmatpush1.bf16.msra.mxu0 0
        %4410 = vmatprep.subr.bf16.mxu0 0
        %4411 = vmatpush1.bf16.msra.mxu0 0
        %4412 = vmatprep.subr.bf16.mxu0 0
        %4413 = vmatpush1.bf16.msra.mxu0 0
        %4414 = vmatprep.subr.bf16.mxu0 0
        %4415 = vmatpush1.bf16.msra.mxu0 0
        %4416 = vmatprep.subr.bf16.mxu0 0
        %4417 = vmatpush1.bf16.msra.mxu0 0
        %4418 = vmatprep.subr.bf16.mxu0 0
        %4419 = vmatpush1.bf16.msra.mxu0 0
        %4420 = vmatprep.subr.bf16.mxu0 0
        %4421 = vmatpush1.bf16.msra.mxu0 0
        %4422 = vmatprep.subr.bf16.mxu0 0
        %4423 = vmatpush1.bf16.msra.mxu0 0
        %4424 = vmatprep.subr.bf16.mxu0 0
        %4425 = vmatpush1.bf16.msra.mxu0 0
        %4426 = vmatprep.subr.bf16.mxu0 0
        %4427 = vmatpush1.bf16.msra.mxu0 0
        %4428 = vmatprep.subr.bf16.mxu0 0
        %4429 = vmatpush1.bf16.msra.mxu0 0
        %4430 = vmatprep.subr.bf16.mxu0 0
        %4431 = vmatpush1.bf16.msra.mxu0 0
        %4432 = vmatprep.subr.bf16.mxu0 0
        %4433 = vmatpush1.bf16.msra.mxu0 0
        %4434 = vmatprep.mubr.bf16.mxu0 0
        %4435 = vmatmul.mubr.bf16.gmra.mrb[0].mxu0 %v4400
        %v4436 = vpop.f32.mrb[0].mxu0
        %v4437 = vadd.f32 %v4385, %v4436
        %v4438 = vpop.f32.mrb[0].mxu0
        %v4439 = vpop.f32.mrb[0].mxu0
        %v4440 = vadd.f32 %v4385, %v4439
        %v4441 = vpop.f32.mrb[0].mxu0
        %4442 = vdwg.mxu0
        %v4444 = vlaneseq
        %v4445 = vshrl.u32 %v4444, 7
        %v4446 = vsub.s32 0, %v4445
        %v4447 = vrot.slane %v2612, %v4446
        %v4453 = vunpack.c.l.b16 %v2608
        %v4454 = vunpack.c.l.b16 %v2609
        %v4455 = vunpack.c.l.b16 %v2610
        %v4456 = vunpack.c.l.b16 %v2611
        %v4457 = vpack.c.b16 %v4454, %v4453
        %v4458 = vpack.c.b16 %v4456, %v4455
        %4461 = vmatprep.subr.bf16.mxu0 0
        %4462 = vmatpush1.bf16.msra.mxu0 %v4457
        %4463 = vmatprep.subr.bf16.mxu0 0
        %4464 = vmatpush1.bf16.msra.mxu0 %v4458
        %4465 = vmatprep.subr.bf16.mxu0 0
        %4466 = vmatpush1.bf16.msra.mxu0 0
        %4467 = vmatprep.subr.bf16.mxu0 0
        %4468 = vmatpush1.bf16.msra.mxu0 0
        %4469 = vmatprep.subr.bf16.mxu0 0
        %4470 = vmatpush1.bf16.msra.mxu0 0
        %4471 = vmatprep.subr.bf16.mxu0 0
        %4472 = vmatpush1.bf16.msra.mxu0 0
        %4473 = vmatprep.subr.bf16.mxu0 0
        %4474 = vmatpush1.bf16.msra.mxu0 0
        %4475 = vmatprep.subr.bf16.mxu0 0
        %4476 = vmatpush1.bf16.msra.mxu0 0
        %4477 = vmatprep.subr.bf16.mxu0 0
        %4478 = vmatpush1.bf16.msra.mxu0 0
        %4479 = vmatprep.subr.bf16.mxu0 0
        %4480 = vmatpush1.bf16.msra.mxu0 0
        %4481 = vmatprep.subr.bf16.mxu0 0
        %4482 = vmatpush1.bf16.msra.mxu0 0
        %4483 = vmatprep.subr.bf16.mxu0 0
        %4484 = vmatpush1.bf16.msra.mxu0 0
        %4485 = vmatprep.subr.bf16.mxu0 0
        %4486 = vmatpush1.bf16.msra.mxu0 0
        %4487 = vmatprep.subr.bf16.mxu0 0
        %4488 = vmatpush1.bf16.msra.mxu0 0
        %4489 = vmatprep.subr.bf16.mxu0 0
        %4490 = vmatpush1.bf16.msra.mxu0 0
        %4491 = vmatprep.subr.bf16.mxu0 0
        %4492 = vmatpush1.bf16.msra.mxu0 0
        %4493 = vmatprep.mubr.bf16.mxu0 0
        %4494 = vmatmul.mubr.bf16.gmra.mrb[0].mxu0 %v4400
        %v4495 = vpop.f32.mrb[0].mxu0
        %v4496 = vadd.f32 %v4447, %v4495
        %v4497 = vpop.f32.mrb[0].mxu0
        %v4498 = vpop.f32.mrb[0].mxu0
        %v4499 = vadd.f32 %v4447, %v4498
        %v4500 = vpop.f32.mrb[0].mxu0
        %4501 = vdwg.mxu0
        %v4502 = vpack.c.bf16 %v4375, %v4375
        %v4503 = vpack.c.bf16 %v4440, %v4437
        %v4505 = vsel %vm2865, %v4502, 0
        %v4508 = vsel %vm2865, %v4503, 0
        %4510 = vmatprep.subr.bf16.mxu0 0
        %4511 = vmatpush1.bf16.xpose.msra.mxu0 %v4508
        %4512 = vmatprep.subr.bf16.mxu0 0
        %4513 = vmatpush1.bf16.xpose.msra.mxu0 0
        %4514 = vmatprep.subr.bf16.mxu0 0
        %4515 = vmatpush1.bf16.xpose.msra.mxu0 0
        %4516 = vmatprep.subr.bf16.mxu0 0
        %4517 = vmatpush1.bf16.xpose.msra.mxu0 0
        %4518 = vmatprep.subr.bf16.mxu0 0
        %4519 = vmatpush1.bf16.xpose.msra.mxu0 0
        %4520 = vmatprep.subr.bf16.mxu0 0
        %4521 = vmatpush1.bf16.xpose.msra.mxu0 0
        %4522 = vmatprep.subr.bf16.mxu0 0
        %4523 = vmatpush1.bf16.xpose.msra.mxu0 0
        %4524 = vmatprep.subr.bf16.mxu0 0
        %4525 = vmatpush1.bf16.xpose.msra.mxu0 0
        %4526 = vmatprep.subr.bf16.mxu0 0
        %4527 = vmatpush1.bf16.xpose.msra.mxu0 0
        %4528 = vmatprep.subr.bf16.mxu0 0
        %4529 = vmatpush1.bf16.xpose.msra.mxu0 0
        %4530 = vmatprep.subr.bf16.mxu0 0
        %4531 = vmatpush1.bf16.xpose.msra.mxu0 0
        %4532 = vmatprep.subr.bf16.mxu0 0
        %4533 = vmatpush1.bf16.xpose.msra.mxu0 0
        %4534 = vmatprep.subr.bf16.mxu0 0
        %4535 = vmatpush1.bf16.xpose.msra.mxu0 0
        %4536 = vmatprep.subr.bf16.mxu0 0
        %4537 = vmatpush1.bf16.xpose.msra.mxu0 0
        %4538 = vmatprep.subr.bf16.mxu0 0
        %4539 = vmatpush1.bf16.xpose.msra.mxu0 0
        %4540 = vmatprep.subr.bf16.mxu0 0
        %4541 = vmatpush1.bf16.xpose.msra.mxu0 0
        %4542 = vmatprep.mubr.bf16.mxu0 0
        %4543 = vmatmul.mubr.bf16.gmra.mrb[0].mxu0 %v4505
        %v4544 = vpop.f32.mrb[0].mxu0
        %v4545 = vadd.f32 0.0, %v4544
        %v4546 = vpop.f32.mrb[0].mxu0
        %v4547 = vpop.f32.mrb[0].mxu0
        %v4548 = vpop.f32.mrb[0].mxu0
        %4549 = vdwg.mxu0
        %v4550 = vmul.f32 %v4545, 0.17677669
        %v4551 = vsel %vm2920, %v4550, -inf
        %4552 = vmax.xlane.f32.xlu0 %v4551
        %v4553 = vpop.xlane.xlu0 %4552
        %v4554 = vsub.f32 %v4550, %v4553
        %v4555 = vmul.f32 %v4554, 1.442695
        %v4556 = vpow.pop %v4555
        %v4557 = vsel %vm2920, %v4556, 0.0
        %4558 = vadd.xlane.f32.xlu0 %v4557
        %v4559 = vpop.xlane.xlu0 %4558
        %v4560 = vrcp.pop %v4559
        %v4561 = vmul.f32 %v4556, %v4560
        %v4562 = vpack.c.bf16 %v4561, %v4561
        %v4563 = vpack.c.bf16 %v4499, %v4496
        %v4565 = vsel %vm2920, %v4562, 0
        %4567 = vmatprep.subr.bf16.mxu0 0
        %4568 = vmatpush1.bf16.msra.mxu0 %v4563
        %4569 = vmatprep.subr.bf16.mxu0 0
        %4570 = vmatpush1.bf16.msra.mxu0 0
        %4571 = vmatprep.subr.bf16.mxu0 0
        %4572 = vmatpush1.bf16.msra.mxu0 0
        %4573 = vmatprep.subr.bf16.mxu0 0
        %4574 = vmatpush1.bf16.msra.mxu0 0
        %4575 = vmatprep.subr.bf16.mxu0 0
        %4576 = vmatpush1.bf16.msra.mxu0 0
        %4577 = vmatprep.subr.bf16.mxu0 0
        %4578 = vmatpush1.bf16.msra.mxu0 0
        %4579 = vmatprep.subr.bf16.mxu0 0
        %4580 = vmatpush1.bf16.msra.mxu0 0
        %4581 = vmatprep.subr.bf16.mxu0 0
        %4582 = vmatpush1.bf16.msra.mxu0 0
        %4583 = vmatprep.subr.bf16.mxu0 0
        %4584 = vmatpush1.bf16.msra.mxu0 0
        %4585 = vmatprep.subr.bf16.mxu0 0
        %4586 = vmatpush1.bf16.msra.mxu0 0
        %4587 = vmatprep.subr.bf16.mxu0 0
        %4588 = vmatpush1.bf16.msra.mxu0 0
        %4589 = vmatprep.subr.bf16.mxu0 0
        %4590 = vmatpush1.bf16.msra.mxu0 0
        %4591 = vmatprep.subr.bf16.mxu0 0
        %4592 = vmatpush1.bf16.msra.mxu0 0
        %4593 = vmatprep.subr.bf16.mxu0 0
        %4594 = vmatpush1.bf16.msra.mxu0 0
        %4595 = vmatprep.subr.bf16.mxu0 0
        %4596 = vmatpush1.bf16.msra.mxu0 0
        %4597 = vmatprep.subr.bf16.mxu0 0
        %4598 = vmatpush1.bf16.msra.mxu0 0
        %4599 = vmatprep.mubr.bf16.mxu0 0
        %4600 = vmatmul.mubr.bf16.gmra.mrb[0].mxu0 %v4565
        %v4601 = vpop.f32.mrb[0].mxu0
        %v4602 = vadd.f32 0.0, %v4601
        %v4603 = vpop.f32.mrb[0].mxu0
        %v4604 = vpop.f32.mrb[0].mxu0
        %v4605 = vpop.f32.mrb[0].mxu0
        %4606 = vdwg.mxu0
        %v4607 = vadd.f32 %v4375, %v4602
        %4609 = vrot.lane.b32.xlu0 %v4502, 120
        %v4610 = vpop.permute.xlu0 %4609
        %4612 = vrot.lane.b32.xlu0 %v4503, 120
        %v4613 = vpop.permute.xlu0 %4612
        %v4615 = vsel %vm2865, %v4610, 0
        %v4618 = vsel %vm2865, %v4613, 0
        %4620 = vmatprep.subr.bf16.mxu0 0
        %4621 = vmatpush1.bf16.xpose.msra.mxu0 %v4618
        %4622 = vmatprep.subr.bf16.mxu0 0
        %4623 = vmatpush1.bf16.xpose.msra.mxu0 0
        %4624 = vmatprep.subr.bf16.mxu0 0
        %4625 = vmatpush1.bf16.xpose.msra.mxu0 0
        %4626 = vmatprep.subr.bf16.mxu0 0
        %4627 = vmatpush1.bf16.xpose.msra.mxu0 0
        %4628 = vmatprep.subr.bf16.mxu0 0
        %4629 = vmatpush1.bf16.xpose.msra.mxu0 0
        %4630 = vmatprep.subr.bf16.mxu0 0
        %4631 = vmatpush1.bf16.xpose.msra.mxu0 0
        %4632 = vmatprep.subr.bf16.mxu0 0
        %4633 = vmatpush1.bf16.xpose.msra.mxu0 0
        %4634 = vmatprep.subr.bf16.mxu0 0
        %4635 = vmatpush1.bf16.xpose.msra.mxu0 0
        %4636 = vmatprep.subr.bf16.mxu0 0
        %4637 = vmatpush1.bf16.xpose.msra.mxu0 0
        %4638 = vmatprep.subr.bf16.mxu0 0
        %4639 = vmatpush1.bf16.xpose.msra.mxu0 0
        %4640 = vmatprep.subr.bf16.mxu0 0
        %4641 = vmatpush1.bf16.xpose.msra.mxu0 0
        %4642 = vmatprep.subr.bf16.mxu0 0
        %4643 = vmatpush1.bf16.xpose.msra.mxu0 0
        %4644 = vmatprep.subr.bf16.mxu0 0
        %4645 = vmatpush1.bf16.xpose.msra.mxu0 0
        %4646 = vmatprep.subr.bf16.mxu0 0
        %4647 = vmatpush1.bf16.xpose.msra.mxu0 0
        %4648 = vmatprep.subr.bf16.mxu0 0
        %4649 = vmatpush1.bf16.xpose.msra.mxu0 0
        %4650 = vmatprep.subr.bf16.mxu0 0
        %4651 = vmatpush1.bf16.xpose.msra.mxu0 0
        %4652 = vmatprep.mubr.bf16.mxu0 0
        %4653 = vmatmul.mubr.bf16.gmra.mrb[0].mxu0 %v4615
        %v4654 = vpop.f32.mrb[0].mxu0
        %v4655 = vadd.f32 0.0, %v4654
        %v4656 = vpop.f32.mrb[0].mxu0
        %v4657 = vpop.f32.mrb[0].mxu0
        %v4658 = vpop.f32.mrb[0].mxu0
        %4659 = vdwg.mxu0
        %v4660 = vmul.f32 %v4655, 0.17677669
        %v4661 = vsel %vm2920, %v4660, -inf
        %4662 = vmax.xlane.f32.xlu0 %v4661
        %v4663 = vpop.xlane.xlu0 %4662
        %v4664 = vsub.f32 %v4660, %v4663
        %v4665 = vmul.f32 %v4664, 1.442695
        %v4666 = vpow.pop %v4665
        %v4667 = vsel %vm2920, %v4666, 0.0
        %4668 = vadd.xlane.f32.xlu0 %v4667
        %v4669 = vpop.xlane.xlu0 %4668
        %v4670 = vrcp.pop %v4669
        %v4671 = vmul.f32 %v4666, %v4670
        %v4672 = vpack.c.bf16 %v4671, %v4671
        %4674 = vrot.lane.b32.xlu0 %v4563, 120
        %v4675 = vpop.permute.xlu0 %4674
        %v4678 = vsel %vm2920, %v4672, 0
        %4680 = vmatprep.subr.bf16.mxu0 0
        %4681 = vmatpush1.bf16.msra.mxu0 %v4675
        %4682 = vmatprep.subr.bf16.mxu0 0
        %4683 = vmatpush1.bf16.msra.mxu0 0
        %4684 = vmatprep.subr.bf16.mxu0 0
        %4685 = vmatpush1.bf16.msra.mxu0 0
        %4686 = vmatprep.subr.bf16.mxu0 0
        %4687 = vmatpush1.bf16.msra.mxu0 0
        %4688 = vmatprep.subr.bf16.mxu0 0
        %4689 = vmatpush1.bf16.msra.mxu0 0
        %4690 = vmatprep.subr.bf16.mxu0 0
        %4691 = vmatpush1.bf16.msra.mxu0 0
        %4692 = vmatprep.subr.bf16.mxu0 0
        %4693 = vmatpush1.bf16.msra.mxu0 0
        %4694 = vmatprep.subr.bf16.mxu0 0
        %4695 = vmatpush1.bf16.msra.mxu0 0
        %4696 = vmatprep.subr.bf16.mxu0 0
        %4697 = vmatpush1.bf16.msra.mxu0 0
        %4698 = vmatprep.subr.bf16.mxu0 0
        %4699 = vmatpush1.bf16.msra.mxu0 0
        %4700 = vmatprep.subr.bf16.mxu0 0
        %4701 = vmatpush1.bf16.msra.mxu0 0
        %4702 = vmatprep.subr.bf16.mxu0 0
        %4703 = vmatpush1.bf16.msra.mxu0 0
        %4704 = vmatprep.subr.bf16.mxu0 0
        %4705 = vmatpush1.bf16.msra.mxu0 0
        %4706 = vmatprep.subr.bf16.mxu0 0
        %4707 = vmatpush1.bf16.msra.mxu0 0
        %4708 = vmatprep.subr.bf16.mxu0 0
        %4709 = vmatpush1.bf16.msra.mxu0 0
        %4710 = vmatprep.subr.bf16.mxu0 0
        %4711 = vmatpush1.bf16.msra.mxu0 0
        %4712 = vmatprep.mubr.bf16.mxu0 0
        %4713 = vmatmul.mubr.bf16.gmra.mrb[0].mxu0 %v4678
        %v4714 = vpop.f32.mrb[0].mxu0
        %v4715 = vadd.f32 0.0, %v4714
        %v4716 = vpop.f32.mrb[0].mxu0
        %v4717 = vpop.f32.mrb[0].mxu0
        %v4718 = vpop.f32.mrb[0].mxu0
        %4719 = vdwg.mxu0
        %4721 = vrot.lane.b32.xlu0 %v4715, 8
        %v4722 = vpop.permute.xlu0 %4721
        %v4724 = vadd.f32 %v4375, %v4722
        %4725 = vrot.lane.b32.xlu0 %v4502, 112
        %v4726 = vpop.permute.xlu0 %4725
        %4727 = vrot.lane.b32.xlu0 %v4503, 112
        %v4728 = vpop.permute.xlu0 %4727
        %v4730 = vsel %vm2865, %v4726, 0
        %v4733 = vsel %vm2865, %v4728, 0
        %4735 = vmatprep.subr.bf16.mxu0 0
        %4736 = vmatpush1.bf16.xpose.msra.mxu0 %v4733
        %4737 = vmatprep.subr.bf16.mxu0 0
        %4738 = vmatpush1.bf16.xpose.msra.mxu0 0
        %4739 = vmatprep.subr.bf16.mxu0 0
        %4740 = vmatpush1.bf16.xpose.msra.mxu0 0
        %4741 = vmatprep.subr.bf16.mxu0 0
        %4742 = vmatpush1.bf16.xpose.msra.mxu0 0
        %4743 = vmatprep.subr.bf16.mxu0 0
        %4744 = vmatpush1.bf16.xpose.msra.mxu0 0
        %4745 = vmatprep.subr.bf16.mxu0 0
        %4746 = vmatpush1.bf16.xpose.msra.mxu0 0
        %4747 = vmatprep.subr.bf16.mxu0 0
        %4748 = vmatpush1.bf16.xpose.msra.mxu0 0
        %4749 = vmatprep.subr.bf16.mxu0 0
        %4750 = vmatpush1.bf16.xpose.msra.mxu0 0
        %4751 = vmatprep.subr.bf16.mxu0 0
        %4752 = vmatpush1.bf16.xpose.msra.mxu0 0
        %4753 = vmatprep.subr.bf16.mxu0 0
        %4754 = vmatpush1.bf16.xpose.msra.mxu0 0
        %4755 = vmatprep.subr.bf16.mxu0 0
        %4756 = vmatpush1.bf16.xpose.msra.mxu0 0
        %4757 = vmatprep.subr.bf16.mxu0 0
        %4758 = vmatpush1.bf16.xpose.msra.mxu0 0
        %4759 = vmatprep.subr.bf16.mxu0 0
        %4760 = vmatpush1.bf16.xpose.msra.mxu0 0
        %4761 = vmatprep.subr.bf16.mxu0 0
        %4762 = vmatpush1.bf16.xpose.msra.mxu0 0
        %4763 = vmatprep.subr.bf16.mxu0 0
        %4764 = vmatpush1.bf16.xpose.msra.mxu0 0
        %4765 = vmatprep.subr.bf16.mxu0 0
        %4766 = vmatpush1.bf16.xpose.msra.mxu0 0
        %4767 = vmatprep.mubr.bf16.mxu0 0
        %4768 = vmatmul.mubr.bf16.gmra.mrb[0].mxu0 %v4730
        %v4769 = vpop.f32.mrb[0].mxu0
        %v4770 = vadd.f32 0.0, %v4769
        %v4771 = vpop.f32.mrb[0].mxu0
        %v4772 = vpop.f32.mrb[0].mxu0
        %v4773 = vpop.f32.mrb[0].mxu0
        %4774 = vdwg.mxu0
        %v4775 = vmul.f32 %v4770, 0.17677669
        %v4776 = vsel %vm2920, %v4775, -inf
        %4777 = vmax.xlane.f32.xlu0 %v4776
        %v4778 = vpop.xlane.xlu0 %4777
        %v4779 = vsub.f32 %v4775, %v4778
        %v4780 = vmul.f32 %v4779, 1.442695
        %v4781 = vpow.pop %v4780
        %v4782 = vsel %vm2920, %v4781, 0.0
        %4783 = vadd.xlane.f32.xlu0 %v4782
        %v4784 = vpop.xlane.xlu0 %4783
        %v4785 = vrcp.pop %v4784
        %v4786 = vmul.f32 %v4781, %v4785
        %v4787 = vpack.c.bf16 %v4786, %v4786
        %4788 = vrot.lane.b32.xlu0 %v4563, 112
        %v4789 = vpop.permute.xlu0 %4788
        %v4792 = vsel %vm2920, %v4787, 0
        %4794 = vmatprep.subr.bf16.mxu0 0
        %4795 = vmatpush1.bf16.msra.mxu0 %v4789
        %4796 = vmatprep.subr.bf16.mxu0 0
        %4797 = vmatpush1.bf16.msra.mxu0 0
        %4798 = vmatprep.subr.bf16.mxu0 0
        %4799 = vmatpush1.bf16.msra.mxu0 0
        %4800 = vmatprep.subr.bf16.mxu0 0
        %4801 = vmatpush1.bf16.msra.mxu0 0
        %4802 = vmatprep.subr.bf16.mxu0 0
        %4803 = vmatpush1.bf16.msra.mxu0 0
        %4804 = vmatprep.subr.bf16.mxu0 0
        %4805 = vmatpush1.bf16.msra.mxu0 0
        %4806 = vmatprep.subr.bf16.mxu0 0
        %4807 = vmatpush1.bf16.msra.mxu0 0
        %4808 = vmatprep.subr.bf16.mxu0 0
        %4809 = vmatpush1.bf16.msra.mxu0 0
        %4810 = vmatprep.subr.bf16.mxu0 0
        %4811 = vmatpush1.bf16.msra.mxu0 0
        %4812 = vmatprep.subr.bf16.mxu0 0
        %4813 = vmatpush1.bf16.msra.mxu0 0
        %4814 = vmatprep.subr.bf16.mxu0 0
        %4815 = vmatpush1.bf16.msra.mxu0 0
        %4816 = vmatprep.subr.bf16.mxu0 0
        %4817 = vmatpush1.bf16.msra.mxu0 0
        %4818 = vmatprep.subr.bf16.mxu0 0
        %4819 = vmatpush1.bf16.msra.mxu0 0
        %4820 = vmatprep.subr.bf16.mxu0 0
        %4821 = vmatpush1.bf16.msra.mxu0 0
        %4822 = vmatprep.subr.bf16.mxu0 0
        %4823 = vmatpush1.bf16.msra.mxu0 0
        %4824 = vmatprep.subr.bf16.mxu0 0
        %4825 = vmatpush1.bf16.msra.mxu0 0
        %4826 = vmatprep.mubr.bf16.mxu0 0
        %4827 = vmatmul.mubr.bf16.gmra.mrb[0].mxu0 %v4792
        %v4828 = vpop.f32.mrb[0].mxu0
        %v4829 = vadd.f32 0.0, %v4828
        %v4830 = vpop.f32.mrb[0].mxu0
        %v4831 = vpop.f32.mrb[0].mxu0
        %v4832 = vpop.f32.mrb[0].mxu0
        %4833 = vdwg.mxu0
        %4835 = vrot.lane.b32.xlu0 %v4829, 16
        %v4836 = vpop.permute.xlu0 %4835
        %v4838 = vadd.f32 %v4375, %v4836
        %4839 = vrot.lane.b32.xlu0 %v4502, 104
        %v4840 = vpop.permute.xlu0 %4839
        %4841 = vrot.lane.b32.xlu0 %v4503, 104
        %v4842 = vpop.permute.xlu0 %4841
        %v4844 = vsel %vm2865, %v4840, 0
        %v4847 = vsel %vm2865, %v4842, 0
        %4849 = vmatprep.subr.bf16.mxu0 0
        %4850 = vmatpush1.bf16.xpose.msra.mxu0 %v4847
        %4851 = vmatprep.subr.bf16.mxu0 0
        %4852 = vmatpush1.bf16.xpose.msra.mxu0 0
        %4853 = vmatprep.subr.bf16.mxu0 0
        %4854 = vmatpush1.bf16.xpose.msra.mxu0 0
        %4855 = vmatprep.subr.bf16.mxu0 0
        %4856 = vmatpush1.bf16.xpose.msra.mxu0 0
        %4857 = vmatprep.subr.bf16.mxu0 0
        %4858 = vmatpush1.bf16.xpose.msra.mxu0 0
        %4859 = vmatprep.subr.bf16.mxu0 0
        %4860 = vmatpush1.bf16.xpose.msra.mxu0 0
        %4861 = vmatprep.subr.bf16.mxu0 0
        %4862 = vmatpush1.bf16.xpose.msra.mxu0 0
        %4863 = vmatprep.subr.bf16.mxu0 0
        %4864 = vmatpush1.bf16.xpose.msra.mxu0 0
        %4865 = vmatprep.subr.bf16.mxu0 0
        %4866 = vmatpush1.bf16.xpose.msra.mxu0 0
        %4867 = vmatprep.subr.bf16.mxu0 0
        %4868 = vmatpush1.bf16.xpose.msra.mxu0 0
        %4869 = vmatprep.subr.bf16.mxu0 0
        %4870 = vmatpush1.bf16.xpose.msra.mxu0 0
        %4871 = vmatprep.subr.bf16.mxu0 0
        %4872 = vmatpush1.bf16.xpose.msra.mxu0 0
        %4873 = vmatprep.subr.bf16.mxu0 0
        %4874 = vmatpush1.bf16.xpose.msra.mxu0 0
        %4875 = vmatprep.subr.bf16.mxu0 0
        %4876 = vmatpush1.bf16.xpose.msra.mxu0 0
        %4877 = vmatprep.subr.bf16.mxu0 0
        %4878 = vmatpush1.bf16.xpose.msra.mxu0 0
        %4879 = vmatprep.subr.bf16.mxu0 0
        %4880 = vmatpush1.bf16.xpose.msra.mxu0 0
        %4881 = vmatprep.mubr.bf16.mxu0 0
        %4882 = vmatmul.mubr.bf16.gmra.mrb[0].mxu0 %v4844
        %v4883 = vpop.f32.mrb[0].mxu0
        %v4884 = vadd.f32 0.0, %v4883
        %v4885 = vpop.f32.mrb[0].mxu0
        %v4886 = vpop.f32.mrb[0].mxu0
        %v4887 = vpop.f32.mrb[0].mxu0
        %4888 = vdwg.mxu0
        %v4889 = vmul.f32 %v4884, 0.17677669
        %v4890 = vsel %vm2920, %v4889, -inf
        %4891 = vmax.xlane.f32.xlu0 %v4890
        %v4892 = vpop.xlane.xlu0 %4891
        %v4893 = vsub.f32 %v4889, %v4892
        %v4894 = vmul.f32 %v4893, 1.442695
        %v4895 = vpow.pop %v4894
        %v4896 = vsel %vm2920, %v4895, 0.0
        %4897 = vadd.xlane.f32.xlu0 %v4896
        %v4898 = vpop.xlane.xlu0 %4897
        %v4899 = vrcp.pop %v4898
        %v4900 = vmul.f32 %v4895, %v4899
        %v4901 = vpack.c.bf16 %v4900, %v4900
        %4902 = vrot.lane.b32.xlu0 %v4563, 104
        %v4903 = vpop.permute.xlu0 %4902
        %v4906 = vsel %vm2920, %v4901, 0
        %4908 = vmatprep.subr.bf16.mxu0 0
        %4909 = vmatpush1.bf16.msra.mxu0 %v4903
        %4910 = vmatprep.subr.bf16.mxu0 0
        %4911 = vmatpush1.bf16.msra.mxu0 0
        %4912 = vmatprep.subr.bf16.mxu0 0
        %4913 = vmatpush1.bf16.msra.mxu0 0
        %4914 = vmatprep.subr.bf16.mxu0 0
        %4915 = vmatpush1.bf16.msra.mxu0 0
        %4916 = vmatprep.subr.bf16.mxu0 0
        %4917 = vmatpush1.bf16.msra.mxu0 0
        %4918 = vmatprep.subr.bf16.mxu0 0
        %4919 = vmatpush1.bf16.msra.mxu0 0
        %4920 = vmatprep.subr.bf16.mxu0 0
        %4921 = vmatpush1.bf16.msra.mxu0 0
        %4922 = vmatprep.subr.bf16.mxu0 0
        %4923 = vmatpush1.bf16.msra.mxu0 0
        %4924 = vmatprep.subr.bf16.mxu0 0
        %4925 = vmatpush1.bf16.msra.mxu0 0
        %4926 = vmatprep.subr.bf16.mxu0 0
        %4927 = vmatpush1.bf16.msra.mxu0 0
        %4928 = vmatprep.subr.bf16.mxu0 0
        %4929 = vmatpush1.bf16.msra.mxu0 0
        %4930 = vmatprep.subr.bf16.mxu0 0
        %4931 = vmatpush1.bf16.msra.mxu0 0
        %4932 = vmatprep.subr.bf16.mxu0 0
        %4933 = vmatpush1.bf16.msra.mxu0 0
        %4934 = vmatprep.subr.bf16.mxu0 0
        %4935 = vmatpush1.bf16.msra.mxu0 0
        %4936 = vmatprep.subr.bf16.mxu0 0
        %4937 = vmatpush1.bf16.msra.mxu0 0
        %4938 = vmatprep.subr.bf16.mxu0 0
        %4939 = vmatpush1.bf16.msra.mxu0 0
        %4940 = vmatprep.mubr.bf16.mxu0 0
        %4941 = vmatmul.mubr.bf16.gmra.mrb[0].mxu0 %v4906
        %v4942 = vpop.f32.mrb[0].mxu0
        %v4943 = vadd.f32 0.0, %v4942
        %v4944 = vpop.f32.mrb[0].mxu0
        %v4945 = vpop.f32.mrb[0].mxu0
        %v4946 = vpop.f32.mrb[0].mxu0
        %4947 = vdwg.mxu0
        %4949 = vrot.lane.b32.xlu0 %v4943, 24
        %v4950 = vpop.permute.xlu0 %4949
        %v4952 = vadd.f32 %v4375, %v4950
        %v4953 = vsel %vm2865, %v4607, %v4724
        %v4954 = vsel %vm2920, %v4953, %v4838
        %v4955 = vsel %vm3328, %v4954, %v4952
        %v4956 = vsel %vm2696, %v4955, 0.0
        %4957 = vadd.xlane.f32.xlu0 %v4956
        %v4958 = vpop.xlane.xlu0 %4957
        %v4959 = vmul.f32 %v4958, %v3333
        %v4960 = vsub.f32 %v4955, %v4959
        %v4961 = vmul.f32 %v4960, %v4960
        %v4962 = vsel %vm2696, %v4961, 0.0
        %4963 = vadd.xlane.f32.xlu0 %v4962
        %v4964 = vpop.xlane.xlu0 %4963
        %v4965 = vmul.f32 %v4964, %v3333
        %v4966 = vadd.f32 %v4965, 1e-05
        %v4967 = vrsqrt.pop %v4966
        %v4968 = vmul.f32 %v4960, %v4967
        %v4970 = vlaneseq
        %v4971 = vshrl.u32 %v4970, 7
        %v4972 = vsub.s32 0, %v4971
        %v4973 = vrot.slane %v2618, %v4972
        %v4975 = vmul.f32 %v4968, %v4973
        %v4977 = vlaneseq
        %v4978 = vshrl.u32 %v4977, 7
        %v4979 = vsub.s32 0, %v4978
        %v4980 = vrot.slane %v2619, %v4979
        %v4982 = vadd.f32 %v4975, %v4980
        %v4983 = vpack.c.bf16 %v4982, %v4982
        %v4985 = vlaneseq
        %v4986 = vshrl.u32 %v4985, 7
        %v4987 = vsub.s32 0, %v4986
        %v4988 = vrot.slane %v2617, %v4987
        %v4994 = vunpack.c.l.b16 %v2613
        %v4995 = vunpack.c.l.b16 %v2614
        %v4996 = vunpack.c.l.b16 %v2615
        %v4997 = vunpack.c.l.b16 %v2616
        %v4998 = vpack.c.b16 %v4995, %v4994
        %v4999 = vpack.c.b16 %v4997, %v4996
        %v5003 = vsel %vm2696, %v4983, 0
        %5005 = vmatprep.subr.bf16.mxu0 0
        %5006 = vmatpush1.bf16.msra.mxu0 %v4998
        %5007 = vmatprep.subr.bf16.mxu0 0
        %5008 = vmatpush1.bf16.msra.mxu0 %v4999
        %5009 = vmatprep.subr.bf16.mxu0 0
        %5010 = vmatpush1.bf16.msra.mxu0 0
        %5011 = vmatprep.subr.bf16.mxu0 0
        %5012 = vmatpush1.bf16.msra.mxu0 0
        %5013 = vmatprep.subr.bf16.mxu0 0
        %5014 = vmatpush1.bf16.msra.mxu0 0
        %5015 = vmatprep.subr.bf16.mxu0 0
        %5016 = vmatpush1.bf16.msra.mxu0 0
        %5017 = vmatprep.subr.bf16.mxu0 0
        %5018 = vmatpush1.bf16.msra.mxu0 0
        %5019 = vmatprep.subr.bf16.mxu0 0
        %5020 = vmatpush1.bf16.msra.mxu0 0
        %5021 = vmatprep.subr.bf16.mxu0 0
        %5022 = vmatpush1.bf16.msra.mxu0 0
        %5023 = vmatprep.subr.bf16.mxu0 0
        %5024 = vmatpush1.bf16.msra.mxu0 0
        %5025 = vmatprep.subr.bf16.mxu0 0
        %5026 = vmatpush1.bf16.msra.mxu0 0
        %5027 = vmatprep.subr.bf16.mxu0 0
        %5028 = vmatpush1.bf16.msra.mxu0 0
        %5029 = vmatprep.subr.bf16.mxu0 0
        %5030 = vmatpush1.bf16.msra.mxu0 0
        %5031 = vmatprep.subr.bf16.mxu0 0
        %5032 = vmatpush1.bf16.msra.mxu0 0
        %5033 = vmatprep.subr.bf16.mxu0 0
        %5034 = vmatpush1.bf16.msra.mxu0 0
        %5035 = vmatprep.subr.bf16.mxu0 0
        %5036 = vmatpush1.bf16.msra.mxu0 0
        %5037 = vmatprep.mubr.bf16.mxu0 0
        %5038 = vmatmul.mubr.bf16.gmra.mrb[0].mxu0 %v5003
        %v5039 = vpop.f32.mrb[0].mxu0
        %v5040 = vadd.f32 %v4988, %v5039
        %v5041 = vpop.f32.mrb[0].mxu0
        %v5042 = vpop.f32.mrb[0].mxu0
        %v5043 = vpop.f32.mrb[0].mxu0
        %5044 = vdwg.mxu0
        %v5045 = vmax.f32 %v5040, 0.0
        %v5046 = vadd.f32 %v4982, %v5045
        %v5047 = vsel %vm2696, %v5046, 0.0
        %5048 = vadd.xlane.f32.xlu0 %v5047
        %v5049 = vpop.xlane.xlu0 %5048
        %v5050 = vmul.f32 %v5049, %v3333
        %v5051 = vsub.f32 %v5046, %v5050
        %v5052 = vmul.f32 %v5051, %v5051
        %v5053 = vsel %vm2696, %v5052, 0.0
        %5054 = vadd.xlane.f32.xlu0 %v5053
        %v5055 = vpop.xlane.xlu0 %5054
        %v5056 = vmul.f32 %v5055, %v3333
        %v5057 = vadd.f32 %v5056, 1e-05
        %v5058 = vrsqrt.pop %v5057
        %v5059 = vmul.f32 %v5051, %v5058
        %v5061 = vlaneseq
        %v5062 = vshrl.u32 %v5061, 7
        %v5063 = vsub.s32 0, %v5062
        %v5064 = vrot.slane %v2620, %v5063
        %v5066 = vmul.f32 %v5059, %v5064
        %v5068 = vlaneseq
        %v5069 = vshrl.u32 %v5068, 7
        %v5070 = vsub.s32 0, %v5069
        %v5071 = vrot.slane %v2621, %v5070
        %v5073 = vadd.f32 %v5066, %v5071
        %v5074 = vpack.c.bf16 %v2623, %v2622
        %v5076 = vlaneseq
        %v5077 = vshrl.u32 %v5076, 7
        %v5078 = vsub.s32 0, %v5077
        %v5079 = vrot.slane %v2628, %v5078
        %v5085 = vunpack.c.l.b16 %v2624
        %v5086 = vunpack.c.l.b16 %v2625
        %v5087 = vunpack.c.l.b16 %v2626
        %v5088 = vunpack.c.l.b16 %v2627
        %v5089 = vpack.c.b16 %v5086, %v5085
        %v5090 = vpack.c.b16 %v5088, %v5087
        %v5094 = vsel %vm2696, %v5074, 0
        %5096 = vmatprep.subr.bf16.mxu0 0
        %5097 = vmatpush1.bf16.msra.mxu0 %v5089
        %5098 = vmatprep.subr.bf16.mxu0 0
        %5099 = vmatpush1.bf16.msra.mxu0 %v5090
        %5100 = vmatprep.subr.bf16.mxu0 0
        %5101 = vmatpush1.bf16.msra.mxu0 0
        %5102 = vmatprep.subr.bf16.mxu0 0
        %5103 = vmatpush1.bf16.msra.mxu0 0
        %5104 = vmatprep.subr.bf16.mxu0 0
        %5105 = vmatpush1.bf16.msra.mxu0 0
        %5106 = vmatprep.subr.bf16.mxu0 0
        %5107 = vmatpush1.bf16.msra.mxu0 0
        %5108 = vmatprep.subr.bf16.mxu0 0
        %5109 = vmatpush1.bf16.msra.mxu0 0
        %5110 = vmatprep.subr.bf16.mxu0 0
        %5111 = vmatpush1.bf16.msra.mxu0 0
        %5112 = vmatprep.subr.bf16.mxu0 0
        %5113 = vmatpush1.bf16.msra.mxu0 0
        %5114 = vmatprep.subr.bf16.mxu0 0
        %5115 = vmatpush1.bf16.msra.mxu0 0
        %5116 = vmatprep.subr.bf16.mxu0 0
        %5117 = vmatpush1.bf16.msra.mxu0 0
        %5118 = vmatprep.subr.bf16.mxu0 0
        %5119 = vmatpush1.bf16.msra.mxu0 0
        %5120 = vmatprep.subr.bf16.mxu0 0
        %5121 = vmatpush1.bf16.msra.mxu0 0
        %5122 = vmatprep.subr.bf16.mxu0 0
        %5123 = vmatpush1.bf16.msra.mxu0 0
        %5124 = vmatprep.subr.bf16.mxu0 0
        %5125 = vmatpush1.bf16.msra.mxu0 0
        %5126 = vmatprep.subr.bf16.mxu0 0
        %5127 = vmatpush1.bf16.msra.mxu0 0
        %5128 = vmatprep.mubr.bf16.mxu0 0
        %5129 = vmatmul.mubr.bf16.gmra.mrb[0].mxu0 %v5094
        %v5130 = vpop.f32.mrb[0].mxu0
        %v5131 = vadd.f32 %v5079, %v5130
        %v5132 = vpop.f32.mrb[0].mxu0
        %v5133 = vpop.f32.mrb[0].mxu0
        %v5134 = vadd.f32 %v5079, %v5133
        %v5135 = vpop.f32.mrb[0].mxu0
        %5136 = vdwg.mxu0
        %v5137 = vpack.c.bf16 %v5073, %v5073
        %v5139 = vlaneseq
        %v5140 = vshrl.u32 %v5139, 7
        %v5141 = vsub.s32 0, %v5140
        %v5142 = vrot.slane %v2633, %v5141
        %v5148 = vunpack.c.l.b16 %v2629
        %v5149 = vunpack.c.l.b16 %v2630
        %v5150 = vunpack.c.l.b16 %v2631
        %v5151 = vunpack.c.l.b16 %v2632
        %v5152 = vpack.c.b16 %v5149, %v5148
        %v5153 = vpack.c.b16 %v5151, %v5150
        %v5157 = vsel %vm2696, %v5137, 0
        %5159 = vmatprep.subr.bf16.mxu0 0
        %5160 = vmatpush1.bf16.msra.mxu0 %v5152
        %5161 = vmatprep.subr.bf16.mxu0 0
        %5162 = vmatpush1.bf16.msra.mxu0 %v5153
        %5163 = vmatprep.subr.bf16.mxu0 0
        %5164 = vmatpush1.bf16.msra.mxu0 0
        %5165 = vmatprep.subr.bf16.mxu0 0
        %5166 = vmatpush1.bf16.msra.mxu0 0
        %5167 = vmatprep.subr.bf16.mxu0 0
        %5168 = vmatpush1.bf16.msra.mxu0 0
        %5169 = vmatprep.subr.bf16.mxu0 0
        %5170 = vmatpush1.bf16.msra.mxu0 0
        %5171 = vmatprep.subr.bf16.mxu0 0
        %5172 = vmatpush1.bf16.msra.mxu0 0
        %5173 = vmatprep.subr.bf16.mxu0 0
        %5174 = vmatpush1.bf16.msra.mxu0 0
        %5175 = vmatprep.subr.bf16.mxu0 0
        %5176 = vmatpush1.bf16.msra.mxu0 0
        %5177 = vmatprep.subr.bf16.mxu0 0
        %5178 = vmatpush1.bf16.msra.mxu0 0
        %5179 = vmatprep.subr.bf16.mxu0 0
        %5180 = vmatpush1.bf16.msra.mxu0 0
        %5181 = vmatprep.subr.bf16.mxu0 0
        %5182 = vmatpush1.bf16.msra.mxu0 0
        %5183 = vmatprep.subr.bf16.mxu0 0
        %5184 = vmatpush1.bf16.msra.mxu0 0
        %5185 = vmatprep.subr.bf16.mxu0 0
        %5186 = vmatpush1.bf16.msra.mxu0 0
        %5187 = vmatprep.subr.bf16.mxu0 0
        %5188 = vmatpush1.bf16.msra.mxu0 0
        %5189 = vmatprep.subr.bf16.mxu0 0
        %5190 = vmatpush1.bf16.msra.mxu0 0
        %5191 = vmatprep.mubr.bf16.mxu0 0
        %5192 = vmatmul.mubr.bf16.gmra.mrb[0].mxu0 %v5157
        %v5193 = vpop.f32.mrb[0].mxu0
        %v5194 = vadd.f32 %v5142, %v5193
        %v5195 = vpop.f32.mrb[0].mxu0
        %v5196 = vpop.f32.mrb[0].mxu0
        %v5197 = vpop.f32.mrb[0].mxu0
        %5198 = vdwg.mxu0
        %v5200 = vlaneseq
        %v5201 = vshrl.u32 %v5200, 7
        %v5202 = vsub.s32 0, %v5201
        %v5203 = vrot.slane %v2638, %v5202
        %v5209 = vunpack.c.l.b16 %v2634
        %v5210 = vunpack.c.l.b16 %v2635
        %v5211 = vunpack.c.l.b16 %v2636
        %v5212 = vunpack.c.l.b16 %v2637
        %v5213 = vpack.c.b16 %v5210, %v5209
        %v5214 = vpack.c.b16 %v5212, %v5211
        %5217 = vmatprep.subr.bf16.mxu0 0
        %5218 = vmatpush1.bf16.msra.mxu0 %v5213
        %5219 = vmatprep.subr.bf16.mxu0 0
        %5220 = vmatpush1.bf16.msra.mxu0 %v5214
        %5221 = vmatprep.subr.bf16.mxu0 0
        %5222 = vmatpush1.bf16.msra.mxu0 0
        %5223 = vmatprep.subr.bf16.mxu0 0
        %5224 = vmatpush1.bf16.msra.mxu0 0
        %5225 = vmatprep.subr.bf16.mxu0 0
        %5226 = vmatpush1.bf16.msra.mxu0 0
        %5227 = vmatprep.subr.bf16.mxu0 0
        %5228 = vmatpush1.bf16.msra.mxu0 0
        %5229 = vmatprep.subr.bf16.mxu0 0
        %5230 = vmatpush1.bf16.msra.mxu0 0
        %5231 = vmatprep.subr.bf16.mxu0 0
        %5232 = vmatpush1.bf16.msra.mxu0 0
        %5233 = vmatprep.subr.bf16.mxu0 0
        %5234 = vmatpush1.bf16.msra.mxu0 0
        %5235 = vmatprep.subr.bf16.mxu0 0
        %5236 = vmatpush1.bf16.msra.mxu0 0
        %5237 = vmatprep.subr.bf16.mxu0 0
        %5238 = vmatpush1.bf16.msra.mxu0 0
        %5239 = vmatprep.subr.bf16.mxu0 0
        %5240 = vmatpush1.bf16.msra.mxu0 0
        %5241 = vmatprep.subr.bf16.mxu0 0
        %5242 = vmatpush1.bf16.msra.mxu0 0
        %5243 = vmatprep.subr.bf16.mxu0 0
        %5244 = vmatpush1.bf16.msra.mxu0 0
        %5245 = vmatprep.subr.bf16.mxu0 0
        %5246 = vmatpush1.bf16.msra.mxu0 0
        %5247 = vmatprep.subr.bf16.mxu0 0
        %5248 = vmatpush1.bf16.msra.mxu0 0
        %5249 = vmatprep.mubr.bf16.mxu0 0
        %5250 = vmatmul.mubr.bf16.gmra.mrb[0].mxu0 %v5157
        %v5251 = vpop.f32.mrb[0].mxu0
        %v5252 = vadd.f32 %v5203, %v5251
        %v5253 = vpop.f32.mrb[0].mxu0
        %v5254 = vpop.f32.mrb[0].mxu0
        %v5255 = vpop.f32.mrb[0].mxu0
        %5256 = vdwg.mxu0
        %v5257 = vpack.c.bf16 %v5134, %v5131
        %v5258 = vpack.c.bf16 %v5194, %v5194
        %v5260 = vsel %vm2865, %v5257, 0
        %v5263 = vsel %vm2865, %v5258, 0
        %5265 = vmatprep.subr.bf16.mxu0 0
        %5266 = vmatpush1.bf16.xpose.msra.mxu0 %v5263
        %5267 = vmatprep.subr.bf16.mxu0 0
        %5268 = vmatpush1.bf16.xpose.msra.mxu0 0
        %5269 = vmatprep.subr.bf16.mxu0 0
        %5270 = vmatpush1.bf16.xpose.msra.mxu0 0
        %5271 = vmatprep.subr.bf16.mxu0 0
        %5272 = vmatpush1.bf16.xpose.msra.mxu0 0
        %5273 = vmatprep.subr.bf16.mxu0 0
        %5274 = vmatpush1.bf16.xpose.msra.mxu0 0
        %5275 = vmatprep.subr.bf16.mxu0 0
        %5276 = vmatpush1.bf16.xpose.msra.mxu0 0
        %5277 = vmatprep.subr.bf16.mxu0 0
        %5278 = vmatpush1.bf16.xpose.msra.mxu0 0
        %5279 = vmatprep.subr.bf16.mxu0 0
        %5280 = vmatpush1.bf16.xpose.msra.mxu0 0
        %5281 = vmatprep.subr.bf16.mxu0 0
        %5282 = vmatpush1.bf16.xpose.msra.mxu0 0
        %5283 = vmatprep.subr.bf16.mxu0 0
        %5284 = vmatpush1.bf16.xpose.msra.mxu0 0
        %5285 = vmatprep.subr.bf16.mxu0 0
        %5286 = vmatpush1.bf16.xpose.msra.mxu0 0
        %5287 = vmatprep.subr.bf16.mxu0 0
        %5288 = vmatpush1.bf16.xpose.msra.mxu0 0
        %5289 = vmatprep.subr.bf16.mxu0 0
        %5290 = vmatpush1.bf16.xpose.msra.mxu0 0
        %5291 = vmatprep.subr.bf16.mxu0 0
        %5292 = vmatpush1.bf16.xpose.msra.mxu0 0
        %5293 = vmatprep.subr.bf16.mxu0 0
        %5294 = vmatpush1.bf16.xpose.msra.mxu0 0
        %5295 = vmatprep.subr.bf16.mxu0 0
        %5296 = vmatpush1.bf16.xpose.msra.mxu0 0
        %5297 = vmatprep.mubr.bf16.mxu0 0
        %5298 = vmatmul.mubr.bf16.gmra.mrb[0].mxu0 %v5260
        %v5299 = vpop.f32.mrb[0].mxu0
        %v5300 = vadd.f32 0.0, %v5299
        %v5301 = vpop.f32.mrb[0].mxu0
        %v5302 = vpop.f32.mrb[0].mxu0
        %v5303 = vadd.f32 0.0, %v5302
        %v5304 = vpop.f32.mrb[0].mxu0
        %5305 = vdwg.mxu0
        %v5306 = vmul.f32 %v5300, 0.17677669
        %v5307 = vmul.f32 %v5303, 0.17677669
        %v5308 = vsel %vm2865, %v5306, -inf
        %5309 = vmax.xlane.f32.xlu0 %v5308
        %v5310 = vpop.xlane.xlu0 %5309
        %v5311 = vsel %vm2865, %v5307, -inf
        %5312 = vmax.xlane.f32.xlu0 %v5311
        %v5313 = vpop.xlane.xlu0 %5312
        %v5314 = vsub.f32 %v5306, %v5310
        %v5315 = vsub.f32 %v5307, %v5313
        %v5316 = vmul.f32 %v5314, 1.442695
        %v5317 = vpow.pop %v5316
        %v5318 = vmul.f32 %v5315, 1.442695
        %v5319 = vpow.pop %v5318
        %v5320 = vsel %vm2865, %v5317, 0.0
        %5321 = vadd.xlane.f32.xlu0 %v5320
        %v5322 = vpop.xlane.xlu0 %5321
        %v5323 = vsel %vm2865, %v5319, 0.0
        %5324 = vadd.xlane.f32.xlu0 %v5323
        %v5325 = vpop.xlane.xlu0 %5324
        %v5326 = vrcp.pop %v5322
        %v5327 = vrcp.pop %v5325
        %v5328 = vmul.f32 %v5317, %v5326
        %v5329 = vmul.f32 %v5319, %v5327
        %v5330 = vpack.c.bf16 %v5329, %v5328
        %v5331 = vpack.c.bf16 %v5252, %v5252
        %v5333 = vsel %vm2865, %v5330, 0
        %v5336 = vsel %vm3710, %v5331, 0
        %5338 = vmatprep.subr.bf16.mxu0 0
        %5339 = vmatpush1.bf16.msra.mxu0 %v5336
        %5340 = vmatprep.subr.bf16.mxu0 0
        %5341 = vmatpush1.bf16.msra.mxu0 0
        %5342 = vmatprep.subr.bf16.mxu0 0
        %5343 = vmatpush1.bf16.msra.mxu0 0
        %5344 = vmatprep.subr.bf16.mxu0 0
        %5345 = vmatpush1.bf16.msra.mxu0 0
        %5346 = vmatprep.subr.bf16.mxu0 0
        %5347 = vmatpush1.bf16.msra.mxu0 0
        %5348 = vmatprep.subr.bf16.mxu0 0
        %5349 = vmatpush1.bf16.msra.mxu0 0
        %5350 = vmatprep.subr.bf16.mxu0 0
        %5351 = vmatpush1.bf16.msra.mxu0 0
        %5352 = vmatprep.subr.bf16.mxu0 0
        %5353 = vmatpush1.bf16.msra.mxu0 0
        %5354 = vmatprep.subr.bf16.mxu0 0
        %5355 = vmatpush1.bf16.msra.mxu0 0
        %5356 = vmatprep.subr.bf16.mxu0 0
        %5357 = vmatpush1.bf16.msra.mxu0 0
        %5358 = vmatprep.subr.bf16.mxu0 0
        %5359 = vmatpush1.bf16.msra.mxu0 0
        %5360 = vmatprep.subr.bf16.mxu0 0
        %5361 = vmatpush1.bf16.msra.mxu0 0
        %5362 = vmatprep.subr.bf16.mxu0 0
        %5363 = vmatpush1.bf16.msra.mxu0 0
        %5364 = vmatprep.subr.bf16.mxu0 0
        %5365 = vmatpush1.bf16.msra.mxu0 0
        %5366 = vmatprep.subr.bf16.mxu0 0
        %5367 = vmatpush1.bf16.msra.mxu0 0
        %5368 = vmatprep.subr.bf16.mxu0 0
        %5369 = vmatpush1.bf16.msra.mxu0 0
        %5370 = vmatprep.mubr.bf16.mxu0 0
        %5371 = vmatmul.mubr.bf16.gmra.mrb[0].mxu0 %v5333
        %v5372 = vpop.f32.mrb[0].mxu0
        %v5373 = vadd.f32 0.0, %v5372
        %v5374 = vpop.f32.mrb[0].mxu0
        %v5375 = vpop.f32.mrb[0].mxu0
        %v5376 = vadd.f32 0.0, %v5375
        %v5377 = vpop.f32.mrb[0].mxu0
        %5378 = vdwg.mxu0
        %v5379 = vadd.f32 %v5131, %v5373
        %v5380 = vadd.f32 %v5134, %v5376
        %5382 = vrot.lane.b32.xlu0 %v5257, 120
        %v5383 = vpop.permute.xlu0 %5382
        %5385 = vrot.lane.b32.xlu0 %v5258, 120
        %v5386 = vpop.permute.xlu0 %5385
        %v5388 = vsel %vm2865, %v5383, 0
        %v5391 = vsel %vm2865, %v5386, 0
        %5393 = vmatprep.subr.bf16.mxu0 0
        %5394 = vmatpush1.bf16.xpose.msra.mxu0 %v5391
        %5395 = vmatprep.subr.bf16.mxu0 0
        %5396 = vmatpush1.bf16.xpose.msra.mxu0 0
        %5397 = vmatprep.subr.bf16.mxu0 0
        %5398 = vmatpush1.bf16.xpose.msra.mxu0 0
        %5399 = vmatprep.subr.bf16.mxu0 0
        %5400 = vmatpush1.bf16.xpose.msra.mxu0 0
        %5401 = vmatprep.subr.bf16.mxu0 0
        %5402 = vmatpush1.bf16.xpose.msra.mxu0 0
        %5403 = vmatprep.subr.bf16.mxu0 0
        %5404 = vmatpush1.bf16.xpose.msra.mxu0 0
        %5405 = vmatprep.subr.bf16.mxu0 0
        %5406 = vmatpush1.bf16.xpose.msra.mxu0 0
        %5407 = vmatprep.subr.bf16.mxu0 0
        %5408 = vmatpush1.bf16.xpose.msra.mxu0 0
        %5409 = vmatprep.subr.bf16.mxu0 0
        %5410 = vmatpush1.bf16.xpose.msra.mxu0 0
        %5411 = vmatprep.subr.bf16.mxu0 0
        %5412 = vmatpush1.bf16.xpose.msra.mxu0 0
        %5413 = vmatprep.subr.bf16.mxu0 0
        %5414 = vmatpush1.bf16.xpose.msra.mxu0 0
        %5415 = vmatprep.subr.bf16.mxu0 0
        %5416 = vmatpush1.bf16.xpose.msra.mxu0 0
        %5417 = vmatprep.subr.bf16.mxu0 0
        %5418 = vmatpush1.bf16.xpose.msra.mxu0 0
        %5419 = vmatprep.subr.bf16.mxu0 0
        %5420 = vmatpush1.bf16.xpose.msra.mxu0 0
        %5421 = vmatprep.subr.bf16.mxu0 0
        %5422 = vmatpush1.bf16.xpose.msra.mxu0 0
        %5423 = vmatprep.subr.bf16.mxu0 0
        %5424 = vmatpush1.bf16.xpose.msra.mxu0 0
        %5425 = vmatprep.mubr.bf16.mxu0 0
        %5426 = vmatmul.mubr.bf16.gmra.mrb[0].mxu0 %v5388
        %v5427 = vpop.f32.mrb[0].mxu0
        %v5428 = vadd.f32 0.0, %v5427
        %v5429 = vpop.f32.mrb[0].mxu0
        %v5430 = vpop.f32.mrb[0].mxu0
        %v5431 = vadd.f32 0.0, %v5430
        %v5432 = vpop.f32.mrb[0].mxu0
        %5433 = vdwg.mxu0
        %v5434 = vmul.f32 %v5428, 0.17677669
        %v5435 = vmul.f32 %v5431, 0.17677669
        %v5436 = vsel %vm2865, %v5434, -inf
        %5437 = vmax.xlane.f32.xlu0 %v5436
        %v5438 = vpop.xlane.xlu0 %5437
        %v5439 = vsel %vm2865, %v5435, -inf
        %5440 = vmax.xlane.f32.xlu0 %v5439
        %v5441 = vpop.xlane.xlu0 %5440
        %v5442 = vsub.f32 %v5434, %v5438
        %v5443 = vsub.f32 %v5435, %v5441
        %v5444 = vmul.f32 %v5442, 1.442695
        %v5445 = vpow.pop %v5444
        %v5446 = vmul.f32 %v5443, 1.442695
        %v5447 = vpow.pop %v5446
        %v5448 = vsel %vm2865, %v5445, 0.0
        %5449 = vadd.xlane.f32.xlu0 %v5448
        %v5450 = vpop.xlane.xlu0 %5449
        %v5451 = vsel %vm2865, %v5447, 0.0
        %5452 = vadd.xlane.f32.xlu0 %v5451
        %v5453 = vpop.xlane.xlu0 %5452
        %v5454 = vrcp.pop %v5450
        %v5455 = vrcp.pop %v5453
        %v5456 = vmul.f32 %v5445, %v5454
        %v5457 = vmul.f32 %v5447, %v5455
        %v5458 = vpack.c.bf16 %v5457, %v5456
        %5460 = vrot.lane.b32.xlu0 %v5331, 120
        %v5461 = vpop.permute.xlu0 %5460
        %v5463 = vsel %vm2865, %v5458, 0
        %v5466 = vsel %vm3710, %v5461, 0
        %5468 = vmatprep.subr.bf16.mxu0 0
        %5469 = vmatpush1.bf16.msra.mxu0 %v5466
        %5470 = vmatprep.subr.bf16.mxu0 0
        %5471 = vmatpush1.bf16.msra.mxu0 0
        %5472 = vmatprep.subr.bf16.mxu0 0
        %5473 = vmatpush1.bf16.msra.mxu0 0
        %5474 = vmatprep.subr.bf16.mxu0 0
        %5475 = vmatpush1.bf16.msra.mxu0 0
        %5476 = vmatprep.subr.bf16.mxu0 0
        %5477 = vmatpush1.bf16.msra.mxu0 0
        %5478 = vmatprep.subr.bf16.mxu0 0
        %5479 = vmatpush1.bf16.msra.mxu0 0
        %5480 = vmatprep.subr.bf16.mxu0 0
        %5481 = vmatpush1.bf16.msra.mxu0 0
        %5482 = vmatprep.subr.bf16.mxu0 0
        %5483 = vmatpush1.bf16.msra.mxu0 0
        %5484 = vmatprep.subr.bf16.mxu0 0
        %5485 = vmatpush1.bf16.msra.mxu0 0
        %5486 = vmatprep.subr.bf16.mxu0 0
        %5487 = vmatpush1.bf16.msra.mxu0 0
        %5488 = vmatprep.subr.bf16.mxu0 0
        %5489 = vmatpush1.bf16.msra.mxu0 0
        %5490 = vmatprep.subr.bf16.mxu0 0
        %5491 = vmatpush1.bf16.msra.mxu0 0
        %5492 = vmatprep.subr.bf16.mxu0 0
        %5493 = vmatpush1.bf16.msra.mxu0 0
        %5494 = vmatprep.subr.bf16.mxu0 0
        %5495 = vmatpush1.bf16.msra.mxu0 0
        %5496 = vmatprep.subr.bf16.mxu0 0
        %5497 = vmatpush1.bf16.msra.mxu0 0
        %5498 = vmatprep.subr.bf16.mxu0 0
        %5499 = vmatpush1.bf16.msra.mxu0 0
        %5500 = vmatprep.mubr.bf16.mxu0 0
        %5501 = vmatmul.mubr.bf16.gmra.mrb[0].mxu0 %v5463
        %v5502 = vpop.f32.mrb[0].mxu0
        %v5503 = vadd.f32 0.0, %v5502
        %v5504 = vpop.f32.mrb[0].mxu0
        %v5505 = vpop.f32.mrb[0].mxu0
        %v5506 = vadd.f32 0.0, %v5505
        %v5507 = vpop.f32.mrb[0].mxu0
        %5508 = vdwg.mxu0
        %5511 = vrot.lane.b32.xlu0 %v5503, 8
        %v5512 = vpop.permute.xlu0 %5511
        %5513 = vrot.lane.b32.xlu0 %v5506, 8
        %v5514 = vpop.permute.xlu0 %5513
        %v5517 = vadd.f32 %v5131, %v5512
        %v5518 = vadd.f32 %v5134, %v5514
        %5519 = vrot.lane.b32.xlu0 %v5257, 112
        %v5520 = vpop.permute.xlu0 %5519
        %5521 = vrot.lane.b32.xlu0 %v5258, 112
        %v5522 = vpop.permute.xlu0 %5521
        %v5524 = vsel %vm2865, %v5520, 0
        %v5527 = vsel %vm2865, %v5522, 0
        %5529 = vmatprep.subr.bf16.mxu0 0
        %5530 = vmatpush1.bf16.xpose.msra.mxu0 %v5527
        %5531 = vmatprep.subr.bf16.mxu0 0
        %5532 = vmatpush1.bf16.xpose.msra.mxu0 0
        %5533 = vmatprep.subr.bf16.mxu0 0
        %5534 = vmatpush1.bf16.xpose.msra.mxu0 0
        %5535 = vmatprep.subr.bf16.mxu0 0
        %5536 = vmatpush1.bf16.xpose.msra.mxu0 0
        %5537 = vmatprep.subr.bf16.mxu0 0
        %5538 = vmatpush1.bf16.xpose.msra.mxu0 0
        %5539 = vmatprep.subr.bf16.mxu0 0
        %5540 = vmatpush1.bf16.xpose.msra.mxu0 0
        %5541 = vmatprep.subr.bf16.mxu0 0
        %5542 = vmatpush1.bf16.xpose.msra.mxu0 0
        %5543 = vmatprep.subr.bf16.mxu0 0
        %5544 = vmatpush1.bf16.xpose.msra.mxu0 0
        %5545 = vmatprep.subr.bf16.mxu0 0
        %5546 = vmatpush1.bf16.xpose.msra.mxu0 0
        %5547 = vmatprep.subr.bf16.mxu0 0
        %5548 = vmatpush1.bf16.xpose.msra.mxu0 0
        %5549 = vmatprep.subr.bf16.mxu0 0
        %5550 = vmatpush1.bf16.xpose.msra.mxu0 0
        %5551 = vmatprep.subr.bf16.mxu0 0
        %5552 = vmatpush1.bf16.xpose.msra.mxu0 0
        %5553 = vmatprep.subr.bf16.mxu0 0
        %5554 = vmatpush1.bf16.xpose.msra.mxu0 0
        %5555 = vmatprep.subr.bf16.mxu0 0
        %5556 = vmatpush1.bf16.xpose.msra.mxu0 0
        %5557 = vmatprep.subr.bf16.mxu0 0
        %5558 = vmatpush1.bf16.xpose.msra.mxu0 0
        %5559 = vmatprep.subr.bf16.mxu0 0
        %5560 = vmatpush1.bf16.xpose.msra.mxu0 0
        %5561 = vmatprep.mubr.bf16.mxu0 0
        %5562 = vmatmul.mubr.bf16.gmra.mrb[0].mxu0 %v5524
        %v5563 = vpop.f32.mrb[0].mxu0
        %v5564 = vadd.f32 0.0, %v5563
        %v5565 = vpop.f32.mrb[0].mxu0
        %v5566 = vpop.f32.mrb[0].mxu0
        %v5567 = vadd.f32 0.0, %v5566
        %v5568 = vpop.f32.mrb[0].mxu0
        %5569 = vdwg.mxu0
        %v5570 = vmul.f32 %v5564, 0.17677669
        %v5571 = vmul.f32 %v5567, 0.17677669
        %v5572 = vsel %vm2865, %v5570, -inf
        %5573 = vmax.xlane.f32.xlu0 %v5572
        %v5574 = vpop.xlane.xlu0 %5573
        %v5575 = vsel %vm2865, %v5571, -inf
        %5576 = vmax.xlane.f32.xlu0 %v5575
        %v5577 = vpop.xlane.xlu0 %5576
        %v5578 = vsub.f32 %v5570, %v5574
        %v5579 = vsub.f32 %v5571, %v5577
        %v5580 = vmul.f32 %v5578, 1.442695
        %v5581 = vpow.pop %v5580
        %v5582 = vmul.f32 %v5579, 1.442695
        %v5583 = vpow.pop %v5582
        %v5584 = vsel %vm2865, %v5581, 0.0
        %5585 = vadd.xlane.f32.xlu0 %v5584
        %v5586 = vpop.xlane.xlu0 %5585
        %v5587 = vsel %vm2865, %v5583, 0.0
        %5588 = vadd.xlane.f32.xlu0 %v5587
        %v5589 = vpop.xlane.xlu0 %5588
        %v5590 = vrcp.pop %v5586
        %v5591 = vrcp.pop %v5589
        %v5592 = vmul.f32 %v5581, %v5590
        %v5593 = vmul.f32 %v5583, %v5591
        %v5594 = vpack.c.bf16 %v5593, %v5592
        %5595 = vrot.lane.b32.xlu0 %v5331, 112
        %v5596 = vpop.permute.xlu0 %5595
        %v5598 = vsel %vm2865, %v5594, 0
        %v5601 = vsel %vm3710, %v5596, 0
        %5603 = vmatprep.subr.bf16.mxu0 0
        %5604 = vmatpush1.bf16.msra.mxu0 %v5601
        %5605 = vmatprep.subr.bf16.mxu0 0
        %5606 = vmatpush1.bf16.msra.mxu0 0
        %5607 = vmatprep.subr.bf16.mxu0 0
        %5608 = vmatpush1.bf16.msra.mxu0 0
        %5609 = vmatprep.subr.bf16.mxu0 0
        %5610 = vmatpush1.bf16.msra.mxu0 0
        %5611 = vmatprep.subr.bf16.mxu0 0
        %5612 = vmatpush1.bf16.msra.mxu0 0
        %5613 = vmatprep.subr.bf16.mxu0 0
        %5614 = vmatpush1.bf16.msra.mxu0 0
        %5615 = vmatprep.subr.bf16.mxu0 0
        %5616 = vmatpush1.bf16.msra.mxu0 0
        %5617 = vmatprep.subr.bf16.mxu0 0
        %5618 = vmatpush1.bf16.msra.mxu0 0
        %5619 = vmatprep.subr.bf16.mxu0 0
        %5620 = vmatpush1.bf16.msra.mxu0 0
        %5621 = vmatprep.subr.bf16.mxu0 0
        %5622 = vmatpush1.bf16.msra.mxu0 0
        %5623 = vmatprep.subr.bf16.mxu0 0
        %5624 = vmatpush1.bf16.msra.mxu0 0
        %5625 = vmatprep.subr.bf16.mxu0 0
        %5626 = vmatpush1.bf16.msra.mxu0 0
        %5627 = vmatprep.subr.bf16.mxu0 0
        %5628 = vmatpush1.bf16.msra.mxu0 0
        %5629 = vmatprep.subr.bf16.mxu0 0
        %5630 = vmatpush1.bf16.msra.mxu0 0
        %5631 = vmatprep.subr.bf16.mxu0 0
        %5632 = vmatpush1.bf16.msra.mxu0 0
        %5633 = vmatprep.subr.bf16.mxu0 0
        %5634 = vmatpush1.bf16.msra.mxu0 0
        %5635 = vmatprep.mubr.bf16.mxu0 0
        %5636 = vmatmul.mubr.bf16.gmra.mrb[0].mxu0 %v5598
        %v5637 = vpop.f32.mrb[0].mxu0
        %v5638 = vadd.f32 0.0, %v5637
        %v5639 = vpop.f32.mrb[0].mxu0
        %v5640 = vpop.f32.mrb[0].mxu0
        %v5641 = vadd.f32 0.0, %v5640
        %v5642 = vpop.f32.mrb[0].mxu0
        %5643 = vdwg.mxu0
        %5646 = vrot.lane.b32.xlu0 %v5638, 16
        %v5647 = vpop.permute.xlu0 %5646
        %5648 = vrot.lane.b32.xlu0 %v5641, 16
        %v5649 = vpop.permute.xlu0 %5648
        %v5652 = vadd.f32 %v5131, %v5647
        %v5653 = vadd.f32 %v5134, %v5649
        %5654 = vrot.lane.b32.xlu0 %v5257, 104
        %v5655 = vpop.permute.xlu0 %5654
        %5656 = vrot.lane.b32.xlu0 %v5258, 104
        %v5657 = vpop.permute.xlu0 %5656
        %v5659 = vsel %vm2865, %v5655, 0
        %v5662 = vsel %vm2865, %v5657, 0
        %5664 = vmatprep.subr.bf16.mxu0 0
        %5665 = vmatpush1.bf16.xpose.msra.mxu0 %v5662
        %5666 = vmatprep.subr.bf16.mxu0 0
        %5667 = vmatpush1.bf16.xpose.msra.mxu0 0
        %5668 = vmatprep.subr.bf16.mxu0 0
        %5669 = vmatpush1.bf16.xpose.msra.mxu0 0
        %5670 = vmatprep.subr.bf16.mxu0 0
        %5671 = vmatpush1.bf16.xpose.msra.mxu0 0
        %5672 = vmatprep.subr.bf16.mxu0 0
        %5673 = vmatpush1.bf16.xpose.msra.mxu0 0
        %5674 = vmatprep.subr.bf16.mxu0 0
        %5675 = vmatpush1.bf16.xpose.msra.mxu0 0
        %5676 = vmatprep.subr.bf16.mxu0 0
        %5677 = vmatpush1.bf16.xpose.msra.mxu0 0
        %5678 = vmatprep.subr.bf16.mxu0 0
        %5679 = vmatpush1.bf16.xpose.msra.mxu0 0
        %5680 = vmatprep.subr.bf16.mxu0 0
        %5681 = vmatpush1.bf16.xpose.msra.mxu0 0
        %5682 = vmatprep.subr.bf16.mxu0 0
        %5683 = vmatpush1.bf16.xpose.msra.mxu0 0
        %5684 = vmatprep.subr.bf16.mxu0 0
        %5685 = vmatpush1.bf16.xpose.msra.mxu0 0
        %5686 = vmatprep.subr.bf16.mxu0 0
        %5687 = vmatpush1.bf16.xpose.msra.mxu0 0
        %5688 = vmatprep.subr.bf16.mxu0 0
        %5689 = vmatpush1.bf16.xpose.msra.mxu0 0
        %5690 = vmatprep.subr.bf16.mxu0 0
        %5691 = vmatpush1.bf16.xpose.msra.mxu0 0
        %5692 = vmatprep.subr.bf16.mxu0 0
        %5693 = vmatpush1.bf16.xpose.msra.mxu0 0
        %5694 = vmatprep.subr.bf16.mxu0 0
        %5695 = vmatpush1.bf16.xpose.msra.mxu0 0
        %5696 = vmatprep.mubr.bf16.mxu0 0
        %5697 = vmatmul.mubr.bf16.gmra.mrb[0].mxu0 %v5659
        %v5698 = vpop.f32.mrb[0].mxu0
        %v5699 = vadd.f32 0.0, %v5698
        %v5700 = vpop.f32.mrb[0].mxu0
        %v5701 = vpop.f32.mrb[0].mxu0
        %v5702 = vadd.f32 0.0, %v5701
        %v5703 = vpop.f32.mrb[0].mxu0
        %5704 = vdwg.mxu0
        %v5705 = vmul.f32 %v5699, 0.17677669
        %v5706 = vmul.f32 %v5702, 0.17677669
        %v5707 = vsel %vm2865, %v5705, -inf
        %5708 = vmax.xlane.f32.xlu0 %v5707
        %v5709 = vpop.xlane.xlu0 %5708
        %v5710 = vsel %vm2865, %v5706, -inf
        %5711 = vmax.xlane.f32.xlu0 %v5710
        %v5712 = vpop.xlane.xlu0 %5711
        %v5713 = vsub.f32 %v5705, %v5709
        %v5714 = vsub.f32 %v5706, %v5712
        %v5715 = vmul.f32 %v5713, 1.442695
        %v5716 = vpow.pop %v5715
        %v5717 = vmul.f32 %v5714, 1.442695
        %v5718 = vpow.pop %v5717
        %v5719 = vsel %vm2865, %v5716, 0.0
        %5720 = vadd.xlane.f32.xlu0 %v5719
        %v5721 = vpop.xlane.xlu0 %5720
        %v5722 = vsel %vm2865, %v5718, 0.0
        %5723 = vadd.xlane.f32.xlu0 %v5722
        %v5724 = vpop.xlane.xlu0 %5723
        %v5725 = vrcp.pop %v5721
        %v5726 = vrcp.pop %v5724
        %v5727 = vmul.f32 %v5716, %v5725
        %v5728 = vmul.f32 %v5718, %v5726
        %v5729 = vpack.c.bf16 %v5728, %v5727
        %5730 = vrot.lane.b32.xlu0 %v5331, 104
        %v5731 = vpop.permute.xlu0 %5730
        %v5733 = vsel %vm2865, %v5729, 0
        %v5736 = vsel %vm3710, %v5731, 0
        %5738 = vmatprep.subr.bf16.mxu0 0
        %5739 = vmatpush1.bf16.msra.mxu0 %v5736
        %5740 = vmatprep.subr.bf16.mxu0 0
        %5741 = vmatpush1.bf16.msra.mxu0 0
        %5742 = vmatprep.subr.bf16.mxu0 0
        %5743 = vmatpush1.bf16.msra.mxu0 0
        %5744 = vmatprep.subr.bf16.mxu0 0
        %5745 = vmatpush1.bf16.msra.mxu0 0
        %5746 = vmatprep.subr.bf16.mxu0 0
        %5747 = vmatpush1.bf16.msra.mxu0 0
        %5748 = vmatprep.subr.bf16.mxu0 0
        %5749 = vmatpush1.bf16.msra.mxu0 0
        %5750 = vmatprep.subr.bf16.mxu0 0
        %5751 = vmatpush1.bf16.msra.mxu0 0
        %5752 = vmatprep.subr.bf16.mxu0 0
        %5753 = vmatpush1.bf16.msra.mxu0 0
        %5754 = vmatprep.subr.bf16.mxu0 0
        %5755 = vmatpush1.bf16.msra.mxu0 0
        %5756 = vmatprep.subr.bf16.mxu0 0
        %5757 = vmatpush1.bf16.msra.mxu0 0
        %5758 = vmatprep.subr.bf16.mxu0 0
        %5759 = vmatpush1.bf16.msra.mxu0 0
        %5760 = vmatprep.subr.bf16.mxu0 0
        %5761 = vmatpush1.bf16.msra.mxu0 0
        %5762 = vmatprep.subr.bf16.mxu0 0
        %5763 = vmatpush1.bf16.msra.mxu0 0
        %5764 = vmatprep.subr.bf16.mxu0 0
        %5765 = vmatpush1.bf16.msra.mxu0 0
        %5766 = vmatprep.subr.bf16.mxu0 0
        %5767 = vmatpush1.bf16.msra.mxu0 0
        %5768 = vmatprep.subr.bf16.mxu0 0
        %5769 = vmatpush1.bf16.msra.mxu0 0
        %5770 = vmatprep.mubr.bf16.mxu0 0
        %5771 = vmatmul.mubr.bf16.gmra.mrb[0].mxu0 %v5733
        %v5772 = vpop.f32.mrb[0].mxu0
        %v5773 = vadd.f32 0.0, %v5772
        %v5774 = vpop.f32.mrb[0].mxu0
        %v5775 = vpop.f32.mrb[0].mxu0
        %v5776 = vadd.f32 0.0, %v5775
        %v5777 = vpop.f32.mrb[0].mxu0
        %5778 = vdwg.mxu0
        %5781 = vrot.lane.b32.xlu0 %v5773, 24
        %v5782 = vpop.permute.xlu0 %5781
        %5783 = vrot.lane.b32.xlu0 %v5776, 24
        %v5784 = vpop.permute.xlu0 %5783
        %v5787 = vadd.f32 %v5131, %v5782
        %v5788 = vadd.f32 %v5134, %v5784
        %v5789 = vsel %vm2865, %v5379, %v5517
        %v5790 = vsel %vm2865, %v5380, %v5518
        %v5791 = vsel %vm2920, %v5789, %v5652
        %v5792 = vsel %vm2920, %v5790, %v5653
        %v5793 = vsel %vm3328, %v5791, %v5787
        %v5794 = vsel %vm3328, %v5792, %v5788
        %v5795 = vsel %vm2696, %v5793, 0.0
        %5796 = vadd.xlane.f32.xlu0 %v5795
        %v5797 = vpop.xlane.xlu0 %5796
        %v5798 = vsel %vm2696, %v5794, 0.0
        %5799 = vadd.xlane.f32.xlu0 %v5798
        %v5800 = vpop.xlane.xlu0 %5799
        %v5801 = vmul.f32 %v5797, %v3333
        %v5802 = vmul.f32 %v5800, %v3333
        %v5803 = vsub.f32 %v5793, %v5801
        %v5804 = vsub.f32 %v5794, %v5802
        %v5805 = vmul.f32 %v5803, %v5803
        %v5806 = vmul.f32 %v5804, %v5804
        %v5807 = vsel %vm2696, %v5805, 0.0
        %5808 = vadd.xlane.f32.xlu0 %v5807
        %v5809 = vpop.xlane.xlu0 %5808
        %v5810 = vsel %vm2696, %v5806, 0.0
        %5811 = vadd.xlane.f32.xlu0 %v5810
        %v5812 = vpop.xlane.xlu0 %5811
        %v5813 = vmul.f32 %v5809, %v3333
        %v5814 = vmul.f32 %v5812, %v3333
        %v5815 = vadd.f32 %v5813, 1e-05
        %v5816 = vadd.f32 %v5814, 1e-05
        %v5817 = vrsqrt.pop %v5815
        %v5818 = vrsqrt.pop %v5816
        %v5819 = vmul.f32 %v5803, %v5817
        %v5820 = vmul.f32 %v5804, %v5818
        %v5822 = vlaneseq
        %v5823 = vshrl.u32 %v5822, 7
        %v5824 = vsub.s32 0, %v5823
        %v5825 = vrot.slane %v2644, %v5824
        %v5827 = vmul.f32 %v5819, %v5825
        %v5828 = vmul.f32 %v5820, %v5825
        %v5830 = vlaneseq
        %v5831 = vshrl.u32 %v5830, 7
        %v5832 = vsub.s32 0, %v5831
        %v5833 = vrot.slane %v2645, %v5832
        %v5835 = vadd.f32 %v5827, %v5833
        %v5836 = vadd.f32 %v5828, %v5833
        %v5837 = vpack.c.bf16 %v5836, %v5835
        %v5839 = vlaneseq
        %v5840 = vshrl.u32 %v5839, 7
        %v5841 = vsub.s32 0, %v5840
        %v5842 = vrot.slane %v2643, %v5841
        %v5848 = vunpack.c.l.b16 %v2639
        %v5849 = vunpack.c.l.b16 %v2640
        %v5850 = vunpack.c.l.b16 %v2641
        %v5851 = vunpack.c.l.b16 %v2642
        %v5852 = vpack.c.b16 %v5849, %v5848
        %v5853 = vpack.c.b16 %v5851, %v5850
        %v5857 = vsel %vm2696, %v5837, 0
        %5859 = vmatprep.subr.bf16.mxu0 0
        %5860 = vmatpush1.bf16.msra.mxu0 %v5852
        %5861 = vmatprep.subr.bf16.mxu0 0
        %5862 = vmatpush1.bf16.msra.mxu0 %v5853
        %5863 = vmatprep.subr.bf16.mxu0 0
        %5864 = vmatpush1.bf16.msra.mxu0 0
        %5865 = vmatprep.subr.bf16.mxu0 0
        %5866 = vmatpush1.bf16.msra.mxu0 0
        %5867 = vmatprep.subr.bf16.mxu0 0
        %5868 = vmatpush1.bf16.msra.mxu0 0
        %5869 = vmatprep.subr.bf16.mxu0 0
        %5870 = vmatpush1.bf16.msra.mxu0 0
        %5871 = vmatprep.subr.bf16.mxu0 0
        %5872 = vmatpush1.bf16.msra.mxu0 0
        %5873 = vmatprep.subr.bf16.mxu0 0
        %5874 = vmatpush1.bf16.msra.mxu0 0
        %5875 = vmatprep.subr.bf16.mxu0 0
        %5876 = vmatpush1.bf16.msra.mxu0 0
        %5877 = vmatprep.subr.bf16.mxu0 0
        %5878 = vmatpush1.bf16.msra.mxu0 0
        %5879 = vmatprep.subr.bf16.mxu0 0
        %5880 = vmatpush1.bf16.msra.mxu0 0
        %5881 = vmatprep.subr.bf16.mxu0 0
        %5882 = vmatpush1.bf16.msra.mxu0 0
        %5883 = vmatprep.subr.bf16.mxu0 0
        %5884 = vmatpush1.bf16.msra.mxu0 0
        %5885 = vmatprep.subr.bf16.mxu0 0
        %5886 = vmatpush1.bf16.msra.mxu0 0
        %5887 = vmatprep.subr.bf16.mxu0 0
        %5888 = vmatpush1.bf16.msra.mxu0 0
        %5889 = vmatprep.subr.bf16.mxu0 0
        %5890 = vmatpush1.bf16.msra.mxu0 0
        %5891 = vmatprep.mubr.bf16.mxu0 0
        %5892 = vmatmul.mubr.bf16.gmra.mrb[0].mxu0 %v5857
        %v5893 = vpop.f32.mrb[0].mxu0
        %v5894 = vadd.f32 %v5842, %v5893
        %v5895 = vpop.f32.mrb[0].mxu0
        %v5896 = vpop.f32.mrb[0].mxu0
        %v5897 = vadd.f32 %v5842, %v5896
        %v5898 = vpop.f32.mrb[0].mxu0
        %5899 = vdwg.mxu0
        %v5900 = vmax.f32 %v5894, 0.0
        %v5901 = vmax.f32 %v5897, 0.0
        %v5902 = vadd.f32 %v5835, %v5900
        %v5903 = vadd.f32 %v5836, %v5901
        %v5904 = vsel %vm2696, %v5902, 0.0
        %5905 = vadd.xlane.f32.xlu0 %v5904
        %v5906 = vpop.xlane.xlu0 %5905
        %v5907 = vsel %vm2696, %v5903, 0.0
        %5908 = vadd.xlane.f32.xlu0 %v5907
        %v5909 = vpop.xlane.xlu0 %5908
        %v5910 = vmul.f32 %v5906, %v3333
        %v5911 = vmul.f32 %v5909, %v3333
        %v5912 = vsub.f32 %v5902, %v5910
        %v5913 = vsub.f32 %v5903, %v5911
        %v5914 = vmul.f32 %v5912, %v5912
        %v5915 = vmul.f32 %v5913, %v5913
        %v5916 = vsel %vm2696, %v5914, 0.0
        %5917 = vadd.xlane.f32.xlu0 %v5916
        %v5918 = vpop.xlane.xlu0 %5917
        %v5919 = vsel %vm2696, %v5915, 0.0
        %5920 = vadd.xlane.f32.xlu0 %v5919
        %v5921 = vpop.xlane.xlu0 %5920
        %v5922 = vmul.f32 %v5918, %v3333
        %v5923 = vmul.f32 %v5921, %v3333
        %v5924 = vadd.f32 %v5922, 1e-05
        %v5925 = vadd.f32 %v5923, 1e-05
        %v5926 = vrsqrt.pop %v5924
        %v5927 = vrsqrt.pop %v5925
        %v5928 = vmul.f32 %v5912, %v5926
        %v5929 = vmul.f32 %v5913, %v5927
        %v5931 = vlaneseq
        %v5932 = vshrl.u32 %v5931, 7
        %v5933 = vsub.s32 0, %v5932
        %v5934 = vrot.slane %v2646, %v5933
        %v5936 = vmul.f32 %v5928, %v5934
        %v5937 = vmul.f32 %v5929, %v5934
        %v5939 = vlaneseq
        %v5940 = vshrl.u32 %v5939, 7
        %v5941 = vsub.s32 0, %v5940
        %v5942 = vrot.slane %v2647, %v5941
        %v5944 = vadd.f32 %v5936, %v5942
        %v5945 = vadd.f32 %v5937, %v5942
        %v5947 = vlaneseq
        %v5948 = vshrl.u32 %v5947, 7
        %v5949 = vsub.s32 0, %v5948
        %v5950 = vrot.slane %v2652, %v5949
        %v5956 = vunpack.c.l.b16 %v2648
        %v5957 = vunpack.c.l.b16 %v2649
        %v5958 = vunpack.c.l.b16 %v2650
        %v5959 = vunpack.c.l.b16 %v2651
        %v5960 = vpack.c.b16 %v5957, %v5956
        %v5961 = vpack.c.b16 %v5959, %v5958
        %5964 = vmatprep.subr.bf16.mxu0 0
        %5965 = vmatpush1.bf16.msra.mxu0 %v5960
        %5966 = vmatprep.subr.bf16.mxu0 0
        %5967 = vmatpush1.bf16.msra.mxu0 %v5961
        %5968 = vmatprep.subr.bf16.mxu0 0
        %5969 = vmatpush1.bf16.msra.mxu0 0
        %5970 = vmatprep.subr.bf16.mxu0 0
        %5971 = vmatpush1.bf16.msra.mxu0 0
        %5972 = vmatprep.subr.bf16.mxu0 0
        %5973 = vmatpush1.bf16.msra.mxu0 0
        %5974 = vmatprep.subr.bf16.mxu0 0
        %5975 = vmatpush1.bf16.msra.mxu0 0
        %5976 = vmatprep.subr.bf16.mxu0 0
        %5977 = vmatpush1.bf16.msra.mxu0 0
        %5978 = vmatprep.subr.bf16.mxu0 0
        %5979 = vmatpush1.bf16.msra.mxu0 0
        %5980 = vmatprep.subr.bf16.mxu0 0
        %5981 = vmatpush1.bf16.msra.mxu0 0
        %5982 = vmatprep.subr.bf16.mxu0 0
        %5983 = vmatpush1.bf16.msra.mxu0 0
        %5984 = vmatprep.subr.bf16.mxu0 0
        %5985 = vmatpush1.bf16.msra.mxu0 0
        %5986 = vmatprep.subr.bf16.mxu0 0
        %5987 = vmatpush1.bf16.msra.mxu0 0
        %5988 = vmatprep.subr.bf16.mxu0 0
        %5989 = vmatpush1.bf16.msra.mxu0 0
        %5990 = vmatprep.subr.bf16.mxu0 0
        %5991 = vmatpush1.bf16.msra.mxu0 0
        %5992 = vmatprep.subr.bf16.mxu0 0
        %5993 = vmatpush1.bf16.msra.mxu0 0
        %5994 = vmatprep.subr.bf16.mxu0 0
        %5995 = vmatpush1.bf16.msra.mxu0 0
        %5996 = vmatprep.mubr.bf16.mxu0 0
        %5997 = vmatmul.mubr.bf16.gmra.mrb[0].mxu0 %v5157
        %v5998 = vpop.f32.mrb[0].mxu0
        %v5999 = vadd.f32 %v5950, %v5998
        %v6000 = vpop.f32.mrb[0].mxu0
        %v6001 = vpop.f32.mrb[0].mxu0
        %v6002 = vpop.f32.mrb[0].mxu0
        %6003 = vdwg.mxu0
        %v6004 = vpack.c.bf16 %v5945, %v5944
        %v6006 = vlaneseq
        %v6007 = vshrl.u32 %v6006, 7
        %v6008 = vsub.s32 0, %v6007
        %v6009 = vrot.slane %v2657, %v6008
        %v6015 = vunpack.c.l.b16 %v2653
        %v6016 = vunpack.c.l.b16 %v2654
        %v6017 = vunpack.c.l.b16 %v2655
        %v6018 = vunpack.c.l.b16 %v2656
        %v6019 = vpack.c.b16 %v6016, %v6015
        %v6020 = vpack.c.b16 %v6018, %v6017
        %v6024 = vsel %vm2696, %v6004, 0
        %6026 = vmatprep.subr.bf16.mxu0 0
        %6027 = vmatpush1.bf16.msra.mxu0 %v6019
        %6028 = vmatprep.subr.bf16.mxu0 0
        %6029 = vmatpush1.bf16.msra.mxu0 %v6020
        %6030 = vmatprep.subr.bf16.mxu0 0
        %6031 = vmatpush1.bf16.msra.mxu0 0
        %6032 = vmatprep.subr.bf16.mxu0 0
        %6033 = vmatpush1.bf16.msra.mxu0 0
        %6034 = vmatprep.subr.bf16.mxu0 0
        %6035 = vmatpush1.bf16.msra.mxu0 0
        %6036 = vmatprep.subr.bf16.mxu0 0
        %6037 = vmatpush1.bf16.msra.mxu0 0
        %6038 = vmatprep.subr.bf16.mxu0 0
        %6039 = vmatpush1.bf16.msra.mxu0 0
        %6040 = vmatprep.subr.bf16.mxu0 0
        %6041 = vmatpush1.bf16.msra.mxu0 0
        %6042 = vmatprep.subr.bf16.mxu0 0
        %6043 = vmatpush1.bf16.msra.mxu0 0
        %6044 = vmatprep.subr.bf16.mxu0 0
        %6045 = vmatpush1.bf16.msra.mxu0 0
        %6046 = vmatprep.subr.bf16.mxu0 0
        %6047 = vmatpush1.bf16.msra.mxu0 0
        %6048 = vmatprep.subr.bf16.mxu0 0
        %6049 = vmatpush1.bf16.msra.mxu0 0
        %6050 = vmatprep.subr.bf16.mxu0 0
        %6051 = vmatpush1.bf16.msra.mxu0 0
        %6052 = vmatprep.subr.bf16.mxu0 0
        %6053 = vmatpush1.bf16.msra.mxu0 0
        %6054 = vmatprep.subr.bf16.mxu0 0
        %6055 = vmatpush1.bf16.msra.mxu0 0
        %6056 = vmatprep.subr.bf16.mxu0 0
        %6057 = vmatpush1.bf16.msra.mxu0 0
        %6058 = vmatprep.mubr.bf16.mxu0 0
        %6059 = vmatmul.mubr.bf16.gmra.mrb[0].mxu0 %v6024
        %v6060 = vpop.f32.mrb[0].mxu0
        %v6061 = vadd.f32 %v6009, %v6060
        %v6062 = vpop.f32.mrb[0].mxu0
        %v6063 = vpop.f32.mrb[0].mxu0
        %v6064 = vadd.f32 %v6009, %v6063
        %v6065 = vpop.f32.mrb[0].mxu0
        %6066 = vdwg.mxu0
        %v6068 = vlaneseq
        %v6069 = vshrl.u32 %v6068, 7
        %v6070 = vsub.s32 0, %v6069
        %v6071 = vrot.slane %v2662, %v6070
        %v6077 = vunpack.c.l.b16 %v2658
        %v6078 = vunpack.c.l.b16 %v2659
        %v6079 = vunpack.c.l.b16 %v2660
        %v6080 = vunpack.c.l.b16 %v2661
        %v6081 = vpack.c.b16 %v6078, %v6077
        %v6082 = vpack.c.b16 %v6080, %v6079
        %6085 = vmatprep.subr.bf16.mxu0 0
        %6086 = vmatpush1.bf16.msra.mxu0 %v6081
        %6087 = vmatprep.subr.bf16.mxu0 0
        %6088 = vmatpush1.bf16.msra.mxu0 %v6082
        %6089 = vmatprep.subr.bf16.mxu0 0
        %6090 = vmatpush1.bf16.msra.mxu0 0
        %6091 = vmatprep.subr.bf16.mxu0 0
        %6092 = vmatpush1.bf16.msra.mxu0 0
        %6093 = vmatprep.subr.bf16.mxu0 0
        %6094 = vmatpush1.bf16.msra.mxu0 0
        %6095 = vmatprep.subr.bf16.mxu0 0
        %6096 = vmatpush1.bf16.msra.mxu0 0
        %6097 = vmatprep.subr.bf16.mxu0 0
        %6098 = vmatpush1.bf16.msra.mxu0 0
        %6099 = vmatprep.subr.bf16.mxu0 0
        %6100 = vmatpush1.bf16.msra.mxu0 0
        %6101 = vmatprep.subr.bf16.mxu0 0
        %6102 = vmatpush1.bf16.msra.mxu0 0
        %6103 = vmatprep.subr.bf16.mxu0 0
        %6104 = vmatpush1.bf16.msra.mxu0 0
        %6105 = vmatprep.subr.bf16.mxu0 0
        %6106 = vmatpush1.bf16.msra.mxu0 0
        %6107 = vmatprep.subr.bf16.mxu0 0
        %6108 = vmatpush1.bf16.msra.mxu0 0
        %6109 = vmatprep.subr.bf16.mxu0 0
        %6110 = vmatpush1.bf16.msra.mxu0 0
        %6111 = vmatprep.subr.bf16.mxu0 0
        %6112 = vmatpush1.bf16.msra.mxu0 0
        %6113 = vmatprep.subr.bf16.mxu0 0
        %6114 = vmatpush1.bf16.msra.mxu0 0
        %6115 = vmatprep.subr.bf16.mxu0 0
        %6116 = vmatpush1.bf16.msra.mxu0 0
        %6117 = vmatprep.mubr.bf16.mxu0 0
        %6118 = vmatmul.mubr.bf16.gmra.mrb[0].mxu0 %v6024
        %v6119 = vpop.f32.mrb[0].mxu0
        %v6120 = vadd.f32 %v6071, %v6119
        %v6121 = vpop.f32.mrb[0].mxu0
        %v6122 = vpop.f32.mrb[0].mxu0
        %v6123 = vadd.f32 %v6071, %v6122
        %v6124 = vpop.f32.mrb[0].mxu0
        %6125 = vdwg.mxu0
        %v6126 = vpack.c.bf16 %v5999, %v5999
        %v6127 = vpack.c.bf16 %v6064, %v6061
        %v6129 = vsel %vm2865, %v6126, 0
        %v6132 = vsel %vm2865, %v6127, 0
        %6134 = vmatprep.subr.bf16.mxu0 0
        %6135 = vmatpush1.bf16.xpose.msra.mxu0 %v6132
        %6136 = vmatprep.subr.bf16.mxu0 0
        %6137 = vmatpush1.bf16.xpose.msra.mxu0 0
        %6138 = vmatprep.subr.bf16.mxu0 0
        %6139 = vmatpush1.bf16.xpose.msra.mxu0 0
        %6140 = vmatprep.subr.bf16.mxu0 0
        %6141 = vmatpush1.bf16.xpose.msra.mxu0 0
        %6142 = vmatprep.subr.bf16.mxu0 0
        %6143 = vmatpush1.bf16.xpose.msra.mxu0 0
        %6144 = vmatprep.subr.bf16.mxu0 0
        %6145 = vmatpush1.bf16.xpose.msra.mxu0 0
        %6146 = vmatprep.subr.bf16.mxu0 0
        %6147 = vmatpush1.bf16.xpose.msra.mxu0 0
        %6148 = vmatprep.subr.bf16.mxu0 0
        %6149 = vmatpush1.bf16.xpose.msra.mxu0 0
        %6150 = vmatprep.subr.bf16.mxu0 0
        %6151 = vmatpush1.bf16.xpose.msra.mxu0 0
        %6152 = vmatprep.subr.bf16.mxu0 0
        %6153 = vmatpush1.bf16.xpose.msra.mxu0 0
        %6154 = vmatprep.subr.bf16.mxu0 0
        %6155 = vmatpush1.bf16.xpose.msra.mxu0 0
        %6156 = vmatprep.subr.bf16.mxu0 0
        %6157 = vmatpush1.bf16.xpose.msra.mxu0 0
        %6158 = vmatprep.subr.bf16.mxu0 0
        %6159 = vmatpush1.bf16.xpose.msra.mxu0 0
        %6160 = vmatprep.subr.bf16.mxu0 0
        %6161 = vmatpush1.bf16.xpose.msra.mxu0 0
        %6162 = vmatprep.subr.bf16.mxu0 0
        %6163 = vmatpush1.bf16.xpose.msra.mxu0 0
        %6164 = vmatprep.subr.bf16.mxu0 0
        %6165 = vmatpush1.bf16.xpose.msra.mxu0 0
        %6166 = vmatprep.mubr.bf16.mxu0 0
        %6167 = vmatmul.mubr.bf16.gmra.mrb[0].mxu0 %v6129
        %v6168 = vpop.f32.mrb[0].mxu0
        %v6169 = vadd.f32 0.0, %v6168
        %v6170 = vpop.f32.mrb[0].mxu0
        %v6171 = vpop.f32.mrb[0].mxu0
        %v6172 = vpop.f32.mrb[0].mxu0
        %6173 = vdwg.mxu0
        %v6174 = vmul.f32 %v6169, 0.17677669
        %v6175 = vsel %vm2920, %v6174, -inf
        %6176 = vmax.xlane.f32.xlu0 %v6175
        %v6177 = vpop.xlane.xlu0 %6176
        %v6178 = vsub.f32 %v6174, %v6177
        %v6179 = vmul.f32 %v6178, 1.442695
        %v6180 = vpow.pop %v6179
        %v6181 = vsel %vm2920, %v6180, 0.0
        %6182 = vadd.xlane.f32.xlu0 %v6181
        %v6183 = vpop.xlane.xlu0 %6182
        %v6184 = vrcp.pop %v6183
        %v6185 = vmul.f32 %v6180, %v6184
        %v6186 = vpack.c.bf16 %v6185, %v6185
        %v6187 = vpack.c.bf16 %v6123, %v6120
        %v6189 = vsel %vm2920, %v6186, 0
        %6191 = vmatprep.subr.bf16.mxu0 0
        %6192 = vmatpush1.bf16.msra.mxu0 %v6187
        %6193 = vmatprep.subr.bf16.mxu0 0
        %6194 = vmatpush1.bf16.msra.mxu0 0
        %6195 = vmatprep.subr.bf16.mxu0 0
        %6196 = vmatpush1.bf16.msra.mxu0 0
        %6197 = vmatprep.subr.bf16.mxu0 0
        %6198 = vmatpush1.bf16.msra.mxu0 0
        %6199 = vmatprep.subr.bf16.mxu0 0
        %6200 = vmatpush1.bf16.msra.mxu0 0
        %6201 = vmatprep.subr.bf16.mxu0 0
        %6202 = vmatpush1.bf16.msra.mxu0 0
        %6203 = vmatprep.subr.bf16.mxu0 0
        %6204 = vmatpush1.bf16.msra.mxu0 0
        %6205 = vmatprep.subr.bf16.mxu0 0
        %6206 = vmatpush1.bf16.msra.mxu0 0
        %6207 = vmatprep.subr.bf16.mxu0 0
        %6208 = vmatpush1.bf16.msra.mxu0 0
        %6209 = vmatprep.subr.bf16.mxu0 0
        %6210 = vmatpush1.bf16.msra.mxu0 0
        %6211 = vmatprep.subr.bf16.mxu0 0
        %6212 = vmatpush1.bf16.msra.mxu0 0
        %6213 = vmatprep.subr.bf16.mxu0 0
        %6214 = vmatpush1.bf16.msra.mxu0 0
        %6215 = vmatprep.subr.bf16.mxu0 0
        %6216 = vmatpush1.bf16.msra.mxu0 0
        %6217 = vmatprep.subr.bf16.mxu0 0
        %6218 = vmatpush1.bf16.msra.mxu0 0
        %6219 = vmatprep.subr.bf16.mxu0 0
        %6220 = vmatpush1.bf16.msra.mxu0 0
        %6221 = vmatprep.subr.bf16.mxu0 0
        %6222 = vmatpush1.bf16.msra.mxu0 0
        %6223 = vmatprep.mubr.bf16.mxu0 0
        %6224 = vmatmul.mubr.bf16.gmra.mrb[0].mxu0 %v6189
        %v6225 = vpop.f32.mrb[0].mxu0
        %v6226 = vadd.f32 0.0, %v6225
        %v6227 = vpop.f32.mrb[0].mxu0
        %v6228 = vpop.f32.mrb[0].mxu0
        %v6229 = vpop.f32.mrb[0].mxu0
        %6230 = vdwg.mxu0
        %v6231 = vadd.f32 %v5999, %v6226
        %6233 = vrot.lane.b32.xlu0 %v6126, 120
        %v6234 = vpop.permute.xlu0 %6233
        %6236 = vrot.lane.b32.xlu0 %v6127, 120
        %v6237 = vpop.permute.xlu0 %6236
        %v6239 = vsel %vm2865, %v6234, 0
        %v6242 = vsel %vm2865, %v6237, 0
        %6244 = vmatprep.subr.bf16.mxu0 0
        %6245 = vmatpush1.bf16.xpose.msra.mxu0 %v6242
        %6246 = vmatprep.subr.bf16.mxu0 0
        %6247 = vmatpush1.bf16.xpose.msra.mxu0 0
        %6248 = vmatprep.subr.bf16.mxu0 0
        %6249 = vmatpush1.bf16.xpose.msra.mxu0 0
        %6250 = vmatprep.subr.bf16.mxu0 0
        %6251 = vmatpush1.bf16.xpose.msra.mxu0 0
        %6252 = vmatprep.subr.bf16.mxu0 0
        %6253 = vmatpush1.bf16.xpose.msra.mxu0 0
        %6254 = vmatprep.subr.bf16.mxu0 0
        %6255 = vmatpush1.bf16.xpose.msra.mxu0 0
        %6256 = vmatprep.subr.bf16.mxu0 0
        %6257 = vmatpush1.bf16.xpose.msra.mxu0 0
        %6258 = vmatprep.subr.bf16.mxu0 0
        %6259 = vmatpush1.bf16.xpose.msra.mxu0 0
        %6260 = vmatprep.subr.bf16.mxu0 0
        %6261 = vmatpush1.bf16.xpose.msra.mxu0 0
        %6262 = vmatprep.subr.bf16.mxu0 0
        %6263 = vmatpush1.bf16.xpose.msra.mxu0 0
        %6264 = vmatprep.subr.bf16.mxu0 0
        %6265 = vmatpush1.bf16.xpose.msra.mxu0 0
        %6266 = vmatprep.subr.bf16.mxu0 0
        %6267 = vmatpush1.bf16.xpose.msra.mxu0 0
        %6268 = vmatprep.subr.bf16.mxu0 0
        %6269 = vmatpush1.bf16.xpose.msra.mxu0 0
        %6270 = vmatprep.subr.bf16.mxu0 0
        %6271 = vmatpush1.bf16.xpose.msra.mxu0 0
        %6272 = vmatprep.subr.bf16.mxu0 0
        %6273 = vmatpush1.bf16.xpose.msra.mxu0 0
        %6274 = vmatprep.subr.bf16.mxu0 0
        %6275 = vmatpush1.bf16.xpose.msra.mxu0 0
        %6276 = vmatprep.mubr.bf16.mxu0 0
        %6277 = vmatmul.mubr.bf16.gmra.mrb[0].mxu0 %v6239
        %v6278 = vpop.f32.mrb[0].mxu0
        %v6279 = vadd.f32 0.0, %v6278
        %v6280 = vpop.f32.mrb[0].mxu0
        %v6281 = vpop.f32.mrb[0].mxu0
        %v6282 = vpop.f32.mrb[0].mxu0
        %6283 = vdwg.mxu0
        %v6284 = vmul.f32 %v6279, 0.17677669
        %v6285 = vsel %vm2920, %v6284, -inf
        %6286 = vmax.xlane.f32.xlu0 %v6285
        %v6287 = vpop.xlane.xlu0 %6286
        %v6288 = vsub.f32 %v6284, %v6287
        %v6289 = vmul.f32 %v6288, 1.442695
        %v6290 = vpow.pop %v6289
        %v6291 = vsel %vm2920, %v6290, 0.0
        %6292 = vadd.xlane.f32.xlu0 %v6291
        %v6293 = vpop.xlane.xlu0 %6292
        %v6294 = vrcp.pop %v6293
        %v6295 = vmul.f32 %v6290, %v6294
        %v6296 = vpack.c.bf16 %v6295, %v6295
        %6298 = vrot.lane.b32.xlu0 %v6187, 120
        %v6299 = vpop.permute.xlu0 %6298
        %v6302 = vsel %vm2920, %v6296, 0
        %6304 = vmatprep.subr.bf16.mxu0 0
        %6305 = vmatpush1.bf16.msra.mxu0 %v6299
        %6306 = vmatprep.subr.bf16.mxu0 0
        %6307 = vmatpush1.bf16.msra.mxu0 0
        %6308 = vmatprep.subr.bf16.mxu0 0
        %6309 = vmatpush1.bf16.msra.mxu0 0
        %6310 = vmatprep.subr.bf16.mxu0 0
        %6311 = vmatpush1.bf16.msra.mxu0 0
        %6312 = vmatprep.subr.bf16.mxu0 0
        %6313 = vmatpush1.bf16.msra.mxu0 0
        %6314 = vmatprep.subr.bf16.mxu0 0
        %6315 = vmatpush1.bf16.msra.mxu0 0
        %6316 = vmatprep.subr.bf16.mxu0 0
        %6317 = vmatpush1.bf16.msra.mxu0 0
        %6318 = vmatprep.subr.bf16.mxu0 0
        %6319 = vmatpush1.bf16.msra.mxu0 0
        %6320 = vmatprep.subr.bf16.mxu0 0
        %6321 = vmatpush1.bf16.msra.mxu0 0
        %6322 = vmatprep.subr.bf16.mxu0 0
        %6323 = vmatpush1.bf16.msra.mxu0 0
        %6324 = vmatprep.subr.bf16.mxu0 0
        %6325 = vmatpush1.bf16.msra.mxu0 0
        %6326 = vmatprep.subr.bf16.mxu0 0
        %6327 = vmatpush1.bf16.msra.mxu0 0
        %6328 = vmatprep.subr.bf16.mxu0 0
        %6329 = vmatpush1.bf16.msra.mxu0 0
        %6330 = vmatprep.subr.bf16.mxu0 0
        %6331 = vmatpush1.bf16.msra.mxu0 0
        %6332 = vmatprep.subr.bf16.mxu0 0
        %6333 = vmatpush1.bf16.msra.mxu0 0
        %6334 = vmatprep.subr.bf16.mxu0 0
        %6335 = vmatpush1.bf16.msra.mxu0 0
        %6336 = vmatprep.mubr.bf16.mxu0 0
        %6337 = vmatmul.mubr.bf16.gmra.mrb[0].mxu0 %v6302
        %v6338 = vpop.f32.mrb[0].mxu0
        %v6339 = vadd.f32 0.0, %v6338
        %v6340 = vpop.f32.mrb[0].mxu0
        %v6341 = vpop.f32.mrb[0].mxu0
        %v6342 = vpop.f32.mrb[0].mxu0
        %6343 = vdwg.mxu0
        %6345 = vrot.lane.b32.xlu0 %v6339, 8
        %v6346 = vpop.permute.xlu0 %6345
        %v6348 = vadd.f32 %v5999, %v6346
        %6349 = vrot.lane.b32.xlu0 %v6126, 112
        %v6350 = vpop.permute.xlu0 %6349
        %6351 = vrot.lane.b32.xlu0 %v6127, 112
        %v6352 = vpop.permute.xlu0 %6351
        %v6354 = vsel %vm2865, %v6350, 0
        %v6357 = vsel %vm2865, %v6352, 0
        %6359 = vmatprep.subr.bf16.mxu0 0
        %6360 = vmatpush1.bf16.xpose.msra.mxu0 %v6357
        %6361 = vmatprep.subr.bf16.mxu0 0
        %6362 = vmatpush1.bf16.xpose.msra.mxu0 0
        %6363 = vmatprep.subr.bf16.mxu0 0
        %6364 = vmatpush1.bf16.xpose.msra.mxu0 0
        %6365 = vmatprep.subr.bf16.mxu0 0
        %6366 = vmatpush1.bf16.xpose.msra.mxu0 0
        %6367 = vmatprep.subr.bf16.mxu0 0
        %6368 = vmatpush1.bf16.xpose.msra.mxu0 0
        %6369 = vmatprep.subr.bf16.mxu0 0
        %6370 = vmatpush1.bf16.xpose.msra.mxu0 0
        %6371 = vmatprep.subr.bf16.mxu0 0
        %6372 = vmatpush1.bf16.xpose.msra.mxu0 0
        %6373 = vmatprep.subr.bf16.mxu0 0
        %6374 = vmatpush1.bf16.xpose.msra.mxu0 0
        %6375 = vmatprep.subr.bf16.mxu0 0
        %6376 = vmatpush1.bf16.xpose.msra.mxu0 0
        %6377 = vmatprep.subr.bf16.mxu0 0
        %6378 = vmatpush1.bf16.xpose.msra.mxu0 0
        %6379 = vmatprep.subr.bf16.mxu0 0
        %6380 = vmatpush1.bf16.xpose.msra.mxu0 0
        %6381 = vmatprep.subr.bf16.mxu0 0
        %6382 = vmatpush1.bf16.xpose.msra.mxu0 0
        %6383 = vmatprep.subr.bf16.mxu0 0
        %6384 = vmatpush1.bf16.xpose.msra.mxu0 0
        %6385 = vmatprep.subr.bf16.mxu0 0
        %6386 = vmatpush1.bf16.xpose.msra.mxu0 0
        %6387 = vmatprep.subr.bf16.mxu0 0
        %6388 = vmatpush1.bf16.xpose.msra.mxu0 0
        %6389 = vmatprep.subr.bf16.mxu0 0
        %6390 = vmatpush1.bf16.xpose.msra.mxu0 0
        %6391 = vmatprep.mubr.bf16.mxu0 0
        %6392 = vmatmul.mubr.bf16.gmra.mrb[0].mxu0 %v6354
        %v6393 = vpop.f32.mrb[0].mxu0
        %v6394 = vadd.f32 0.0, %v6393
        %v6395 = vpop.f32.mrb[0].mxu0
        %v6396 = vpop.f32.mrb[0].mxu0
        %v6397 = vpop.f32.mrb[0].mxu0
        %6398 = vdwg.mxu0
        %v6399 = vmul.f32 %v6394, 0.17677669
        %v6400 = vsel %vm2920, %v6399, -inf
        %6401 = vmax.xlane.f32.xlu0 %v6400
        %v6402 = vpop.xlane.xlu0 %6401
        %v6403 = vsub.f32 %v6399, %v6402
        %v6404 = vmul.f32 %v6403, 1.442695
        %v6405 = vpow.pop %v6404
        %v6406 = vsel %vm2920, %v6405, 0.0
        %6407 = vadd.xlane.f32.xlu0 %v6406
        %v6408 = vpop.xlane.xlu0 %6407
        %v6409 = vrcp.pop %v6408
        %v6410 = vmul.f32 %v6405, %v6409
        %v6411 = vpack.c.bf16 %v6410, %v6410
        %6412 = vrot.lane.b32.xlu0 %v6187, 112
        %v6413 = vpop.permute.xlu0 %6412
        %v6416 = vsel %vm2920, %v6411, 0
        %6418 = vmatprep.subr.bf16.mxu0 0
        %6419 = vmatpush1.bf16.msra.mxu0 %v6413
        %6420 = vmatprep.subr.bf16.mxu0 0
        %6421 = vmatpush1.bf16.msra.mxu0 0
        %6422 = vmatprep.subr.bf16.mxu0 0
        %6423 = vmatpush1.bf16.msra.mxu0 0
        %6424 = vmatprep.subr.bf16.mxu0 0
        %6425 = vmatpush1.bf16.msra.mxu0 0
        %6426 = vmatprep.subr.bf16.mxu0 0
        %6427 = vmatpush1.bf16.msra.mxu0 0
        %6428 = vmatprep.subr.bf16.mxu0 0
        %6429 = vmatpush1.bf16.msra.mxu0 0
        %6430 = vmatprep.subr.bf16.mxu0 0
        %6431 = vmatpush1.bf16.msra.mxu0 0
        %6432 = vmatprep.subr.bf16.mxu0 0
        %6433 = vmatpush1.bf16.msra.mxu0 0
        %6434 = vmatprep.subr.bf16.mxu0 0
        %6435 = vmatpush1.bf16.msra.mxu0 0
        %6436 = vmatprep.subr.bf16.mxu0 0
        %6437 = vmatpush1.bf16.msra.mxu0 0
        %6438 = vmatprep.subr.bf16.mxu0 0
        %6439 = vmatpush1.bf16.msra.mxu0 0
        %6440 = vmatprep.subr.bf16.mxu0 0
        %6441 = vmatpush1.bf16.msra.mxu0 0
        %6442 = vmatprep.subr.bf16.mxu0 0
        %6443 = vmatpush1.bf16.msra.mxu0 0
        %6444 = vmatprep.subr.bf16.mxu0 0
        %6445 = vmatpush1.bf16.msra.mxu0 0
        %6446 = vmatprep.subr.bf16.mxu0 0
        %6447 = vmatpush1.bf16.msra.mxu0 0
        %6448 = vmatprep.subr.bf16.mxu0 0
        %6449 = vmatpush1.bf16.msra.mxu0 0
        %6450 = vmatprep.mubr.bf16.mxu0 0
        %6451 = vmatmul.mubr.bf16.gmra.mrb[0].mxu0 %v6416
        %v6452 = vpop.f32.mrb[0].mxu0
        %v6453 = vadd.f32 0.0, %v6452
        %v6454 = vpop.f32.mrb[0].mxu0
        %v6455 = vpop.f32.mrb[0].mxu0
        %v6456 = vpop.f32.mrb[0].mxu0
        %6457 = vdwg.mxu0
        %6459 = vrot.lane.b32.xlu0 %v6453, 16
        %v6460 = vpop.permute.xlu0 %6459
        %v6462 = vadd.f32 %v5999, %v6460
        %6463 = vrot.lane.b32.xlu0 %v6126, 104
        %v6464 = vpop.permute.xlu0 %6463
        %6465 = vrot.lane.b32.xlu0 %v6127, 104
        %v6466 = vpop.permute.xlu0 %6465
        %v6468 = vsel %vm2865, %v6464, 0
        %v6471 = vsel %vm2865, %v6466, 0
        %6473 = vmatprep.subr.bf16.mxu0 0
        %6474 = vmatpush1.bf16.xpose.msra.mxu0 %v6471
        %6475 = vmatprep.subr.bf16.mxu0 0
        %6476 = vmatpush1.bf16.xpose.msra.mxu0 0
        %6477 = vmatprep.subr.bf16.mxu0 0
        %6478 = vmatpush1.bf16.xpose.msra.mxu0 0
        %6479 = vmatprep.subr.bf16.mxu0 0
        %6480 = vmatpush1.bf16.xpose.msra.mxu0 0
        %6481 = vmatprep.subr.bf16.mxu0 0
        %6482 = vmatpush1.bf16.xpose.msra.mxu0 0
        %6483 = vmatprep.subr.bf16.mxu0 0
        %6484 = vmatpush1.bf16.xpose.msra.mxu0 0
        %6485 = vmatprep.subr.bf16.mxu0 0
        %6486 = vmatpush1.bf16.xpose.msra.mxu0 0
        %6487 = vmatprep.subr.bf16.mxu0 0
        %6488 = vmatpush1.bf16.xpose.msra.mxu0 0
        %6489 = vmatprep.subr.bf16.mxu0 0
        %6490 = vmatpush1.bf16.xpose.msra.mxu0 0
        %6491 = vmatprep.subr.bf16.mxu0 0
        %6492 = vmatpush1.bf16.xpose.msra.mxu0 0
        %6493 = vmatprep.subr.bf16.mxu0 0
        %6494 = vmatpush1.bf16.xpose.msra.mxu0 0
        %6495 = vmatprep.subr.bf16.mxu0 0
        %6496 = vmatpush1.bf16.xpose.msra.mxu0 0
        %6497 = vmatprep.subr.bf16.mxu0 0
        %6498 = vmatpush1.bf16.xpose.msra.mxu0 0
        %6499 = vmatprep.subr.bf16.mxu0 0
        %6500 = vmatpush1.bf16.xpose.msra.mxu0 0
        %6501 = vmatprep.subr.bf16.mxu0 0
        %6502 = vmatpush1.bf16.xpose.msra.mxu0 0
        %6503 = vmatprep.subr.bf16.mxu0 0
        %6504 = vmatpush1.bf16.xpose.msra.mxu0 0
        %6505 = vmatprep.mubr.bf16.mxu0 0
        %6506 = vmatmul.mubr.bf16.gmra.mrb[0].mxu0 %v6468
        %v6507 = vpop.f32.mrb[0].mxu0
        %v6508 = vadd.f32 0.0, %v6507
        %v6509 = vpop.f32.mrb[0].mxu0
        %v6510 = vpop.f32.mrb[0].mxu0
        %v6511 = vpop.f32.mrb[0].mxu0
        %6512 = vdwg.mxu0
        %v6513 = vmul.f32 %v6508, 0.17677669
        %v6514 = vsel %vm2920, %v6513, -inf
        %6515 = vmax.xlane.f32.xlu0 %v6514
        %v6516 = vpop.xlane.xlu0 %6515
        %v6517 = vsub.f32 %v6513, %v6516
        %v6518 = vmul.f32 %v6517, 1.442695
        %v6519 = vpow.pop %v6518
        %v6520 = vsel %vm2920, %v6519, 0.0
        %6521 = vadd.xlane.f32.xlu0 %v6520
        %v6522 = vpop.xlane.xlu0 %6521
        %v6523 = vrcp.pop %v6522
        %v6524 = vmul.f32 %v6519, %v6523
        %v6525 = vpack.c.bf16 %v6524, %v6524
        %6526 = vrot.lane.b32.xlu0 %v6187, 104
        %v6527 = vpop.permute.xlu0 %6526
        %v6530 = vsel %vm2920, %v6525, 0
        %6532 = vmatprep.subr.bf16.mxu0 0
        %6533 = vmatpush1.bf16.msra.mxu0 %v6527
        %6534 = vmatprep.subr.bf16.mxu0 0
        %6535 = vmatpush1.bf16.msra.mxu0 0
        %6536 = vmatprep.subr.bf16.mxu0 0
        %6537 = vmatpush1.bf16.msra.mxu0 0
        %6538 = vmatprep.subr.bf16.mxu0 0
        %6539 = vmatpush1.bf16.msra.mxu0 0
        %6540 = vmatprep.subr.bf16.mxu0 0
        %6541 = vmatpush1.bf16.msra.mxu0 0
        %6542 = vmatprep.subr.bf16.mxu0 0
        %6543 = vmatpush1.bf16.msra.mxu0 0
        %6544 = vmatprep.subr.bf16.mxu0 0
        %6545 = vmatpush1.bf16.msra.mxu0 0
        %6546 = vmatprep.subr.bf16.mxu0 0
        %6547 = vmatpush1.bf16.msra.mxu0 0
        %6548 = vmatprep.subr.bf16.mxu0 0
        %6549 = vmatpush1.bf16.msra.mxu0 0
        %6550 = vmatprep.subr.bf16.mxu0 0
        %6551 = vmatpush1.bf16.msra.mxu0 0
        %6552 = vmatprep.subr.bf16.mxu0 0
        %6553 = vmatpush1.bf16.msra.mxu0 0
        %6554 = vmatprep.subr.bf16.mxu0 0
        %6555 = vmatpush1.bf16.msra.mxu0 0
        %6556 = vmatprep.subr.bf16.mxu0 0
        %6557 = vmatpush1.bf16.msra.mxu0 0
        %6558 = vmatprep.subr.bf16.mxu0 0
        %6559 = vmatpush1.bf16.msra.mxu0 0
        %6560 = vmatprep.subr.bf16.mxu0 0
        %6561 = vmatpush1.bf16.msra.mxu0 0
        %6562 = vmatprep.subr.bf16.mxu0 0
        %6563 = vmatpush1.bf16.msra.mxu0 0
        %6564 = vmatprep.mubr.bf16.mxu0 0
        %6565 = vmatmul.mubr.bf16.gmra.mrb[0].mxu0 %v6530
        %v6566 = vpop.f32.mrb[0].mxu0
        %v6567 = vadd.f32 0.0, %v6566
        %v6568 = vpop.f32.mrb[0].mxu0
        %v6569 = vpop.f32.mrb[0].mxu0
        %v6570 = vpop.f32.mrb[0].mxu0
        %6571 = vdwg.mxu0
        %6573 = vrot.lane.b32.xlu0 %v6567, 24
        %v6574 = vpop.permute.xlu0 %6573
        %v6576 = vadd.f32 %v5999, %v6574
        %v6577 = vsel %vm2865, %v6231, %v6348
        %v6578 = vsel %vm2920, %v6577, %v6462
        %v6579 = vsel %vm3328, %v6578, %v6576
        %v6580 = vsel %vm2696, %v6579, 0.0
        %6581 = vadd.xlane.f32.xlu0 %v6580
        %v6582 = vpop.xlane.xlu0 %6581
        %v6583 = vmul.f32 %v6582, %v3333
        %v6584 = vsub.f32 %v6579, %v6583
        %v6585 = vmul.f32 %v6584, %v6584
        %v6586 = vsel %vm2696, %v6585, 0.0
        %6587 = vadd.xlane.f32.xlu0 %v6586
        %v6588 = vpop.xlane.xlu0 %6587
        %v6589 = vmul.f32 %v6588, %v3333
        %v6590 = vadd.f32 %v6589, 1e-05
        %v6591 = vrsqrt.pop %v6590
        %v6592 = vmul.f32 %v6584, %v6591
        %v6594 = vlaneseq
        %v6595 = vshrl.u32 %v6594, 7
        %v6596 = vsub.s32 0, %v6595
        %v6597 = vrot.slane %v2668, %v6596
        %v6599 = vmul.f32 %v6592, %v6597
        %v6601 = vlaneseq
        %v6602 = vshrl.u32 %v6601, 7
        %v6603 = vsub.s32 0, %v6602
        %v6604 = vrot.slane %v2669, %v6603
        %v6606 = vadd.f32 %v6599, %v6604
        %v6607 = vpack.c.bf16 %v6606, %v6606
        %v6609 = vlaneseq
        %v6610 = vshrl.u32 %v6609, 7
        %v6611 = vsub.s32 0, %v6610
        %v6612 = vrot.slane %v2667, %v6611
        %v6618 = vunpack.c.l.b16 %v2663
        %v6619 = vunpack.c.l.b16 %v2664
        %v6620 = vunpack.c.l.b16 %v2665
        %v6621 = vunpack.c.l.b16 %v2666
        %v6622 = vpack.c.b16 %v6619, %v6618
        %v6623 = vpack.c.b16 %v6621, %v6620
        %v6627 = vsel %vm2696, %v6607, 0
        %6629 = vmatprep.subr.bf16.mxu0 0
        %6630 = vmatpush1.bf16.msra.mxu0 %v6622
        %6631 = vmatprep.subr.bf16.mxu0 0
        %6632 = vmatpush1.bf16.msra.mxu0 %v6623
        %6633 = vmatprep.subr.bf16.mxu0 0
        %6634 = vmatpush1.bf16.msra.mxu0 0
        %6635 = vmatprep.subr.bf16.mxu0 0
        %6636 = vmatpush1.bf16.msra.mxu0 0
        %6637 = vmatprep.subr.bf16.mxu0 0
        %6638 = vmatpush1.bf16.msra.mxu0 0
        %6639 = vmatprep.subr.bf16.mxu0 0
        %6640 = vmatpush1.bf16.msra.mxu0 0
        %6641 = vmatprep.subr.bf16.mxu0 0
        %6642 = vmatpush1.bf16.msra.mxu0 0
        %6643 = vmatprep.subr.bf16.mxu0 0
        %6644 = vmatpush1.bf16.msra.mxu0 0
        %6645 = vmatprep.subr.bf16.mxu0 0
        %6646 = vmatpush1.bf16.msra.mxu0 0
        %6647 = vmatprep.subr.bf16.mxu0 0
        %6648 = vmatpush1.bf16.msra.mxu0 0
        %6649 = vmatprep.subr.bf16.mxu0 0
        %6650 = vmatpush1.bf16.msra.mxu0 0
        %6651 = vmatprep.subr.bf16.mxu0 0
        %6652 = vmatpush1.bf16.msra.mxu0 0
        %6653 = vmatprep.subr.bf16.mxu0 0
        %6654 = vmatpush1.bf16.msra.mxu0 0
        %6655 = vmatprep.subr.bf16.mxu0 0
        %6656 = vmatpush1.bf16.msra.mxu0 0
        %6657 = vmatprep.subr.bf16.mxu0 0
        %6658 = vmatpush1.bf16.msra.mxu0 0
        %6659 = vmatprep.subr.bf16.mxu0 0
        %6660 = vmatpush1.bf16.msra.mxu0 0
        %6661 = vmatprep.mubr.bf16.mxu0 0
        %6662 = vmatmul.mubr.bf16.gmra.mrb[0].mxu0 %v6627
        %v6663 = vpop.f32.mrb[0].mxu0
        %v6664 = vadd.f32 %v6612, %v6663
        %v6665 = vpop.f32.mrb[0].mxu0
        %v6666 = vpop.f32.mrb[0].mxu0
        %v6667 = vpop.f32.mrb[0].mxu0
        %6668 = vdwg.mxu0
        %v6669 = vmax.f32 %v6664, 0.0
        %v6670 = vadd.f32 %v6606, %v6669
        %v6671 = vsel %vm2696, %v6670, 0.0
        %6672 = vadd.xlane.f32.xlu0 %v6671
        %v6673 = vpop.xlane.xlu0 %6672
        %v6674 = vmul.f32 %v6673, %v3333
        %v6675 = vsub.f32 %v6670, %v6674
        %v6676 = vmul.f32 %v6675, %v6675
        %v6677 = vsel %vm2696, %v6676, 0.0
        %6678 = vadd.xlane.f32.xlu0 %v6677
        %v6679 = vpop.xlane.xlu0 %6678
        %v6680 = vmul.f32 %v6679, %v3333
        %v6681 = vadd.f32 %v6680, 1e-05
        %v6682 = vrsqrt.pop %v6681
        %v6683 = vmul.f32 %v6675, %v6682
        %v6685 = vlaneseq
        %v6686 = vshrl.u32 %v6685, 7
        %v6687 = vsub.s32 0, %v6686
        %v6688 = vrot.slane %v2670, %v6687
        %v6690 = vmul.f32 %v6683, %v6688
        %v6692 = vlaneseq
        %v6693 = vshrl.u32 %v6692, 7
        %v6694 = vsub.s32 0, %v6693
        %v6695 = vrot.slane %v2671, %v6694
        %v6697 = vadd.f32 %v6690, %v6695
        %v6698 = vpack.c.bf16 %v6697, %v6697
        %v6700 = vlaneseq
        %v6701 = vshrl.u32 %v6700, 7
        %v6702 = vsub.s32 0, %v6701
        %v6703 = vrot.slane %v2676, %v6702
        %v6709 = vunpack.c.l.b16 %v2672
        %v6710 = vunpack.c.l.b16 %v2673
        %v6711 = vunpack.c.l.b16 %v2674
        %v6712 = vunpack.c.l.b16 %v2675
        %v6713 = vpack.c.b16 %v6710, %v6709
        %v6714 = vpack.c.b16 %v6712, %v6711
        %v6718 = vsel %vm2696, %v6698, 0
        %6720 = vmatprep.subr.bf16.mxu0 0
        %6721 = vmatpush1.bf16.msra.mxu0 %v6713
        %6722 = vmatprep.subr.bf16.mxu0 0
        %6723 = vmatpush1.bf16.msra.mxu0 %v6714
        %6724 = vmatprep.subr.bf16.mxu0 0
        %6725 = vmatpush1.bf16.msra.mxu0 0
        %6726 = vmatprep.subr.bf16.mxu0 0
        %6727 = vmatpush1.bf16.msra.mxu0 0
        %6728 = vmatprep.subr.bf16.mxu0 0
        %6729 = vmatpush1.bf16.msra.mxu0 0
        %6730 = vmatprep.subr.bf16.mxu0 0
        %6731 = vmatpush1.bf16.msra.mxu0 0
        %6732 = vmatprep.subr.bf16.mxu0 0
        %6733 = vmatpush1.bf16.msra.mxu0 0
        %6734 = vmatprep.subr.bf16.mxu0 0
        %6735 = vmatpush1.bf16.msra.mxu0 0
        %6736 = vmatprep.subr.bf16.mxu0 0
        %6737 = vmatpush1.bf16.msra.mxu0 0
        %6738 = vmatprep.subr.bf16.mxu0 0
        %6739 = vmatpush1.bf16.msra.mxu0 0
        %6740 = vmatprep.subr.bf16.mxu0 0
        %6741 = vmatpush1.bf16.msra.mxu0 0
        %6742 = vmatprep.subr.bf16.mxu0 0
        %6743 = vmatpush1.bf16.msra.mxu0 0
        %6744 = vmatprep.subr.bf16.mxu0 0
        %6745 = vmatpush1.bf16.msra.mxu0 0
        %6746 = vmatprep.subr.bf16.mxu0 0
        %6747 = vmatpush1.bf16.msra.mxu0 0
        %6748 = vmatprep.subr.bf16.mxu0 0
        %6749 = vmatpush1.bf16.msra.mxu0 0
        %6750 = vmatprep.subr.bf16.mxu0 0
        %6751 = vmatpush1.bf16.msra.mxu0 0
        %6752 = vmatprep.mubr.bf16.mxu0 0
        %6753 = vmatmul.mubr.bf16.gmra.mrb[0].mxu0 %v6718
        %v6754 = vpop.f32.mrb[0].mxu0
        %v6755 = vadd.f32 %v6703, %v6754
        %v6756 = vpop.f32.mrb[0].mxu0
        %v6757 = vpop.f32.mrb[0].mxu0
        %v6758 = vpop.f32.mrb[0].mxu0
        %6759 = vdwg.mxu0
        %6760 = vst.msk [vmem:[%s2542] sm:$0xff] %vm2920, %v6755
        %s6761 = sand.u32 %s1598, 1
        %s6762 = scalar_lea.sflag [#allocation4], %s6761
        %s6763 = sand.u32 %s1598, 1
        %s6764 = smul.addr %s6763, 8
        %s6765 = scalar_lea.vmem [#allocation68], %s6764
        // Predicated region
        $region461: #{tpu_custom_call.1} parent=287 // pred_check
          %p6766 = pneg %p1608
        $region462: #{tpu_custom_call.1} parent=287 // pred_check_branch
          %6768 = sbr.rel (%p6766) target = $region464
        $region463: #{tpu_custom_call.1} parent=287 // pred_region
          %s6770 = ssub.s32 128, 128
          %6771 = vsyncadd %s6762, %s6770
          %s6772 = smul.addr %s173, 128
          %s6773 = scalar_lea.hbm %s135, %s6772
          %s6775 = sshll.u32 %s6765, 4
          %s6776 = int_to_ptr.vmem [resolvable:$true] %s6775
          %6778 = dma.vmem_to_hbm [thread:$0]  %s6776, 128, %s6773, %s6762
        $region464: #{tpu_custom_call.1} parent=287 // pred_fallthru
          _
      $region288: #{tpu_custom_call.1} parent=5 // pred_fallthru
        _
      %p6779 = scmp.le.s32.totalorder 2, %s168
      // Predicated region
      $region465: #{tpu_custom_call.1} parent=5 // pred_check
        %p6780 = pneg %p6779
      $region466: #{tpu_custom_call.1} parent=5 // pred_check_branch
        %6782 = sbr.rel (%p6780) target = $region468
      $region467: #{tpu_custom_call.1} parent=5 // pred_region
        %s6783 = ssub.s32 %s168, 2
        // Predicated region
        $region469: #{tpu_custom_call.1} parent=467 // pred_check
          %p6784 = pneg %p1614
        $region470: #{tpu_custom_call.1} parent=467 // pred_check_branch
          %6786 = sbr.rel (%p6784) target = $region472
        $region471: #{tpu_custom_call.1} parent=467 // pred_region
          %s6787 = sand.u32 %s1599, 1
          %s6788 = scalar_lea.sflag [#allocation4], %s6787
          %s6789 = sand.u32 %s1599, 1
          %s6790 = smul.addr %s6789, 8
          %s6791 = scalar_lea.vmem [#allocation68], %s6790
          %6792 = dma.done %s6788, 128
        $region472: #{tpu_custom_call.1} parent=467 // pred_fallthru
          _
      $region468: #{tpu_custom_call.1} parent=5 // pred_fallthru
        _
    $region6: #{tpu_custom_call.1} parent=1 // loop_footer
      %s172 = sadd.s32 1, %s168
    $region7: #{tpu_custom_call.1} parent=1 // loop_footer_branch
      %167 = sbr.rel target = $region3
    $region8: #{tpu_custom_call.1} parent=1 // loop_exit
      _
    %6793 = vsyncpa [#allocation3], 1
    %s6794 = scalar_lea.sflag [#allocation3], 1
    %6795 = vsyncpa %s6794, 1
    %6796 = vsyncpa [#allocation6], 1
    %s6797 = scalar_lea.sflag [#allocation6], 1
    %6798 = vsyncpa %s6797, 1
    %6799 = vsyncpa [#allocation9], 1
    %6800 = vsyncpa [#allocation12], 1
    %6801 = vsyncpa [#allocation15], 1
    %6802 = vsyncpa [#allocation18], 1
    %6803 = vsyncpa [#allocation21], 1
    %6804 = vsyncpa [#allocation24], 1
    %6805 = vsyncpa [#allocation27], 1
    %6806 = vsyncpa [#allocation30], 1
    %6807 = vsyncpa [#allocation33], 1
    %6808 = vsyncpa [#allocation36], 1
    %6809 = vsyncpa [#allocation39], 1
    %6810 = vsyncpa [#allocation42], 1
    %6811 = vsyncpa [#allocation45], 1
    %6812 = vsyncpa [#allocation48], 1
    %6813 = vsyncpa [#allocation51], 1
    %6814 = vsyncpa [#allocation54], 1
    %6815 = vsyncpa [#allocation57], 1
    %6816 = vsyncpa [#allocation60], 1
    %6817 = vsyncpa [#allocation63], 1
    %6818 = vsyncpa [#allocation66], 1
    %6819 = vsyncpa [#allocation4], 1
    %s6820 = scalar_lea.sflag [#allocation4], 1
    %6821 = vsyncpa %s6820, 1

</llo_original>
